<compile_context>
chip_gen: v7x
topology: tpu7x:2x2x1
jax: 0.10.0
libtpu: 0.0.40
codegen_flags: <defaults>
</compile_context>

<pallas_src>
import jax
import jax.numpy as jnp
import numpy as np
from jax.experimental import pallas as pl
from jax.experimental.pallas import tpu as pltpu

STRIDE = 3
LANE = 128
SUBLANE = 8
MAX_BATCH_TILE = 512                 # sweepable; only z/out tiles scale with it
VMEM_LIMIT_BYTES = 32 * 1024 * 1024  # bf16 weights + bt<=512 tiles fit with headroom


def _round_up(x, m):
    return (x + m - 1) // m * m


# ------------------------------ Pallas kernel --------------------------------
def _decoder_fused_kernel(z_ref, w1_ref, b1_ref, wc1_ref, bc1_ref,
                          wc2_ref, bc2_ref, o_ref):
    # fc1 + ReLU (dropout = inference identity). Weights are bf16, activations
    # cast to bf16 only at the dot operands; accumulate + bias/ReLU in f32.
    h = jnp.dot(z_ref[...].astype(jnp.bfloat16), w1_ref[...],
                preferred_element_type=jnp.float32)
    h = jnp.maximum(h + b1_ref[...], 0.0)
    # convt1 as dense matmul against the offline-scattered weight, + bias, ReLU
    y = jnp.dot(h.astype(jnp.bfloat16), wc1_ref[...],
                preferred_element_type=jnp.float32)
    y = jnp.maximum(y + bc1_ref[...], 0.0)
    # convt2 and fc2 folded into one lane-dense matmul
    out = jnp.dot(y.astype(jnp.bfloat16), wc2_ref[...],
                  preferred_element_type=jnp.float32)
    o_ref[...] = (out + bc2_ref[...]).astype(o_ref.dtype)


# ---------------------------- parameter creation ------------------------------
def init_decoder_params(key, latent_dims, window_length, kernel_size):
    l0 = 21                                  # 672 = 32 * 21 after view(-1, 32, 21)
    l1 = (l0 - 1) * STRIDE + kernel_size     # actual convt1 output length
    l2 = (l1 - 1) * STRIDE + kernel_size     # actual convt2 output length
    ks = jax.random.split(key, 8)

    def u(k, shape, fan_in):
        bound = 1.0 / np.sqrt(fan_in)
        return jax.random.uniform(k, shape, jnp.float32, -bound, bound)

    params = dict(
        fc1_w=u(ks[0], (latent_dims, 672), latent_dims),          # stored transposed
        fc1_b=u(ks[1], (672,), latent_dims),
        ct1_w=u(ks[2], (32, 16, kernel_size), 32 * kernel_size),  # (Cin, Cout, K)
        ct1_b=u(ks[3], (16,), 32 * kernel_size),
        ct2_w=u(ks[4], (16, 1, kernel_size), 16 * kernel_size),
        ct2_b=u(ks[5], (1,), 16 * kernel_size),
        fc2_w=u(ks[6], (l2, window_length), l2),                  # stored transposed
        fc2_b=u(ks[7], (window_length,), l2),
    )
    shapes = dict(l0=l0, l1=l1, l2=l2, K=kernel_size)
    return params, shapes


def prepare_fused_params(params, shapes):
    """Offline (numpy) weight folding / layout prep. Done once, outside the kernel."""
    K, l0, l1, l2 = shapes["K"], shapes["l0"], shapes["l1"], shapes["l2"]
    cin, cout = 32, 16
    n1, n2 = cin * l0, cout * l1                     # 672, 16*l1
    n1p = _round_up(n1, LANE)                        # lane-padded widths
    n2p = _round_up(n2, LANE)

    fc1_w = np.asarray(params["fc1_w"], np.float32)
    fc1_b = np.asarray(params["fc1_b"], np.float32)
    ct1_w = np.asarray(params["ct1_w"], np.float32)
    ct1_b = np.asarray(params["ct1_b"], np.float32)
    ct2_w = np.asarray(params["ct2_w"], np.float32)
    ct2_b = np.asarray(params["ct2_b"], np.float32)
    fc2_w = np.asarray(params["fc2_w"], np.float32)
    fc2_b = np.asarray(params["fc2_b"], np.float32)
    wl = fc2_w.shape[1]
    wlp = _round_up(wl, LANE)                        # lane-dense output width

    # fc1, zero-padded to a lane multiple; padded columns stay exactly zero
    # downstream (relu(0)=0 and the matching rows of w_ct1 are zero), even
    # after the bf16 cast (0.0 is exact in bf16).
    w1 = np.zeros((fc1_w.shape[0], n1p), np.float32)
    w1[:, :n1] = fc1_w
    b1 = np.zeros((1, n1p), np.float32)
    b1[0, :n1] = fc1_b

    # convt1 as a dense matrix over NCW-flattened input/output:
    #   row = ci*l0 + i  (matches h.view(-1, 32, 21)),  col = co*l1 + i*stride + k
    # (+= handles stride < K overlap-add correctly as well).
    w_ct1 = np.zeros((n1p, n2p), np.float32)
    for ci in range(cin):
        for i in range(l0):
            r = ci * l0 + i
            for co in range(cout):
                base = co * l1 + i * STRIDE
                w_ct1[r, base:base + K] += ct1_w[ci, co, :]
    b_ct1 = np.zeros((1, n2p), np.float32)
    b_ct1[0, :n2] = np.repeat(ct1_b, l1)             # index co*l1 + p -> ct1_b[co]

    # convt2 folded with fc2 (output columns padded to a lane multiple):
    #   W_comb[co*l1 + p, w] = sum_k ct2_w[co,0,k] * fc2_w[p*stride + k, w]
    #   b_comb[w]            = ct2_b * sum_q fc2_w[q, w] + fc2_b[w]
    w_comb = np.zeros((n2p, wlp), np.float32)
    for co in range(cout):
        for p in range(l1):
            q = p * STRIDE
            w_comb[co * l1 + p, :wl] = ct2_w[co, 0, :] @ fc2_w[q:q + K, :]
    b_comb = np.zeros((1, wlp), np.float32)
    b_comb[0, :wl] = ct2_b[0] * fc2_w.sum(axis=0) + fc2_b

    return dict(
        # big matmul weights stored bf16 (MXU-native, half the HBM/VMEM bytes)
        w1=jnp.asarray(w1, jnp.bfloat16),
        w_ct1=jnp.asarray(w_ct1, jnp.bfloat16),
        w_comb=jnp.asarray(w_comb, jnp.bfloat16),
        # biases stay f32 (added to the f32 accumulators)
        b1=jnp.asarray(b1), b_ct1=jnp.asarray(b_ct1), b_comb=jnp.asarray(b_comb),
        window_length=wl,
    )


# -------------------------------- forward pass --------------------------------
def _choose_batch_tile(B):
    """Batch tile multiple of 8, capped at MAX_BATCH_TILE, >=2 grid steps when possible."""
    b8 = _round_up(B, SUBLANE)
    if b8 <= SUBLANE:
        return SUBLANE, SUBLANE
    bt = min(MAX_BATCH_TILE, _round_up(pl.cdiv(b8, 2), SUBLANE))
    return bt, _round_up(B, bt)


def _build_decoder_call(bt, b_pad, latent_dims, n1p, n2p, wlp, single_buffer_weights):
    if single_buffer_weights:
        def w_spec(shape):
            # constant index map -> never refetched; single-buffer halves resident VMEM
            return pl.BlockSpec(shape, lambda i: (0, 0), pipeline_mode=pl.Buffered(1))
    else:
        def w_spec(shape):
            return pl.BlockSpec(shape, lambda i: (0, 0))

    return pl.pallas_call(
        _decoder_fused_kernel,
        out_shape=jax.ShapeDtypeStruct((b_pad, wlp), jnp.float32),
        grid=(b_pad // bt,),
        in_specs=[
            pl.BlockSpec((bt, latent_dims), lambda i: (i, 0)),   # z batch tile
            w_spec((latent_dims, n1p)),                          # resident weights
            w_spec((1, n1p)),
            w_spec((n1p, n2p)),
            w_spec((1, n2p)),
            w_spec((n2p, wlp)),
            w_spec((1, wlp)),
        ],
        out_specs=pl.BlockSpec((bt, wlp), lambda i: (i, 0)),     # lane-dense output
        compiler_params=pltpu.CompilerParams(
            dimension_semantics=("parallel",),
            vmem_limit_bytes=VMEM_LIMIT_BYTES),
    )


def decoder_forward(fused, z):
    B, latent_dims = z.shape
    n1p = fused["w1"].shape[1]
    n2p = fused["w_ct1"].shape[1]
    wlp = fused["w_comb"].shape[1]
    wl = fused["window_length"]

    bt, b_pad = _choose_batch_tile(B)
    if b_pad != B:
        z = jnp.pad(z, ((0, b_pad - B), (0, 0)))

    args = (z, fused["w1"], fused["b1"], fused["w_ct1"], fused["b_ct1"],
            fused["w_comb"], fused["b_comb"])
    try:
        out = _build_decoder_call(bt, b_pad, latent_dims, n1p, n2p, wlp, True)(*args)
        out = jax.block_until_ready(out)
    except Exception:
        # pipeline_mode=pl.Buffered(1) not supported -> fall back to default buffering
        out = _build_decoder_call(bt, b_pad, latent_dims, n1p, n2p, wlp, False)(*args)

    return out[:B, :wl].reshape(B, 1, wl)


# ------------------------------ pure-JAX reference -----------------------------
def _convt1d_ref(x, w, b, stride):
    Bsz, Cin, L = x.shape
    _, Cout, K = w.shape
    Lout = (L - 1) * stride + K
    out = jnp.zeros((Bsz, Cout, Lout), jnp.float32)
    for k in range(K):
        contrib = jnp.einsum("bci,co->boi", x, w[:, :, k])
        out = out.at[:, :, k: k + (L - 1) * stride + 1: stride].add(contrib)
    return out + b[None, :, None]


def decoder_ref(params, shapes, z):
    B = z.shape[0]
    h = jax.nn.relu(z @ params["fc1_w"] + params["fc1_b"])
    x = h.reshape(B, 32, shapes["l0"])
    y = jax.nn.relu(_convt1d_ref(x, params["ct1_w"], params["ct1_b"], STRIDE))
    y2 = _convt1d_ref(y, params["ct2_w"], params["ct2_b"], STRIDE)
    return y2 @ params["fc2_w"] + params["fc2_b"]


# ------------------------------------ main -------------------------------------
if __name__ == "__main__":
    latent_dims = 32
    window_length = 128
    kernel_size = 3
    batch = 2

    key = jax.random.PRNGKey(0)
    k_params, k_z = jax.random.split(key)
    params, shapes = init_decoder_params(k_params, latent_dims, window_length, kernel_size)
    fused = prepare_fused_params(params, shapes)
    z = jax.random.normal(k_z, (batch, latent_dims), jnp.float32)

    out = jax.block_until_ready(decoder_forward(fused, z))
    ref = jax.block_until_ready(decoder_ref(params, shapes, z))

    assert out.shape == (batch, 1, window_length), out.shape
    np.testing.assert_allclose(np.asarray(out), np.asarray(ref), rtol=2e-2, atol=2e-2)

    print("KERNEL_OK")
</pallas_src>

<mosaic_0001>
module attributes {stable_mosaic.version = 11 : i64} {
  func.func @_decoder_fused_kernel(%arg0: i32, %arg1: memref<8x32xf32, #tpu.memory_space<vmem>>, %arg2: memref<32x768xbf16, #tpu.memory_space<vmem>>, %arg3: memref<1x768xf32, #tpu.memory_space<vmem>>, %arg4: memref<768x1024xbf16, #tpu.memory_space<vmem>>, %arg5: memref<1x1024xf32, #tpu.memory_space<vmem>>, %arg6: memref<1024x128xbf16, #tpu.memory_space<vmem>>, %arg7: memref<1x128xf32, #tpu.memory_space<vmem>>, %arg8: memref<8x128xf32, #tpu.memory_space<vmem>>) attributes {dimension_semantics = [#tpu.dimension_semantics<parallel>], iteration_bounds = array<i64: 1>, scalar_prefetch = 0 : i64, scratch_operands = 0 : i64, tpu.core_type = #tpu.core_type<tc>, window_params = [{transform_indices = @transform_0, window_bounds = array<i64: 8, 32>}, {pipeline_mode = #tpu.pipeline_mode<synchronous>, transform_indices = @transform_1, window_bounds = array<i64: 32, 768>}, {pipeline_mode = #tpu.pipeline_mode<synchronous>, transform_indices = @transform_2, window_bounds = array<i64: 1, 768>}, {pipeline_mode = #tpu.pipeline_mode<synchronous>, transform_indices = @transform_3, window_bounds = array<i64: 768, 1024>}, {pipeline_mode = #tpu.pipeline_mode<synchronous>, transform_indices = @transform_4, window_bounds = array<i64: 1, 1024>}, {pipeline_mode = #tpu.pipeline_mode<synchronous>, transform_indices = @transform_5, window_bounds = array<i64: 1024, 128>}, {pipeline_mode = #tpu.pipeline_mode<synchronous>, transform_indices = @transform_6, window_bounds = array<i64: 1, 128>}, {transform_indices = @transform_7, window_bounds = array<i64: 8, 128>}]} {
    %c0 = arith.constant 0 : index
    %c0_0 = arith.constant 0 : index
    %0 = vector.load %arg1[%c0, %c0_0] : memref<8x32xf32, #tpu.memory_space<vmem>>, vector<8x32xf32>
    %1 = arith.truncf %0 : vector<8x32xf32> to vector<8x32xbf16>
    %c0_1 = arith.constant 0 : index
    %c0_2 = arith.constant 0 : index
    %2 = vector.load %arg2[%c0_1, %c0_2] : memref<32x768xbf16, #tpu.memory_space<vmem>>, vector<32x768xbf16>
    %cst = arith.constant dense<0.000000e+00> : vector<8x768xf32>
    %3 = tpu.matmul %1, %2, %cst {dimension_numbers = #tpu.dot_dimension_numbers<[1], [0], [0], [1], [0, 0, 1, 1], [], []>} : vector<8x32xbf16>, vector<32x768xbf16>, vector<8x768xf32> -> vector<8x768xf32>
    %c0_3 = arith.constant 0 : index
    %c0_4 = arith.constant 0 : index
    %4 = vector.load %arg3[%c0_3, %c0_4] : memref<1x768xf32, #tpu.memory_space<vmem>>, vector<1x768xf32>
    %5 = vector.broadcast %4 : vector<1x768xf32> to vector<8x768xf32>
    %6 = arith.addf %3, %5 : vector<8x768xf32>
    %cst_5 = arith.constant 0.000000e+00 : f32
    %7 = vector.broadcast %cst_5 : f32 to vector<8x768xf32>
    %8 = arith.maximumf %6, %7 : vector<8x768xf32>
    %9 = arith.truncf %8 : vector<8x768xf32> to vector<8x768xbf16>
    %c0_6 = arith.constant 0 : index
    %c0_7 = arith.constant 0 : index
    %10 = vector.load %arg4[%c0_6, %c0_7] : memref<768x1024xbf16, #tpu.memory_space<vmem>>, vector<768x1024xbf16>
    %cst_8 = arith.constant dense<0.000000e+00> : vector<8x1024xf32>
    %11 = tpu.matmul %9, %10, %cst_8 {dimension_numbers = #tpu.dot_dimension_numbers<[1], [0], [0], [1], [0, 0, 1, 1], [], []>} : vector<8x768xbf16>, vector<768x1024xbf16>, vector<8x1024xf32> -> vector<8x1024xf32>
    %c0_9 = arith.constant 0 : index
    %c0_10 = arith.constant 0 : index
    %12 = vector.load %arg5[%c0_9, %c0_10] : memref<1x1024xf32, #tpu.memory_space<vmem>>, vector<1x1024xf32>
    %13 = vector.broadcast %12 : vector<1x1024xf32> to vector<8x1024xf32>
    %14 = arith.addf %11, %13 : vector<8x1024xf32>
    %cst_11 = arith.constant 0.000000e+00 : f32
    %15 = vector.broadcast %cst_11 : f32 to vector<8x1024xf32>
    %16 = arith.maximumf %14, %15 : vector<8x1024xf32>
    %17 = arith.truncf %16 : vector<8x1024xf32> to vector<8x1024xbf16>
    %c0_12 = arith.constant 0 : index
    %c0_13 = arith.constant 0 : index
    %18 = vector.load %arg6[%c0_12, %c0_13] : memref<1024x128xbf16, #tpu.memory_space<vmem>>, vector<1024x128xbf16>
    %cst_14 = arith.constant dense<0.000000e+00> : vector<8x128xf32>
    %19 = tpu.matmul %17, %18, %cst_14 {dimension_numbers = #tpu.dot_dimension_numbers<[1], [0], [0], [1], [0, 0, 1, 1], [], []>} : vector<8x1024xbf16>, vector<1024x128xbf16>, vector<8x128xf32> -> vector<8x128xf32>
    %c0_15 = arith.constant 0 : index
    %c0_16 = arith.constant 0 : index
    %20 = vector.load %arg7[%c0_15, %c0_16] : memref<1x128xf32, #tpu.memory_space<vmem>>, vector<1x128xf32>
    %21 = vector.broadcast %20 : vector<1x128xf32> to vector<8x128xf32>
    %22 = arith.addf %19, %21 : vector<8x128xf32>
    %c0_17 = arith.constant 0 : index
    %c0_18 = arith.constant 0 : index
    %23 = vector.load %arg8[%c0_17, %c0_18] : memref<8x128xf32, #tpu.memory_space<vmem>>, vector<8x128xf32>
    tpu.vector_store %arg8[%c0_17, %c0_18], %22 {strides = array<i32>} : memref<8x128xf32, #tpu.memory_space<vmem>>, vector<8x128xf32>,
    return
  }
  func.func @transform_0(%arg0: i32) -> (i32, i32) {
    %c0_i32 = arith.constant 0 : i32
    %c0_i32_0 = arith.constant 0 : i32
    return %arg0, %c0_i32 : i32, i32
  }
  func.func @transform_1(%arg0: i32) -> (i32, i32) {
    %c0_i32 = arith.constant 0 : i32
    %c0_i32_0 = arith.constant 0 : i32
    %c0_i32_1 = arith.constant 0 : i32
    return %c0_i32, %c0_i32_0 : i32, i32
  }
  func.func @transform_2(%arg0: i32) -> (i32, i32) {
    %c0_i32 = arith.constant 0 : i32
    %c0_i32_0 = arith.constant 0 : i32
    %c0_i32_1 = arith.constant 0 : i32
    return %c0_i32, %c0_i32_0 : i32, i32
  }
  func.func @transform_3(%arg0: i32) -> (i32, i32) {
    %c0_i32 = arith.constant 0 : i32
    %c0_i32_0 = arith.constant 0 : i32
    %c0_i32_1 = arith.constant 0 : i32
    return %c0_i32, %c0_i32_0 : i32, i32
  }
  func.func @transform_4(%arg0: i32) -> (i32, i32) {
    %c0_i32 = arith.constant 0 : i32
    %c0_i32_0 = arith.constant 0 : i32
    %c0_i32_1 = arith.constant 0 : i32
    return %c0_i32, %c0_i32_0 : i32, i32
  }
  func.func @transform_5(%arg0: i32) -> (i32, i32) {
    %c0_i32 = arith.constant 0 : i32
    %c0_i32_0 = arith.constant 0 : i32
    %c0_i32_1 = arith.constant 0 : i32
    return %c0_i32, %c0_i32_0 : i32, i32
  }
  func.func @transform_6(%arg0: i32) -> (i32, i32) {
    %c0_i32 = arith.constant 0 : i32
    %c0_i32_0 = arith.constant 0 : i32
    %c0_i32_1 = arith.constant 0 : i32
    return %c0_i32, %c0_i32_0 : i32, i32
  }
  func.func @transform_7(%arg0: i32) -> (i32, i32) {
    %c0_i32 = arith.constant 0 : i32
    %c0_i32_0 = arith.constant 0 : i32
    return %arg0, %c0_i32 : i32, i32
  }
}

module attributes {stable_mosaic.version = 11 : i64} {
  func.func @_decoder_fused_kernel(%arg0: i32, %arg1: memref<8x32xf32, #tpu.memory_space<vmem>>, %arg2: memref<32x768xbf16, #tpu.memory_space<vmem>>, %arg3: memref<1x768xf32, #tpu.memory_space<vmem>>, %arg4: memref<768x1024xbf16, #tpu.memory_space<vmem>>, %arg5: memref<1x1024xf32, #tpu.memory_space<vmem>>, %arg6: memref<1024x128xbf16, #tpu.memory_space<vmem>>, %arg7: memref<1x128xf32, #tpu.memory_space<vmem>>, %arg8: memref<8x128xf32, #tpu.memory_space<vmem>>) attributes {dimension_semantics = [#tpu.dimension_semantics<parallel>], iteration_bounds = array<i64: 1>, scalar_prefetch = 0 : i64, scratch_operands = 0 : i64, tpu.core_type = #tpu.core_type<tc>, window_params = [{transform_indices = @transform_0, window_bounds = array<i64: 8, 32>}, {pipeline_mode = #tpu.pipeline_mode<synchronous>, transform_indices = @transform_1, window_bounds = array<i64: 32, 768>}, {pipeline_mode = #tpu.pipeline_mode<synchronous>, transform_indices = @transform_2, window_bounds = array<i64: 1, 768>}, {pipeline_mode = #tpu.pipeline_mode<synchronous>, transform_indices = @transform_3, window_bounds = array<i64: 768, 1024>}, {pipeline_mode = #tpu.pipeline_mode<synchronous>, transform_indices = @transform_4, window_bounds = array<i64: 1, 1024>}, {pipeline_mode = #tpu.pipeline_mode<synchronous>, transform_indices = @transform_5, window_bounds = array<i64: 1024, 128>}, {pipeline_mode = #tpu.pipeline_mode<synchronous>, transform_indices = @transform_6, window_bounds = array<i64: 1, 128>}, {transform_indices = @transform_7, window_bounds = array<i64: 8, 128>}]} {
    %c0 = arith.constant 0 : index
    %c0_0 = arith.constant 0 : index
    %0 = vector.load %arg1[%c0, %c0_0] : memref<8x32xf32, #tpu.memory_space<vmem>>, vector<8x32xf32>
    %1 = arith.truncf %0 : vector<8x32xf32> to vector<8x32xbf16>
    %c0_1 = arith.constant 0 : index
    %c0_2 = arith.constant 0 : index
    %2 = vector.load %arg2[%c0_1, %c0_2] : memref<32x768xbf16, #tpu.memory_space<vmem>>, vector<32x768xbf16>
    %cst = arith.constant dense<0.000000e+00> : vector<8x768xf32>
    %3 = tpu.matmul %1, %2, %cst {dimension_numbers = #tpu.dot_dimension_numbers<[1], [0], [0], [1], [0, 0, 1, 1], [], []>} : vector<8x32xbf16>, vector<32x768xbf16>, vector<8x768xf32> -> vector<8x768xf32>
    %c0_3 = arith.constant 0 : index
    %c0_4 = arith.constant 0 : index
    %4 = vector.load %arg3[%c0_3, %c0_4] : memref<1x768xf32, #tpu.memory_space<vmem>>, vector<1x768xf32>
    %5 = vector.broadcast %4 : vector<1x768xf32> to vector<8x768xf32>
    %6 = arith.addf %3, %5 : vector<8x768xf32>
    %cst_5 = arith.constant 0.000000e+00 : f32
    %7 = vector.broadcast %cst_5 : f32 to vector<8x768xf32>
    %8 = arith.maximumf %6, %7 : vector<8x768xf32>
    %9 = arith.truncf %8 : vector<8x768xf32> to vector<8x768xbf16>
    %c0_6 = arith.constant 0 : index
    %c0_7 = arith.constant 0 : index
    %10 = vector.load %arg4[%c0_6, %c0_7] : memref<768x1024xbf16, #tpu.memory_space<vmem>>, vector<768x1024xbf16>
    %cst_8 = arith.constant dense<0.000000e+00> : vector<8x1024xf32>
    %11 = tpu.matmul %9, %10, %cst_8 {dimension_numbers = #tpu.dot_dimension_numbers<[1], [0], [0], [1], [0, 0, 1, 1], [], []>} : vector<8x768xbf16>, vector<768x1024xbf16>, vector<8x1024xf32> -> vector<8x1024xf32>
    %c0_9 = arith.constant 0 : index
    %c0_10 = arith.constant 0 : index
    %12 = vector.load %arg5[%c0_9, %c0_10] : memref<1x1024xf32, #tpu.memory_space<vmem>>, vector<1x1024xf32>
    %13 = vector.broadcast %12 : vector<1x1024xf32> to vector<8x1024xf32>
    %14 = arith.addf %11, %13 : vector<8x1024xf32>
    %cst_11 = arith.constant 0.000000e+00 : f32
    %15 = vector.broadcast %cst_11 : f32 to vector<8x1024xf32>
    %16 = arith.maximumf %14, %15 : vector<8x1024xf32>
    %17 = arith.truncf %16 : vector<8x1024xf32> to vector<8x1024xbf16>
    %c0_12 = arith.constant 0 : index
    %c0_13 = arith.constant 0 : index
    %18 = vector.load %arg6[%c0_12, %c0_13] : memref<1024x128xbf16, #tpu.memory_space<vmem>>, vector<1024x128xbf16>
    %cst_14 = arith.constant dense<0.000000e+00> : vector<8x128xf32>
    %19 = tpu.matmul %17, %18, %cst_14 {dimension_numbers = #tpu.dot_dimension_numbers<[1], [0], [0], [1], [0, 0, 1, 1], [], []>} : vector<8x1024xbf16>, vector<1024x128xbf16>, vector<8x128xf32> -> vector<8x128xf32>
    %c0_15 = arith.constant 0 : index
    %c0_16 = arith.constant 0 : index
    %20 = vector.load %arg7[%c0_15, %c0_16] : memref<1x128xf32, #tpu.memory_space<vmem>>, vector<1x128xf32>
    %21 = vector.broadcast %20 : vector<1x128xf32> to vector<8x128xf32>
    %22 = arith.addf %19, %21 : vector<8x128xf32>
    %c0_17 = arith.constant 0 : index
    %c0_18 = arith.constant 0 : index
    %23 = vector.load %arg8[%c0_17, %c0_18] : memref<8x128xf32, #tpu.memory_space<vmem>>, vector<8x128xf32>
    tpu.vector_store %arg8[%c0_17, %c0_18], %22 {strides = array<i32>} : memref<8x128xf32, #tpu.memory_space<vmem>>, vector<8x128xf32>,
    return
  }
  func.func @transform_0(%arg0: i32) -> (i32, i32) {
    %c0_i32 = arith.constant 0 : i32
    %c0_i32_0 = arith.constant 0 : i32
    return %arg0, %c0_i32 : i32, i32
  }
  func.func @transform_1(%arg0: i32) -> (i32, i32) {
    %c0_i32 = arith.constant 0 : i32
    %c0_i32_0 = arith.constant 0 : i32
    %c0_i32_1 = arith.constant 0 : i32
    return %c0_i32, %c0_i32_0 : i32, i32
  }
  func.func @transform_2(%arg0: i32) -> (i32, i32) {
    %c0_i32 = arith.constant 0 : i32
    %c0_i32_0 = arith.constant 0 : i32
    %c0_i32_1 = arith.constant 0 : i32
    return %c0_i32, %c0_i32_0 : i32, i32
  }
  func.func @transform_3(%arg0: i32) -> (i32, i32) {
    %c0_i32 = arith.constant 0 : i32
    %c0_i32_0 = arith.constant 0 : i32
    %c0_i32_1 = arith.constant 0 : i32
    return %c0_i32, %c0_i32_0 : i32, i32
  }
  func.func @transform_4(%arg0: i32) -> (i32, i32) {
    %c0_i32 = arith.constant 0 : i32
    %c0_i32_0 = arith.constant 0 : i32
    %c0_i32_1 = arith.constant 0 : i32
    return %c0_i32, %c0_i32_0 : i32, i32
  }
  func.func @transform_5(%arg0: i32) -> (i32, i32) {
    %c0_i32 = arith.constant 0 : i32
    %c0_i32_0 = arith.constant 0 : i32
    %c0_i32_1 = arith.constant 0 : i32
    return %c0_i32, %c0_i32_0 : i32, i32
  }
  func.func @transform_6(%arg0: i32) -> (i32, i32) {
    %c0_i32 = arith.constant 0 : i32
    %c0_i32_0 = arith.constant 0 : i32
    %c0_i32_1 = arith.constant 0 : i32
    return %c0_i32, %c0_i32_0 : i32, i32
  }
  func.func @transform_7(%arg0: i32) -> (i32, i32) {
    %c0_i32 = arith.constant 0 : i32
    %c0_i32_0 = arith.constant 0 : i32
    return %arg0, %c0_i32 : i32, i32
  }
}

</mosaic_0001>

<llo_original>
// kernel: tpu_custom_call.1
$region0: #{tpu_custom_call.1}
  #allocation0 [shape = 'u32[]', space=smem, size = 0x4, offset = 0x4, fixed_abs, tag = 'smem constant byte address 0x4 - core index']
  #allocation1 [shape = 'u32[144,128]{1,0:T(1,128)}', space=vmem, size = 0x12000, scoped, tag = 'internal scratch']
  %s0 = inlined_call_operand.hbm [shape: f32[8,32], index: 0, kind: input, shape index: {}]
  %s1 = inlined_call_operand.hbm [shape: bf16[32,768], index: 1, kind: input, shape index: {}]
  %s2 = inlined_call_operand.hbm [shape: f32[1,768], index: 2, kind: input, shape index: {}]
  %s3 = inlined_call_operand.hbm [shape: bf16[768,1024], index: 3, kind: input, shape index: {}]
  %s4 = inlined_call_operand.hbm [shape: f32[1,1024], index: 4, kind: input, shape index: {}]
  %s5 = inlined_call_operand.hbm [shape: bf16[1024,128], index: 5, kind: input, shape index: {}]
  %s6 = inlined_call_operand.hbm [shape: f32[1,128], index: 6, kind: input, shape index: {}]
  %s7 = inlined_call_operand.hbm [shape: f32[8,128], index: 7, kind: output, shape index: {}]
  %s8 = sld [smem:[#allocation0]]
  $region66: #{tpu_custom_call.1} parent=0
    _
  %s10 = ssub.s32 1, %s8
  %s11 = scalar_select 0, %s10, %s8
  $region1: #{tpu_custom_call.1} parent=0
    #allocation2 [shape = 'u8[4096]{0}', space=vmem, size = 0x1000, scoped, tag = 'input window, operand 0, single buffered']
    #allocation3 [shape = 's32[1]{0}', space=sflag, size = 0x4, scoped, tag = 'scoped memory for tpu_custom_call.1']
    #allocation4 [shape = 's32[1]{0}', space=sflag, size = 0x4, scoped, tag = 'scoped memory for tpu_custom_call.1']
    #allocation5 [shape = 'u8[49152]{0}', space=vmem, size = 0xc000, scoped, tag = 'input window, operand 1, single buffered']
    #allocation6 [shape = 's32[1]{0}', space=sflag, size = 0x4, scoped, tag = 'scoped memory for tpu_custom_call.1']
    #allocation7 [shape = 'u8[3072]{0}', space=vmem, size = 0xc00, scoped, tag = 'input window, operand 2, single buffered']
    #allocation8 [shape = 'u8[1572864]{0}', space=vmem, size = 0x180000, scoped, tag = 'input window, operand 3, single buffered']
    #allocation9 [shape = 's32[1]{0}', space=sflag, size = 0x4, scoped, tag = 'scoped memory for tpu_custom_call.1']
    #allocation10 [shape = 'u8[4096]{0}', space=vmem, size = 0x1000, scoped, tag = 'input window, operand 4, single buffered']
    #allocation11 [shape = 'u8[262144]{0}', space=vmem, size = 0x40000, scoped, tag = 'input window, operand 5, single buffered']
    #allocation12 [shape = 's32[1]{0}', space=sflag, size = 0x4, scoped, tag = 'scoped memory for tpu_custom_call.1']
    #allocation13 [shape = 'u8[512]{0}', space=vmem, size = 0x400, scoped, tag = 'input window, operand 6, single buffered']
    #allocation14 [shape = 'u8[4096]{0}', space=vmem, size = 0x1000, scoped, tag = 'output window, operand 0, single buffered']
    %12 = vsyncpa [#allocation3], 0
    %13 = vsyncpa [#allocation6], 0
    %14 = vsyncpa [#allocation9], 0
    %15 = vsyncpa [#allocation12], 0
    %16 = vsyncpa [#allocation4], 0
    // Predicated region
    $region2: #{tpu_custom_call.1} parent=1 // pred_check
      _
    $region3: #{tpu_custom_call.1} parent=1 // pred_check_branch
      %18 = sbr.rel (0) target = $region5
    $region4: #{tpu_custom_call.1} parent=1 // pred_region
      %s20 = ssub.s32 128, 128
      %21 = vsyncadd [#allocation3], %s20
      %s23 = sshll.u32 [#allocation2], 4
      %s24 = int_to_ptr.vmem [resolvable:$true] %s23
      %26 = dma.hbm_to_vmem [thread:$0]  %s0, 128, %s24, [#allocation3]
    $region5: #{tpu_custom_call.1} parent=1 // pred_fallthru
      _
    // Predicated region
    $region6: #{tpu_custom_call.1} parent=1 // pred_check
      _
    $region7: #{tpu_custom_call.1} parent=1 // pred_check_branch
      %28 = sbr.rel (0) target = $region9
    $region8: #{tpu_custom_call.1} parent=1 // pred_region
      %s30 = ssub.s32 1536, 1536
      %31 = vsyncadd [#allocation6], %s30
      %s32 = sshll.u32 [#allocation5], 4
      %s33 = int_to_ptr.vmem [resolvable:$true] %s32
      %38 = dma.hbm_to_vmem [thread:$0]  %s1, 1536, %s33, [#allocation6], 384, 384, 24
    $region9: #{tpu_custom_call.1} parent=1 // pred_fallthru
      _
    // Predicated region
    $region10: #{tpu_custom_call.1} parent=1 // pred_check
      _
    $region11: #{tpu_custom_call.1} parent=1 // pred_check_branch
      %40 = sbr.rel (0) target = $region13
    $region12: #{tpu_custom_call.1} parent=1 // pred_region
      %s42 = ssub.s32 96, 96
      %43 = vsyncadd [#allocation6], %s42
      %s45 = sshll.u32 [#allocation7], 4
      %s46 = int_to_ptr.vmem [resolvable:$true] %s45
      %48 = dma.hbm_to_vmem [thread:$0]  %s2, 96, %s46, [#allocation6]
    $region13: #{tpu_custom_call.1} parent=1 // pred_fallthru
      _
    // Predicated region
    $region14: #{tpu_custom_call.1} parent=1 // pred_check
      _
    $region15: #{tpu_custom_call.1} parent=1 // pred_check_branch
      %50 = sbr.rel (0) target = $region17
    $region16: #{tpu_custom_call.1} parent=1 // pred_region
      %s52 = ssub.s32 49152, 49152
      %53 = vsyncadd [#allocation9], %s52
      %s54 = sshll.u32 [#allocation8], 4
      %s55 = int_to_ptr.vmem [resolvable:$true] %s54
      %60 = dma.hbm_to_vmem [thread:$0]  %s3, 49152, %s55, [#allocation9], 512, 512, 32
    $region17: #{tpu_custom_call.1} parent=1 // pred_fallthru
      _
    // Predicated region
    $region18: #{tpu_custom_call.1} parent=1 // pred_check
      _
    $region19: #{tpu_custom_call.1} parent=1 // pred_check_branch
      %62 = sbr.rel (0) target = $region21
    $region20: #{tpu_custom_call.1} parent=1 // pred_region
      %s64 = ssub.s32 128, 128
      %65 = vsyncadd [#allocation9], %s64
      %s67 = sshll.u32 [#allocation10], 4
      %s68 = int_to_ptr.vmem [resolvable:$true] %s67
      %70 = dma.hbm_to_vmem [thread:$0]  %s4, 128, %s68, [#allocation9]
    $region21: #{tpu_custom_call.1} parent=1 // pred_fallthru
      _
    // Predicated region
    $region22: #{tpu_custom_call.1} parent=1 // pred_check
      _
    $region23: #{tpu_custom_call.1} parent=1 // pred_check_branch
      %72 = sbr.rel (0) target = $region25
    $region24: #{tpu_custom_call.1} parent=1 // pred_region
      %s74 = ssub.s32 8192, 8192
      %75 = vsyncadd [#allocation12], %s74
      %s76 = sshll.u32 [#allocation11], 4
      %s77 = int_to_ptr.vmem [resolvable:$true] %s76
      %82 = dma.hbm_to_vmem [thread:$0]  %s5, 8192, %s77, [#allocation12], 64, 64, 4
    $region25: #{tpu_custom_call.1} parent=1 // pred_fallthru
      _
    // Predicated region
    $region26: #{tpu_custom_call.1} parent=1 // pred_check
      _
    $region27: #{tpu_custom_call.1} parent=1 // pred_check_branch
      %84 = sbr.rel (0) target = $region29
    $region28: #{tpu_custom_call.1} parent=1 // pred_region
      %s86 = ssub.s32 16, 16
      %87 = vsyncadd [#allocation12], %s86
      %s89 = sshll.u32 [#allocation13], 4
      %s90 = int_to_ptr.vmem [resolvable:$true] %s89
      %92 = dma.hbm_to_vmem [thread:$0]  %s6, 16, %s90, [#allocation12]
    $region29: #{tpu_custom_call.1} parent=1 // pred_fallthru
      _
    // Predicated region
    $region30: #{tpu_custom_call.1} parent=1 // pred_check
      _
    $region31: #{tpu_custom_call.1} parent=1 // pred_check_branch
      %94 = sbr.rel (0) target = $region33
    $region32: #{tpu_custom_call.1} parent=1 // pred_region
      %95 = dma.done [#allocation3], 128
    $region33: #{tpu_custom_call.1} parent=1 // pred_fallthru
      _
    // Predicated region
    $region34: #{tpu_custom_call.1} parent=1 // pred_check
      _
    $region35: #{tpu_custom_call.1} parent=1 // pred_check_branch
      %97 = sbr.rel (0) target = $region37
    $region36: #{tpu_custom_call.1} parent=1 // pred_region
      %98 = dma.done [#allocation6], 1536
    $region37: #{tpu_custom_call.1} parent=1 // pred_fallthru
      _
    // Predicated region
    $region38: #{tpu_custom_call.1} parent=1 // pred_check
      _
    $region39: #{tpu_custom_call.1} parent=1 // pred_check_branch
      %100 = sbr.rel (0) target = $region41
    $region40: #{tpu_custom_call.1} parent=1 // pred_region
      %101 = dma.done [#allocation6], 96
    $region41: #{tpu_custom_call.1} parent=1 // pred_fallthru
      _
    // Predicated region
    $region42: #{tpu_custom_call.1} parent=1 // pred_check
      _
    $region43: #{tpu_custom_call.1} parent=1 // pred_check_branch
      %103 = sbr.rel (0) target = $region45
    $region44: #{tpu_custom_call.1} parent=1 // pred_region
      %104 = dma.done [#allocation9], 49152
    $region45: #{tpu_custom_call.1} parent=1 // pred_fallthru
      _
    // Predicated region
    $region46: #{tpu_custom_call.1} parent=1 // pred_check
      _
    $region47: #{tpu_custom_call.1} parent=1 // pred_check_branch
      %106 = sbr.rel (0) target = $region49
    $region48: #{tpu_custom_call.1} parent=1 // pred_region
      %107 = dma.done [#allocation9], 128
    $region49: #{tpu_custom_call.1} parent=1 // pred_fallthru
      _
    // Predicated region
    $region50: #{tpu_custom_call.1} parent=1 // pred_check
      _
    $region51: #{tpu_custom_call.1} parent=1 // pred_check_branch
      %109 = sbr.rel (0) target = $region53
    $region52: #{tpu_custom_call.1} parent=1 // pred_region
      %110 = dma.done [#allocation12], 8192
    $region53: #{tpu_custom_call.1} parent=1 // pred_fallthru
      _
    // Predicated region
    $region54: #{tpu_custom_call.1} parent=1 // pred_check
      _
    $region55: #{tpu_custom_call.1} parent=1 // pred_check_branch
      %112 = sbr.rel (0) target = $region57
    $region56: #{tpu_custom_call.1} parent=1 // pred_region
      %113 = dma.done [#allocation12], 16
    $region57: #{tpu_custom_call.1} parent=1 // pred_fallthru
      _
    %v115 = vld [vmem:[#allocation2] sm:$0xff]
    %v116 = vpack.c.bf16 %v115, %v115
    %v117 = vld [vmem:[#allocation5] sm:$0xff]
    %v118 = vld [vmem:[#allocation5 + $0x8] sm:$0xff]
    %v119 = vld [vmem:[#allocation5 + $0x10] sm:$0xff]
    %v120 = vld [vmem:[#allocation5 + $0x18] sm:$0xff]
    %v121 = vld [vmem:[#allocation5 + $0x20] sm:$0xff]
    %v122 = vld [vmem:[#allocation5 + $0x28] sm:$0xff]
    %v123 = vld [vmem:[#allocation5 + $0x30] sm:$0xff]
    %v124 = vld [vmem:[#allocation5 + $0x38] sm:$0xff]
    %v125 = vld [vmem:[#allocation5 + $0x40] sm:$0xff]
    %v126 = vld [vmem:[#allocation5 + $0x48] sm:$0xff]
    %v127 = vld [vmem:[#allocation5 + $0x50] sm:$0xff]
    %v128 = vld [vmem:[#allocation5 + $0x58] sm:$0xff]
    %v129 = vld [vmem:[#allocation7] sm:$0x3f]
    %v131 = vlaneseq
    %v132 = vshrl.u32 %v131, 7
    %v133 = vsub.s32 0, %v132
    %v134 = vrot.slane %v129, %v133
    %v135 = vlaneseq
    %v136 = vshrl.u32 %v135, 7
    %v137 = vsub.s32 1, %v136
    %v138 = vrot.slane %v129, %v137
    %v139 = vlaneseq
    %v140 = vshrl.u32 %v139, 7
    %v141 = vsub.s32 2, %v140
    %v142 = vrot.slane %v129, %v141
    %v143 = vlaneseq
    %v144 = vshrl.u32 %v143, 7
    %v145 = vsub.s32 3, %v144
    %v146 = vrot.slane %v129, %v145
    %v147 = vlaneseq
    %v148 = vshrl.u32 %v147, 7
    %v149 = vsub.s32 4, %v148
    %v150 = vrot.slane %v129, %v149
    %v151 = vlaneseq
    %v152 = vshrl.u32 %v151, 7
    %v153 = vsub.s32 5, %v152
    %v154 = vrot.slane %v129, %v153
    %v173 = vunpack.c.l.b16 %v117
    %v174 = vunpack.c.h.b16 %v117
    %v175 = vunpack.c.l.b16 %v118
    %v176 = vunpack.c.h.b16 %v118
    %v177 = vunpack.c.l.b16 %v119
    %v178 = vunpack.c.h.b16 %v119
    %v179 = vunpack.c.l.b16 %v120
    %v180 = vunpack.c.h.b16 %v120
    %v181 = vunpack.c.l.b16 %v121
    %v182 = vunpack.c.h.b16 %v121
    %v183 = vunpack.c.l.b16 %v122
    %v184 = vunpack.c.h.b16 %v122
    %v185 = vunpack.c.l.b16 %v123
    %v186 = vunpack.c.h.b16 %v123
    %v187 = vunpack.c.l.b16 %v124
    %v188 = vunpack.c.h.b16 %v124
    %v189 = vunpack.c.l.b16 %v125
    %v190 = vunpack.c.h.b16 %v125
    %v191 = vunpack.c.l.b16 %v126
    %v192 = vunpack.c.h.b16 %v126
    %v193 = vunpack.c.l.b16 %v127
    %v194 = vunpack.c.h.b16 %v127
    %v195 = vunpack.c.l.b16 %v128
    %v196 = vunpack.c.h.b16 %v128
    %v197 = vpack.c.b16 %v179, %v173
    %v198 = vpack.c.b16 %v180, %v174
    %v199 = vpack.c.b16 %v181, %v175
    %v200 = vpack.c.b16 %v182, %v176
    %v201 = vpack.c.b16 %v183, %v177
    %v202 = vpack.c.b16 %v184, %v178
    %v203 = vpack.c.b16 %v191, %v185
    %v204 = vpack.c.b16 %v192, %v186
    %v205 = vpack.c.b16 %v193, %v187
    %v206 = vpack.c.b16 %v194, %v188
    %v207 = vpack.c.b16 %v195, %v189
    %v208 = vpack.c.b16 %v196, %v190
    %vm221 = vcmask 261120
    %v223 = vsel %vm221, %v116, 0
    %225 = vmatprep.subr.bf16.mxu0 %v198
    %226 = vmatpush1.bf16.msra.mxu0 %v197
    %227 = vmatprep.subr.bf16.mxu0 %v204
    %228 = vmatpush1.bf16.msra.mxu0 %v203
    %229 = vmatprep.subr.bf16.mxu0 0
    %230 = vmatpush1.bf16.msra.mxu0 0
    %231 = vmatprep.subr.bf16.mxu0 0
    %232 = vmatpush1.bf16.msra.mxu0 0
    %233 = vmatprep.subr.bf16.mxu0 0
    %234 = vmatpush1.bf16.msra.mxu0 0
    %235 = vmatprep.subr.bf16.mxu0 0
    %236 = vmatpush1.bf16.msra.mxu0 0
    %237 = vmatprep.subr.bf16.mxu0 0
    %238 = vmatpush1.bf16.msra.mxu0 0
    %239 = vmatprep.subr.bf16.mxu0 0
    %240 = vmatpush1.bf16.msra.mxu0 0
    %241 = vmatprep.subr.bf16.mxu0 0
    %242 = vmatpush1.bf16.msra.mxu0 0
    %243 = vmatprep.subr.bf16.mxu0 0
    %244 = vmatpush1.bf16.msra.mxu0 0
    %245 = vmatprep.subr.bf16.mxu0 0
    %246 = vmatpush1.bf16.msra.mxu0 0
    %247 = vmatprep.subr.bf16.mxu0 0
    %248 = vmatpush1.bf16.msra.mxu0 0
    %249 = vmatprep.subr.bf16.mxu0 0
    %250 = vmatpush1.bf16.msra.mxu0 0
    %251 = vmatprep.subr.bf16.mxu0 0
    %252 = vmatpush1.bf16.msra.mxu0 0
    %253 = vmatprep.subr.bf16.mxu0 0
    %254 = vmatpush1.bf16.msra.mxu0 0
    %255 = vmatprep.subr.bf16.mxu0 0
    %256 = vmatpush1.bf16.msra.mxu0 0
    %257 = vmatprep.mubr.bf16.mxu0 0
    %258 = vmatmul.mubr.bf16.gmra.mrb[0].mxu0 %v223
    %v259 = vpop.f32.mrb[0].mxu0
    %v260 = vadd.f32 %v134, %v259
    %v261 = vpop.f32.mrb[0].mxu0
    %v262 = vadd.f32 %v138, %v261
    %v263 = vpop.f32.mrb[0].mxu0
    %v264 = vpop.f32.mrb[0].mxu0
    %265 = vdwg.mxu0
    %266 = vmatprep.subr.bf16.mxu0 %v200
    %267 = vmatpush1.bf16.msra.mxu0 %v199
    %268 = vmatprep.subr.bf16.mxu0 %v206
    %269 = vmatpush1.bf16.msra.mxu0 %v205
    %270 = vmatprep.subr.bf16.mxu0 0
    %271 = vmatpush1.bf16.msra.mxu0 0
    %272 = vmatprep.subr.bf16.mxu0 0
    %273 = vmatpush1.bf16.msra.mxu0 0
    %274 = vmatprep.subr.bf16.mxu0 0
    %275 = vmatpush1.bf16.msra.mxu0 0
    %276 = vmatprep.subr.bf16.mxu0 0
    %277 = vmatpush1.bf16.msra.mxu0 0
    %278 = vmatprep.subr.bf16.mxu0 0
    %279 = vmatpush1.bf16.msra.mxu0 0
    %280 = vmatprep.subr.bf16.mxu0 0
    %281 = vmatpush1.bf16.msra.mxu0 0
    %282 = vmatprep.subr.bf16.mxu0 0
    %283 = vmatpush1.bf16.msra.mxu0 0
    %284 = vmatprep.subr.bf16.mxu0 0
    %285 = vmatpush1.bf16.msra.mxu0 0
    %286 = vmatprep.subr.bf16.mxu0 0
    %287 = vmatpush1.bf16.msra.mxu0 0
    %288 = vmatprep.subr.bf16.mxu0 0
    %289 = vmatpush1.bf16.msra.mxu0 0
    %290 = vmatprep.subr.bf16.mxu0 0
    %291 = vmatpush1.bf16.msra.mxu0 0
    %292 = vmatprep.subr.bf16.mxu0 0
    %293 = vmatpush1.bf16.msra.mxu0 0
    %294 = vmatprep.subr.bf16.mxu0 0
    %295 = vmatpush1.bf16.msra.mxu0 0
    %296 = vmatprep.subr.bf16.mxu0 0
    %297 = vmatpush1.bf16.msra.mxu0 0
    %298 = vmatprep.mubr.bf16.mxu0 0
    %299 = vmatmul.mubr.bf16.gmra.mrb[0].mxu0 %v223
    %v300 = vpop.f32.mrb[0].mxu0
    %v301 = vadd.f32 %v142, %v300
    %v302 = vpop.f32.mrb[0].mxu0
    %v303 = vadd.f32 %v146, %v302
    %v304 = vpop.f32.mrb[0].mxu0
    %v305 = vpop.f32.mrb[0].mxu0
    %306 = vdwg.mxu0
    %307 = vmatprep.subr.bf16.mxu0 %v202
    %308 = vmatpush1.bf16.msra.mxu0 %v201
    %309 = vmatprep.subr.bf16.mxu0 %v208
    %310 = vmatpush1.bf16.msra.mxu0 %v207
    %311 = vmatprep.subr.bf16.mxu0 0
    %312 = vmatpush1.bf16.msra.mxu0 0
    %313 = vmatprep.subr.bf16.mxu0 0
    %314 = vmatpush1.bf16.msra.mxu0 0
    %315 = vmatprep.subr.bf16.mxu0 0
    %316 = vmatpush1.bf16.msra.mxu0 0
    %317 = vmatprep.subr.bf16.mxu0 0
    %318 = vmatpush1.bf16.msra.mxu0 0
    %319 = vmatprep.subr.bf16.mxu0 0
    %320 = vmatpush1.bf16.msra.mxu0 0
    %321 = vmatprep.subr.bf16.mxu0 0
    %322 = vmatpush1.bf16.msra.mxu0 0
    %323 = vmatprep.subr.bf16.mxu0 0
    %324 = vmatpush1.bf16.msra.mxu0 0
    %325 = vmatprep.subr.bf16.mxu0 0
    %326 = vmatpush1.bf16.msra.mxu0 0
    %327 = vmatprep.subr.bf16.mxu0 0
    %328 = vmatpush1.bf16.msra.mxu0 0
    %329 = vmatprep.subr.bf16.mxu0 0
    %330 = vmatpush1.bf16.msra.mxu0 0
    %331 = vmatprep.subr.bf16.mxu0 0
    %332 = vmatpush1.bf16.msra.mxu0 0
    %333 = vmatprep.subr.bf16.mxu0 0
    %334 = vmatpush1.bf16.msra.mxu0 0
    %335 = vmatprep.subr.bf16.mxu0 0
    %336 = vmatpush1.bf16.msra.mxu0 0
    %337 = vmatprep.subr.bf16.mxu0 0
    %338 = vmatpush1.bf16.msra.mxu0 0
    %339 = vmatprep.mubr.bf16.mxu0 0
    %340 = vmatmul.mubr.bf16.gmra.mrb[0].mxu0 %v223
    %v341 = vpop.f32.mrb[0].mxu0
    %v342 = vadd.f32 %v150, %v341
    %v343 = vpop.f32.mrb[0].mxu0
    %v344 = vadd.f32 %v154, %v343
    %v345 = vpop.f32.mrb[0].mxu0
    %v346 = vpop.f32.mrb[0].mxu0
    %347 = vdwg.mxu0
    %v348 = vmax.f32 %v260, 0.0
    %v349 = vmax.f32 %v262, 0.0
    %v350 = vmax.f32 %v301, 0.0
    %v351 = vmax.f32 %v303, 0.0
    %v352 = vmax.f32 %v342, 0.0
    %v353 = vmax.f32 %v344, 0.0
    %v354 = vpack.c.bf16 %v348, %v348
    %v355 = vpack.c.bf16 %v349, %v349
    %v356 = vpack.c.bf16 %v350, %v350
    %v357 = vpack.c.bf16 %v351, %v351
    %v358 = vpack.c.bf16 %v352, %v352
    %v359 = vpack.c.bf16 %v353, %v353
    %v360 = vld [vmem:[#allocation8] sm:$0xff]
    %v361 = vld [vmem:[#allocation8 + $0x8] sm:$0xff]
    %v362 = vld [vmem:[#allocation8 + $0x10] sm:$0xff]
    %v363 = vld [vmem:[#allocation8 + $0x18] sm:$0xff]
    %v364 = vld [vmem:[#allocation8 + $0x20] sm:$0xff]
    %v365 = vld [vmem:[#allocation8 + $0x28] sm:$0xff]
    %v366 = vld [vmem:[#allocation8 + $0x30] sm:$0xff]
    %v367 = vld [vmem:[#allocation8 + $0x38] sm:$0xff]
    %v368 = vld [vmem:[#allocation8 + $0x40] sm:$0xff]
    %v369 = vld [vmem:[#allocation8 + $0x48] sm:$0xff]
    %v370 = vld [vmem:[#allocation8 + $0x50] sm:$0xff]
    %v371 = vld [vmem:[#allocation8 + $0x58] sm:$0xff]
    %v372 = vld [vmem:[#allocation8 + $0x60] sm:$0xff]
    %v373 = vld [vmem:[#allocation8 + $0x68] sm:$0xff]
    %v374 = vld [vmem:[#allocation8 + $0x70] sm:$0xff]
    %v375 = vld [vmem:[#allocation8 + $0x78] sm:$0xff]
    %v376 = vld [vmem:[#allocation8 + $0x80] sm:$0xff]
    %v377 = vld [vmem:[#allocation8 + $0x88] sm:$0xff]
    %v378 = vld [vmem:[#allocation8 + $0x90] sm:$0xff]
    %v379 = vld [vmem:[#allocation8 + $0x98] sm:$0xff]
    %v380 = vld [vmem:[#allocation8 + $0xa0] sm:$0xff]
    %v381 = vld [vmem:[#allocation8 + $0xa8] sm:$0xff]
    %v382 = vld [vmem:[#allocation8 + $0xb0] sm:$0xff]
    %v383 = vld [vmem:[#allocation8 + $0xb8] sm:$0xff]
    %v384 = vld [vmem:[#allocation8 + $0xc0] sm:$0xff]
    %v385 = vld [vmem:[#allocation8 + $0xc8] sm:$0xff]
    %v386 = vld [vmem:[#allocation8 + $0xd0] sm:$0xff]
    %v387 = vld [vmem:[#allocation8 + $0xd8] sm:$0xff]
    %v388 = vld [vmem:[#allocation8 + $0xe0] sm:$0xff]
    %v389 = vld [vmem:[#allocation8 + $0xe8] sm:$0xff]
    %v390 = vld [vmem:[#allocation8 + $0xf0] sm:$0xff]
    %v391 = vld [vmem:[#allocation8 + $0xf8] sm:$0xff]
    %v392 = vld [vmem:[#allocation8 + $0x100] sm:$0xff]
    %v393 = vld [vmem:[#allocation8 + $0x108] sm:$0xff]
    %v394 = vld [vmem:[#allocation8 + $0x110] sm:$0xff]
    %v395 = vld [vmem:[#allocation8 + $0x118] sm:$0xff]
    %v396 = vld [vmem:[#allocation8 + $0x120] sm:$0xff]
    %v397 = vld [vmem:[#allocation8 + $0x128] sm:$0xff]
    %v398 = vld [vmem:[#allocation8 + $0x130] sm:$0xff]
    %v399 = vld [vmem:[#allocation8 + $0x138] sm:$0xff]
    %v400 = vld [vmem:[#allocation8 + $0x140] sm:$0xff]
    %v401 = vld [vmem:[#allocation8 + $0x148] sm:$0xff]
    %v402 = vld [vmem:[#allocation8 + $0x150] sm:$0xff]
    %v403 = vld [vmem:[#allocation8 + $0x158] sm:$0xff]
    %v404 = vld [vmem:[#allocation8 + $0x160] sm:$0xff]
    %v405 = vld [vmem:[#allocation8 + $0x168] sm:$0xff]
    %v406 = vld [vmem:[#allocation8 + $0x170] sm:$0xff]
    %v407 = vld [vmem:[#allocation8 + $0x178] sm:$0xff]
    %v408 = vld [vmem:[#allocation8 + $0x180] sm:$0xff]
    %v409 = vld [vmem:[#allocation8 + $0x188] sm:$0xff]
    %v410 = vld [vmem:[#allocation8 + $0x190] sm:$0xff]
    %v411 = vld [vmem:[#allocation8 + $0x198] sm:$0xff]
    %v412 = vld [vmem:[#allocation8 + $0x1a0] sm:$0xff]
    %v413 = vld [vmem:[#allocation8 + $0x1a8] sm:$0xff]
    %v414 = vld [vmem:[#allocation8 + $0x1b0] sm:$0xff]
    %v415 = vld [vmem:[#allocation8 + $0x1b8] sm:$0xff]
    %v416 = vld [vmem:[#allocation8 + $0x1c0] sm:$0xff]
    %v417 = vld [vmem:[#allocation8 + $0x1c8] sm:$0xff]
    %v418 = vld [vmem:[#allocation8 + $0x1d0] sm:$0xff]
    %v419 = vld [vmem:[#allocation8 + $0x1d8] sm:$0xff]
    %v420 = vld [vmem:[#allocation8 + $0x1e0] sm:$0xff]
    %v421 = vld [vmem:[#allocation8 + $0x1e8] sm:$0xff]
    %v422 = vld [vmem:[#allocation8 + $0x1f0] sm:$0xff]
    %v423 = vld [vmem:[#allocation8 + $0x1f8] sm:$0xff]
    %v424 = vld [vmem:[#allocation8 + $0x200] sm:$0xff]
    %v425 = vld [vmem:[#allocation8 + $0x208] sm:$0xff]
    %v426 = vld [vmem:[#allocation8 + $0x210] sm:$0xff]
    %v427 = vld [vmem:[#allocation8 + $0x218] sm:$0xff]
    %v428 = vld [vmem:[#allocation8 + $0x220] sm:$0xff]
    %v429 = vld [vmem:[#allocation8 + $0x228] sm:$0xff]
    %v430 = vld [vmem:[#allocation8 + $0x230] sm:$0xff]
    %v431 = vld [vmem:[#allocation8 + $0x238] sm:$0xff]
    %v432 = vld [vmem:[#allocation8 + $0x240] sm:$0xff]
    %v433 = vld [vmem:[#allocation8 + $0x248] sm:$0xff]
    %v434 = vld [vmem:[#allocation8 + $0x250] sm:$0xff]
    %v435 = vld [vmem:[#allocation8 + $0x258] sm:$0xff]
    %v436 = vld [vmem:[#allocation8 + $0x260] sm:$0xff]
    %v437 = vld [vmem:[#allocation8 + $0x268] sm:$0xff]
    %v438 = vld [vmem:[#allocation8 + $0x270] sm:$0xff]
    %v439 = vld [vmem:[#allocation8 + $0x278] sm:$0xff]
    %v440 = vld [vmem:[#allocation8 + $0x280] sm:$0xff]
    %v441 = vld [vmem:[#allocation8 + $0x288] sm:$0xff]
    %v442 = vld [vmem:[#allocation8 + $0x290] sm:$0xff]
    %v443 = vld [vmem:[#allocation8 + $0x298] sm:$0xff]
    %v444 = vld [vmem:[#allocation8 + $0x2a0] sm:$0xff]
    %v445 = vld [vmem:[#allocation8 + $0x2a8] sm:$0xff]
    %v446 = vld [vmem:[#allocation8 + $0x2b0] sm:$0xff]
    %v447 = vld [vmem:[#allocation8 + $0x2b8] sm:$0xff]
    %v448 = vld [vmem:[#allocation8 + $0x2c0] sm:$0xff]
    %v449 = vld [vmem:[#allocation8 + $0x2c8] sm:$0xff]
    %v450 = vld [vmem:[#allocation8 + $0x2d0] sm:$0xff]
    %v451 = vld [vmem:[#allocation8 + $0x2d8] sm:$0xff]
    %v452 = vld [vmem:[#allocation8 + $0x2e0] sm:$0xff]
    %v453 = vld [vmem:[#allocation8 + $0x2e8] sm:$0xff]
    %v454 = vld [vmem:[#allocation8 + $0x2f0] sm:$0xff]
    %v455 = vld [vmem:[#allocation8 + $0x2f8] sm:$0xff]
    %v456 = vld [vmem:[#allocation8 + $0x300] sm:$0xff]
    %v457 = vld [vmem:[#allocation8 + $0x308] sm:$0xff]
    %v458 = vld [vmem:[#allocation8 + $0x310] sm:$0xff]
    %v459 = vld [vmem:[#allocation8 + $0x318] sm:$0xff]
    %v460 = vld [vmem:[#allocation8 + $0x320] sm:$0xff]
    %v461 = vld [vmem:[#allocation8 + $0x328] sm:$0xff]
    %v462 = vld [vmem:[#allocation8 + $0x330] sm:$0xff]
    %v463 = vld [vmem:[#allocation8 + $0x338] sm:$0xff]
    %v464 = vld [vmem:[#allocation8 + $0x340] sm:$0xff]
    %v465 = vld [vmem:[#allocation8 + $0x348] sm:$0xff]
    %v466 = vld [vmem:[#allocation8 + $0x350] sm:$0xff]
    %v467 = vld [vmem:[#allocation8 + $0x358] sm:$0xff]
    %v468 = vld [vmem:[#allocation8 + $0x360] sm:$0xff]
    %v469 = vld [vmem:[#allocation8 + $0x368] sm:$0xff]
    %v470 = vld [vmem:[#allocation8 + $0x370] sm:$0xff]
    %v471 = vld [vmem:[#allocation8 + $0x378] sm:$0xff]
    %v472 = vld [vmem:[#allocation8 + $0x380] sm:$0xff]
    %v473 = vld [vmem:[#allocation8 + $0x388] sm:$0xff]
    %v474 = vld [vmem:[#allocation8 + $0x390] sm:$0xff]
    %v475 = vld [vmem:[#allocation8 + $0x398] sm:$0xff]
    %v476 = vld [vmem:[#allocation8 + $0x3a0] sm:$0xff]
    %v477 = vld [vmem:[#allocation8 + $0x3a8] sm:$0xff]
    %v478 = vld [vmem:[#allocation8 + $0x3b0] sm:$0xff]
    %v479 = vld [vmem:[#allocation8 + $0x3b8] sm:$0xff]
    %v480 = vld [vmem:[#allocation8 + $0x3c0] sm:$0xff]
    %v481 = vld [vmem:[#allocation8 + $0x3c8] sm:$0xff]
    %v482 = vld [vmem:[#allocation8 + $0x3d0] sm:$0xff]
    %v483 = vld [vmem:[#allocation8 + $0x3d8] sm:$0xff]
    %v484 = vld [vmem:[#allocation8 + $0x3e0] sm:$0xff]
    %v485 = vld [vmem:[#allocation8 + $0x3e8] sm:$0xff]
    %v486 = vld [vmem:[#allocation8 + $0x3f0] sm:$0xff]
    %v487 = vld [vmem:[#allocation8 + $0x3f8] sm:$0xff]
    %v488 = vld [vmem:[#allocation8 + $0x400] sm:$0xff]
    %v489 = vld [vmem:[#allocation8 + $0x408] sm:$0xff]
    %v490 = vld [vmem:[#allocation8 + $0x410] sm:$0xff]
    %v491 = vld [vmem:[#allocation8 + $0x418] sm:$0xff]
    %v492 = vld [vmem:[#allocation8 + $0x420] sm:$0xff]
    %v493 = vld [vmem:[#allocation8 + $0x428] sm:$0xff]
    %v494 = vld [vmem:[#allocation8 + $0x430] sm:$0xff]
    %v495 = vld [vmem:[#allocation8 + $0x438] sm:$0xff]
    %v496 = vld [vmem:[#allocation8 + $0x440] sm:$0xff]
    %v497 = vld [vmem:[#allocation8 + $0x448] sm:$0xff]
    %v498 = vld [vmem:[#allocation8 + $0x450] sm:$0xff]
    %v499 = vld [vmem:[#allocation8 + $0x458] sm:$0xff]
    %v500 = vld [vmem:[#allocation8 + $0x460] sm:$0xff]
    %v501 = vld [vmem:[#allocation8 + $0x468] sm:$0xff]
    %v502 = vld [vmem:[#allocation8 + $0x470] sm:$0xff]
    %v503 = vld [vmem:[#allocation8 + $0x478] sm:$0xff]
    %v504 = vld [vmem:[#allocation8 + $0x480] sm:$0xff]
    %v505 = vld [vmem:[#allocation8 + $0x488] sm:$0xff]
    %v506 = vld [vmem:[#allocation8 + $0x490] sm:$0xff]
    %v507 = vld [vmem:[#allocation8 + $0x498] sm:$0xff]
    %v508 = vld [vmem:[#allocation8 + $0x4a0] sm:$0xff]
    %v509 = vld [vmem:[#allocation8 + $0x4a8] sm:$0xff]
    %v510 = vld [vmem:[#allocation8 + $0x4b0] sm:$0xff]
    %v511 = vld [vmem:[#allocation8 + $0x4b8] sm:$0xff]
    %v512 = vld [vmem:[#allocation8 + $0x4c0] sm:$0xff]
    %v513 = vld [vmem:[#allocation8 + $0x4c8] sm:$0xff]
    %v514 = vld [vmem:[#allocation8 + $0x4d0] sm:$0xff]
    %v515 = vld [vmem:[#allocation8 + $0x4d8] sm:$0xff]
    %v516 = vld [vmem:[#allocation8 + $0x4e0] sm:$0xff]
    %v517 = vld [vmem:[#allocation8 + $0x4e8] sm:$0xff]
    %v518 = vld [vmem:[#allocation8 + $0x4f0] sm:$0xff]
    %v519 = vld [vmem:[#allocation8 + $0x4f8] sm:$0xff]
    %v520 = vld [vmem:[#allocation8 + $0x500] sm:$0xff]
    %v521 = vld [vmem:[#allocation8 + $0x508] sm:$0xff]
    %v522 = vld [vmem:[#allocation8 + $0x510] sm:$0xff]
    %v523 = vld [vmem:[#allocation8 + $0x518] sm:$0xff]
    %v524 = vld [vmem:[#allocation8 + $0x520] sm:$0xff]
    %v525 = vld [vmem:[#allocation8 + $0x528] sm:$0xff]
    %v526 = vld [vmem:[#allocation8 + $0x530] sm:$0xff]
    %v527 = vld [vmem:[#allocation8 + $0x538] sm:$0xff]
    %v528 = vld [vmem:[#allocation8 + $0x540] sm:$0xff]
    %v529 = vld [vmem:[#allocation8 + $0x548] sm:$0xff]
    %v530 = vld [vmem:[#allocation8 + $0x550] sm:$0xff]
    %v531 = vld [vmem:[#allocation8 + $0x558] sm:$0xff]
    %v532 = vld [vmem:[#allocation8 + $0x560] sm:$0xff]
    %v533 = vld [vmem:[#allocation8 + $0x568] sm:$0xff]
    %v534 = vld [vmem:[#allocation8 + $0x570] sm:$0xff]
    %v535 = vld [vmem:[#allocation8 + $0x578] sm:$0xff]
    %v536 = vld [vmem:[#allocation8 + $0x580] sm:$0xff]
    %v537 = vld [vmem:[#allocation8 + $0x588] sm:$0xff]
    %v538 = vld [vmem:[#allocation8 + $0x590] sm:$0xff]
    %v539 = vld [vmem:[#allocation8 + $0x598] sm:$0xff]
    %v540 = vld [vmem:[#allocation8 + $0x5a0] sm:$0xff]
    %v541 = vld [vmem:[#allocation8 + $0x5a8] sm:$0xff]
    %v542 = vld [vmem:[#allocation8 + $0x5b0] sm:$0xff]
    %v543 = vld [vmem:[#allocation8 + $0x5b8] sm:$0xff]
    %v544 = vld [vmem:[#allocation8 + $0x5c0] sm:$0xff]
    %v545 = vld [vmem:[#allocation8 + $0x5c8] sm:$0xff]
    %v546 = vld [vmem:[#allocation8 + $0x5d0] sm:$0xff]
    %v547 = vld [vmem:[#allocation8 + $0x5d8] sm:$0xff]
    %v548 = vld [vmem:[#allocation8 + $0x5e0] sm:$0xff]
    %v549 = vld [vmem:[#allocation8 + $0x5e8] sm:$0xff]
    %v550 = vld [vmem:[#allocation8 + $0x5f0] sm:$0xff]
    %v551 = vld [vmem:[#allocation8 + $0x5f8] sm:$0xff]
    %v552 = vld [vmem:[#allocation8 + $0x600] sm:$0xff]
    %v553 = vld [vmem:[#allocation8 + $0x608] sm:$0xff]
    %v554 = vld [vmem:[#allocation8 + $0x610] sm:$0xff]
    %v555 = vld [vmem:[#allocation8 + $0x618] sm:$0xff]
    %v556 = vld [vmem:[#allocation8 + $0x620] sm:$0xff]
    %v557 = vld [vmem:[#allocation8 + $0x628] sm:$0xff]
    %v558 = vld [vmem:[#allocation8 + $0x630] sm:$0xff]
    %v559 = vld [vmem:[#allocation8 + $0x638] sm:$0xff]
    %v560 = vld [vmem:[#allocation8 + $0x640] sm:$0xff]
    %v561 = vld [vmem:[#allocation8 + $0x648] sm:$0xff]
    %v562 = vld [vmem:[#allocation8 + $0x650] sm:$0xff]
    %v563 = vld [vmem:[#allocation8 + $0x658] sm:$0xff]
    %v564 = vld [vmem:[#allocation8 + $0x660] sm:$0xff]
    %v565 = vld [vmem:[#allocation8 + $0x668] sm:$0xff]
    %v566 = vld [vmem:[#allocation8 + $0x670] sm:$0xff]
    %v567 = vld [vmem:[#allocation8 + $0x678] sm:$0xff]
    %v568 = vld [vmem:[#allocation8 + $0x680] sm:$0xff]
    %v569 = vld [vmem:[#allocation8 + $0x688] sm:$0xff]
    %v570 = vld [vmem:[#allocation8 + $0x690] sm:$0xff]
    %v571 = vld [vmem:[#allocation8 + $0x698] sm:$0xff]
    %v572 = vld [vmem:[#allocation8 + $0x6a0] sm:$0xff]
    %v573 = vld [vmem:[#allocation8 + $0x6a8] sm:$0xff]
    %v574 = vld [vmem:[#allocation8 + $0x6b0] sm:$0xff]
    %v575 = vld [vmem:[#allocation8 + $0x6b8] sm:$0xff]
    %v576 = vld [vmem:[#allocation8 + $0x6c0] sm:$0xff]
    %v577 = vld [vmem:[#allocation8 + $0x6c8] sm:$0xff]
    %v578 = vld [vmem:[#allocation8 + $0x6d0] sm:$0xff]
    %v579 = vld [vmem:[#allocation8 + $0x6d8] sm:$0xff]
    %v580 = vld [vmem:[#allocation8 + $0x6e0] sm:$0xff]
    %v581 = vld [vmem:[#allocation8 + $0x6e8] sm:$0xff]
    %v582 = vld [vmem:[#allocation8 + $0x6f0] sm:$0xff]
    %v583 = vld [vmem:[#allocation8 + $0x6f8] sm:$0xff]
    %v584 = vld [vmem:[#allocation8 + $0x700] sm:$0xff]
    %v585 = vld [vmem:[#allocation8 + $0x708] sm:$0xff]
    %v586 = vld [vmem:[#allocation8 + $0x710] sm:$0xff]
    %v587 = vld [vmem:[#allocation8 + $0x718] sm:$0xff]
    %v588 = vld [vmem:[#allocation8 + $0x720] sm:$0xff]
    %v589 = vld [vmem:[#allocation8 + $0x728] sm:$0xff]
    %v590 = vld [vmem:[#allocation8 + $0x730] sm:$0xff]
    %v591 = vld [vmem:[#allocation8 + $0x738] sm:$0xff]
    %v592 = vld [vmem:[#allocation8 + $0x740] sm:$0xff]
    %v593 = vld [vmem:[#allocation8 + $0x748] sm:$0xff]
    %v594 = vld [vmem:[#allocation8 + $0x750] sm:$0xff]
    %v595 = vld [vmem:[#allocation8 + $0x758] sm:$0xff]
    %v596 = vld [vmem:[#allocation8 + $0x760] sm:$0xff]
    %v597 = vld [vmem:[#allocation8 + $0x768] sm:$0xff]
    %v598 = vld [vmem:[#allocation8 + $0x770] sm:$0xff]
    %v599 = vld [vmem:[#allocation8 + $0x778] sm:$0xff]
    %v600 = vld [vmem:[#allocation8 + $0x780] sm:$0xff]
    %v601 = vld [vmem:[#allocation8 + $0x788] sm:$0xff]
    %v602 = vld [vmem:[#allocation8 + $0x790] sm:$0xff]
    %v603 = vld [vmem:[#allocation8 + $0x798] sm:$0xff]
    %v604 = vld [vmem:[#allocation8 + $0x7a0] sm:$0xff]
    %v605 = vld [vmem:[#allocation8 + $0x7a8] sm:$0xff]
    %v606 = vld [vmem:[#allocation8 + $0x7b0] sm:$0xff]
    %v607 = vld [vmem:[#allocation8 + $0x7b8] sm:$0xff]
    %v608 = vld [vmem:[#allocation8 + $0x7c0] sm:$0xff]
    %v609 = vld [vmem:[#allocation8 + $0x7c8] sm:$0xff]
    %v610 = vld [vmem:[#allocation8 + $0x7d0] sm:$0xff]
    %v611 = vld [vmem:[#allocation8 + $0x7d8] sm:$0xff]
    %v612 = vld [vmem:[#allocation8 + $0x7e0] sm:$0xff]
    %v613 = vld [vmem:[#allocation8 + $0x7e8] sm:$0xff]
    %v614 = vld [vmem:[#allocation8 + $0x7f0] sm:$0xff]
    %v615 = vld [vmem:[#allocation8 + $0x7f8] sm:$0xff]
    %v616 = vld [vmem:[#allocation8 + $0x800] sm:$0xff]
    %v617 = vld [vmem:[#allocation8 + $0x808] sm:$0xff]
    %v618 = vld [vmem:[#allocation8 + $0x810] sm:$0xff]
    %v619 = vld [vmem:[#allocation8 + $0x818] sm:$0xff]
    %v620 = vld [vmem:[#allocation8 + $0x820] sm:$0xff]
    %v621 = vld [vmem:[#allocation8 + $0x828] sm:$0xff]
    %v622 = vld [vmem:[#allocation8 + $0x830] sm:$0xff]
    %v623 = vld [vmem:[#allocation8 + $0x838] sm:$0xff]
    %v624 = vld [vmem:[#allocation8 + $0x840] sm:$0xff]
    %v625 = vld [vmem:[#allocation8 + $0x848] sm:$0xff]
    %v626 = vld [vmem:[#allocation8 + $0x850] sm:$0xff]
    %v627 = vld [vmem:[#allocation8 + $0x858] sm:$0xff]
    %v628 = vld [vmem:[#allocation8 + $0x860] sm:$0xff]
    %v629 = vld [vmem:[#allocation8 + $0x868] sm:$0xff]
    %v630 = vld [vmem:[#allocation8 + $0x870] sm:$0xff]
    %v631 = vld [vmem:[#allocation8 + $0x878] sm:$0xff]
    %v632 = vld [vmem:[#allocation8 + $0x880] sm:$0xff]
    %v633 = vld [vmem:[#allocation8 + $0x888] sm:$0xff]
    %v634 = vld [vmem:[#allocation8 + $0x890] sm:$0xff]
    %v635 = vld [vmem:[#allocation8 + $0x898] sm:$0xff]
    %v636 = vld [vmem:[#allocation8 + $0x8a0] sm:$0xff]
    %v637 = vld [vmem:[#allocation8 + $0x8a8] sm:$0xff]
    %v638 = vld [vmem:[#allocation8 + $0x8b0] sm:$0xff]
    %v639 = vld [vmem:[#allocation8 + $0x8b8] sm:$0xff]
    %v640 = vld [vmem:[#allocation8 + $0x8c0] sm:$0xff]
    %v641 = vld [vmem:[#allocation8 + $0x8c8] sm:$0xff]
    %v642 = vld [vmem:[#allocation8 + $0x8d0] sm:$0xff]
    %v643 = vld [vmem:[#allocation8 + $0x8d8] sm:$0xff]
    %v644 = vld [vmem:[#allocation8 + $0x8e0] sm:$0xff]
    %v645 = vld [vmem:[#allocation8 + $0x8e8] sm:$0xff]
    %v646 = vld [vmem:[#allocation8 + $0x8f0] sm:$0xff]
    %v647 = vld [vmem:[#allocation8 + $0x8f8] sm:$0xff]
    %v648 = vld [vmem:[#allocation8 + $0x900] sm:$0xff]
    %v649 = vld [vmem:[#allocation8 + $0x908] sm:$0xff]
    %v650 = vld [vmem:[#allocation8 + $0x910] sm:$0xff]
    %v651 = vld [vmem:[#allocation8 + $0x918] sm:$0xff]
    %v652 = vld [vmem:[#allocation8 + $0x920] sm:$0xff]
    %v653 = vld [vmem:[#allocation8 + $0x928] sm:$0xff]
    %v654 = vld [vmem:[#allocation8 + $0x930] sm:$0xff]
    %v655 = vld [vmem:[#allocation8 + $0x938] sm:$0xff]
    %v656 = vld [vmem:[#allocation8 + $0x940] sm:$0xff]
    %v657 = vld [vmem:[#allocation8 + $0x948] sm:$0xff]
    %v658 = vld [vmem:[#allocation8 + $0x950] sm:$0xff]
    %v659 = vld [vmem:[#allocation8 + $0x958] sm:$0xff]
    %v660 = vld [vmem:[#allocation8 + $0x960] sm:$0xff]
    %v661 = vld [vmem:[#allocation8 + $0x968] sm:$0xff]
    %v662 = vld [vmem:[#allocation8 + $0x970] sm:$0xff]
    %v663 = vld [vmem:[#allocation8 + $0x978] sm:$0xff]
    %v664 = vld [vmem:[#allocation8 + $0x980] sm:$0xff]
    %v665 = vld [vmem:[#allocation8 + $0x988] sm:$0xff]
    %v666 = vld [vmem:[#allocation8 + $0x990] sm:$0xff]
    %v667 = vld [vmem:[#allocation8 + $0x998] sm:$0xff]
    %v668 = vld [vmem:[#allocation8 + $0x9a0] sm:$0xff]
    %v669 = vld [vmem:[#allocation8 + $0x9a8] sm:$0xff]
    %v670 = vld [vmem:[#allocation8 + $0x9b0] sm:$0xff]
    %v671 = vld [vmem:[#allocation8 + $0x9b8] sm:$0xff]
    %v672 = vld [vmem:[#allocation8 + $0x9c0] sm:$0xff]
    %v673 = vld [vmem:[#allocation8 + $0x9c8] sm:$0xff]
    %v674 = vld [vmem:[#allocation8 + $0x9d0] sm:$0xff]
    %v675 = vld [vmem:[#allocation8 + $0x9d8] sm:$0xff]
    %v676 = vld [vmem:[#allocation8 + $0x9e0] sm:$0xff]
    %v677 = vld [vmem:[#allocation8 + $0x9e8] sm:$0xff]
    %v678 = vld [vmem:[#allocation8 + $0x9f0] sm:$0xff]
    %v679 = vld [vmem:[#allocation8 + $0x9f8] sm:$0xff]
    %v680 = vld [vmem:[#allocation8 + $0xa00] sm:$0xff]
    %v681 = vld [vmem:[#allocation8 + $0xa08] sm:$0xff]
    %v682 = vld [vmem:[#allocation8 + $0xa10] sm:$0xff]
    %v683 = vld [vmem:[#allocation8 + $0xa18] sm:$0xff]
    %v684 = vld [vmem:[#allocation8 + $0xa20] sm:$0xff]
    %v685 = vld [vmem:[#allocation8 + $0xa28] sm:$0xff]
    %v686 = vld [vmem:[#allocation8 + $0xa30] sm:$0xff]
    %v687 = vld [vmem:[#allocation8 + $0xa38] sm:$0xff]
    %v688 = vld [vmem:[#allocation8 + $0xa40] sm:$0xff]
    %v689 = vld [vmem:[#allocation8 + $0xa48] sm:$0xff]
    %v690 = vld [vmem:[#allocation8 + $0xa50] sm:$0xff]
    %v691 = vld [vmem:[#allocation8 + $0xa58] sm:$0xff]
    %v692 = vld [vmem:[#allocation8 + $0xa60] sm:$0xff]
    %v693 = vld [vmem:[#allocation8 + $0xa68] sm:$0xff]
    %v694 = vld [vmem:[#allocation8 + $0xa70] sm:$0xff]
    %v695 = vld [vmem:[#allocation8 + $0xa78] sm:$0xff]
    %v696 = vld [vmem:[#allocation8 + $0xa80] sm:$0xff]
    %v697 = vld [vmem:[#allocation8 + $0xa88] sm:$0xff]
    %v698 = vld [vmem:[#allocation8 + $0xa90] sm:$0xff]
    %v699 = vld [vmem:[#allocation8 + $0xa98] sm:$0xff]
    %v700 = vld [vmem:[#allocation8 + $0xaa0] sm:$0xff]
    %v701 = vld [vmem:[#allocation8 + $0xaa8] sm:$0xff]
    %v702 = vld [vmem:[#allocation8 + $0xab0] sm:$0xff]
    %v703 = vld [vmem:[#allocation8 + $0xab8] sm:$0xff]
    %v704 = vld [vmem:[#allocation8 + $0xac0] sm:$0xff]
    %v705 = vld [vmem:[#allocation8 + $0xac8] sm:$0xff]
    %v706 = vld [vmem:[#allocation8 + $0xad0] sm:$0xff]
    %v707 = vld [vmem:[#allocation8 + $0xad8] sm:$0xff]
    %v708 = vld [vmem:[#allocation8 + $0xae0] sm:$0xff]
    %v709 = vld [vmem:[#allocation8 + $0xae8] sm:$0xff]
    %v710 = vld [vmem:[#allocation8 + $0xaf0] sm:$0xff]
    %v711 = vld [vmem:[#allocation8 + $0xaf8] sm:$0xff]
    %v712 = vld [vmem:[#allocation8 + $0xb00] sm:$0xff]
    %v713 = vld [vmem:[#allocation8 + $0xb08] sm:$0xff]
    %v714 = vld [vmem:[#allocation8 + $0xb10] sm:$0xff]
    %v715 = vld [vmem:[#allocation8 + $0xb18] sm:$0xff]
    %v716 = vld [vmem:[#allocation8 + $0xb20] sm:$0xff]
    %v717 = vld [vmem:[#allocation8 + $0xb28] sm:$0xff]
    %v718 = vld [vmem:[#allocation8 + $0xb30] sm:$0xff]
    %v719 = vld [vmem:[#allocation8 + $0xb38] sm:$0xff]
    %v720 = vld [vmem:[#allocation8 + $0xb40] sm:$0xff]
    %v721 = vld [vmem:[#allocation8 + $0xb48] sm:$0xff]
    %v722 = vld [vmem:[#allocation8 + $0xb50] sm:$0xff]
    %v723 = vld [vmem:[#allocation8 + $0xb58] sm:$0xff]
    %v724 = vld [vmem:[#allocation8 + $0xb60] sm:$0xff]
    %v725 = vld [vmem:[#allocation8 + $0xb68] sm:$0xff]
    %v726 = vld [vmem:[#allocation8 + $0xb70] sm:$0xff]
    %v727 = vld [vmem:[#allocation8 + $0xb78] sm:$0xff]
    %v728 = vld [vmem:[#allocation8 + $0xb80] sm:$0xff]
    %v729 = vld [vmem:[#allocation8 + $0xb88] sm:$0xff]
    %v730 = vld [vmem:[#allocation8 + $0xb90] sm:$0xff]
    %v731 = vld [vmem:[#allocation8 + $0xb98] sm:$0xff]
    %v732 = vld [vmem:[#allocation8 + $0xba0] sm:$0xff]
    %v733 = vld [vmem:[#allocation8 + $0xba8] sm:$0xff]
    %v734 = vld [vmem:[#allocation8 + $0xbb0] sm:$0xff]
    %v735 = vld [vmem:[#allocation8 + $0xbb8] sm:$0xff]
    %v736 = vld [vmem:[#allocation8 + $0xbc0] sm:$0xff]
    %v737 = vld [vmem:[#allocation8 + $0xbc8] sm:$0xff]
    %v738 = vld [vmem:[#allocation8 + $0xbd0] sm:$0xff]
    %v739 = vld [vmem:[#allocation8 + $0xbd8] sm:$0xff]
    %v740 = vld [vmem:[#allocation8 + $0xbe0] sm:$0xff]
    %v741 = vld [vmem:[#allocation8 + $0xbe8] sm:$0xff]
    %v742 = vld [vmem:[#allocation8 + $0xbf0] sm:$0xff]
    %v743 = vld [vmem:[#allocation8 + $0xbf8] sm:$0xff]
    %v744 = vld [vmem:[#allocation10] sm:$0xff]
    %v746 = vlaneseq
    %v747 = vshrl.u32 %v746, 7
    %v748 = vsub.s32 0, %v747
    %v749 = vrot.slane %v744, %v748
    %v750 = vlaneseq
    %v751 = vshrl.u32 %v750, 7
    %v752 = vsub.s32 1, %v751
    %v753 = vrot.slane %v744, %v752
    %v754 = vlaneseq
    %v755 = vshrl.u32 %v754, 7
    %v756 = vsub.s32 2, %v755
    %v757 = vrot.slane %v744, %v756
    %v758 = vlaneseq
    %v759 = vshrl.u32 %v758, 7
    %v760 = vsub.s32 3, %v759
    %v761 = vrot.slane %v744, %v760
    %v762 = vlaneseq
    %v763 = vshrl.u32 %v762, 7
    %v764 = vsub.s32 4, %v763
    %v765 = vrot.slane %v744, %v764
    %v766 = vlaneseq
    %v767 = vshrl.u32 %v766, 7
    %v768 = vsub.s32 5, %v767
    %v769 = vrot.slane %v744, %v768
    %v770 = vlaneseq
    %v771 = vshrl.u32 %v770, 7
    %v772 = vsub.s32 6, %v771
    %v773 = vrot.slane %v744, %v772
    %v774 = vlaneseq
    %v775 = vshrl.u32 %v774, 7
    %v776 = vsub.s32 7, %v775
    %v777 = vrot.slane %v744, %v776
    %v1170 = vunpack.c.l.b16 %v360
    %v1171 = vunpack.c.h.b16 %v360
    %v1172 = vunpack.c.l.b16 %v361
    %v1173 = vunpack.c.h.b16 %v361
    %v1174 = vunpack.c.l.b16 %v362
    %v1175 = vunpack.c.h.b16 %v362
    %v1176 = vunpack.c.l.b16 %v363
    %v1177 = vunpack.c.h.b16 %v363
    %v1178 = vunpack.c.l.b16 %v364
    %v1179 = vunpack.c.h.b16 %v364
    %v1180 = vunpack.c.l.b16 %v365
    %v1181 = vunpack.c.h.b16 %v365
    %v1182 = vunpack.c.l.b16 %v366
    %v1183 = vunpack.c.h.b16 %v366
    %v1184 = vunpack.c.l.b16 %v367
    %v1185 = vunpack.c.h.b16 %v367
    %v1186 = vunpack.c.l.b16 %v368
    %v1187 = vunpack.c.h.b16 %v368
    %v1188 = vunpack.c.l.b16 %v369
    %v1189 = vunpack.c.h.b16 %v369
    %v1190 = vunpack.c.l.b16 %v370
    %v1191 = vunpack.c.h.b16 %v370
    %v1192 = vunpack.c.l.b16 %v371
    %v1193 = vunpack.c.h.b16 %v371
    %v1194 = vunpack.c.l.b16 %v372
    %v1195 = vunpack.c.h.b16 %v372
    %v1196 = vunpack.c.l.b16 %v373
    %v1197 = vunpack.c.h.b16 %v373
    %v1198 = vunpack.c.l.b16 %v374
    %v1199 = vunpack.c.h.b16 %v374
    %v1200 = vunpack.c.l.b16 %v375
    %v1201 = vunpack.c.h.b16 %v375
    %v1202 = vunpack.c.l.b16 %v376
    %v1203 = vunpack.c.h.b16 %v376
    %v1204 = vunpack.c.l.b16 %v377
    %v1205 = vunpack.c.h.b16 %v377
    %v1206 = vunpack.c.l.b16 %v378
    %v1207 = vunpack.c.h.b16 %v378
    %v1208 = vunpack.c.l.b16 %v379
    %v1209 = vunpack.c.h.b16 %v379
    %v1210 = vunpack.c.l.b16 %v380
    %v1211 = vunpack.c.h.b16 %v380
    %v1212 = vunpack.c.l.b16 %v381
    %v1213 = vunpack.c.h.b16 %v381
    %v1214 = vunpack.c.l.b16 %v382
    %v1215 = vunpack.c.h.b16 %v382
    %v1216 = vunpack.c.l.b16 %v383
    %v1217 = vunpack.c.h.b16 %v383
    %v1218 = vunpack.c.l.b16 %v384
    %v1219 = vunpack.c.h.b16 %v384
    %v1220 = vunpack.c.l.b16 %v385
    %v1221 = vunpack.c.h.b16 %v385
    %v1222 = vunpack.c.l.b16 %v386
    %v1223 = vunpack.c.h.b16 %v386
    %v1224 = vunpack.c.l.b16 %v387
    %v1225 = vunpack.c.h.b16 %v387
    %v1226 = vunpack.c.l.b16 %v388
    %v1227 = vunpack.c.h.b16 %v388
    %v1228 = vunpack.c.l.b16 %v389
    %v1229 = vunpack.c.h.b16 %v389
    %v1230 = vunpack.c.l.b16 %v390
    %v1231 = vunpack.c.h.b16 %v390
    %v1232 = vunpack.c.l.b16 %v391
    %v1233 = vunpack.c.h.b16 %v391
    %v1234 = vunpack.c.l.b16 %v392
    %v1235 = vunpack.c.h.b16 %v392
    %v1236 = vunpack.c.l.b16 %v393
    %v1237 = vunpack.c.h.b16 %v393
    %v1238 = vunpack.c.l.b16 %v394
    %v1239 = vunpack.c.h.b16 %v394
    %v1240 = vunpack.c.l.b16 %v395
    %v1241 = vunpack.c.h.b16 %v395
    %v1242 = vunpack.c.l.b16 %v396
    %v1243 = vunpack.c.h.b16 %v396
    %v1244 = vunpack.c.l.b16 %v397
    %v1245 = vunpack.c.h.b16 %v397
    %v1246 = vunpack.c.l.b16 %v398
    %v1247 = vunpack.c.h.b16 %v398
    %v1248 = vunpack.c.l.b16 %v399
    %v1249 = vunpack.c.h.b16 %v399
    %v1250 = vunpack.c.l.b16 %v400
    %v1251 = vunpack.c.h.b16 %v400
    %v1252 = vunpack.c.l.b16 %v401
    %v1253 = vunpack.c.h.b16 %v401
    %v1254 = vunpack.c.l.b16 %v402
    %v1255 = vunpack.c.h.b16 %v402
    %v1256 = vunpack.c.l.b16 %v403
    %v1257 = vunpack.c.h.b16 %v403
    %v1258 = vunpack.c.l.b16 %v404
    %v1259 = vunpack.c.h.b16 %v404
    %v1260 = vunpack.c.l.b16 %v405
    %v1261 = vunpack.c.h.b16 %v405
    %v1262 = vunpack.c.l.b16 %v406
    %v1263 = vunpack.c.h.b16 %v406
    %v1264 = vunpack.c.l.b16 %v407
    %v1265 = vunpack.c.h.b16 %v407
    %v1266 = vunpack.c.l.b16 %v408
    %v1267 = vunpack.c.h.b16 %v408
    %v1268 = vunpack.c.l.b16 %v409
    %v1269 = vunpack.c.h.b16 %v409
    %v1270 = vunpack.c.l.b16 %v410
    %v1271 = vunpack.c.h.b16 %v410
    %v1272 = vunpack.c.l.b16 %v411
    %v1273 = vunpack.c.h.b16 %v411
    %v1274 = vunpack.c.l.b16 %v412
    %v1275 = vunpack.c.h.b16 %v412
    %v1276 = vunpack.c.l.b16 %v413
    %v1277 = vunpack.c.h.b16 %v413
    %v1278 = vunpack.c.l.b16 %v414
    %v1279 = vunpack.c.h.b16 %v414
    %v1280 = vunpack.c.l.b16 %v415
    %v1281 = vunpack.c.h.b16 %v415
    %v1282 = vunpack.c.l.b16 %v416
    %v1283 = vunpack.c.h.b16 %v416
    %v1284 = vunpack.c.l.b16 %v417
    %v1285 = vunpack.c.h.b16 %v417
    %v1286 = vunpack.c.l.b16 %v418
    %v1287 = vunpack.c.h.b16 %v418
    %v1288 = vunpack.c.l.b16 %v419
    %v1289 = vunpack.c.h.b16 %v419
    %v1290 = vunpack.c.l.b16 %v420
    %v1291 = vunpack.c.h.b16 %v420
    %v1292 = vunpack.c.l.b16 %v421
    %v1293 = vunpack.c.h.b16 %v421
    %v1294 = vunpack.c.l.b16 %v422
    %v1295 = vunpack.c.h.b16 %v422
    %v1296 = vunpack.c.l.b16 %v423
    %v1297 = vunpack.c.h.b16 %v423
    %v1298 = vunpack.c.l.b16 %v424
    %v1299 = vunpack.c.h.b16 %v424
    %v1300 = vunpack.c.l.b16 %v425
    %v1301 = vunpack.c.h.b16 %v425
    %v1302 = vunpack.c.l.b16 %v426
    %v1303 = vunpack.c.h.b16 %v426
    %v1304 = vunpack.c.l.b16 %v427
    %v1305 = vunpack.c.h.b16 %v427
    %v1306 = vunpack.c.l.b16 %v428
    %v1307 = vunpack.c.h.b16 %v428
    %v1308 = vunpack.c.l.b16 %v429
    %v1309 = vunpack.c.h.b16 %v429
    %v1310 = vunpack.c.l.b16 %v430
    %v1311 = vunpack.c.h.b16 %v430
    %v1312 = vunpack.c.l.b16 %v431
    %v1313 = vunpack.c.h.b16 %v431
    %v1314 = vunpack.c.l.b16 %v432
    %v1315 = vunpack.c.h.b16 %v432
    %v1316 = vunpack.c.l.b16 %v433
    %v1317 = vunpack.c.h.b16 %v433
    %v1318 = vunpack.c.l.b16 %v434
    %v1319 = vunpack.c.h.b16 %v434
    %v1320 = vunpack.c.l.b16 %v435
    %v1321 = vunpack.c.h.b16 %v435
    %v1322 = vunpack.c.l.b16 %v436
    %v1323 = vunpack.c.h.b16 %v436
    %v1324 = vunpack.c.l.b16 %v437
    %v1325 = vunpack.c.h.b16 %v437
    %v1326 = vunpack.c.l.b16 %v438
    %v1327 = vunpack.c.h.b16 %v438
    %v1328 = vunpack.c.l.b16 %v439
    %v1329 = vunpack.c.h.b16 %v439
    %v1330 = vunpack.c.l.b16 %v440
    %v1331 = vunpack.c.h.b16 %v440
    %v1332 = vunpack.c.l.b16 %v441
    %v1333 = vunpack.c.h.b16 %v441
    %v1334 = vunpack.c.l.b16 %v442
    %v1335 = vunpack.c.h.b16 %v442
    %v1336 = vunpack.c.l.b16 %v443
    %v1337 = vunpack.c.h.b16 %v443
    %v1338 = vunpack.c.l.b16 %v444
    %v1339 = vunpack.c.h.b16 %v444
    %v1340 = vunpack.c.l.b16 %v445
    %v1341 = vunpack.c.h.b16 %v445
    %v1342 = vunpack.c.l.b16 %v446
    %v1343 = vunpack.c.h.b16 %v446
    %v1344 = vunpack.c.l.b16 %v447
    %v1345 = vunpack.c.h.b16 %v447
    %v1346 = vunpack.c.l.b16 %v448
    %v1347 = vunpack.c.h.b16 %v448
    %v1348 = vunpack.c.l.b16 %v449
    %v1349 = vunpack.c.h.b16 %v449
    %v1350 = vunpack.c.l.b16 %v450
    %v1351 = vunpack.c.h.b16 %v450
    %v1352 = vunpack.c.l.b16 %v451
    %v1353 = vunpack.c.h.b16 %v451
    %v1354 = vunpack.c.l.b16 %v452
    %v1355 = vunpack.c.h.b16 %v452
    %v1356 = vunpack.c.l.b16 %v453
    %v1357 = vunpack.c.h.b16 %v453
    %v1358 = vunpack.c.l.b16 %v454
    %v1359 = vunpack.c.h.b16 %v454
    %v1360 = vunpack.c.l.b16 %v455
    %v1361 = vunpack.c.h.b16 %v455
    %v1362 = vunpack.c.l.b16 %v456
    %v1363 = vunpack.c.h.b16 %v456
    %v1364 = vunpack.c.l.b16 %v457
    %v1365 = vunpack.c.h.b16 %v457
    %v1366 = vunpack.c.l.b16 %v458
    %v1367 = vunpack.c.h.b16 %v458
    %v1368 = vunpack.c.l.b16 %v459
    %v1369 = vunpack.c.h.b16 %v459
    %v1370 = vunpack.c.l.b16 %v460
    %v1371 = vunpack.c.h.b16 %v460
    %v1372 = vunpack.c.l.b16 %v461
    %v1373 = vunpack.c.h.b16 %v461
    %v1374 = vunpack.c.l.b16 %v462
    %v1375 = vunpack.c.h.b16 %v462
    %v1376 = vunpack.c.l.b16 %v463
    %v1377 = vunpack.c.h.b16 %v463
    %v1378 = vunpack.c.l.b16 %v464
    %v1379 = vunpack.c.h.b16 %v464
    %v1380 = vunpack.c.l.b16 %v465
    %v1381 = vunpack.c.h.b16 %v465
    %v1382 = vunpack.c.l.b16 %v466
    %v1383 = vunpack.c.h.b16 %v466
    %v1384 = vunpack.c.l.b16 %v467
    %v1385 = vunpack.c.h.b16 %v467
    %v1386 = vunpack.c.l.b16 %v468
    %v1387 = vunpack.c.h.b16 %v468
    %v1388 = vunpack.c.l.b16 %v469
    %v1389 = vunpack.c.h.b16 %v469
    %v1390 = vunpack.c.l.b16 %v470
    %v1391 = vunpack.c.h.b16 %v470
    %v1392 = vunpack.c.l.b16 %v471
    %v1393 = vunpack.c.h.b16 %v471
    %v1394 = vunpack.c.l.b16 %v472
    %v1395 = vunpack.c.h.b16 %v472
    %v1396 = vunpack.c.l.b16 %v473
    %v1397 = vunpack.c.h.b16 %v473
    %v1398 = vunpack.c.l.b16 %v474
    %v1399 = vunpack.c.h.b16 %v474
    %v1400 = vunpack.c.l.b16 %v475
    %v1401 = vunpack.c.h.b16 %v475
    %v1402 = vunpack.c.l.b16 %v476
    %v1403 = vunpack.c.h.b16 %v476
    %v1404 = vunpack.c.l.b16 %v477
    %v1405 = vunpack.c.h.b16 %v477
    %v1406 = vunpack.c.l.b16 %v478
    %v1407 = vunpack.c.h.b16 %v478
    %v1408 = vunpack.c.l.b16 %v479
    %v1409 = vunpack.c.h.b16 %v479
    %v1410 = vunpack.c.l.b16 %v480
    %v1411 = vunpack.c.h.b16 %v480
    %v1412 = vunpack.c.l.b16 %v481
    %v1413 = vunpack.c.h.b16 %v481
    %v1414 = vunpack.c.l.b16 %v482
    %v1415 = vunpack.c.h.b16 %v482
    %v1416 = vunpack.c.l.b16 %v483
    %v1417 = vunpack.c.h.b16 %v483
    %v1418 = vunpack.c.l.b16 %v484
    %v1419 = vunpack.c.h.b16 %v484
    %v1420 = vunpack.c.l.b16 %v485
    %v1421 = vunpack.c.h.b16 %v485
    %v1422 = vunpack.c.l.b16 %v486
    %v1423 = vunpack.c.h.b16 %v486
    %v1424 = vunpack.c.l.b16 %v487
    %v1425 = vunpack.c.h.b16 %v487
    %v1426 = vunpack.c.l.b16 %v488
    %v1427 = vunpack.c.h.b16 %v488
    %v1428 = vunpack.c.l.b16 %v489
    %v1429 = vunpack.c.h.b16 %v489
    %v1430 = vunpack.c.l.b16 %v490
    %v1431 = vunpack.c.h.b16 %v490
    %v1432 = vunpack.c.l.b16 %v491
    %v1433 = vunpack.c.h.b16 %v491
    %v1434 = vunpack.c.l.b16 %v492
    %v1435 = vunpack.c.h.b16 %v492
    %v1436 = vunpack.c.l.b16 %v493
    %v1437 = vunpack.c.h.b16 %v493
    %v1438 = vunpack.c.l.b16 %v494
    %v1439 = vunpack.c.h.b16 %v494
    %v1440 = vunpack.c.l.b16 %v495
    %v1441 = vunpack.c.h.b16 %v495
    %v1442 = vunpack.c.l.b16 %v496
    %v1443 = vunpack.c.h.b16 %v496
    %v1444 = vunpack.c.l.b16 %v497
    %v1445 = vunpack.c.h.b16 %v497
    %v1446 = vunpack.c.l.b16 %v498
    %v1447 = vunpack.c.h.b16 %v498
    %v1448 = vunpack.c.l.b16 %v499
    %v1449 = vunpack.c.h.b16 %v499
    %v1450 = vunpack.c.l.b16 %v500
    %v1451 = vunpack.c.h.b16 %v500
    %v1452 = vunpack.c.l.b16 %v501
    %v1453 = vunpack.c.h.b16 %v501
    %v1454 = vunpack.c.l.b16 %v502
    %v1455 = vunpack.c.h.b16 %v502
    %v1456 = vunpack.c.l.b16 %v503
    %v1457 = vunpack.c.h.b16 %v503
    %v1458 = vunpack.c.l.b16 %v504
    %v1459 = vunpack.c.h.b16 %v504
    %v1460 = vunpack.c.l.b16 %v505
    %v1461 = vunpack.c.h.b16 %v505
    %v1462 = vunpack.c.l.b16 %v506
    %v1463 = vunpack.c.h.b16 %v506
    %v1464 = vunpack.c.l.b16 %v507
    %v1465 = vunpack.c.h.b16 %v507
    %v1466 = vunpack.c.l.b16 %v508
    %v1467 = vunpack.c.h.b16 %v508
    %v1468 = vunpack.c.l.b16 %v509
    %v1469 = vunpack.c.h.b16 %v509
    %v1470 = vunpack.c.l.b16 %v510
    %v1471 = vunpack.c.h.b16 %v510
    %v1472 = vunpack.c.l.b16 %v511
    %v1473 = vunpack.c.h.b16 %v511
    %v1474 = vunpack.c.l.b16 %v512
    %v1475 = vunpack.c.h.b16 %v512
    %v1476 = vunpack.c.l.b16 %v513
    %v1477 = vunpack.c.h.b16 %v513
    %v1478 = vunpack.c.l.b16 %v514
    %v1479 = vunpack.c.h.b16 %v514
    %v1480 = vunpack.c.l.b16 %v515
    %v1481 = vunpack.c.h.b16 %v515
    %v1482 = vunpack.c.l.b16 %v516
    %v1483 = vunpack.c.h.b16 %v516
    %v1484 = vunpack.c.l.b16 %v517
    %v1485 = vunpack.c.h.b16 %v517
    %v1486 = vunpack.c.l.b16 %v518
    %v1487 = vunpack.c.h.b16 %v518
    %v1488 = vunpack.c.l.b16 %v519
    %v1489 = vunpack.c.h.b16 %v519
    %v1490 = vunpack.c.l.b16 %v520
    %v1491 = vunpack.c.h.b16 %v520
    %v1492 = vunpack.c.l.b16 %v521
    %v1493 = vunpack.c.h.b16 %v521
    %v1494 = vunpack.c.l.b16 %v522
    %v1495 = vunpack.c.h.b16 %v522
    %v1496 = vunpack.c.l.b16 %v523
    %v1497 = vunpack.c.h.b16 %v523
    %v1498 = vunpack.c.l.b16 %v524
    %v1499 = vunpack.c.h.b16 %v524
    %v1500 = vunpack.c.l.b16 %v525
    %v1501 = vunpack.c.h.b16 %v525
    %v1502 = vunpack.c.l.b16 %v526
    %v1503 = vunpack.c.h.b16 %v526
    %v1504 = vunpack.c.l.b16 %v527
    %v1505 = vunpack.c.h.b16 %v527
    %v1506 = vunpack.c.l.b16 %v528
    %v1507 = vunpack.c.h.b16 %v528
    %v1508 = vunpack.c.l.b16 %v529
    %v1509 = vunpack.c.h.b16 %v529
    %v1510 = vunpack.c.l.b16 %v530
    %v1511 = vunpack.c.h.b16 %v530
    %v1512 = vunpack.c.l.b16 %v531
    %v1513 = vunpack.c.h.b16 %v531
    %v1514 = vunpack.c.l.b16 %v532
    %v1515 = vunpack.c.h.b16 %v532
    %v1516 = vunpack.c.l.b16 %v533
    %v1517 = vunpack.c.h.b16 %v533
    %v1518 = vunpack.c.l.b16 %v534
    %v1519 = vunpack.c.h.b16 %v534
    %v1520 = vunpack.c.l.b16 %v535
    %v1521 = vunpack.c.h.b16 %v535
    %v1522 = vunpack.c.l.b16 %v536
    %v1523 = vunpack.c.h.b16 %v536
    %v1524 = vunpack.c.l.b16 %v537
    %v1525 = vunpack.c.h.b16 %v537
    %v1526 = vunpack.c.l.b16 %v538
    %v1527 = vunpack.c.h.b16 %v538
    %v1528 = vunpack.c.l.b16 %v539
    %v1529 = vunpack.c.h.b16 %v539
    %v1530 = vunpack.c.l.b16 %v540
    %v1531 = vunpack.c.h.b16 %v540
    %v1532 = vunpack.c.l.b16 %v541
    %v1533 = vunpack.c.h.b16 %v541
    %v1534 = vunpack.c.l.b16 %v542
    %v1535 = vunpack.c.h.b16 %v542
    %v1536 = vunpack.c.l.b16 %v543
    %v1537 = vunpack.c.h.b16 %v543
    %v1538 = vunpack.c.l.b16 %v544
    %v1539 = vunpack.c.h.b16 %v544
    %v1540 = vunpack.c.l.b16 %v545
    %v1541 = vunpack.c.h.b16 %v545
    %v1542 = vunpack.c.l.b16 %v546
    %v1543 = vunpack.c.h.b16 %v546
    %v1544 = vunpack.c.l.b16 %v547
    %v1545 = vunpack.c.h.b16 %v547
    %v1546 = vunpack.c.l.b16 %v548
    %v1547 = vunpack.c.h.b16 %v548
    %v1548 = vunpack.c.l.b16 %v549
    %v1549 = vunpack.c.h.b16 %v549
    %v1550 = vunpack.c.l.b16 %v550
    %v1551 = vunpack.c.h.b16 %v550
    %v1552 = vunpack.c.l.b16 %v551
    %v1553 = vunpack.c.h.b16 %v551
    %v1554 = vunpack.c.l.b16 %v552
    %v1555 = vunpack.c.h.b16 %v552
    %v1556 = vunpack.c.l.b16 %v553
    %v1557 = vunpack.c.h.b16 %v553
    %v1558 = vunpack.c.l.b16 %v554
    %v1559 = vunpack.c.h.b16 %v554
    %v1560 = vunpack.c.l.b16 %v555
    %v1561 = vunpack.c.h.b16 %v555
    %v1562 = vunpack.c.l.b16 %v556
    %v1563 = vunpack.c.h.b16 %v556
    %v1564 = vunpack.c.l.b16 %v557
    %v1565 = vunpack.c.h.b16 %v557
    %v1566 = vunpack.c.l.b16 %v558
    %v1567 = vunpack.c.h.b16 %v558
    %v1568 = vunpack.c.l.b16 %v559
    %v1569 = vunpack.c.h.b16 %v559
    %v1570 = vunpack.c.l.b16 %v560
    %v1571 = vunpack.c.h.b16 %v560
    %v1572 = vunpack.c.l.b16 %v561
    %v1573 = vunpack.c.h.b16 %v561
    %v1574 = vunpack.c.l.b16 %v562
    %v1575 = vunpack.c.h.b16 %v562
    %v1576 = vunpack.c.l.b16 %v563
    %v1577 = vunpack.c.h.b16 %v563
    %v1578 = vunpack.c.l.b16 %v564
    %v1579 = vunpack.c.h.b16 %v564
    %v1580 = vunpack.c.l.b16 %v565
    %v1581 = vunpack.c.h.b16 %v565
    %v1582 = vunpack.c.l.b16 %v566
    %v1583 = vunpack.c.h.b16 %v566
    %v1584 = vunpack.c.l.b16 %v567
    %v1585 = vunpack.c.h.b16 %v567
    %v1586 = vunpack.c.l.b16 %v568
    %v1587 = vunpack.c.h.b16 %v568
    %v1588 = vunpack.c.l.b16 %v569
    %v1589 = vunpack.c.h.b16 %v569
    %v1590 = vunpack.c.l.b16 %v570
    %v1591 = vunpack.c.h.b16 %v570
    %v1592 = vunpack.c.l.b16 %v571
    %v1593 = vunpack.c.h.b16 %v571
    %v1594 = vunpack.c.l.b16 %v572
    %v1595 = vunpack.c.h.b16 %v572
    %v1596 = vunpack.c.l.b16 %v573
    %v1597 = vunpack.c.h.b16 %v573
    %v1598 = vunpack.c.l.b16 %v574
    %v1599 = vunpack.c.h.b16 %v574
    %v1600 = vunpack.c.l.b16 %v575
    %v1601 = vunpack.c.h.b16 %v575
    %v1602 = vunpack.c.l.b16 %v576
    %v1603 = vunpack.c.h.b16 %v576
    %v1604 = vunpack.c.l.b16 %v577
    %v1605 = vunpack.c.h.b16 %v577
    %v1606 = vunpack.c.l.b16 %v578
    %v1607 = vunpack.c.h.b16 %v578
    %v1608 = vunpack.c.l.b16 %v579
    %v1609 = vunpack.c.h.b16 %v579
    %v1610 = vunpack.c.l.b16 %v580
    %v1611 = vunpack.c.h.b16 %v580
    %v1612 = vunpack.c.l.b16 %v581
    %v1613 = vunpack.c.h.b16 %v581
    %v1614 = vunpack.c.l.b16 %v582
    %v1615 = vunpack.c.h.b16 %v582
    %v1616 = vunpack.c.l.b16 %v583
    %v1617 = vunpack.c.h.b16 %v583
    %v1618 = vunpack.c.l.b16 %v584
    %v1619 = vunpack.c.h.b16 %v584
    %v1620 = vunpack.c.l.b16 %v585
    %v1621 = vunpack.c.h.b16 %v585
    %v1622 = vunpack.c.l.b16 %v586
    %v1623 = vunpack.c.h.b16 %v586
    %v1624 = vunpack.c.l.b16 %v587
    %v1625 = vunpack.c.h.b16 %v587
    %v1626 = vunpack.c.l.b16 %v588
    %v1627 = vunpack.c.h.b16 %v588
    %v1628 = vunpack.c.l.b16 %v589
    %v1629 = vunpack.c.h.b16 %v589
    %v1630 = vunpack.c.l.b16 %v590
    %v1631 = vunpack.c.h.b16 %v590
    %v1632 = vunpack.c.l.b16 %v591
    %v1633 = vunpack.c.h.b16 %v591
    %v1634 = vunpack.c.l.b16 %v592
    %v1635 = vunpack.c.h.b16 %v592
    %v1636 = vunpack.c.l.b16 %v593
    %v1637 = vunpack.c.h.b16 %v593
    %v1638 = vunpack.c.l.b16 %v594
    %v1639 = vunpack.c.h.b16 %v594
    %v1640 = vunpack.c.l.b16 %v595
    %v1641 = vunpack.c.h.b16 %v595
    %v1642 = vunpack.c.l.b16 %v596
    %v1643 = vunpack.c.h.b16 %v596
    %v1644 = vunpack.c.l.b16 %v597
    %v1645 = vunpack.c.h.b16 %v597
    %v1646 = vunpack.c.l.b16 %v598
    %v1647 = vunpack.c.h.b16 %v598
    %v1648 = vunpack.c.l.b16 %v599
    %v1649 = vunpack.c.h.b16 %v599
    %v1650 = vunpack.c.l.b16 %v600
    %v1651 = vunpack.c.h.b16 %v600
    %v1652 = vunpack.c.l.b16 %v601
    %v1653 = vunpack.c.h.b16 %v601
    %v1654 = vunpack.c.l.b16 %v602
    %v1655 = vunpack.c.h.b16 %v602
    %v1656 = vunpack.c.l.b16 %v603
    %v1657 = vunpack.c.h.b16 %v603
    %v1658 = vunpack.c.l.b16 %v604
    %v1659 = vunpack.c.h.b16 %v604
    %v1660 = vunpack.c.l.b16 %v605
    %v1661 = vunpack.c.h.b16 %v605
    %v1662 = vunpack.c.l.b16 %v606
    %v1663 = vunpack.c.h.b16 %v606
    %v1664 = vunpack.c.l.b16 %v607
    %v1665 = vunpack.c.h.b16 %v607
    %v1666 = vunpack.c.l.b16 %v608
    %v1667 = vunpack.c.h.b16 %v608
    %v1668 = vunpack.c.l.b16 %v609
    %v1669 = vunpack.c.h.b16 %v609
    %v1670 = vunpack.c.l.b16 %v610
    %v1671 = vunpack.c.h.b16 %v610
    %v1672 = vunpack.c.l.b16 %v611
    %v1673 = vunpack.c.h.b16 %v611
    %v1674 = vunpack.c.l.b16 %v612
    %v1675 = vunpack.c.h.b16 %v612
    %v1676 = vunpack.c.l.b16 %v613
    %v1677 = vunpack.c.h.b16 %v613
    %v1678 = vunpack.c.l.b16 %v614
    %v1679 = vunpack.c.h.b16 %v614
    %v1680 = vunpack.c.l.b16 %v615
    %v1681 = vunpack.c.h.b16 %v615
    %v1682 = vunpack.c.l.b16 %v616
    %v1683 = vunpack.c.h.b16 %v616
    %v1684 = vunpack.c.l.b16 %v617
    %v1685 = vunpack.c.h.b16 %v617
    %v1686 = vunpack.c.l.b16 %v618
    %v1687 = vunpack.c.h.b16 %v618
    %v1688 = vunpack.c.l.b16 %v619
    %v1689 = vunpack.c.h.b16 %v619
    %v1690 = vunpack.c.l.b16 %v620
    %v1691 = vunpack.c.h.b16 %v620
    %v1692 = vunpack.c.l.b16 %v621
    %v1693 = vunpack.c.h.b16 %v621
    %v1694 = vunpack.c.l.b16 %v622
    %v1695 = vunpack.c.h.b16 %v622
    %v1696 = vunpack.c.l.b16 %v623
    %v1697 = vunpack.c.h.b16 %v623
    %v1698 = vunpack.c.l.b16 %v624
    %v1699 = vunpack.c.h.b16 %v624
    %v1700 = vunpack.c.l.b16 %v625
    %v1701 = vunpack.c.h.b16 %v625
    %v1702 = vunpack.c.l.b16 %v626
    %v1703 = vunpack.c.h.b16 %v626
    %v1704 = vunpack.c.l.b16 %v627
    %v1705 = vunpack.c.h.b16 %v627
    %v1706 = vunpack.c.l.b16 %v628
    %v1707 = vunpack.c.h.b16 %v628
    %v1708 = vunpack.c.l.b16 %v629
    %v1709 = vunpack.c.h.b16 %v629
    %v1710 = vunpack.c.l.b16 %v630
    %v1711 = vunpack.c.h.b16 %v630
    %v1712 = vunpack.c.l.b16 %v631
    %v1713 = vunpack.c.h.b16 %v631
    %v1714 = vunpack.c.l.b16 %v632
    %v1715 = vunpack.c.h.b16 %v632
    %v1716 = vunpack.c.l.b16 %v633
    %v1717 = vunpack.c.h.b16 %v633
    %v1718 = vunpack.c.l.b16 %v634
    %v1719 = vunpack.c.h.b16 %v634
    %v1720 = vunpack.c.l.b16 %v635
    %v1721 = vunpack.c.h.b16 %v635
    %v1722 = vunpack.c.l.b16 %v636
    %v1723 = vunpack.c.h.b16 %v636
    %v1724 = vunpack.c.l.b16 %v637
    %v1725 = vunpack.c.h.b16 %v637
    %v1726 = vunpack.c.l.b16 %v638
    %v1727 = vunpack.c.h.b16 %v638
    %v1728 = vunpack.c.l.b16 %v639
    %v1729 = vunpack.c.h.b16 %v639
    %v1730 = vunpack.c.l.b16 %v640
    %v1731 = vunpack.c.h.b16 %v640
    %v1732 = vunpack.c.l.b16 %v641
    %v1733 = vunpack.c.h.b16 %v641
    %v1734 = vunpack.c.l.b16 %v642
    %v1735 = vunpack.c.h.b16 %v642
    %v1736 = vunpack.c.l.b16 %v643
    %v1737 = vunpack.c.h.b16 %v643
    %v1738 = vunpack.c.l.b16 %v644
    %v1739 = vunpack.c.h.b16 %v644
    %v1740 = vunpack.c.l.b16 %v645
    %v1741 = vunpack.c.h.b16 %v645
    %v1742 = vunpack.c.l.b16 %v646
    %v1743 = vunpack.c.h.b16 %v646
    %v1744 = vunpack.c.l.b16 %v647
    %v1745 = vunpack.c.h.b16 %v647
    %v1746 = vunpack.c.l.b16 %v648
    %v1747 = vunpack.c.h.b16 %v648
    %v1748 = vunpack.c.l.b16 %v649
    %v1749 = vunpack.c.h.b16 %v649
    %v1750 = vunpack.c.l.b16 %v650
    %v1751 = vunpack.c.h.b16 %v650
    %v1752 = vunpack.c.l.b16 %v651
    %v1753 = vunpack.c.h.b16 %v651
    %v1754 = vunpack.c.l.b16 %v652
    %v1755 = vunpack.c.h.b16 %v652
    %v1756 = vunpack.c.l.b16 %v653
    %v1757 = vunpack.c.h.b16 %v653
    %v1758 = vunpack.c.l.b16 %v654
    %v1759 = vunpack.c.h.b16 %v654
    %v1760 = vunpack.c.l.b16 %v655
    %v1761 = vunpack.c.h.b16 %v655
    %v1762 = vunpack.c.l.b16 %v656
    %v1763 = vunpack.c.h.b16 %v656
    %v1764 = vunpack.c.l.b16 %v657
    %v1765 = vunpack.c.h.b16 %v657
    %v1766 = vunpack.c.l.b16 %v658
    %v1767 = vunpack.c.h.b16 %v658
    %v1768 = vunpack.c.l.b16 %v659
    %v1769 = vunpack.c.h.b16 %v659
    %v1770 = vunpack.c.l.b16 %v660
    %v1771 = vunpack.c.h.b16 %v660
    %v1772 = vunpack.c.l.b16 %v661
    %v1773 = vunpack.c.h.b16 %v661
    %v1774 = vunpack.c.l.b16 %v662
    %v1775 = vunpack.c.h.b16 %v662
    %v1776 = vunpack.c.l.b16 %v663
    %v1777 = vunpack.c.h.b16 %v663
    %v1778 = vunpack.c.l.b16 %v664
    %v1779 = vunpack.c.h.b16 %v664
    %v1780 = vunpack.c.l.b16 %v665
    %v1781 = vunpack.c.h.b16 %v665
    %v1782 = vunpack.c.l.b16 %v666
    %v1783 = vunpack.c.h.b16 %v666
    %v1784 = vunpack.c.l.b16 %v667
    %v1785 = vunpack.c.h.b16 %v667
    %v1786 = vunpack.c.l.b16 %v668
    %v1787 = vunpack.c.h.b16 %v668
    %v1788 = vunpack.c.l.b16 %v669
    %v1789 = vunpack.c.h.b16 %v669
    %v1790 = vunpack.c.l.b16 %v670
    %v1791 = vunpack.c.h.b16 %v670
    %v1792 = vunpack.c.l.b16 %v671
    %v1793 = vunpack.c.h.b16 %v671
    %v1794 = vunpack.c.l.b16 %v672
    %v1795 = vunpack.c.h.b16 %v672
    %v1796 = vunpack.c.l.b16 %v673
    %v1797 = vunpack.c.h.b16 %v673
    %v1798 = vunpack.c.l.b16 %v674
    %v1799 = vunpack.c.h.b16 %v674
    %v1800 = vunpack.c.l.b16 %v675
    %v1801 = vunpack.c.h.b16 %v675
    %v1802 = vunpack.c.l.b16 %v676
    %v1803 = vunpack.c.h.b16 %v676
    %v1804 = vunpack.c.l.b16 %v677
    %v1805 = vunpack.c.h.b16 %v677
    %v1806 = vunpack.c.l.b16 %v678
    %v1807 = vunpack.c.h.b16 %v678
    %v1808 = vunpack.c.l.b16 %v679
    %v1809 = vunpack.c.h.b16 %v679
    %v1810 = vunpack.c.l.b16 %v680
    %v1811 = vunpack.c.h.b16 %v680
    %v1812 = vunpack.c.l.b16 %v681
    %v1813 = vunpack.c.h.b16 %v681
    %v1814 = vunpack.c.l.b16 %v682
    %v1815 = vunpack.c.h.b16 %v682
    %v1816 = vunpack.c.l.b16 %v683
    %v1817 = vunpack.c.h.b16 %v683
    %v1818 = vunpack.c.l.b16 %v684
    %v1819 = vunpack.c.h.b16 %v684
    %v1820 = vunpack.c.l.b16 %v685
    %v1821 = vunpack.c.h.b16 %v685
    %v1822 = vunpack.c.l.b16 %v686
    %v1823 = vunpack.c.h.b16 %v686
    %v1824 = vunpack.c.l.b16 %v687
    %v1825 = vunpack.c.h.b16 %v687
    %v1826 = vunpack.c.l.b16 %v688
    %v1827 = vunpack.c.h.b16 %v688
    %v1828 = vunpack.c.l.b16 %v689
    %v1829 = vunpack.c.h.b16 %v689
    %v1830 = vunpack.c.l.b16 %v690
    %v1831 = vunpack.c.h.b16 %v690
    %v1832 = vunpack.c.l.b16 %v691
    %v1833 = vunpack.c.h.b16 %v691
    %v1834 = vunpack.c.l.b16 %v692
    %v1835 = vunpack.c.h.b16 %v692
    %v1836 = vunpack.c.l.b16 %v693
    %v1837 = vunpack.c.h.b16 %v693
    %v1838 = vunpack.c.l.b16 %v694
    %v1839 = vunpack.c.h.b16 %v694
    %v1840 = vunpack.c.l.b16 %v695
    %v1841 = vunpack.c.h.b16 %v695
    %v1842 = vunpack.c.l.b16 %v696
    %v1843 = vunpack.c.h.b16 %v696
    %v1844 = vunpack.c.l.b16 %v697
    %v1845 = vunpack.c.h.b16 %v697
    %v1846 = vunpack.c.l.b16 %v698
    %v1847 = vunpack.c.h.b16 %v698
    %v1848 = vunpack.c.l.b16 %v699
    %v1849 = vunpack.c.h.b16 %v699
    %v1850 = vunpack.c.l.b16 %v700
    %v1851 = vunpack.c.h.b16 %v700
    %v1852 = vunpack.c.l.b16 %v701
    %v1853 = vunpack.c.h.b16 %v701
    %v1854 = vunpack.c.l.b16 %v702
    %v1855 = vunpack.c.h.b16 %v702
    %v1856 = vunpack.c.l.b16 %v703
    %v1857 = vunpack.c.h.b16 %v703
    %v1858 = vunpack.c.l.b16 %v704
    %v1859 = vunpack.c.h.b16 %v704
    %v1860 = vunpack.c.l.b16 %v705
    %v1861 = vunpack.c.h.b16 %v705
    %v1862 = vunpack.c.l.b16 %v706
    %v1863 = vunpack.c.h.b16 %v706
    %v1864 = vunpack.c.l.b16 %v707
    %v1865 = vunpack.c.h.b16 %v707
    %v1866 = vunpack.c.l.b16 %v708
    %v1867 = vunpack.c.h.b16 %v708
    %v1868 = vunpack.c.l.b16 %v709
    %v1869 = vunpack.c.h.b16 %v709
    %v1870 = vunpack.c.l.b16 %v710
    %v1871 = vunpack.c.h.b16 %v710
    %v1872 = vunpack.c.l.b16 %v711
    %v1873 = vunpack.c.h.b16 %v711
    %v1874 = vunpack.c.l.b16 %v712
    %v1875 = vunpack.c.h.b16 %v712
    %v1876 = vunpack.c.l.b16 %v713
    %v1877 = vunpack.c.h.b16 %v713
    %v1878 = vunpack.c.l.b16 %v714
    %v1879 = vunpack.c.h.b16 %v714
    %v1880 = vunpack.c.l.b16 %v715
    %v1881 = vunpack.c.h.b16 %v715
    %v1882 = vunpack.c.l.b16 %v716
    %v1883 = vunpack.c.h.b16 %v716
    %v1884 = vunpack.c.l.b16 %v717
    %v1885 = vunpack.c.h.b16 %v717
    %v1886 = vunpack.c.l.b16 %v718
    %v1887 = vunpack.c.h.b16 %v718
    %v1888 = vunpack.c.l.b16 %v719
    %v1889 = vunpack.c.h.b16 %v719
    %v1890 = vunpack.c.l.b16 %v720
    %v1891 = vunpack.c.h.b16 %v720
    %v1892 = vunpack.c.l.b16 %v721
    %v1893 = vunpack.c.h.b16 %v721
    %v1894 = vunpack.c.l.b16 %v722
    %v1895 = vunpack.c.h.b16 %v722
    %v1896 = vunpack.c.l.b16 %v723
    %v1897 = vunpack.c.h.b16 %v723
    %v1898 = vunpack.c.l.b16 %v724
    %v1899 = vunpack.c.h.b16 %v724
    %v1900 = vunpack.c.l.b16 %v725
    %v1901 = vunpack.c.h.b16 %v725
    %v1902 = vunpack.c.l.b16 %v726
    %v1903 = vunpack.c.h.b16 %v726
    %v1904 = vunpack.c.l.b16 %v727
    %v1905 = vunpack.c.h.b16 %v727
    %v1906 = vunpack.c.l.b16 %v728
    %v1907 = vunpack.c.h.b16 %v728
    %v1908 = vunpack.c.l.b16 %v729
    %v1909 = vunpack.c.h.b16 %v729
    %v1910 = vunpack.c.l.b16 %v730
    %v1911 = vunpack.c.h.b16 %v730
    %v1912 = vunpack.c.l.b16 %v731
    %v1913 = vunpack.c.h.b16 %v731
    %v1914 = vunpack.c.l.b16 %v732
    %v1915 = vunpack.c.h.b16 %v732
    %v1916 = vunpack.c.l.b16 %v733
    %v1917 = vunpack.c.h.b16 %v733
    %v1918 = vunpack.c.l.b16 %v734
    %v1919 = vunpack.c.h.b16 %v734
    %v1920 = vunpack.c.l.b16 %v735
    %v1921 = vunpack.c.h.b16 %v735
    %v1922 = vunpack.c.l.b16 %v736
    %v1923 = vunpack.c.h.b16 %v736
    %v1924 = vunpack.c.l.b16 %v737
    %v1925 = vunpack.c.h.b16 %v737
    %v1926 = vunpack.c.l.b16 %v738
    %v1927 = vunpack.c.h.b16 %v738
    %v1928 = vunpack.c.l.b16 %v739
    %v1929 = vunpack.c.h.b16 %v739
    %v1930 = vunpack.c.l.b16 %v740
    %v1931 = vunpack.c.h.b16 %v740
    %v1932 = vunpack.c.l.b16 %v741
    %v1933 = vunpack.c.h.b16 %v741
    %v1934 = vunpack.c.l.b16 %v742
    %v1935 = vunpack.c.h.b16 %v742
    %v1936 = vunpack.c.l.b16 %v743
    %v1937 = vunpack.c.h.b16 %v743
    %v1938 = vpack.c.b16 %v1178, %v1170
    %v1939 = vpack.c.b16 %v1179, %v1171
    %v1940 = vpack.c.b16 %v1180, %v1172
    %v1941 = vpack.c.b16 %v1181, %v1173
    %v1942 = vpack.c.b16 %v1182, %v1174
    %v1943 = vpack.c.b16 %v1183, %v1175
    %v1944 = vpack.c.b16 %v1184, %v1176
    %v1945 = vpack.c.b16 %v1185, %v1177
    %v1946 = vpack.c.b16 %v1194, %v1186
    %v1947 = vpack.c.b16 %v1195, %v1187
    %v1948 = vpack.c.b16 %v1196, %v1188
    %v1949 = vpack.c.b16 %v1197, %v1189
    %v1950 = vpack.c.b16 %v1198, %v1190
    %v1951 = vpack.c.b16 %v1199, %v1191
    %v1952 = vpack.c.b16 %v1200, %v1192
    %v1953 = vpack.c.b16 %v1201, %v1193
    %v1954 = vpack.c.b16 %v1210, %v1202
    %v1955 = vpack.c.b16 %v1211, %v1203
    %v1956 = vpack.c.b16 %v1212, %v1204
    %v1957 = vpack.c.b16 %v1213, %v1205
    %v1958 = vpack.c.b16 %v1214, %v1206
    %v1959 = vpack.c.b16 %v1215, %v1207
    %v1960 = vpack.c.b16 %v1216, %v1208
    %v1961 = vpack.c.b16 %v1217, %v1209
    %v1962 = vpack.c.b16 %v1226, %v1218
    %v1963 = vpack.c.b16 %v1227, %v1219
    %v1964 = vpack.c.b16 %v1228, %v1220
    %v1965 = vpack.c.b16 %v1229, %v1221
    %v1966 = vpack.c.b16 %v1230, %v1222
    %v1967 = vpack.c.b16 %v1231, %v1223
    %v1968 = vpack.c.b16 %v1232, %v1224
    %v1969 = vpack.c.b16 %v1233, %v1225
    %v1970 = vpack.c.b16 %v1242, %v1234
    %v1971 = vpack.c.b16 %v1243, %v1235
    %v1972 = vpack.c.b16 %v1244, %v1236
    %v1973 = vpack.c.b16 %v1245, %v1237
    %v1974 = vpack.c.b16 %v1246, %v1238
    %v1975 = vpack.c.b16 %v1247, %v1239
    %v1976 = vpack.c.b16 %v1248, %v1240
    %v1977 = vpack.c.b16 %v1249, %v1241
    %v1978 = vpack.c.b16 %v1258, %v1250
    %v1979 = vpack.c.b16 %v1259, %v1251
    %v1980 = vpack.c.b16 %v1260, %v1252
    %v1981 = vpack.c.b16 %v1261, %v1253
    %v1982 = vpack.c.b16 %v1262, %v1254
    %v1983 = vpack.c.b16 %v1263, %v1255
    %v1984 = vpack.c.b16 %v1264, %v1256
    %v1985 = vpack.c.b16 %v1265, %v1257
    %v1986 = vpack.c.b16 %v1274, %v1266
    %v1987 = vpack.c.b16 %v1275, %v1267
    %v1988 = vpack.c.b16 %v1276, %v1268
    %v1989 = vpack.c.b16 %v1277, %v1269
    %v1990 = vpack.c.b16 %v1278, %v1270
    %v1991 = vpack.c.b16 %v1279, %v1271
    %v1992 = vpack.c.b16 %v1280, %v1272
    %v1993 = vpack.c.b16 %v1281, %v1273
    %v1994 = vpack.c.b16 %v1290, %v1282
    %v1995 = vpack.c.b16 %v1291, %v1283
    %v1996 = vpack.c.b16 %v1292, %v1284
    %v1997 = vpack.c.b16 %v1293, %v1285
    %v1998 = vpack.c.b16 %v1294, %v1286
    %v1999 = vpack.c.b16 %v1295, %v1287
    %v2000 = vpack.c.b16 %v1296, %v1288
    %v2001 = vpack.c.b16 %v1297, %v1289
    %v2002 = vpack.c.b16 %v1306, %v1298
    %v2003 = vpack.c.b16 %v1307, %v1299
    %v2004 = vpack.c.b16 %v1308, %v1300
    %v2005 = vpack.c.b16 %v1309, %v1301
    %v2006 = vpack.c.b16 %v1310, %v1302
    %v2007 = vpack.c.b16 %v1311, %v1303
    %v2008 = vpack.c.b16 %v1312, %v1304
    %v2009 = vpack.c.b16 %v1313, %v1305
    %v2010 = vpack.c.b16 %v1322, %v1314
    %v2011 = vpack.c.b16 %v1323, %v1315
    %v2012 = vpack.c.b16 %v1324, %v1316
    %v2013 = vpack.c.b16 %v1325, %v1317
    %v2014 = vpack.c.b16 %v1326, %v1318
    %v2015 = vpack.c.b16 %v1327, %v1319
    %v2016 = vpack.c.b16 %v1328, %v1320
    %v2017 = vpack.c.b16 %v1329, %v1321
    %v2018 = vpack.c.b16 %v1338, %v1330
    %v2019 = vpack.c.b16 %v1339, %v1331
    %v2020 = vpack.c.b16 %v1340, %v1332
    %v2021 = vpack.c.b16 %v1341, %v1333
    %v2022 = vpack.c.b16 %v1342, %v1334
    %v2023 = vpack.c.b16 %v1343, %v1335
    %v2024 = vpack.c.b16 %v1344, %v1336
    %v2025 = vpack.c.b16 %v1345, %v1337
    %v2026 = vpack.c.b16 %v1354, %v1346
    %v2027 = vpack.c.b16 %v1355, %v1347
    %v2028 = vpack.c.b16 %v1356, %v1348
    %v2029 = vpack.c.b16 %v1357, %v1349
    %v2030 = vpack.c.b16 %v1358, %v1350
    %v2031 = vpack.c.b16 %v1359, %v1351
    %v2032 = vpack.c.b16 %v1360, %v1352
    %v2033 = vpack.c.b16 %v1361, %v1353
    %v2034 = vpack.c.b16 %v1370, %v1362
    %v2035 = vpack.c.b16 %v1371, %v1363
    %v2036 = vpack.c.b16 %v1372, %v1364
    %v2037 = vpack.c.b16 %v1373, %v1365
    %v2038 = vpack.c.b16 %v1374, %v1366
    %v2039 = vpack.c.b16 %v1375, %v1367
    %v2040 = vpack.c.b16 %v1376, %v1368
    %v2041 = vpack.c.b16 %v1377, %v1369
    %v2042 = vpack.c.b16 %v1386, %v1378
    %v2043 = vpack.c.b16 %v1387, %v1379
    %v2044 = vpack.c.b16 %v1388, %v1380
    %v2045 = vpack.c.b16 %v1389, %v1381
    %v2046 = vpack.c.b16 %v1390, %v1382
    %v2047 = vpack.c.b16 %v1391, %v1383
    %v2048 = vpack.c.b16 %v1392, %v1384
    %v2049 = vpack.c.b16 %v1393, %v1385
    %v2050 = vpack.c.b16 %v1402, %v1394
    %v2051 = vpack.c.b16 %v1403, %v1395
    %v2052 = vpack.c.b16 %v1404, %v1396
    %v2053 = vpack.c.b16 %v1405, %v1397
    %v2054 = vpack.c.b16 %v1406, %v1398
    %v2055 = vpack.c.b16 %v1407, %v1399
    %v2056 = vpack.c.b16 %v1408, %v1400
    %v2057 = vpack.c.b16 %v1409, %v1401
    %v2058 = vpack.c.b16 %v1418, %v1410
    %v2059 = vpack.c.b16 %v1419, %v1411
    %v2060 = vpack.c.b16 %v1420, %v1412
    %v2061 = vpack.c.b16 %v1421, %v1413
    %v2062 = vpack.c.b16 %v1422, %v1414
    %v2063 = vpack.c.b16 %v1423, %v1415
    %v2064 = vpack.c.b16 %v1424, %v1416
    %v2065 = vpack.c.b16 %v1425, %v1417
    %v2066 = vpack.c.b16 %v1434, %v1426
    %v2067 = vpack.c.b16 %v1435, %v1427
    %v2068 = vpack.c.b16 %v1436, %v1428
    %v2069 = vpack.c.b16 %v1437, %v1429
    %v2070 = vpack.c.b16 %v1438, %v1430
    %v2071 = vpack.c.b16 %v1439, %v1431
    %v2072 = vpack.c.b16 %v1440, %v1432
    %v2073 = vpack.c.b16 %v1441, %v1433
    %v2074 = vpack.c.b16 %v1450, %v1442
    %v2075 = vpack.c.b16 %v1451, %v1443
    %v2076 = vpack.c.b16 %v1452, %v1444
    %v2077 = vpack.c.b16 %v1453, %v1445
    %v2078 = vpack.c.b16 %v1454, %v1446
    %v2079 = vpack.c.b16 %v1455, %v1447
    %v2080 = vpack.c.b16 %v1456, %v1448
    %v2081 = vpack.c.b16 %v1457, %v1449
    %v2082 = vpack.c.b16 %v1466, %v1458
    %v2083 = vpack.c.b16 %v1467, %v1459
    %v2084 = vpack.c.b16 %v1468, %v1460
    %v2085 = vpack.c.b16 %v1469, %v1461
    %v2086 = vpack.c.b16 %v1470, %v1462
    %v2087 = vpack.c.b16 %v1471, %v1463
    %v2088 = vpack.c.b16 %v1472, %v1464
    %v2089 = vpack.c.b16 %v1473, %v1465
    %v2090 = vpack.c.b16 %v1482, %v1474
    %v2091 = vpack.c.b16 %v1483, %v1475
    %v2092 = vpack.c.b16 %v1484, %v1476
    %v2093 = vpack.c.b16 %v1485, %v1477
    %v2094 = vpack.c.b16 %v1486, %v1478
    %v2095 = vpack.c.b16 %v1487, %v1479
    %v2096 = vpack.c.b16 %v1488, %v1480
    %v2097 = vpack.c.b16 %v1489, %v1481
    %v2098 = vpack.c.b16 %v1498, %v1490
    %v2099 = vpack.c.b16 %v1499, %v1491
    %v2100 = vpack.c.b16 %v1500, %v1492
    %v2101 = vpack.c.b16 %v1501, %v1493
    %v2102 = vpack.c.b16 %v1502, %v1494
    %v2103 = vpack.c.b16 %v1503, %v1495
    %v2104 = vpack.c.b16 %v1504, %v1496
    %v2105 = vpack.c.b16 %v1505, %v1497
    %v2106 = vpack.c.b16 %v1514, %v1506
    %v2107 = vpack.c.b16 %v1515, %v1507
    %v2108 = vpack.c.b16 %v1516, %v1508
    %v2109 = vpack.c.b16 %v1517, %v1509
    %v2110 = vpack.c.b16 %v1518, %v1510
    %v2111 = vpack.c.b16 %v1519, %v1511
    %v2112 = vpack.c.b16 %v1520, %v1512
    %v2113 = vpack.c.b16 %v1521, %v1513
    %v2114 = vpack.c.b16 %v1530, %v1522
    %v2115 = vpack.c.b16 %v1531, %v1523
    %v2116 = vpack.c.b16 %v1532, %v1524
    %v2117 = vpack.c.b16 %v1533, %v1525
    %v2118 = vpack.c.b16 %v1534, %v1526
    %v2119 = vpack.c.b16 %v1535, %v1527
    %v2120 = vpack.c.b16 %v1536, %v1528
    %v2121 = vpack.c.b16 %v1537, %v1529
    %v2122 = vpack.c.b16 %v1546, %v1538
    %v2123 = vpack.c.b16 %v1547, %v1539
    %v2124 = vpack.c.b16 %v1548, %v1540
    %v2125 = vpack.c.b16 %v1549, %v1541
    %v2126 = vpack.c.b16 %v1550, %v1542
    %v2127 = vpack.c.b16 %v1551, %v1543
    %v2128 = vpack.c.b16 %v1552, %v1544
    %v2129 = vpack.c.b16 %v1553, %v1545
    %v2130 = vpack.c.b16 %v1562, %v1554
    %v2131 = vpack.c.b16 %v1563, %v1555
    %v2132 = vpack.c.b16 %v1564, %v1556
    %v2133 = vpack.c.b16 %v1565, %v1557
    %v2134 = vpack.c.b16 %v1566, %v1558
    %v2135 = vpack.c.b16 %v1567, %v1559
    %v2136 = vpack.c.b16 %v1568, %v1560
    %v2137 = vpack.c.b16 %v1569, %v1561
    %v2138 = vpack.c.b16 %v1578, %v1570
    %v2139 = vpack.c.b16 %v1579, %v1571
    %v2140 = vpack.c.b16 %v1580, %v1572
    %v2141 = vpack.c.b16 %v1581, %v1573
    %v2142 = vpack.c.b16 %v1582, %v1574
    %v2143 = vpack.c.b16 %v1583, %v1575
    %v2144 = vpack.c.b16 %v1584, %v1576
    %v2145 = vpack.c.b16 %v1585, %v1577
    %v2146 = vpack.c.b16 %v1594, %v1586
    %v2147 = vpack.c.b16 %v1595, %v1587
    %v2148 = vpack.c.b16 %v1596, %v1588
    %v2149 = vpack.c.b16 %v1597, %v1589
    %v2150 = vpack.c.b16 %v1598, %v1590
    %v2151 = vpack.c.b16 %v1599, %v1591
    %v2152 = vpack.c.b16 %v1600, %v1592
    %v2153 = vpack.c.b16 %v1601, %v1593
    %v2154 = vpack.c.b16 %v1610, %v1602
    %v2155 = vpack.c.b16 %v1611, %v1603
    %v2156 = vpack.c.b16 %v1612, %v1604
    %v2157 = vpack.c.b16 %v1613, %v1605
    %v2158 = vpack.c.b16 %v1614, %v1606
    %v2159 = vpack.c.b16 %v1615, %v1607
    %v2160 = vpack.c.b16 %v1616, %v1608
    %v2161 = vpack.c.b16 %v1617, %v1609
    %v2162 = vpack.c.b16 %v1626, %v1618
    %v2163 = vpack.c.b16 %v1627, %v1619
    %v2164 = vpack.c.b16 %v1628, %v1620
    %v2165 = vpack.c.b16 %v1629, %v1621
    %v2166 = vpack.c.b16 %v1630, %v1622
    %v2167 = vpack.c.b16 %v1631, %v1623
    %v2168 = vpack.c.b16 %v1632, %v1624
    %v2169 = vpack.c.b16 %v1633, %v1625
    %v2170 = vpack.c.b16 %v1642, %v1634
    %v2171 = vpack.c.b16 %v1643, %v1635
    %v2172 = vpack.c.b16 %v1644, %v1636
    %v2173 = vpack.c.b16 %v1645, %v1637
    %v2174 = vpack.c.b16 %v1646, %v1638
    %v2175 = vpack.c.b16 %v1647, %v1639
    %v2176 = vpack.c.b16 %v1648, %v1640
    %v2177 = vpack.c.b16 %v1649, %v1641
    %v2178 = vpack.c.b16 %v1658, %v1650
    %v2179 = vpack.c.b16 %v1659, %v1651
    %v2180 = vpack.c.b16 %v1660, %v1652
    %v2181 = vpack.c.b16 %v1661, %v1653
    %v2182 = vpack.c.b16 %v1662, %v1654
    %v2183 = vpack.c.b16 %v1663, %v1655
    %v2184 = vpack.c.b16 %v1664, %v1656
    %v2185 = vpack.c.b16 %v1665, %v1657
    %v2186 = vpack.c.b16 %v1674, %v1666
    %v2187 = vpack.c.b16 %v1675, %v1667
    %v2188 = vpack.c.b16 %v1676, %v1668
    %v2189 = vpack.c.b16 %v1677, %v1669
    %v2190 = vpack.c.b16 %v1678, %v1670
    %v2191 = vpack.c.b16 %v1679, %v1671
    %v2192 = vpack.c.b16 %v1680, %v1672
    %v2193 = vpack.c.b16 %v1681, %v1673
    %v2194 = vpack.c.b16 %v1690, %v1682
    %v2195 = vpack.c.b16 %v1691, %v1683
    %v2196 = vpack.c.b16 %v1692, %v1684
    %v2197 = vpack.c.b16 %v1693, %v1685
    %v2198 = vpack.c.b16 %v1694, %v1686
    %v2199 = vpack.c.b16 %v1695, %v1687
    %v2200 = vpack.c.b16 %v1696, %v1688
    %v2201 = vpack.c.b16 %v1697, %v1689
    %v2202 = vpack.c.b16 %v1706, %v1698
    %v2203 = vpack.c.b16 %v1707, %v1699
    %v2204 = vpack.c.b16 %v1708, %v1700
    %v2205 = vpack.c.b16 %v1709, %v1701
    %v2206 = vpack.c.b16 %v1710, %v1702
    %v2207 = vpack.c.b16 %v1711, %v1703
    %v2208 = vpack.c.b16 %v1712, %v1704
    %v2209 = vpack.c.b16 %v1713, %v1705
    %v2210 = vpack.c.b16 %v1722, %v1714
    %v2211 = vpack.c.b16 %v1723, %v1715
    %v2212 = vpack.c.b16 %v1724, %v1716
    %v2213 = vpack.c.b16 %v1725, %v1717
    %v2214 = vpack.c.b16 %v1726, %v1718
    %v2215 = vpack.c.b16 %v1727, %v1719
    %v2216 = vpack.c.b16 %v1728, %v1720
    %v2217 = vpack.c.b16 %v1729, %v1721
    %v2218 = vpack.c.b16 %v1738, %v1730
    %v2219 = vpack.c.b16 %v1739, %v1731
    %v2220 = vpack.c.b16 %v1740, %v1732
    %v2221 = vpack.c.b16 %v1741, %v1733
    %v2222 = vpack.c.b16 %v1742, %v1734
    %v2223 = vpack.c.b16 %v1743, %v1735
    %v2224 = vpack.c.b16 %v1744, %v1736
    %v2225 = vpack.c.b16 %v1745, %v1737
    %v2226 = vpack.c.b16 %v1754, %v1746
    %v2227 = vpack.c.b16 %v1755, %v1747
    %v2228 = vpack.c.b16 %v1756, %v1748
    %v2229 = vpack.c.b16 %v1757, %v1749
    %v2230 = vpack.c.b16 %v1758, %v1750
    %v2231 = vpack.c.b16 %v1759, %v1751
    %v2232 = vpack.c.b16 %v1760, %v1752
    %v2233 = vpack.c.b16 %v1761, %v1753
    %v2234 = vpack.c.b16 %v1770, %v1762
    %v2235 = vpack.c.b16 %v1771, %v1763
    %v2236 = vpack.c.b16 %v1772, %v1764
    %v2237 = vpack.c.b16 %v1773, %v1765
    %v2238 = vpack.c.b16 %v1774, %v1766
    %v2239 = vpack.c.b16 %v1775, %v1767
    %v2240 = vpack.c.b16 %v1776, %v1768
    %v2241 = vpack.c.b16 %v1777, %v1769
    %v2242 = vpack.c.b16 %v1786, %v1778
    %v2243 = vpack.c.b16 %v1787, %v1779
    %v2244 = vpack.c.b16 %v1788, %v1780
    %v2245 = vpack.c.b16 %v1789, %v1781
    %v2246 = vpack.c.b16 %v1790, %v1782
    %v2247 = vpack.c.b16 %v1791, %v1783
    %v2248 = vpack.c.b16 %v1792, %v1784
    %v2249 = vpack.c.b16 %v1793, %v1785
    %v2250 = vpack.c.b16 %v1802, %v1794
    %v2251 = vpack.c.b16 %v1803, %v1795
    %v2252 = vpack.c.b16 %v1804, %v1796
    %v2253 = vpack.c.b16 %v1805, %v1797
    %v2254 = vpack.c.b16 %v1806, %v1798
    %v2255 = vpack.c.b16 %v1807, %v1799
    %v2256 = vpack.c.b16 %v1808, %v1800
    %v2257 = vpack.c.b16 %v1809, %v1801
    %v2258 = vpack.c.b16 %v1818, %v1810
    %v2259 = vpack.c.b16 %v1819, %v1811
    %v2260 = vpack.c.b16 %v1820, %v1812
    %v2261 = vpack.c.b16 %v1821, %v1813
    %v2262 = vpack.c.b16 %v1822, %v1814
    %v2263 = vpack.c.b16 %v1823, %v1815
    %v2264 = vpack.c.b16 %v1824, %v1816
    %v2265 = vpack.c.b16 %v1825, %v1817
    %v2266 = vpack.c.b16 %v1834, %v1826
    %v2267 = vpack.c.b16 %v1835, %v1827
    %v2268 = vpack.c.b16 %v1836, %v1828
    %v2269 = vpack.c.b16 %v1837, %v1829
    %v2270 = vpack.c.b16 %v1838, %v1830
    %v2271 = vpack.c.b16 %v1839, %v1831
    %v2272 = vpack.c.b16 %v1840, %v1832
    %v2273 = vpack.c.b16 %v1841, %v1833
    %v2274 = vpack.c.b16 %v1850, %v1842
    %v2275 = vpack.c.b16 %v1851, %v1843
    %v2276 = vpack.c.b16 %v1852, %v1844
    %v2277 = vpack.c.b16 %v1853, %v1845
    %v2278 = vpack.c.b16 %v1854, %v1846
    %v2279 = vpack.c.b16 %v1855, %v1847
    %v2280 = vpack.c.b16 %v1856, %v1848
    %v2281 = vpack.c.b16 %v1857, %v1849
    %v2282 = vpack.c.b16 %v1866, %v1858
    %v2283 = vpack.c.b16 %v1867, %v1859
    %v2284 = vpack.c.b16 %v1868, %v1860
    %v2285 = vpack.c.b16 %v1869, %v1861
    %v2286 = vpack.c.b16 %v1870, %v1862
    %v2287 = vpack.c.b16 %v1871, %v1863
    %v2288 = vpack.c.b16 %v1872, %v1864
    %v2289 = vpack.c.b16 %v1873, %v1865
    %v2290 = vpack.c.b16 %v1882, %v1874
    %v2291 = vpack.c.b16 %v1883, %v1875
    %v2292 = vpack.c.b16 %v1884, %v1876
    %v2293 = vpack.c.b16 %v1885, %v1877
    %v2294 = vpack.c.b16 %v1886, %v1878
    %v2295 = vpack.c.b16 %v1887, %v1879
    %v2296 = vpack.c.b16 %v1888, %v1880
    %v2297 = vpack.c.b16 %v1889, %v1881
    %v2298 = vpack.c.b16 %v1898, %v1890
    %v2299 = vpack.c.b16 %v1899, %v1891
    %v2300 = vpack.c.b16 %v1900, %v1892
    %v2301 = vpack.c.b16 %v1901, %v1893
    %v2302 = vpack.c.b16 %v1902, %v1894
    %v2303 = vpack.c.b16 %v1903, %v1895
    %v2304 = vpack.c.b16 %v1904, %v1896
    %v2305 = vpack.c.b16 %v1905, %v1897
    %v2306 = vpack.c.b16 %v1914, %v1906
    %v2307 = vpack.c.b16 %v1915, %v1907
    %v2308 = vpack.c.b16 %v1916, %v1908
    %v2309 = vpack.c.b16 %v1917, %v1909
    %v2310 = vpack.c.b16 %v1918, %v1910
    %v2311 = vpack.c.b16 %v1919, %v1911
    %v2312 = vpack.c.b16 %v1920, %v1912
    %v2313 = vpack.c.b16 %v1921, %v1913
    %v2314 = vpack.c.b16 %v1930, %v1922
    %v2315 = vpack.c.b16 %v1931, %v1923
    %v2316 = vpack.c.b16 %v1932, %v1924
    %v2317 = vpack.c.b16 %v1933, %v1925
    %v2318 = vpack.c.b16 %v1934, %v1926
    %v2319 = vpack.c.b16 %v1935, %v1927
    %v2320 = vpack.c.b16 %v1936, %v1928
    %v2321 = vpack.c.b16 %v1937, %v1929
    %2706 = vmatprep.subr.bf16.mxu0 %v1939
    %2707 = vmatpush1.bf16.msra.mxu0 %v1938
    %2708 = vmatprep.subr.bf16.mxu0 %v1947
    %2709 = vmatpush1.bf16.msra.mxu0 %v1946
    %2710 = vmatprep.subr.bf16.mxu0 %v1955
    %2711 = vmatpush1.bf16.msra.mxu0 %v1954
    %2712 = vmatprep.subr.bf16.mxu0 %v1963
    %2713 = vmatpush1.bf16.msra.mxu0 %v1962
    %2714 = vmatprep.subr.bf16.mxu0 %v1971
    %2715 = vmatpush1.bf16.msra.mxu0 %v1970
    %2716 = vmatprep.subr.bf16.mxu0 %v1979
    %2717 = vmatpush1.bf16.msra.mxu0 %v1978
    %2718 = vmatprep.subr.bf16.mxu0 %v1987
    %2719 = vmatpush1.bf16.msra.mxu0 %v1986
    %2720 = vmatprep.subr.bf16.mxu0 %v1995
    %2721 = vmatpush1.bf16.msra.mxu0 %v1994
    %2722 = vmatprep.subr.bf16.mxu0 %v2003
    %2723 = vmatpush1.bf16.msra.mxu0 %v2002
    %2724 = vmatprep.subr.bf16.mxu0 %v2011
    %2725 = vmatpush1.bf16.msra.mxu0 %v2010
    %2726 = vmatprep.subr.bf16.mxu0 %v2019
    %2727 = vmatpush1.bf16.msra.mxu0 %v2018
    %2728 = vmatprep.subr.bf16.mxu0 %v2027
    %2729 = vmatpush1.bf16.msra.mxu0 %v2026
    %2730 = vmatprep.subr.bf16.mxu0 %v2035
    %2731 = vmatpush1.bf16.msra.mxu0 %v2034
    %2732 = vmatprep.subr.bf16.mxu0 %v2043
    %2733 = vmatpush1.bf16.msra.mxu0 %v2042
    %2734 = vmatprep.subr.bf16.mxu0 %v2051
    %2735 = vmatpush1.bf16.msra.mxu0 %v2050
    %2736 = vmatprep.subr.bf16.mxu0 %v2059
    %2737 = vmatpush1.bf16.msra.mxu0 %v2058
    %2738 = vmatprep.mubr.bf16.mxu0 %v355
    %2739 = vmatmul.mubr.bf16.gmra.mrb[0].mxu0 %v354
    %v2740 = vpop.f32.mrb[0].mxu0
    %v2741 = vadd.f32 %v749, %v2740
    %v2742 = vpop.f32.mrb[0].mxu0
    %v2743 = vadd.f32 %v753, %v2742
    %v2744 = vpop.f32.mrb[0].mxu0
    %v2745 = vpop.f32.mrb[0].mxu0
    %2746 = vdwg.mxu0
    %2747 = vmatprep.subr.bf16.mxu0 %v2067
    %2748 = vmatpush1.bf16.msra.mxu0 %v2066
    %2749 = vmatprep.subr.bf16.mxu0 %v2075
    %2750 = vmatpush1.bf16.msra.mxu0 %v2074
    %2751 = vmatprep.subr.bf16.mxu0 %v2083
    %2752 = vmatpush1.bf16.msra.mxu0 %v2082
    %2753 = vmatprep.subr.bf16.mxu0 %v2091
    %2754 = vmatpush1.bf16.msra.mxu0 %v2090
    %2755 = vmatprep.subr.bf16.mxu0 %v2099
    %2756 = vmatpush1.bf16.msra.mxu0 %v2098
    %2757 = vmatprep.subr.bf16.mxu0 %v2107
    %2758 = vmatpush1.bf16.msra.mxu0 %v2106
    %2759 = vmatprep.subr.bf16.mxu0 %v2115
    %2760 = vmatpush1.bf16.msra.mxu0 %v2114
    %2761 = vmatprep.subr.bf16.mxu0 %v2123
    %2762 = vmatpush1.bf16.msra.mxu0 %v2122
    %2763 = vmatprep.subr.bf16.mxu0 %v2131
    %2764 = vmatpush1.bf16.msra.mxu0 %v2130
    %2765 = vmatprep.subr.bf16.mxu0 %v2139
    %2766 = vmatpush1.bf16.msra.mxu0 %v2138
    %2767 = vmatprep.subr.bf16.mxu0 %v2147
    %2768 = vmatpush1.bf16.msra.mxu0 %v2146
    %2769 = vmatprep.subr.bf16.mxu0 %v2155
    %2770 = vmatpush1.bf16.msra.mxu0 %v2154
    %2771 = vmatprep.subr.bf16.mxu0 %v2163
    %2772 = vmatpush1.bf16.msra.mxu0 %v2162
    %2773 = vmatprep.subr.bf16.mxu0 %v2171
    %2774 = vmatpush1.bf16.msra.mxu0 %v2170
    %2775 = vmatprep.subr.bf16.mxu0 %v2179
    %2776 = vmatpush1.bf16.msra.mxu0 %v2178
    %2777 = vmatprep.subr.bf16.mxu0 %v2187
    %2778 = vmatpush1.bf16.msra.mxu0 %v2186
    %2779 = vmatprep.mubr.bf16.mxu0 %v357
    %2780 = vmatmul.mubr.bf16.gmra.mrb[0].mxu0 %v356
    %v2781 = vpop.f32.mrb[0].mxu0
    %v2782 = vadd.f32 %v2741, %v2781
    %v2783 = vpop.f32.mrb[0].mxu0
    %v2784 = vadd.f32 %v2743, %v2783
    %v2785 = vpop.f32.mrb[0].mxu0
    %v2786 = vpop.f32.mrb[0].mxu0
    %2787 = vdwg.mxu0
    %2788 = vmatprep.subr.bf16.mxu0 %v2195
    %2789 = vmatpush1.bf16.msra.mxu0 %v2194
    %2790 = vmatprep.subr.bf16.mxu0 %v2203
    %2791 = vmatpush1.bf16.msra.mxu0 %v2202
    %2792 = vmatprep.subr.bf16.mxu0 %v2211
    %2793 = vmatpush1.bf16.msra.mxu0 %v2210
    %2794 = vmatprep.subr.bf16.mxu0 %v2219
    %2795 = vmatpush1.bf16.msra.mxu0 %v2218
    %2796 = vmatprep.subr.bf16.mxu0 %v2227
    %2797 = vmatpush1.bf16.msra.mxu0 %v2226
    %2798 = vmatprep.subr.bf16.mxu0 %v2235
    %2799 = vmatpush1.bf16.msra.mxu0 %v2234
    %2800 = vmatprep.subr.bf16.mxu0 %v2243
    %2801 = vmatpush1.bf16.msra.mxu0 %v2242
    %2802 = vmatprep.subr.bf16.mxu0 %v2251
    %2803 = vmatpush1.bf16.msra.mxu0 %v2250
    %2804 = vmatprep.subr.bf16.mxu0 %v2259
    %2805 = vmatpush1.bf16.msra.mxu0 %v2258
    %2806 = vmatprep.subr.bf16.mxu0 %v2267
    %2807 = vmatpush1.bf16.msra.mxu0 %v2266
    %2808 = vmatprep.subr.bf16.mxu0 %v2275
    %2809 = vmatpush1.bf16.msra.mxu0 %v2274
    %2810 = vmatprep.subr.bf16.mxu0 %v2283
    %2811 = vmatpush1.bf16.msra.mxu0 %v2282
    %2812 = vmatprep.subr.bf16.mxu0 %v2291
    %2813 = vmatpush1.bf16.msra.mxu0 %v2290
    %2814 = vmatprep.subr.bf16.mxu0 %v2299
    %2815 = vmatpush1.bf16.msra.mxu0 %v2298
    %2816 = vmatprep.subr.bf16.mxu0 %v2307
    %2817 = vmatpush1.bf16.msra.mxu0 %v2306
    %2818 = vmatprep.subr.bf16.mxu0 %v2315
    %2819 = vmatpush1.bf16.msra.mxu0 %v2314
    %2820 = vmatprep.mubr.bf16.mxu0 %v359
    %2821 = vmatmul.mubr.bf16.gmra.mrb[0].mxu0 %v358
    %v2822 = vpop.f32.mrb[0].mxu0
    %v2823 = vadd.f32 %v2782, %v2822
    %v2824 = vpop.f32.mrb[0].mxu0
    %v2825 = vadd.f32 %v2784, %v2824
    %v2826 = vpop.f32.mrb[0].mxu0
    %v2827 = vpop.f32.mrb[0].mxu0
    %2828 = vdwg.mxu0
    %2829 = vmatprep.subr.bf16.mxu0 %v1941
    %2830 = vmatpush1.bf16.msra.mxu0 %v1940
    %2831 = vmatprep.subr.bf16.mxu0 %v1949
    %2832 = vmatpush1.bf16.msra.mxu0 %v1948
    %2833 = vmatprep.subr.bf16.mxu0 %v1957
    %2834 = vmatpush1.bf16.msra.mxu0 %v1956
    %2835 = vmatprep.subr.bf16.mxu0 %v1965
    %2836 = vmatpush1.bf16.msra.mxu0 %v1964
    %2837 = vmatprep.subr.bf16.mxu0 %v1973
    %2838 = vmatpush1.bf16.msra.mxu0 %v1972
    %2839 = vmatprep.subr.bf16.mxu0 %v1981
    %2840 = vmatpush1.bf16.msra.mxu0 %v1980
    %2841 = vmatprep.subr.bf16.mxu0 %v1989
    %2842 = vmatpush1.bf16.msra.mxu0 %v1988
    %2843 = vmatprep.subr.bf16.mxu0 %v1997
    %2844 = vmatpush1.bf16.msra.mxu0 %v1996
    %2845 = vmatprep.subr.bf16.mxu0 %v2005
    %2846 = vmatpush1.bf16.msra.mxu0 %v2004
    %2847 = vmatprep.subr.bf16.mxu0 %v2013
    %2848 = vmatpush1.bf16.msra.mxu0 %v2012
    %2849 = vmatprep.subr.bf16.mxu0 %v2021
    %2850 = vmatpush1.bf16.msra.mxu0 %v2020
    %2851 = vmatprep.subr.bf16.mxu0 %v2029
    %2852 = vmatpush1.bf16.msra.mxu0 %v2028
    %2853 = vmatprep.subr.bf16.mxu0 %v2037
    %2854 = vmatpush1.bf16.msra.mxu0 %v2036
    %2855 = vmatprep.subr.bf16.mxu0 %v2045
    %2856 = vmatpush1.bf16.msra.mxu0 %v2044
    %2857 = vmatprep.subr.bf16.mxu0 %v2053
    %2858 = vmatpush1.bf16.msra.mxu0 %v2052
    %2859 = vmatprep.subr.bf16.mxu0 %v2061
    %2860 = vmatpush1.bf16.msra.mxu0 %v2060
    %2861 = vmatprep.mubr.bf16.mxu0 %v355
    %2862 = vmatmul.mubr.bf16.gmra.mrb[0].mxu0 %v354
    %v2863 = vpop.f32.mrb[0].mxu0
    %v2864 = vadd.f32 %v757, %v2863
    %v2865 = vpop.f32.mrb[0].mxu0
    %v2866 = vadd.f32 %v761, %v2865
    %v2867 = vpop.f32.mrb[0].mxu0
    %v2868 = vpop.f32.mrb[0].mxu0
    %2869 = vdwg.mxu0
    %2870 = vmatprep.subr.bf16.mxu0 %v2069
    %2871 = vmatpush1.bf16.msra.mxu0 %v2068
    %2872 = vmatprep.subr.bf16.mxu0 %v2077
    %2873 = vmatpush1.bf16.msra.mxu0 %v2076
    %2874 = vmatprep.subr.bf16.mxu0 %v2085
    %2875 = vmatpush1.bf16.msra.mxu0 %v2084
    %2876 = vmatprep.subr.bf16.mxu0 %v2093
    %2877 = vmatpush1.bf16.msra.mxu0 %v2092
    %2878 = vmatprep.subr.bf16.mxu0 %v2101
    %2879 = vmatpush1.bf16.msra.mxu0 %v2100
    %2880 = vmatprep.subr.bf16.mxu0 %v2109
    %2881 = vmatpush1.bf16.msra.mxu0 %v2108
    %2882 = vmatprep.subr.bf16.mxu0 %v2117
    %2883 = vmatpush1.bf16.msra.mxu0 %v2116
    %2884 = vmatprep.subr.bf16.mxu0 %v2125
    %2885 = vmatpush1.bf16.msra.mxu0 %v2124
    %2886 = vmatprep.subr.bf16.mxu0 %v2133
    %2887 = vmatpush1.bf16.msra.mxu0 %v2132
    %2888 = vmatprep.subr.bf16.mxu0 %v2141
    %2889 = vmatpush1.bf16.msra.mxu0 %v2140
    %2890 = vmatprep.subr.bf16.mxu0 %v2149
    %2891 = vmatpush1.bf16.msra.mxu0 %v2148
    %2892 = vmatprep.subr.bf16.mxu0 %v2157
    %2893 = vmatpush1.bf16.msra.mxu0 %v2156
    %2894 = vmatprep.subr.bf16.mxu0 %v2165
    %2895 = vmatpush1.bf16.msra.mxu0 %v2164
    %2896 = vmatprep.subr.bf16.mxu0 %v2173
    %2897 = vmatpush1.bf16.msra.mxu0 %v2172
    %2898 = vmatprep.subr.bf16.mxu0 %v2181
    %2899 = vmatpush1.bf16.msra.mxu0 %v2180
    %2900 = vmatprep.subr.bf16.mxu0 %v2189
    %2901 = vmatpush1.bf16.msra.mxu0 %v2188
    %2902 = vmatprep.mubr.bf16.mxu0 %v357
    %2903 = vmatmul.mubr.bf16.gmra.mrb[0].mxu0 %v356
    %v2904 = vpop.f32.mrb[0].mxu0
    %v2905 = vadd.f32 %v2864, %v2904
    %v2906 = vpop.f32.mrb[0].mxu0
    %v2907 = vadd.f32 %v2866, %v2906
    %v2908 = vpop.f32.mrb[0].mxu0
    %v2909 = vpop.f32.mrb[0].mxu0
    %2910 = vdwg.mxu0
    %2911 = vmatprep.subr.bf16.mxu0 %v2197
    %2912 = vmatpush1.bf16.msra.mxu0 %v2196
    %2913 = vmatprep.subr.bf16.mxu0 %v2205
    %2914 = vmatpush1.bf16.msra.mxu0 %v2204
    %2915 = vmatprep.subr.bf16.mxu0 %v2213
    %2916 = vmatpush1.bf16.msra.mxu0 %v2212
    %2917 = vmatprep.subr.bf16.mxu0 %v2221
    %2918 = vmatpush1.bf16.msra.mxu0 %v2220
    %2919 = vmatprep.subr.bf16.mxu0 %v2229
    %2920 = vmatpush1.bf16.msra.mxu0 %v2228
    %2921 = vmatprep.subr.bf16.mxu0 %v2237
    %2922 = vmatpush1.bf16.msra.mxu0 %v2236
    %2923 = vmatprep.subr.bf16.mxu0 %v2245
    %2924 = vmatpush1.bf16.msra.mxu0 %v2244
    %2925 = vmatprep.subr.bf16.mxu0 %v2253
    %2926 = vmatpush1.bf16.msra.mxu0 %v2252
    %2927 = vmatprep.subr.bf16.mxu0 %v2261
    %2928 = vmatpush1.bf16.msra.mxu0 %v2260
    %2929 = vmatprep.subr.bf16.mxu0 %v2269
    %2930 = vmatpush1.bf16.msra.mxu0 %v2268
    %2931 = vmatprep.subr.bf16.mxu0 %v2277
    %2932 = vmatpush1.bf16.msra.mxu0 %v2276
    %2933 = vmatprep.subr.bf16.mxu0 %v2285
    %2934 = vmatpush1.bf16.msra.mxu0 %v2284
    %2935 = vmatprep.subr.bf16.mxu0 %v2293
    %2936 = vmatpush1.bf16.msra.mxu0 %v2292
    %2937 = vmatprep.subr.bf16.mxu0 %v2301
    %2938 = vmatpush1.bf16.msra.mxu0 %v2300
    %2939 = vmatprep.subr.bf16.mxu0 %v2309
    %2940 = vmatpush1.bf16.msra.mxu0 %v2308
    %2941 = vmatprep.subr.bf16.mxu0 %v2317
    %2942 = vmatpush1.bf16.msra.mxu0 %v2316
    %2943 = vmatprep.mubr.bf16.mxu0 %v359
    %2944 = vmatmul.mubr.bf16.gmra.mrb[0].mxu0 %v358
    %v2945 = vpop.f32.mrb[0].mxu0
    %v2946 = vadd.f32 %v2905, %v2945
    %v2947 = vpop.f32.mrb[0].mxu0
    %v2948 = vadd.f32 %v2907, %v2947
    %v2949 = vpop.f32.mrb[0].mxu0
    %v2950 = vpop.f32.mrb[0].mxu0
    %2951 = vdwg.mxu0
    %2952 = vmatprep.subr.bf16.mxu0 %v1943
    %2953 = vmatpush1.bf16.msra.mxu0 %v1942
    %2954 = vmatprep.subr.bf16.mxu0 %v1951
    %2955 = vmatpush1.bf16.msra.mxu0 %v1950
    %2956 = vmatprep.subr.bf16.mxu0 %v1959
    %2957 = vmatpush1.bf16.msra.mxu0 %v1958
    %2958 = vmatprep.subr.bf16.mxu0 %v1967
    %2959 = vmatpush1.bf16.msra.mxu0 %v1966
    %2960 = vmatprep.subr.bf16.mxu0 %v1975
    %2961 = vmatpush1.bf16.msra.mxu0 %v1974
    %2962 = vmatprep.subr.bf16.mxu0 %v1983
    %2963 = vmatpush1.bf16.msra.mxu0 %v1982
    %2964 = vmatprep.subr.bf16.mxu0 %v1991
    %2965 = vmatpush1.bf16.msra.mxu0 %v1990
    %2966 = vmatprep.subr.bf16.mxu0 %v1999
    %2967 = vmatpush1.bf16.msra.mxu0 %v1998
    %2968 = vmatprep.subr.bf16.mxu0 %v2007
    %2969 = vmatpush1.bf16.msra.mxu0 %v2006
    %2970 = vmatprep.subr.bf16.mxu0 %v2015
    %2971 = vmatpush1.bf16.msra.mxu0 %v2014
    %2972 = vmatprep.subr.bf16.mxu0 %v2023
    %2973 = vmatpush1.bf16.msra.mxu0 %v2022
    %2974 = vmatprep.subr.bf16.mxu0 %v2031
    %2975 = vmatpush1.bf16.msra.mxu0 %v2030
    %2976 = vmatprep.subr.bf16.mxu0 %v2039
    %2977 = vmatpush1.bf16.msra.mxu0 %v2038
    %2978 = vmatprep.subr.bf16.mxu0 %v2047
    %2979 = vmatpush1.bf16.msra.mxu0 %v2046
    %2980 = vmatprep.subr.bf16.mxu0 %v2055
    %2981 = vmatpush1.bf16.msra.mxu0 %v2054
    %2982 = vmatprep.subr.bf16.mxu0 %v2063
    %2983 = vmatpush1.bf16.msra.mxu0 %v2062
    %2984 = vmatprep.mubr.bf16.mxu0 %v355
    %2985 = vmatmul.mubr.bf16.gmra.mrb[0].mxu0 %v354
    %v2986 = vpop.f32.mrb[0].mxu0
    %v2987 = vadd.f32 %v765, %v2986
    %v2988 = vpop.f32.mrb[0].mxu0
    %v2989 = vadd.f32 %v769, %v2988
    %v2990 = vpop.f32.mrb[0].mxu0
    %v2991 = vpop.f32.mrb[0].mxu0
    %2992 = vdwg.mxu0
    %2993 = vmatprep.subr.bf16.mxu0 %v2071
    %2994 = vmatpush1.bf16.msra.mxu0 %v2070
    %2995 = vmatprep.subr.bf16.mxu0 %v2079
    %2996 = vmatpush1.bf16.msra.mxu0 %v2078
    %2997 = vmatprep.subr.bf16.mxu0 %v2087
    %2998 = vmatpush1.bf16.msra.mxu0 %v2086
    %2999 = vmatprep.subr.bf16.mxu0 %v2095
    %3000 = vmatpush1.bf16.msra.mxu0 %v2094
    %3001 = vmatprep.subr.bf16.mxu0 %v2103
    %3002 = vmatpush1.bf16.msra.mxu0 %v2102
    %3003 = vmatprep.subr.bf16.mxu0 %v2111
    %3004 = vmatpush1.bf16.msra.mxu0 %v2110
    %3005 = vmatprep.subr.bf16.mxu0 %v2119
    %3006 = vmatpush1.bf16.msra.mxu0 %v2118
    %3007 = vmatprep.subr.bf16.mxu0 %v2127
    %3008 = vmatpush1.bf16.msra.mxu0 %v2126
    %3009 = vmatprep.subr.bf16.mxu0 %v2135
    %3010 = vmatpush1.bf16.msra.mxu0 %v2134
    %3011 = vmatprep.subr.bf16.mxu0 %v2143
    %3012 = vmatpush1.bf16.msra.mxu0 %v2142
    %3013 = vmatprep.subr.bf16.mxu0 %v2151
    %3014 = vmatpush1.bf16.msra.mxu0 %v2150
    %3015 = vmatprep.subr.bf16.mxu0 %v2159
    %3016 = vmatpush1.bf16.msra.mxu0 %v2158
    %3017 = vmatprep.subr.bf16.mxu0 %v2167
    %3018 = vmatpush1.bf16.msra.mxu0 %v2166
    %3019 = vmatprep.subr.bf16.mxu0 %v2175
    %3020 = vmatpush1.bf16.msra.mxu0 %v2174
    %3021 = vmatprep.subr.bf16.mxu0 %v2183
    %3022 = vmatpush1.bf16.msra.mxu0 %v2182
    %3023 = vmatprep.subr.bf16.mxu0 %v2191
    %3024 = vmatpush1.bf16.msra.mxu0 %v2190
    %3025 = vmatprep.mubr.bf16.mxu0 %v357
    %3026 = vmatmul.mubr.bf16.gmra.mrb[0].mxu0 %v356
    %v3027 = vpop.f32.mrb[0].mxu0
    %v3028 = vadd.f32 %v2987, %v3027
    %v3029 = vpop.f32.mrb[0].mxu0
    %v3030 = vadd.f32 %v2989, %v3029
    %v3031 = vpop.f32.mrb[0].mxu0
    %v3032 = vpop.f32.mrb[0].mxu0
    %3033 = vdwg.mxu0
    %3034 = vmatprep.subr.bf16.mxu0 %v2199
    %3035 = vmatpush1.bf16.msra.mxu0 %v2198
    %3036 = vmatprep.subr.bf16.mxu0 %v2207
    %3037 = vmatpush1.bf16.msra.mxu0 %v2206
    %3038 = vmatprep.subr.bf16.mxu0 %v2215
    %3039 = vmatpush1.bf16.msra.mxu0 %v2214
    %3040 = vmatprep.subr.bf16.mxu0 %v2223
    %3041 = vmatpush1.bf16.msra.mxu0 %v2222
    %3042 = vmatprep.subr.bf16.mxu0 %v2231
    %3043 = vmatpush1.bf16.msra.mxu0 %v2230
    %3044 = vmatprep.subr.bf16.mxu0 %v2239
    %3045 = vmatpush1.bf16.msra.mxu0 %v2238
    %3046 = vmatprep.subr.bf16.mxu0 %v2247
    %3047 = vmatpush1.bf16.msra.mxu0 %v2246
    %3048 = vmatprep.subr.bf16.mxu0 %v2255
    %3049 = vmatpush1.bf16.msra.mxu0 %v2254
    %3050 = vmatprep.subr.bf16.mxu0 %v2263
    %3051 = vmatpush1.bf16.msra.mxu0 %v2262
    %3052 = vmatprep.subr.bf16.mxu0 %v2271
    %3053 = vmatpush1.bf16.msra.mxu0 %v2270
    %3054 = vmatprep.subr.bf16.mxu0 %v2279
    %3055 = vmatpush1.bf16.msra.mxu0 %v2278
    %3056 = vmatprep.subr.bf16.mxu0 %v2287
    %3057 = vmatpush1.bf16.msra.mxu0 %v2286
    %3058 = vmatprep.subr.bf16.mxu0 %v2295
    %3059 = vmatpush1.bf16.msra.mxu0 %v2294
    %3060 = vmatprep.subr.bf16.mxu0 %v2303
    %3061 = vmatpush1.bf16.msra.mxu0 %v2302
    %3062 = vmatprep.subr.bf16.mxu0 %v2311
    %3063 = vmatpush1.bf16.msra.mxu0 %v2310
    %3064 = vmatprep.subr.bf16.mxu0 %v2319
    %3065 = vmatpush1.bf16.msra.mxu0 %v2318
    %3066 = vmatprep.mubr.bf16.mxu0 %v359
    %3067 = vmatmul.mubr.bf16.gmra.mrb[0].mxu0 %v358
    %v3068 = vpop.f32.mrb[0].mxu0
    %v3069 = vadd.f32 %v3028, %v3068
    %v3070 = vpop.f32.mrb[0].mxu0
    %v3071 = vadd.f32 %v3030, %v3070
    %v3072 = vpop.f32.mrb[0].mxu0
    %v3073 = vpop.f32.mrb[0].mxu0
    %3074 = vdwg.mxu0
    %3075 = vmatprep.subr.bf16.mxu0 %v1945
    %3076 = vmatpush1.bf16.msra.mxu0 %v1944
    %3077 = vmatprep.subr.bf16.mxu0 %v1953
    %3078 = vmatpush1.bf16.msra.mxu0 %v1952
    %3079 = vmatprep.subr.bf16.mxu0 %v1961
    %3080 = vmatpush1.bf16.msra.mxu0 %v1960
    %3081 = vmatprep.subr.bf16.mxu0 %v1969
    %3082 = vmatpush1.bf16.msra.mxu0 %v1968
    %3083 = vmatprep.subr.bf16.mxu0 %v1977
    %3084 = vmatpush1.bf16.msra.mxu0 %v1976
    %3085 = vmatprep.subr.bf16.mxu0 %v1985
    %3086 = vmatpush1.bf16.msra.mxu0 %v1984
    %3087 = vmatprep.subr.bf16.mxu0 %v1993
    %3088 = vmatpush1.bf16.msra.mxu0 %v1992
    %3089 = vmatprep.subr.bf16.mxu0 %v2001
    %3090 = vmatpush1.bf16.msra.mxu0 %v2000
    %3091 = vmatprep.subr.bf16.mxu0 %v2009
    %3092 = vmatpush1.bf16.msra.mxu0 %v2008
    %3093 = vmatprep.subr.bf16.mxu0 %v2017
    %3094 = vmatpush1.bf16.msra.mxu0 %v2016
    %3095 = vmatprep.subr.bf16.mxu0 %v2025
    %3096 = vmatpush1.bf16.msra.mxu0 %v2024
    %3097 = vmatprep.subr.bf16.mxu0 %v2033
    %3098 = vmatpush1.bf16.msra.mxu0 %v2032
    %3099 = vmatprep.subr.bf16.mxu0 %v2041
    %3100 = vmatpush1.bf16.msra.mxu0 %v2040
    %3101 = vmatprep.subr.bf16.mxu0 %v2049
    %3102 = vmatpush1.bf16.msra.mxu0 %v2048
    %3103 = vmatprep.subr.bf16.mxu0 %v2057
    %3104 = vmatpush1.bf16.msra.mxu0 %v2056
    %3105 = vmatprep.subr.bf16.mxu0 %v2065
    %3106 = vmatpush1.bf16.msra.mxu0 %v2064
    %3107 = vmatprep.mubr.bf16.mxu0 %v355
    %3108 = vmatmul.mubr.bf16.gmra.mrb[0].mxu0 %v354
    %v3109 = vpop.f32.mrb[0].mxu0
    %v3110 = vadd.f32 %v773, %v3109
    %v3111 = vpop.f32.mrb[0].mxu0
    %v3112 = vadd.f32 %v777, %v3111
    %v3113 = vpop.f32.mrb[0].mxu0
    %v3114 = vpop.f32.mrb[0].mxu0
    %3115 = vdwg.mxu0
    %3116 = vmatprep.subr.bf16.mxu0 %v2073
    %3117 = vmatpush1.bf16.msra.mxu0 %v2072
    %3118 = vmatprep.subr.bf16.mxu0 %v2081
    %3119 = vmatpush1.bf16.msra.mxu0 %v2080
    %3120 = vmatprep.subr.bf16.mxu0 %v2089
    %3121 = vmatpush1.bf16.msra.mxu0 %v2088
    %3122 = vmatprep.subr.bf16.mxu0 %v2097
    %3123 = vmatpush1.bf16.msra.mxu0 %v2096
    %3124 = vmatprep.subr.bf16.mxu0 %v2105
    %3125 = vmatpush1.bf16.msra.mxu0 %v2104
    %3126 = vmatprep.subr.bf16.mxu0 %v2113
    %3127 = vmatpush1.bf16.msra.mxu0 %v2112
    %3128 = vmatprep.subr.bf16.mxu0 %v2121
    %3129 = vmatpush1.bf16.msra.mxu0 %v2120
    %3130 = vmatprep.subr.bf16.mxu0 %v2129
    %3131 = vmatpush1.bf16.msra.mxu0 %v2128
    %3132 = vmatprep.subr.bf16.mxu0 %v2137
    %3133 = vmatpush1.bf16.msra.mxu0 %v2136
    %3134 = vmatprep.subr.bf16.mxu0 %v2145
    %3135 = vmatpush1.bf16.msra.mxu0 %v2144
    %3136 = vmatprep.subr.bf16.mxu0 %v2153
    %3137 = vmatpush1.bf16.msra.mxu0 %v2152
    %3138 = vmatprep.subr.bf16.mxu0 %v2161
    %3139 = vmatpush1.bf16.msra.mxu0 %v2160
    %3140 = vmatprep.subr.bf16.mxu0 %v2169
    %3141 = vmatpush1.bf16.msra.mxu0 %v2168
    %3142 = vmatprep.subr.bf16.mxu0 %v2177
    %3143 = vmatpush1.bf16.msra.mxu0 %v2176
    %3144 = vmatprep.subr.bf16.mxu0 %v2185
    %3145 = vmatpush1.bf16.msra.mxu0 %v2184
    %3146 = vmatprep.subr.bf16.mxu0 %v2193
    %3147 = vmatpush1.bf16.msra.mxu0 %v2192
    %3148 = vmatprep.mubr.bf16.mxu0 %v357
    %3149 = vmatmul.mubr.bf16.gmra.mrb[0].mxu0 %v356
    %v3150 = vpop.f32.mrb[0].mxu0
    %v3151 = vadd.f32 %v3110, %v3150
    %v3152 = vpop.f32.mrb[0].mxu0
    %v3153 = vadd.f32 %v3112, %v3152
    %v3154 = vpop.f32.mrb[0].mxu0
    %v3155 = vpop.f32.mrb[0].mxu0
    %3156 = vdwg.mxu0
    %3157 = vmatprep.subr.bf16.mxu0 %v2201
    %3158 = vmatpush1.bf16.msra.mxu0 %v2200
    %3159 = vmatprep.subr.bf16.mxu0 %v2209
    %3160 = vmatpush1.bf16.msra.mxu0 %v2208
    %3161 = vmatprep.subr.bf16.mxu0 %v2217
    %3162 = vmatpush1.bf16.msra.mxu0 %v2216
    %3163 = vmatprep.subr.bf16.mxu0 %v2225
    %3164 = vmatpush1.bf16.msra.mxu0 %v2224
    %3165 = vmatprep.subr.bf16.mxu0 %v2233
    %3166 = vmatpush1.bf16.msra.mxu0 %v2232
    %3167 = vmatprep.subr.bf16.mxu0 %v2241
    %3168 = vmatpush1.bf16.msra.mxu0 %v2240
    %3169 = vmatprep.subr.bf16.mxu0 %v2249
    %3170 = vmatpush1.bf16.msra.mxu0 %v2248
    %3171 = vmatprep.subr.bf16.mxu0 %v2257
    %3172 = vmatpush1.bf16.msra.mxu0 %v2256
    %3173 = vmatprep.subr.bf16.mxu0 %v2265
    %3174 = vmatpush1.bf16.msra.mxu0 %v2264
    %3175 = vmatprep.subr.bf16.mxu0 %v2273
    %3176 = vmatpush1.bf16.msra.mxu0 %v2272
    %3177 = vmatprep.subr.bf16.mxu0 %v2281
    %3178 = vmatpush1.bf16.msra.mxu0 %v2280
    %3179 = vmatprep.subr.bf16.mxu0 %v2289
    %3180 = vmatpush1.bf16.msra.mxu0 %v2288
    %3181 = vmatprep.subr.bf16.mxu0 %v2297
    %3182 = vmatpush1.bf16.msra.mxu0 %v2296
    %3183 = vmatprep.subr.bf16.mxu0 %v2305
    %3184 = vmatpush1.bf16.msra.mxu0 %v2304
    %3185 = vmatprep.subr.bf16.mxu0 %v2313
    %3186 = vmatpush1.bf16.msra.mxu0 %v2312
    %3187 = vmatprep.subr.bf16.mxu0 %v2321
    %3188 = vmatpush1.bf16.msra.mxu0 %v2320
    %3189 = vmatprep.mubr.bf16.mxu0 %v359
    %3190 = vmatmul.mubr.bf16.gmra.mrb[0].mxu0 %v358
    %v3191 = vpop.f32.mrb[0].mxu0
    %v3192 = vadd.f32 %v3151, %v3191
    %v3193 = vpop.f32.mrb[0].mxu0
    %v3194 = vadd.f32 %v3153, %v3193
    %v3195 = vpop.f32.mrb[0].mxu0
    %v3196 = vpop.f32.mrb[0].mxu0
    %3197 = vdwg.mxu0
    %v3198 = vmax.f32 %v2823, 0.0
    %v3199 = vmax.f32 %v2825, 0.0
    %v3200 = vmax.f32 %v2946, 0.0
    %v3201 = vmax.f32 %v2948, 0.0
    %v3202 = vmax.f32 %v3069, 0.0
    %v3203 = vmax.f32 %v3071, 0.0
    %v3204 = vmax.f32 %v3192, 0.0
    %v3205 = vmax.f32 %v3194, 0.0
    %v3206 = vpack.c.bf16 %v3198, %v3198
    %v3207 = vpack.c.bf16 %v3199, %v3199
    %v3208 = vpack.c.bf16 %v3200, %v3200
    %v3209 = vpack.c.bf16 %v3201, %v3201
    %v3210 = vpack.c.bf16 %v3202, %v3202
    %v3211 = vpack.c.bf16 %v3203, %v3203
    %v3212 = vpack.c.bf16 %v3204, %v3204
    %v3213 = vpack.c.bf16 %v3205, %v3205
    %v3214 = vld [vmem:[#allocation11] sm:$0xf]
    %v3215 = vld [vmem:[#allocation11 + $0x4] sm:$0xf]
    %v3216 = vld [vmem:[#allocation11 + $0x8] sm:$0xf]
    %v3217 = vld [vmem:[#allocation11 + $0xc] sm:$0xf]
    %v3218 = vld [vmem:[#allocation11 + $0x10] sm:$0xf]
    %v3219 = vld [vmem:[#allocation11 + $0x14] sm:$0xf]
    %v3220 = vld [vmem:[#allocation11 + $0x18] sm:$0xf]
    %v3221 = vld [vmem:[#allocation11 + $0x1c] sm:$0xf]
    %v3222 = vld [vmem:[#allocation11 + $0x20] sm:$0xf]
    %v3223 = vld [vmem:[#allocation11 + $0x24] sm:$0xf]
    %v3224 = vld [vmem:[#allocation11 + $0x28] sm:$0xf]
    %v3225 = vld [vmem:[#allocation11 + $0x2c] sm:$0xf]
    %v3226 = vld [vmem:[#allocation11 + $0x30] sm:$0xf]
    %v3227 = vld [vmem:[#allocation11 + $0x34] sm:$0xf]
    %v3228 = vld [vmem:[#allocation11 + $0x38] sm:$0xf]
    %v3229 = vld [vmem:[#allocation11 + $0x3c] sm:$0xf]
    %v3230 = vld [vmem:[#allocation11 + $0x40] sm:$0xf]
    %v3231 = vld [vmem:[#allocation11 + $0x44] sm:$0xf]
    %v3232 = vld [vmem:[#allocation11 + $0x48] sm:$0xf]
    %v3233 = vld [vmem:[#allocation11 + $0x4c] sm:$0xf]
    %v3234 = vld [vmem:[#allocation11 + $0x50] sm:$0xf]
    %v3235 = vld [vmem:[#allocation11 + $0x54] sm:$0xf]
    %v3236 = vld [vmem:[#allocation11 + $0x58] sm:$0xf]
    %v3237 = vld [vmem:[#allocation11 + $0x5c] sm:$0xf]
    %v3238 = vld [vmem:[#allocation11 + $0x60] sm:$0xf]
    %v3239 = vld [vmem:[#allocation11 + $0x64] sm:$0xf]
    %v3240 = vld [vmem:[#allocation11 + $0x68] sm:$0xf]
    %v3241 = vld [vmem:[#allocation11 + $0x6c] sm:$0xf]
    %v3242 = vld [vmem:[#allocation11 + $0x70] sm:$0xf]
    %v3243 = vld [vmem:[#allocation11 + $0x74] sm:$0xf]
    %v3244 = vld [vmem:[#allocation11 + $0x78] sm:$0xf]
    %v3245 = vld [vmem:[#allocation11 + $0x7c] sm:$0xf]
    %v3246 = vld [vmem:[#allocation11 + $0x80] sm:$0xf]
    %v3247 = vld [vmem:[#allocation11 + $0x84] sm:$0xf]
    %v3248 = vld [vmem:[#allocation11 + $0x88] sm:$0xf]
    %v3249 = vld [vmem:[#allocation11 + $0x8c] sm:$0xf]
    %v3250 = vld [vmem:[#allocation11 + $0x90] sm:$0xf]
    %v3251 = vld [vmem:[#allocation11 + $0x94] sm:$0xf]
    %v3252 = vld [vmem:[#allocation11 + $0x98] sm:$0xf]
    %v3253 = vld [vmem:[#allocation11 + $0x9c] sm:$0xf]
    %v3254 = vld [vmem:[#allocation11 + $0xa0] sm:$0xf]
    %v3255 = vld [vmem:[#allocation11 + $0xa4] sm:$0xf]
    %v3256 = vld [vmem:[#allocation11 + $0xa8] sm:$0xf]
    %v3257 = vld [vmem:[#allocation11 + $0xac] sm:$0xf]
    %v3258 = vld [vmem:[#allocation11 + $0xb0] sm:$0xf]
    %v3259 = vld [vmem:[#allocation11 + $0xb4] sm:$0xf]
    %v3260 = vld [vmem:[#allocation11 + $0xb8] sm:$0xf]
    %v3261 = vld [vmem:[#allocation11 + $0xbc] sm:$0xf]
    %v3262 = vld [vmem:[#allocation11 + $0xc0] sm:$0xf]
    %v3263 = vld [vmem:[#allocation11 + $0xc4] sm:$0xf]
    %v3264 = vld [vmem:[#allocation11 + $0xc8] sm:$0xf]
    %v3265 = vld [vmem:[#allocation11 + $0xcc] sm:$0xf]
    %v3266 = vld [vmem:[#allocation11 + $0xd0] sm:$0xf]
    %v3267 = vld [vmem:[#allocation11 + $0xd4] sm:$0xf]
    %v3268 = vld [vmem:[#allocation11 + $0xd8] sm:$0xf]
    %v3269 = vld [vmem:[#allocation11 + $0xdc] sm:$0xf]
    %v3270 = vld [vmem:[#allocation11 + $0xe0] sm:$0xf]
    %v3271 = vld [vmem:[#allocation11 + $0xe4] sm:$0xf]
    %v3272 = vld [vmem:[#allocation11 + $0xe8] sm:$0xf]
    %v3273 = vld [vmem:[#allocation11 + $0xec] sm:$0xf]
    %v3274 = vld [vmem:[#allocation11 + $0xf0] sm:$0xf]
    %v3275 = vld [vmem:[#allocation11 + $0xf4] sm:$0xf]
    %v3276 = vld [vmem:[#allocation11 + $0xf8] sm:$0xf]
    %v3277 = vld [vmem:[#allocation11 + $0xfc] sm:$0xf]
    %v3278 = vld [vmem:[#allocation11 + $0x100] sm:$0xf]
    %v3279 = vld [vmem:[#allocation11 + $0x104] sm:$0xf]
    %v3280 = vld [vmem:[#allocation11 + $0x108] sm:$0xf]
    %v3281 = vld [vmem:[#allocation11 + $0x10c] sm:$0xf]
    %v3282 = vld [vmem:[#allocation11 + $0x110] sm:$0xf]
    %v3283 = vld [vmem:[#allocation11 + $0x114] sm:$0xf]
    %v3284 = vld [vmem:[#allocation11 + $0x118] sm:$0xf]
    %v3285 = vld [vmem:[#allocation11 + $0x11c] sm:$0xf]
    %v3286 = vld [vmem:[#allocation11 + $0x120] sm:$0xf]
    %v3287 = vld [vmem:[#allocation11 + $0x124] sm:$0xf]
    %v3288 = vld [vmem:[#allocation11 + $0x128] sm:$0xf]
    %v3289 = vld [vmem:[#allocation11 + $0x12c] sm:$0xf]
    %v3290 = vld [vmem:[#allocation11 + $0x130] sm:$0xf]
    %v3291 = vld [vmem:[#allocation11 + $0x134] sm:$0xf]
    %v3292 = vld [vmem:[#allocation11 + $0x138] sm:$0xf]
    %v3293 = vld [vmem:[#allocation11 + $0x13c] sm:$0xf]
    %v3294 = vld [vmem:[#allocation11 + $0x140] sm:$0xf]
    %v3295 = vld [vmem:[#allocation11 + $0x144] sm:$0xf]
    %v3296 = vld [vmem:[#allocation11 + $0x148] sm:$0xf]
    %v3297 = vld [vmem:[#allocation11 + $0x14c] sm:$0xf]
    %v3298 = vld [vmem:[#allocation11 + $0x150] sm:$0xf]
    %v3299 = vld [vmem:[#allocation11 + $0x154] sm:$0xf]
    %v3300 = vld [vmem:[#allocation11 + $0x158] sm:$0xf]
    %v3301 = vld [vmem:[#allocation11 + $0x15c] sm:$0xf]
    %v3302 = vld [vmem:[#allocation11 + $0x160] sm:$0xf]
    %v3303 = vld [vmem:[#allocation11 + $0x164] sm:$0xf]
    %v3304 = vld [vmem:[#allocation11 + $0x168] sm:$0xf]
    %v3305 = vld [vmem:[#allocation11 + $0x16c] sm:$0xf]
    %v3306 = vld [vmem:[#allocation11 + $0x170] sm:$0xf]
    %v3307 = vld [vmem:[#allocation11 + $0x174] sm:$0xf]
    %v3308 = vld [vmem:[#allocation11 + $0x178] sm:$0xf]
    %v3309 = vld [vmem:[#allocation11 + $0x17c] sm:$0xf]
    %v3310 = vld [vmem:[#allocation11 + $0x180] sm:$0xf]
    %v3311 = vld [vmem:[#allocation11 + $0x184] sm:$0xf]
    %v3312 = vld [vmem:[#allocation11 + $0x188] sm:$0xf]
    %v3313 = vld [vmem:[#allocation11 + $0x18c] sm:$0xf]
    %v3314 = vld [vmem:[#allocation11 + $0x190] sm:$0xf]
    %v3315 = vld [vmem:[#allocation11 + $0x194] sm:$0xf]
    %v3316 = vld [vmem:[#allocation11 + $0x198] sm:$0xf]
    %v3317 = vld [vmem:[#allocation11 + $0x19c] sm:$0xf]
    %v3318 = vld [vmem:[#allocation11 + $0x1a0] sm:$0xf]
    %v3319 = vld [vmem:[#allocation11 + $0x1a4] sm:$0xf]
    %v3320 = vld [vmem:[#allocation11 + $0x1a8] sm:$0xf]
    %v3321 = vld [vmem:[#allocation11 + $0x1ac] sm:$0xf]
    %v3322 = vld [vmem:[#allocation11 + $0x1b0] sm:$0xf]
    %v3323 = vld [vmem:[#allocation11 + $0x1b4] sm:$0xf]
    %v3324 = vld [vmem:[#allocation11 + $0x1b8] sm:$0xf]
    %v3325 = vld [vmem:[#allocation11 + $0x1bc] sm:$0xf]
    %v3326 = vld [vmem:[#allocation11 + $0x1c0] sm:$0xf]
    %v3327 = vld [vmem:[#allocation11 + $0x1c4] sm:$0xf]
    %v3328 = vld [vmem:[#allocation11 + $0x1c8] sm:$0xf]
    %v3329 = vld [vmem:[#allocation11 + $0x1cc] sm:$0xf]
    %v3330 = vld [vmem:[#allocation11 + $0x1d0] sm:$0xf]
    %v3331 = vld [vmem:[#allocation11 + $0x1d4] sm:$0xf]
    %v3332 = vld [vmem:[#allocation11 + $0x1d8] sm:$0xf]
    %v3333 = vld [vmem:[#allocation11 + $0x1dc] sm:$0xf]
    %v3334 = vld [vmem:[#allocation11 + $0x1e0] sm:$0xf]
    %v3335 = vld [vmem:[#allocation11 + $0x1e4] sm:$0xf]
    %v3336 = vld [vmem:[#allocation11 + $0x1e8] sm:$0xf]
    %v3337 = vld [vmem:[#allocation11 + $0x1ec] sm:$0xf]
    %v3338 = vld [vmem:[#allocation11 + $0x1f0] sm:$0xf]
    %v3339 = vld [vmem:[#allocation11 + $0x1f4] sm:$0xf]
    %v3340 = vld [vmem:[#allocation11 + $0x1f8] sm:$0xf]
    %v3341 = vld [vmem:[#allocation11 + $0x1fc] sm:$0xf]
    %v3342 = vld [vmem:[#allocation13] sm:$0x1]
    %v3344 = vlaneseq
    %v3345 = vshrl.u32 %v3344, 7
    %v3346 = vsub.s32 0, %v3345
    %v3347 = vrot.slane %v3342, %v3346
    %v3477 = vunpack.c.l.b16 %v3214
    %v3478 = vunpack.c.l.b16 %v3215
    %v3479 = vunpack.c.l.b16 %v3216
    %v3480 = vunpack.c.l.b16 %v3217
    %v3481 = vunpack.c.l.b16 %v3218
    %v3482 = vunpack.c.l.b16 %v3219
    %v3483 = vunpack.c.l.b16 %v3220
    %v3484 = vunpack.c.l.b16 %v3221
    %v3485 = vunpack.c.l.b16 %v3222
    %v3486 = vunpack.c.l.b16 %v3223
    %v3487 = vunpack.c.l.b16 %v3224
    %v3488 = vunpack.c.l.b16 %v3225
    %v3489 = vunpack.c.l.b16 %v3226
    %v3490 = vunpack.c.l.b16 %v3227
    %v3491 = vunpack.c.l.b16 %v3228
    %v3492 = vunpack.c.l.b16 %v3229
    %v3493 = vunpack.c.l.b16 %v3230
    %v3494 = vunpack.c.l.b16 %v3231
    %v3495 = vunpack.c.l.b16 %v3232
    %v3496 = vunpack.c.l.b16 %v3233
    %v3497 = vunpack.c.l.b16 %v3234
    %v3498 = vunpack.c.l.b16 %v3235
    %v3499 = vunpack.c.l.b16 %v3236
    %v3500 = vunpack.c.l.b16 %v3237
    %v3501 = vunpack.c.l.b16 %v3238
    %v3502 = vunpack.c.l.b16 %v3239
    %v3503 = vunpack.c.l.b16 %v3240
    %v3504 = vunpack.c.l.b16 %v3241
    %v3505 = vunpack.c.l.b16 %v3242
    %v3506 = vunpack.c.l.b16 %v3243
    %v3507 = vunpack.c.l.b16 %v3244
    %v3508 = vunpack.c.l.b16 %v3245
    %v3509 = vunpack.c.l.b16 %v3246
    %v3510 = vunpack.c.l.b16 %v3247
    %v3511 = vunpack.c.l.b16 %v3248
    %v3512 = vunpack.c.l.b16 %v3249
    %v3513 = vunpack.c.l.b16 %v3250
    %v3514 = vunpack.c.l.b16 %v3251
    %v3515 = vunpack.c.l.b16 %v3252
    %v3516 = vunpack.c.l.b16 %v3253
    %v3517 = vunpack.c.l.b16 %v3254
    %v3518 = vunpack.c.l.b16 %v3255
    %v3519 = vunpack.c.l.b16 %v3256
    %v3520 = vunpack.c.l.b16 %v3257
    %v3521 = vunpack.c.l.b16 %v3258
    %v3522 = vunpack.c.l.b16 %v3259
    %v3523 = vunpack.c.l.b16 %v3260
    %v3524 = vunpack.c.l.b16 %v3261
    %v3525 = vunpack.c.l.b16 %v3262
    %v3526 = vunpack.c.l.b16 %v3263
    %v3527 = vunpack.c.l.b16 %v3264
    %v3528 = vunpack.c.l.b16 %v3265
    %v3529 = vunpack.c.l.b16 %v3266
    %v3530 = vunpack.c.l.b16 %v3267
    %v3531 = vunpack.c.l.b16 %v3268
    %v3532 = vunpack.c.l.b16 %v3269
    %v3533 = vunpack.c.l.b16 %v3270
    %v3534 = vunpack.c.l.b16 %v3271
    %v3535 = vunpack.c.l.b16 %v3272
    %v3536 = vunpack.c.l.b16 %v3273
    %v3537 = vunpack.c.l.b16 %v3274
    %v3538 = vunpack.c.l.b16 %v3275
    %v3539 = vunpack.c.l.b16 %v3276
    %v3540 = vunpack.c.l.b16 %v3277
    %v3541 = vunpack.c.l.b16 %v3278
    %v3542 = vunpack.c.l.b16 %v3279
    %v3543 = vunpack.c.l.b16 %v3280
    %v3544 = vunpack.c.l.b16 %v3281
    %v3545 = vunpack.c.l.b16 %v3282
    %v3546 = vunpack.c.l.b16 %v3283
    %v3547 = vunpack.c.l.b16 %v3284
    %v3548 = vunpack.c.l.b16 %v3285
    %v3549 = vunpack.c.l.b16 %v3286
    %v3550 = vunpack.c.l.b16 %v3287
    %v3551 = vunpack.c.l.b16 %v3288
    %v3552 = vunpack.c.l.b16 %v3289
    %v3553 = vunpack.c.l.b16 %v3290
    %v3554 = vunpack.c.l.b16 %v3291
    %v3555 = vunpack.c.l.b16 %v3292
    %v3556 = vunpack.c.l.b16 %v3293
    %v3557 = vunpack.c.l.b16 %v3294
    %v3558 = vunpack.c.l.b16 %v3295
    %v3559 = vunpack.c.l.b16 %v3296
    %v3560 = vunpack.c.l.b16 %v3297
    %v3561 = vunpack.c.l.b16 %v3298
    %v3562 = vunpack.c.l.b16 %v3299
    %v3563 = vunpack.c.l.b16 %v3300
    %v3564 = vunpack.c.l.b16 %v3301
    %v3565 = vunpack.c.l.b16 %v3302
    %v3566 = vunpack.c.l.b16 %v3303
    %v3567 = vunpack.c.l.b16 %v3304
    %v3568 = vunpack.c.l.b16 %v3305
    %v3569 = vunpack.c.l.b16 %v3306
    %v3570 = vunpack.c.l.b16 %v3307
    %v3571 = vunpack.c.l.b16 %v3308
    %v3572 = vunpack.c.l.b16 %v3309
    %v3573 = vunpack.c.l.b16 %v3310
    %v3574 = vunpack.c.l.b16 %v3311
    %v3575 = vunpack.c.l.b16 %v3312
    %v3576 = vunpack.c.l.b16 %v3313
    %v3577 = vunpack.c.l.b16 %v3314
    %v3578 = vunpack.c.l.b16 %v3315
    %v3579 = vunpack.c.l.b16 %v3316
    %v3580 = vunpack.c.l.b16 %v3317
    %v3581 = vunpack.c.l.b16 %v3318
    %v3582 = vunpack.c.l.b16 %v3319
    %v3583 = vunpack.c.l.b16 %v3320
    %v3584 = vunpack.c.l.b16 %v3321
    %v3585 = vunpack.c.l.b16 %v3322
    %v3586 = vunpack.c.l.b16 %v3323
    %v3587 = vunpack.c.l.b16 %v3324
    %v3588 = vunpack.c.l.b16 %v3325
    %v3589 = vunpack.c.l.b16 %v3326
    %v3590 = vunpack.c.l.b16 %v3327
    %v3591 = vunpack.c.l.b16 %v3328
    %v3592 = vunpack.c.l.b16 %v3329
    %v3593 = vunpack.c.l.b16 %v3330
    %v3594 = vunpack.c.l.b16 %v3331
    %v3595 = vunpack.c.l.b16 %v3332
    %v3596 = vunpack.c.l.b16 %v3333
    %v3597 = vunpack.c.l.b16 %v3334
    %v3598 = vunpack.c.l.b16 %v3335
    %v3599 = vunpack.c.l.b16 %v3336
    %v3600 = vunpack.c.l.b16 %v3337
    %v3601 = vunpack.c.l.b16 %v3338
    %v3602 = vunpack.c.l.b16 %v3339
    %v3603 = vunpack.c.l.b16 %v3340
    %v3604 = vunpack.c.l.b16 %v3341
    %v3605 = vpack.c.b16 %v3478, %v3477
    %v3606 = vpack.c.b16 %v3480, %v3479
    %v3607 = vpack.c.b16 %v3482, %v3481
    %v3608 = vpack.c.b16 %v3484, %v3483
    %v3609 = vpack.c.b16 %v3486, %v3485
    %v3610 = vpack.c.b16 %v3488, %v3487
    %v3611 = vpack.c.b16 %v3490, %v3489
    %v3612 = vpack.c.b16 %v3492, %v3491
    %v3613 = vpack.c.b16 %v3494, %v3493
    %v3614 = vpack.c.b16 %v3496, %v3495
    %v3615 = vpack.c.b16 %v3498, %v3497
    %v3616 = vpack.c.b16 %v3500, %v3499
    %v3617 = vpack.c.b16 %v3502, %v3501
    %v3618 = vpack.c.b16 %v3504, %v3503
    %v3619 = vpack.c.b16 %v3506, %v3505
    %v3620 = vpack.c.b16 %v3508, %v3507
    %v3621 = vpack.c.b16 %v3510, %v3509
    %v3622 = vpack.c.b16 %v3512, %v3511
    %v3623 = vpack.c.b16 %v3514, %v3513
    %v3624 = vpack.c.b16 %v3516, %v3515
    %v3625 = vpack.c.b16 %v3518, %v3517
    %v3626 = vpack.c.b16 %v3520, %v3519
    %v3627 = vpack.c.b16 %v3522, %v3521
    %v3628 = vpack.c.b16 %v3524, %v3523
    %v3629 = vpack.c.b16 %v3526, %v3525
    %v3630 = vpack.c.b16 %v3528, %v3527
    %v3631 = vpack.c.b16 %v3530, %v3529
    %v3632 = vpack.c.b16 %v3532, %v3531
    %v3633 = vpack.c.b16 %v3534, %v3533
    %v3634 = vpack.c.b16 %v3536, %v3535
    %v3635 = vpack.c.b16 %v3538, %v3537
    %v3636 = vpack.c.b16 %v3540, %v3539
    %v3637 = vpack.c.b16 %v3542, %v3541
    %v3638 = vpack.c.b16 %v3544, %v3543
    %v3639 = vpack.c.b16 %v3546, %v3545
    %v3640 = vpack.c.b16 %v3548, %v3547
    %v3641 = vpack.c.b16 %v3550, %v3549
    %v3642 = vpack.c.b16 %v3552, %v3551
    %v3643 = vpack.c.b16 %v3554, %v3553
    %v3644 = vpack.c.b16 %v3556, %v3555
    %v3645 = vpack.c.b16 %v3558, %v3557
    %v3646 = vpack.c.b16 %v3560, %v3559
    %v3647 = vpack.c.b16 %v3562, %v3561
    %v3648 = vpack.c.b16 %v3564, %v3563
    %v3649 = vpack.c.b16 %v3566, %v3565
    %v3650 = vpack.c.b16 %v3568, %v3567
    %v3651 = vpack.c.b16 %v3570, %v3569
    %v3652 = vpack.c.b16 %v3572, %v3571
    %v3653 = vpack.c.b16 %v3574, %v3573
    %v3654 = vpack.c.b16 %v3576, %v3575
    %v3655 = vpack.c.b16 %v3578, %v3577
    %v3656 = vpack.c.b16 %v3580, %v3579
    %v3657 = vpack.c.b16 %v3582, %v3581
    %v3658 = vpack.c.b16 %v3584, %v3583
    %v3659 = vpack.c.b16 %v3586, %v3585
    %v3660 = vpack.c.b16 %v3588, %v3587
    %v3661 = vpack.c.b16 %v3590, %v3589
    %v3662 = vpack.c.b16 %v3592, %v3591
    %v3663 = vpack.c.b16 %v3594, %v3593
    %v3664 = vpack.c.b16 %v3596, %v3595
    %v3665 = vpack.c.b16 %v3598, %v3597
    %v3666 = vpack.c.b16 %v3600, %v3599
    %v3667 = vpack.c.b16 %v3602, %v3601
    %v3668 = vpack.c.b16 %v3604, %v3603
    %3733 = vmatprep.subr.bf16.mxu0 0
    %3734 = vmatpush1.bf16.msra.mxu0 %v3605
    %3735 = vmatprep.subr.bf16.mxu0 0
    %3736 = vmatpush1.bf16.msra.mxu0 %v3606
    %3737 = vmatprep.subr.bf16.mxu0 0
    %3738 = vmatpush1.bf16.msra.mxu0 %v3607
    %3739 = vmatprep.subr.bf16.mxu0 0
    %3740 = vmatpush1.bf16.msra.mxu0 %v3608
    %3741 = vmatprep.subr.bf16.mxu0 0
    %3742 = vmatpush1.bf16.msra.mxu0 %v3609
    %3743 = vmatprep.subr.bf16.mxu0 0
    %3744 = vmatpush1.bf16.msra.mxu0 %v3610
    %3745 = vmatprep.subr.bf16.mxu0 0
    %3746 = vmatpush1.bf16.msra.mxu0 %v3611
    %3747 = vmatprep.subr.bf16.mxu0 0
    %3748 = vmatpush1.bf16.msra.mxu0 %v3612
    %3749 = vmatprep.subr.bf16.mxu0 0
    %3750 = vmatpush1.bf16.msra.mxu0 %v3613
    %3751 = vmatprep.subr.bf16.mxu0 0
    %3752 = vmatpush1.bf16.msra.mxu0 %v3614
    %3753 = vmatprep.subr.bf16.mxu0 0
    %3754 = vmatpush1.bf16.msra.mxu0 %v3615
    %3755 = vmatprep.subr.bf16.mxu0 0
    %3756 = vmatpush1.bf16.msra.mxu0 %v3616
    %3757 = vmatprep.subr.bf16.mxu0 0
    %3758 = vmatpush1.bf16.msra.mxu0 %v3617
    %3759 = vmatprep.subr.bf16.mxu0 0
    %3760 = vmatpush1.bf16.msra.mxu0 %v3618
    %3761 = vmatprep.subr.bf16.mxu0 0
    %3762 = vmatpush1.bf16.msra.mxu0 %v3619
    %3763 = vmatprep.subr.bf16.mxu0 0
    %3764 = vmatpush1.bf16.msra.mxu0 %v3620
    %3765 = vmatprep.mubr.bf16.mxu0 %v3207
    %3766 = vmatmul.mubr.bf16.gmra.mrb[0].mxu0 %v3206
    %v3767 = vpop.f32.mrb[0].mxu0
    %v3768 = vadd.f32 %v3347, %v3767
    %v3769 = vpop.f32.mrb[0].mxu0
    %v3770 = vpop.f32.mrb[0].mxu0
    %v3771 = vpop.f32.mrb[0].mxu0
    %3772 = vdwg.mxu0
    %3773 = vmatprep.subr.bf16.mxu0 0
    %3774 = vmatpush1.bf16.msra.mxu0 %v3621
    %3775 = vmatprep.subr.bf16.mxu0 0
    %3776 = vmatpush1.bf16.msra.mxu0 %v3622
    %3777 = vmatprep.subr.bf16.mxu0 0
    %3778 = vmatpush1.bf16.msra.mxu0 %v3623
    %3779 = vmatprep.subr.bf16.mxu0 0
    %3780 = vmatpush1.bf16.msra.mxu0 %v3624
    %3781 = vmatprep.subr.bf16.mxu0 0
    %3782 = vmatpush1.bf16.msra.mxu0 %v3625
    %3783 = vmatprep.subr.bf16.mxu0 0
    %3784 = vmatpush1.bf16.msra.mxu0 %v3626
    %3785 = vmatprep.subr.bf16.mxu0 0
    %3786 = vmatpush1.bf16.msra.mxu0 %v3627
    %3787 = vmatprep.subr.bf16.mxu0 0
    %3788 = vmatpush1.bf16.msra.mxu0 %v3628
    %3789 = vmatprep.subr.bf16.mxu0 0
    %3790 = vmatpush1.bf16.msra.mxu0 %v3629
    %3791 = vmatprep.subr.bf16.mxu0 0
    %3792 = vmatpush1.bf16.msra.mxu0 %v3630
    %3793 = vmatprep.subr.bf16.mxu0 0
    %3794 = vmatpush1.bf16.msra.mxu0 %v3631
    %3795 = vmatprep.subr.bf16.mxu0 0
    %3796 = vmatpush1.bf16.msra.mxu0 %v3632
    %3797 = vmatprep.subr.bf16.mxu0 0
    %3798 = vmatpush1.bf16.msra.mxu0 %v3633
    %3799 = vmatprep.subr.bf16.mxu0 0
    %3800 = vmatpush1.bf16.msra.mxu0 %v3634
    %3801 = vmatprep.subr.bf16.mxu0 0
    %3802 = vmatpush1.bf16.msra.mxu0 %v3635
    %3803 = vmatprep.subr.bf16.mxu0 0
    %3804 = vmatpush1.bf16.msra.mxu0 %v3636
    %3805 = vmatprep.mubr.bf16.mxu0 %v3209
    %3806 = vmatmul.mubr.bf16.gmra.mrb[0].mxu0 %v3208
    %v3807 = vpop.f32.mrb[0].mxu0
    %v3808 = vadd.f32 %v3768, %v3807
    %v3809 = vpop.f32.mrb[0].mxu0
    %v3810 = vpop.f32.mrb[0].mxu0
    %v3811 = vpop.f32.mrb[0].mxu0
    %3812 = vdwg.mxu0
    %3813 = vmatprep.subr.bf16.mxu0 0
    %3814 = vmatpush1.bf16.msra.mxu0 %v3637
    %3815 = vmatprep.subr.bf16.mxu0 0
    %3816 = vmatpush1.bf16.msra.mxu0 %v3638
    %3817 = vmatprep.subr.bf16.mxu0 0
    %3818 = vmatpush1.bf16.msra.mxu0 %v3639
    %3819 = vmatprep.subr.bf16.mxu0 0
    %3820 = vmatpush1.bf16.msra.mxu0 %v3640
    %3821 = vmatprep.subr.bf16.mxu0 0
    %3822 = vmatpush1.bf16.msra.mxu0 %v3641
    %3823 = vmatprep.subr.bf16.mxu0 0
    %3824 = vmatpush1.bf16.msra.mxu0 %v3642
    %3825 = vmatprep.subr.bf16.mxu0 0
    %3826 = vmatpush1.bf16.msra.mxu0 %v3643
    %3827 = vmatprep.subr.bf16.mxu0 0
    %3828 = vmatpush1.bf16.msra.mxu0 %v3644
    %3829 = vmatprep.subr.bf16.mxu0 0
    %3830 = vmatpush1.bf16.msra.mxu0 %v3645
    %3831 = vmatprep.subr.bf16.mxu0 0
    %3832 = vmatpush1.bf16.msra.mxu0 %v3646
    %3833 = vmatprep.subr.bf16.mxu0 0
    %3834 = vmatpush1.bf16.msra.mxu0 %v3647
    %3835 = vmatprep.subr.bf16.mxu0 0
    %3836 = vmatpush1.bf16.msra.mxu0 %v3648
    %3837 = vmatprep.subr.bf16.mxu0 0
    %3838 = vmatpush1.bf16.msra.mxu0 %v3649
    %3839 = vmatprep.subr.bf16.mxu0 0
    %3840 = vmatpush1.bf16.msra.mxu0 %v3650
    %3841 = vmatprep.subr.bf16.mxu0 0
    %3842 = vmatpush1.bf16.msra.mxu0 %v3651
    %3843 = vmatprep.subr.bf16.mxu0 0
    %3844 = vmatpush1.bf16.msra.mxu0 %v3652
    %3845 = vmatprep.mubr.bf16.mxu0 %v3211
    %3846 = vmatmul.mubr.bf16.gmra.mrb[0].mxu0 %v3210
    %v3847 = vpop.f32.mrb[0].mxu0
    %v3848 = vadd.f32 %v3808, %v3847
    %v3849 = vpop.f32.mrb[0].mxu0
    %v3850 = vpop.f32.mrb[0].mxu0
    %v3851 = vpop.f32.mrb[0].mxu0
    %3852 = vdwg.mxu0
    %3853 = vmatprep.subr.bf16.mxu0 0
    %3854 = vmatpush1.bf16.msra.mxu0 %v3653
    %3855 = vmatprep.subr.bf16.mxu0 0
    %3856 = vmatpush1.bf16.msra.mxu0 %v3654
    %3857 = vmatprep.subr.bf16.mxu0 0
    %3858 = vmatpush1.bf16.msra.mxu0 %v3655
    %3859 = vmatprep.subr.bf16.mxu0 0
    %3860 = vmatpush1.bf16.msra.mxu0 %v3656
    %3861 = vmatprep.subr.bf16.mxu0 0
    %3862 = vmatpush1.bf16.msra.mxu0 %v3657
    %3863 = vmatprep.subr.bf16.mxu0 0
    %3864 = vmatpush1.bf16.msra.mxu0 %v3658
    %3865 = vmatprep.subr.bf16.mxu0 0
    %3866 = vmatpush1.bf16.msra.mxu0 %v3659
    %3867 = vmatprep.subr.bf16.mxu0 0
    %3868 = vmatpush1.bf16.msra.mxu0 %v3660
    %3869 = vmatprep.subr.bf16.mxu0 0
    %3870 = vmatpush1.bf16.msra.mxu0 %v3661
    %3871 = vmatprep.subr.bf16.mxu0 0
    %3872 = vmatpush1.bf16.msra.mxu0 %v3662
    %3873 = vmatprep.subr.bf16.mxu0 0
    %3874 = vmatpush1.bf16.msra.mxu0 %v3663
    %3875 = vmatprep.subr.bf16.mxu0 0
    %3876 = vmatpush1.bf16.msra.mxu0 %v3664
    %3877 = vmatprep.subr.bf16.mxu0 0
    %3878 = vmatpush1.bf16.msra.mxu0 %v3665
    %3879 = vmatprep.subr.bf16.mxu0 0
    %3880 = vmatpush1.bf16.msra.mxu0 %v3666
    %3881 = vmatprep.subr.bf16.mxu0 0
    %3882 = vmatpush1.bf16.msra.mxu0 %v3667
    %3883 = vmatprep.subr.bf16.mxu0 0
    %3884 = vmatpush1.bf16.msra.mxu0 %v3668
    %3885 = vmatprep.mubr.bf16.mxu0 %v3213
    %3886 = vmatmul.mubr.bf16.gmra.mrb[0].mxu0 %v3212
    %v3887 = vpop.f32.mrb[0].mxu0
    %v3888 = vadd.f32 %v3848, %v3887
    %v3889 = vpop.f32.mrb[0].mxu0
    %v3890 = vpop.f32.mrb[0].mxu0
    %v3891 = vpop.f32.mrb[0].mxu0
    %3892 = vdwg.mxu0
    %3893 = vst [vmem:[#allocation14] sm:$0xff] %v3888
    // Predicated region
    $region58: #{tpu_custom_call.1} parent=1 // pred_check
      _
    $region59: #{tpu_custom_call.1} parent=1 // pred_check_branch
      %3895 = sbr.rel (0) target = $region61
    $region60: #{tpu_custom_call.1} parent=1 // pred_region
      %s3897 = ssub.s32 128, 128
      %3898 = vsyncadd [#allocation4], %s3897
      %s3900 = sshll.u32 [#allocation14], 4
      %s3901 = int_to_ptr.vmem [resolvable:$true] %s3900
      %3903 = dma.vmem_to_hbm [thread:$0]  %s3901, 128, %s7, [#allocation4]
    $region61: #{tpu_custom_call.1} parent=1 // pred_fallthru
      _
    // Predicated region
    $region62: #{tpu_custom_call.1} parent=1 // pred_check
      _
    $region63: #{tpu_custom_call.1} parent=1 // pred_check_branch
      %3905 = sbr.rel (0) target = $region65
    $region64: #{tpu_custom_call.1} parent=1 // pred_region
      %3906 = dma.done [#allocation4], 128
    $region65: #{tpu_custom_call.1} parent=1 // pred_fallthru
      _
    %3907 = vsyncpa [#allocation3], 1
    %3908 = vsyncpa [#allocation6], 1
    %3909 = vsyncpa [#allocation9], 1
    %3910 = vsyncpa [#allocation12], 1
    %3911 = vsyncpa [#allocation4], 1

// kernel: tpu_custom_call.1
$region0: #{tpu_custom_call.1}
  #allocation0 [shape = 'u32[]', space=smem, size = 0x4, offset = 0x4, fixed_abs, tag = 'smem constant byte address 0x4 - core index']
  #allocation1 [shape = 'u32[144,128]{1,0:T(1,128)}', space=vmem, size = 0x12000, scoped, tag = 'internal scratch']
  %s0 = inlined_call_operand.hbm [shape: f32[8,32], index: 0, kind: input, shape index: {}]
  %s1 = inlined_call_operand.hbm [shape: bf16[32,768], index: 1, kind: input, shape index: {}]
  %s2 = inlined_call_operand.hbm [shape: f32[1,768], index: 2, kind: input, shape index: {}]
  %s3 = inlined_call_operand.hbm [shape: bf16[768,1024], index: 3, kind: input, shape index: {}]
  %s4 = inlined_call_operand.hbm [shape: f32[1,1024], index: 4, kind: input, shape index: {}]
  %s5 = inlined_call_operand.hbm [shape: bf16[1024,128], index: 5, kind: input, shape index: {}]
  %s6 = inlined_call_operand.hbm [shape: f32[1,128], index: 6, kind: input, shape index: {}]
  %s7 = inlined_call_operand.hbm [shape: f32[8,128], index: 7, kind: output, shape index: {}]
  %s8 = sld [smem:[#allocation0]]
  $region66: #{tpu_custom_call.1} parent=0
    _
  %s10 = ssub.s32 1, %s8
  %s11 = scalar_select 0, %s10, %s8
  $region1: #{tpu_custom_call.1} parent=0
    #allocation2 [shape = 'u8[4096]{0}', space=vmem, size = 0x1000, scoped, tag = 'input window, operand 0, single buffered']
    #allocation3 [shape = 's32[1]{0}', space=sflag, size = 0x4, scoped, tag = 'scoped memory for tpu_custom_call.1']
    #allocation4 [shape = 's32[1]{0}', space=sflag, size = 0x4, scoped, tag = 'scoped memory for tpu_custom_call.1']
    #allocation5 [shape = 'u8[49152]{0}', space=vmem, size = 0xc000, scoped, tag = 'input window, operand 1, single buffered']
    #allocation6 [shape = 's32[1]{0}', space=sflag, size = 0x4, scoped, tag = 'scoped memory for tpu_custom_call.1']
    #allocation7 [shape = 'u8[3072]{0}', space=vmem, size = 0xc00, scoped, tag = 'input window, operand 2, single buffered']
    #allocation8 [shape = 'u8[1572864]{0}', space=vmem, size = 0x180000, scoped, tag = 'input window, operand 3, single buffered']
    #allocation9 [shape = 's32[1]{0}', space=sflag, size = 0x4, scoped, tag = 'scoped memory for tpu_custom_call.1']
    #allocation10 [shape = 'u8[4096]{0}', space=vmem, size = 0x1000, scoped, tag = 'input window, operand 4, single buffered']
    #allocation11 [shape = 'u8[262144]{0}', space=vmem, size = 0x40000, scoped, tag = 'input window, operand 5, single buffered']
    #allocation12 [shape = 's32[1]{0}', space=sflag, size = 0x4, scoped, tag = 'scoped memory for tpu_custom_call.1']
    #allocation13 [shape = 'u8[512]{0}', space=vmem, size = 0x400, scoped, tag = 'input window, operand 6, single buffered']
    #allocation14 [shape = 'u8[4096]{0}', space=vmem, size = 0x1000, scoped, tag = 'output window, operand 0, single buffered']
    %12 = vsyncpa [#allocation3], 0
    %13 = vsyncpa [#allocation6], 0
    %14 = vsyncpa [#allocation9], 0
    %15 = vsyncpa [#allocation12], 0
    %16 = vsyncpa [#allocation4], 0
    // Predicated region
    $region2: #{tpu_custom_call.1} parent=1 // pred_check
      _
    $region3: #{tpu_custom_call.1} parent=1 // pred_check_branch
      %18 = sbr.rel (0) target = $region5
    $region4: #{tpu_custom_call.1} parent=1 // pred_region
      %s20 = ssub.s32 128, 128
      %21 = vsyncadd [#allocation3], %s20
      %s23 = sshll.u32 [#allocation2], 4
      %s24 = int_to_ptr.vmem [resolvable:$true] %s23
      %26 = dma.hbm_to_vmem [thread:$0]  %s0, 128, %s24, [#allocation3]
    $region5: #{tpu_custom_call.1} parent=1 // pred_fallthru
      _
    // Predicated region
    $region6: #{tpu_custom_call.1} parent=1 // pred_check
      _
    $region7: #{tpu_custom_call.1} parent=1 // pred_check_branch
      %28 = sbr.rel (0) target = $region9
    $region8: #{tpu_custom_call.1} parent=1 // pred_region
      %s30 = ssub.s32 1536, 1536
      %31 = vsyncadd [#allocation6], %s30
      %s32 = sshll.u32 [#allocation5], 4
      %s33 = int_to_ptr.vmem [resolvable:$true] %s32
      %38 = dma.hbm_to_vmem [thread:$0]  %s1, 1536, %s33, [#allocation6], 384, 384, 24
    $region9: #{tpu_custom_call.1} parent=1 // pred_fallthru
      _
    // Predicated region
    $region10: #{tpu_custom_call.1} parent=1 // pred_check
      _
    $region11: #{tpu_custom_call.1} parent=1 // pred_check_branch
      %40 = sbr.rel (0) target = $region13
    $region12: #{tpu_custom_call.1} parent=1 // pred_region
      %s42 = ssub.s32 96, 96
      %43 = vsyncadd [#allocation6], %s42
      %s45 = sshll.u32 [#allocation7], 4
      %s46 = int_to_ptr.vmem [resolvable:$true] %s45
      %48 = dma.hbm_to_vmem [thread:$0]  %s2, 96, %s46, [#allocation6]
    $region13: #{tpu_custom_call.1} parent=1 // pred_fallthru
      _
    // Predicated region
    $region14: #{tpu_custom_call.1} parent=1 // pred_check
      _
    $region15: #{tpu_custom_call.1} parent=1 // pred_check_branch
      %50 = sbr.rel (0) target = $region17
    $region16: #{tpu_custom_call.1} parent=1 // pred_region
      %s52 = ssub.s32 49152, 49152
      %53 = vsyncadd [#allocation9], %s52
      %s54 = sshll.u32 [#allocation8], 4
      %s55 = int_to_ptr.vmem [resolvable:$true] %s54
      %60 = dma.hbm_to_vmem [thread:$0]  %s3, 49152, %s55, [#allocation9], 512, 512, 32
    $region17: #{tpu_custom_call.1} parent=1 // pred_fallthru
      _
    // Predicated region
    $region18: #{tpu_custom_call.1} parent=1 // pred_check
      _
    $region19: #{tpu_custom_call.1} parent=1 // pred_check_branch
      %62 = sbr.rel (0) target = $region21
    $region20: #{tpu_custom_call.1} parent=1 // pred_region
      %s64 = ssub.s32 128, 128
      %65 = vsyncadd [#allocation9], %s64
      %s67 = sshll.u32 [#allocation10], 4
      %s68 = int_to_ptr.vmem [resolvable:$true] %s67
      %70 = dma.hbm_to_vmem [thread:$0]  %s4, 128, %s68, [#allocation9]
    $region21: #{tpu_custom_call.1} parent=1 // pred_fallthru
      _
    // Predicated region
    $region22: #{tpu_custom_call.1} parent=1 // pred_check
      _
    $region23: #{tpu_custom_call.1} parent=1 // pred_check_branch
      %72 = sbr.rel (0) target = $region25
    $region24: #{tpu_custom_call.1} parent=1 // pred_region
      %s74 = ssub.s32 8192, 8192
      %75 = vsyncadd [#allocation12], %s74
      %s76 = sshll.u32 [#allocation11], 4
      %s77 = int_to_ptr.vmem [resolvable:$true] %s76
      %82 = dma.hbm_to_vmem [thread:$0]  %s5, 8192, %s77, [#allocation12], 64, 64, 4
    $region25: #{tpu_custom_call.1} parent=1 // pred_fallthru
      _
    // Predicated region
    $region26: #{tpu_custom_call.1} parent=1 // pred_check
      _
    $region27: #{tpu_custom_call.1} parent=1 // pred_check_branch
      %84 = sbr.rel (0) target = $region29
    $region28: #{tpu_custom_call.1} parent=1 // pred_region
      %s86 = ssub.s32 16, 16
      %87 = vsyncadd [#allocation12], %s86
      %s89 = sshll.u32 [#allocation13], 4
      %s90 = int_to_ptr.vmem [resolvable:$true] %s89
      %92 = dma.hbm_to_vmem [thread:$0]  %s6, 16, %s90, [#allocation12]
    $region29: #{tpu_custom_call.1} parent=1 // pred_fallthru
      _
    // Predicated region
    $region30: #{tpu_custom_call.1} parent=1 // pred_check
      _
    $region31: #{tpu_custom_call.1} parent=1 // pred_check_branch
      %94 = sbr.rel (0) target = $region33
    $region32: #{tpu_custom_call.1} parent=1 // pred_region
      %95 = dma.done [#allocation3], 128
    $region33: #{tpu_custom_call.1} parent=1 // pred_fallthru
      _
    // Predicated region
    $region34: #{tpu_custom_call.1} parent=1 // pred_check
      _
    $region35: #{tpu_custom_call.1} parent=1 // pred_check_branch
      %97 = sbr.rel (0) target = $region37
    $region36: #{tpu_custom_call.1} parent=1 // pred_region
      %98 = dma.done [#allocation6], 1536
    $region37: #{tpu_custom_call.1} parent=1 // pred_fallthru
      _
    // Predicated region
    $region38: #{tpu_custom_call.1} parent=1 // pred_check
      _
    $region39: #{tpu_custom_call.1} parent=1 // pred_check_branch
      %100 = sbr.rel (0) target = $region41
    $region40: #{tpu_custom_call.1} parent=1 // pred_region
      %101 = dma.done [#allocation6], 96
    $region41: #{tpu_custom_call.1} parent=1 // pred_fallthru
      _
    // Predicated region
    $region42: #{tpu_custom_call.1} parent=1 // pred_check
      _
    $region43: #{tpu_custom_call.1} parent=1 // pred_check_branch
      %103 = sbr.rel (0) target = $region45
    $region44: #{tpu_custom_call.1} parent=1 // pred_region
      %104 = dma.done [#allocation9], 49152
    $region45: #{tpu_custom_call.1} parent=1 // pred_fallthru
      _
    // Predicated region
    $region46: #{tpu_custom_call.1} parent=1 // pred_check
      _
    $region47: #{tpu_custom_call.1} parent=1 // pred_check_branch
      %106 = sbr.rel (0) target = $region49
    $region48: #{tpu_custom_call.1} parent=1 // pred_region
      %107 = dma.done [#allocation9], 128
    $region49: #{tpu_custom_call.1} parent=1 // pred_fallthru
      _
    // Predicated region
    $region50: #{tpu_custom_call.1} parent=1 // pred_check
      _
    $region51: #{tpu_custom_call.1} parent=1 // pred_check_branch
      %109 = sbr.rel (0) target = $region53
    $region52: #{tpu_custom_call.1} parent=1 // pred_region
      %110 = dma.done [#allocation12], 8192
    $region53: #{tpu_custom_call.1} parent=1 // pred_fallthru
      _
    // Predicated region
    $region54: #{tpu_custom_call.1} parent=1 // pred_check
      _
    $region55: #{tpu_custom_call.1} parent=1 // pred_check_branch
      %112 = sbr.rel (0) target = $region57
    $region56: #{tpu_custom_call.1} parent=1 // pred_region
      %113 = dma.done [#allocation12], 16
    $region57: #{tpu_custom_call.1} parent=1 // pred_fallthru
      _
    %v115 = vld [vmem:[#allocation2] sm:$0xff]
    %v116 = vpack.c.bf16 %v115, %v115
    %v117 = vld [vmem:[#allocation5] sm:$0xff]
    %v118 = vld [vmem:[#allocation5 + $0x8] sm:$0xff]
    %v119 = vld [vmem:[#allocation5 + $0x10] sm:$0xff]
    %v120 = vld [vmem:[#allocation5 + $0x18] sm:$0xff]
    %v121 = vld [vmem:[#allocation5 + $0x20] sm:$0xff]
    %v122 = vld [vmem:[#allocation5 + $0x28] sm:$0xff]
    %v123 = vld [vmem:[#allocation5 + $0x30] sm:$0xff]
    %v124 = vld [vmem:[#allocation5 + $0x38] sm:$0xff]
    %v125 = vld [vmem:[#allocation5 + $0x40] sm:$0xff]
    %v126 = vld [vmem:[#allocation5 + $0x48] sm:$0xff]
    %v127 = vld [vmem:[#allocation5 + $0x50] sm:$0xff]
    %v128 = vld [vmem:[#allocation5 + $0x58] sm:$0xff]
    %v129 = vld [vmem:[#allocation7] sm:$0x3f]
    %v131 = vlaneseq
    %v132 = vshrl.u32 %v131, 7
    %v133 = vsub.s32 0, %v132
    %v134 = vrot.slane %v129, %v133
    %v135 = vlaneseq
    %v136 = vshrl.u32 %v135, 7
    %v137 = vsub.s32 1, %v136
    %v138 = vrot.slane %v129, %v137
    %v139 = vlaneseq
    %v140 = vshrl.u32 %v139, 7
    %v141 = vsub.s32 2, %v140
    %v142 = vrot.slane %v129, %v141
    %v143 = vlaneseq
    %v144 = vshrl.u32 %v143, 7
    %v145 = vsub.s32 3, %v144
    %v146 = vrot.slane %v129, %v145
    %v147 = vlaneseq
    %v148 = vshrl.u32 %v147, 7
    %v149 = vsub.s32 4, %v148
    %v150 = vrot.slane %v129, %v149
    %v151 = vlaneseq
    %v152 = vshrl.u32 %v151, 7
    %v153 = vsub.s32 5, %v152
    %v154 = vrot.slane %v129, %v153
    %v173 = vunpack.c.l.b16 %v117
    %v174 = vunpack.c.h.b16 %v117
    %v175 = vunpack.c.l.b16 %v118
    %v176 = vunpack.c.h.b16 %v118
    %v177 = vunpack.c.l.b16 %v119
    %v178 = vunpack.c.h.b16 %v119
    %v179 = vunpack.c.l.b16 %v120
    %v180 = vunpack.c.h.b16 %v120
    %v181 = vunpack.c.l.b16 %v121
    %v182 = vunpack.c.h.b16 %v121
    %v183 = vunpack.c.l.b16 %v122
    %v184 = vunpack.c.h.b16 %v122
    %v185 = vunpack.c.l.b16 %v123
    %v186 = vunpack.c.h.b16 %v123
    %v187 = vunpack.c.l.b16 %v124
    %v188 = vunpack.c.h.b16 %v124
    %v189 = vunpack.c.l.b16 %v125
    %v190 = vunpack.c.h.b16 %v125
    %v191 = vunpack.c.l.b16 %v126
    %v192 = vunpack.c.h.b16 %v126
    %v193 = vunpack.c.l.b16 %v127
    %v194 = vunpack.c.h.b16 %v127
    %v195 = vunpack.c.l.b16 %v128
    %v196 = vunpack.c.h.b16 %v128
    %v197 = vpack.c.b16 %v179, %v173
    %v198 = vpack.c.b16 %v180, %v174
    %v199 = vpack.c.b16 %v181, %v175
    %v200 = vpack.c.b16 %v182, %v176
    %v201 = vpack.c.b16 %v183, %v177
    %v202 = vpack.c.b16 %v184, %v178
    %v203 = vpack.c.b16 %v191, %v185
    %v204 = vpack.c.b16 %v192, %v186
    %v205 = vpack.c.b16 %v193, %v187
    %v206 = vpack.c.b16 %v194, %v188
    %v207 = vpack.c.b16 %v195, %v189
    %v208 = vpack.c.b16 %v196, %v190
    %vm221 = vcmask 261120
    %v223 = vsel %vm221, %v116, 0
    %225 = vmatprep.subr.bf16.mxu0 %v198
    %226 = vmatpush1.bf16.msra.mxu0 %v197
    %227 = vmatprep.subr.bf16.mxu0 %v204
    %228 = vmatpush1.bf16.msra.mxu0 %v203
    %229 = vmatprep.subr.bf16.mxu0 0
    %230 = vmatpush1.bf16.msra.mxu0 0
    %231 = vmatprep.subr.bf16.mxu0 0
    %232 = vmatpush1.bf16.msra.mxu0 0
    %233 = vmatprep.subr.bf16.mxu0 0
    %234 = vmatpush1.bf16.msra.mxu0 0
    %235 = vmatprep.subr.bf16.mxu0 0
    %236 = vmatpush1.bf16.msra.mxu0 0
    %237 = vmatprep.subr.bf16.mxu0 0
    %238 = vmatpush1.bf16.msra.mxu0 0
    %239 = vmatprep.subr.bf16.mxu0 0
    %240 = vmatpush1.bf16.msra.mxu0 0
    %241 = vmatprep.subr.bf16.mxu0 0
    %242 = vmatpush1.bf16.msra.mxu0 0
    %243 = vmatprep.subr.bf16.mxu0 0
    %244 = vmatpush1.bf16.msra.mxu0 0
    %245 = vmatprep.subr.bf16.mxu0 0
    %246 = vmatpush1.bf16.msra.mxu0 0
    %247 = vmatprep.subr.bf16.mxu0 0
    %248 = vmatpush1.bf16.msra.mxu0 0
    %249 = vmatprep.subr.bf16.mxu0 0
    %250 = vmatpush1.bf16.msra.mxu0 0
    %251 = vmatprep.subr.bf16.mxu0 0
    %252 = vmatpush1.bf16.msra.mxu0 0
    %253 = vmatprep.subr.bf16.mxu0 0
    %254 = vmatpush1.bf16.msra.mxu0 0
    %255 = vmatprep.subr.bf16.mxu0 0
    %256 = vmatpush1.bf16.msra.mxu0 0
    %257 = vmatprep.mubr.bf16.mxu0 0
    %258 = vmatmul.mubr.bf16.gmra.mrb[0].mxu0 %v223
    %v259 = vpop.f32.mrb[0].mxu0
    %v260 = vadd.f32 %v134, %v259
    %v261 = vpop.f32.mrb[0].mxu0
    %v262 = vadd.f32 %v138, %v261
    %v263 = vpop.f32.mrb[0].mxu0
    %v264 = vpop.f32.mrb[0].mxu0
    %265 = vdwg.mxu0
    %266 = vmatprep.subr.bf16.mxu0 %v200
    %267 = vmatpush1.bf16.msra.mxu0 %v199
    %268 = vmatprep.subr.bf16.mxu0 %v206
    %269 = vmatpush1.bf16.msra.mxu0 %v205
    %270 = vmatprep.subr.bf16.mxu0 0
    %271 = vmatpush1.bf16.msra.mxu0 0
    %272 = vmatprep.subr.bf16.mxu0 0
    %273 = vmatpush1.bf16.msra.mxu0 0
    %274 = vmatprep.subr.bf16.mxu0 0
    %275 = vmatpush1.bf16.msra.mxu0 0
    %276 = vmatprep.subr.bf16.mxu0 0
    %277 = vmatpush1.bf16.msra.mxu0 0
    %278 = vmatprep.subr.bf16.mxu0 0
    %279 = vmatpush1.bf16.msra.mxu0 0
    %280 = vmatprep.subr.bf16.mxu0 0
    %281 = vmatpush1.bf16.msra.mxu0 0
    %282 = vmatprep.subr.bf16.mxu0 0
    %283 = vmatpush1.bf16.msra.mxu0 0
    %284 = vmatprep.subr.bf16.mxu0 0
    %285 = vmatpush1.bf16.msra.mxu0 0
    %286 = vmatprep.subr.bf16.mxu0 0
    %287 = vmatpush1.bf16.msra.mxu0 0
    %288 = vmatprep.subr.bf16.mxu0 0
    %289 = vmatpush1.bf16.msra.mxu0 0
    %290 = vmatprep.subr.bf16.mxu0 0
    %291 = vmatpush1.bf16.msra.mxu0 0
    %292 = vmatprep.subr.bf16.mxu0 0
    %293 = vmatpush1.bf16.msra.mxu0 0
    %294 = vmatprep.subr.bf16.mxu0 0
    %295 = vmatpush1.bf16.msra.mxu0 0
    %296 = vmatprep.subr.bf16.mxu0 0
    %297 = vmatpush1.bf16.msra.mxu0 0
    %298 = vmatprep.mubr.bf16.mxu0 0
    %299 = vmatmul.mubr.bf16.gmra.mrb[0].mxu0 %v223
    %v300 = vpop.f32.mrb[0].mxu0
    %v301 = vadd.f32 %v142, %v300
    %v302 = vpop.f32.mrb[0].mxu0
    %v303 = vadd.f32 %v146, %v302
    %v304 = vpop.f32.mrb[0].mxu0
    %v305 = vpop.f32.mrb[0].mxu0
    %306 = vdwg.mxu0
    %307 = vmatprep.subr.bf16.mxu0 %v202
    %308 = vmatpush1.bf16.msra.mxu0 %v201
    %309 = vmatprep.subr.bf16.mxu0 %v208
    %310 = vmatpush1.bf16.msra.mxu0 %v207
    %311 = vmatprep.subr.bf16.mxu0 0
    %312 = vmatpush1.bf16.msra.mxu0 0
    %313 = vmatprep.subr.bf16.mxu0 0
    %314 = vmatpush1.bf16.msra.mxu0 0
    %315 = vmatprep.subr.bf16.mxu0 0
    %316 = vmatpush1.bf16.msra.mxu0 0
    %317 = vmatprep.subr.bf16.mxu0 0
    %318 = vmatpush1.bf16.msra.mxu0 0
    %319 = vmatprep.subr.bf16.mxu0 0
    %320 = vmatpush1.bf16.msra.mxu0 0
    %321 = vmatprep.subr.bf16.mxu0 0
    %322 = vmatpush1.bf16.msra.mxu0 0
    %323 = vmatprep.subr.bf16.mxu0 0
    %324 = vmatpush1.bf16.msra.mxu0 0
    %325 = vmatprep.subr.bf16.mxu0 0
    %326 = vmatpush1.bf16.msra.mxu0 0
    %327 = vmatprep.subr.bf16.mxu0 0
    %328 = vmatpush1.bf16.msra.mxu0 0
    %329 = vmatprep.subr.bf16.mxu0 0
    %330 = vmatpush1.bf16.msra.mxu0 0
    %331 = vmatprep.subr.bf16.mxu0 0
    %332 = vmatpush1.bf16.msra.mxu0 0
    %333 = vmatprep.subr.bf16.mxu0 0
    %334 = vmatpush1.bf16.msra.mxu0 0
    %335 = vmatprep.subr.bf16.mxu0 0
    %336 = vmatpush1.bf16.msra.mxu0 0
    %337 = vmatprep.subr.bf16.mxu0 0
    %338 = vmatpush1.bf16.msra.mxu0 0
    %339 = vmatprep.mubr.bf16.mxu0 0
    %340 = vmatmul.mubr.bf16.gmra.mrb[0].mxu0 %v223
    %v341 = vpop.f32.mrb[0].mxu0
    %v342 = vadd.f32 %v150, %v341
    %v343 = vpop.f32.mrb[0].mxu0
    %v344 = vadd.f32 %v154, %v343
    %v345 = vpop.f32.mrb[0].mxu0
    %v346 = vpop.f32.mrb[0].mxu0
    %347 = vdwg.mxu0
    %v348 = vmax.f32 %v260, 0.0
    %v349 = vmax.f32 %v262, 0.0
    %v350 = vmax.f32 %v301, 0.0
    %v351 = vmax.f32 %v303, 0.0
    %v352 = vmax.f32 %v342, 0.0
    %v353 = vmax.f32 %v344, 0.0
    %v354 = vpack.c.bf16 %v348, %v348
    %v355 = vpack.c.bf16 %v349, %v349
    %v356 = vpack.c.bf16 %v350, %v350
    %v357 = vpack.c.bf16 %v351, %v351
    %v358 = vpack.c.bf16 %v352, %v352
    %v359 = vpack.c.bf16 %v353, %v353
    %v360 = vld [vmem:[#allocation8] sm:$0xff]
    %v361 = vld [vmem:[#allocation8 + $0x8] sm:$0xff]
    %v362 = vld [vmem:[#allocation8 + $0x10] sm:$0xff]
    %v363 = vld [vmem:[#allocation8 + $0x18] sm:$0xff]
    %v364 = vld [vmem:[#allocation8 + $0x20] sm:$0xff]
    %v365 = vld [vmem:[#allocation8 + $0x28] sm:$0xff]
    %v366 = vld [vmem:[#allocation8 + $0x30] sm:$0xff]
    %v367 = vld [vmem:[#allocation8 + $0x38] sm:$0xff]
    %v368 = vld [vmem:[#allocation8 + $0x40] sm:$0xff]
    %v369 = vld [vmem:[#allocation8 + $0x48] sm:$0xff]
    %v370 = vld [vmem:[#allocation8 + $0x50] sm:$0xff]
    %v371 = vld [vmem:[#allocation8 + $0x58] sm:$0xff]
    %v372 = vld [vmem:[#allocation8 + $0x60] sm:$0xff]
    %v373 = vld [vmem:[#allocation8 + $0x68] sm:$0xff]
    %v374 = vld [vmem:[#allocation8 + $0x70] sm:$0xff]
    %v375 = vld [vmem:[#allocation8 + $0x78] sm:$0xff]
    %v376 = vld [vmem:[#allocation8 + $0x80] sm:$0xff]
    %v377 = vld [vmem:[#allocation8 + $0x88] sm:$0xff]
    %v378 = vld [vmem:[#allocation8 + $0x90] sm:$0xff]
    %v379 = vld [vmem:[#allocation8 + $0x98] sm:$0xff]
    %v380 = vld [vmem:[#allocation8 + $0xa0] sm:$0xff]
    %v381 = vld [vmem:[#allocation8 + $0xa8] sm:$0xff]
    %v382 = vld [vmem:[#allocation8 + $0xb0] sm:$0xff]
    %v383 = vld [vmem:[#allocation8 + $0xb8] sm:$0xff]
    %v384 = vld [vmem:[#allocation8 + $0xc0] sm:$0xff]
    %v385 = vld [vmem:[#allocation8 + $0xc8] sm:$0xff]
    %v386 = vld [vmem:[#allocation8 + $0xd0] sm:$0xff]
    %v387 = vld [vmem:[#allocation8 + $0xd8] sm:$0xff]
    %v388 = vld [vmem:[#allocation8 + $0xe0] sm:$0xff]
    %v389 = vld [vmem:[#allocation8 + $0xe8] sm:$0xff]
    %v390 = vld [vmem:[#allocation8 + $0xf0] sm:$0xff]
    %v391 = vld [vmem:[#allocation8 + $0xf8] sm:$0xff]
    %v392 = vld [vmem:[#allocation8 + $0x100] sm:$0xff]
    %v393 = vld [vmem:[#allocation8 + $0x108] sm:$0xff]
    %v394 = vld [vmem:[#allocation8 + $0x110] sm:$0xff]
    %v395 = vld [vmem:[#allocation8 + $0x118] sm:$0xff]
    %v396 = vld [vmem:[#allocation8 + $0x120] sm:$0xff]
    %v397 = vld [vmem:[#allocation8 + $0x128] sm:$0xff]
    %v398 = vld [vmem:[#allocation8 + $0x130] sm:$0xff]
    %v399 = vld [vmem:[#allocation8 + $0x138] sm:$0xff]
    %v400 = vld [vmem:[#allocation8 + $0x140] sm:$0xff]
    %v401 = vld [vmem:[#allocation8 + $0x148] sm:$0xff]
    %v402 = vld [vmem:[#allocation8 + $0x150] sm:$0xff]
    %v403 = vld [vmem:[#allocation8 + $0x158] sm:$0xff]
    %v404 = vld [vmem:[#allocation8 + $0x160] sm:$0xff]
    %v405 = vld [vmem:[#allocation8 + $0x168] sm:$0xff]
    %v406 = vld [vmem:[#allocation8 + $0x170] sm:$0xff]
    %v407 = vld [vmem:[#allocation8 + $0x178] sm:$0xff]
    %v408 = vld [vmem:[#allocation8 + $0x180] sm:$0xff]
    %v409 = vld [vmem:[#allocation8 + $0x188] sm:$0xff]
    %v410 = vld [vmem:[#allocation8 + $0x190] sm:$0xff]
    %v411 = vld [vmem:[#allocation8 + $0x198] sm:$0xff]
    %v412 = vld [vmem:[#allocation8 + $0x1a0] sm:$0xff]
    %v413 = vld [vmem:[#allocation8 + $0x1a8] sm:$0xff]
    %v414 = vld [vmem:[#allocation8 + $0x1b0] sm:$0xff]
    %v415 = vld [vmem:[#allocation8 + $0x1b8] sm:$0xff]
    %v416 = vld [vmem:[#allocation8 + $0x1c0] sm:$0xff]
    %v417 = vld [vmem:[#allocation8 + $0x1c8] sm:$0xff]
    %v418 = vld [vmem:[#allocation8 + $0x1d0] sm:$0xff]
    %v419 = vld [vmem:[#allocation8 + $0x1d8] sm:$0xff]
    %v420 = vld [vmem:[#allocation8 + $0x1e0] sm:$0xff]
    %v421 = vld [vmem:[#allocation8 + $0x1e8] sm:$0xff]
    %v422 = vld [vmem:[#allocation8 + $0x1f0] sm:$0xff]
    %v423 = vld [vmem:[#allocation8 + $0x1f8] sm:$0xff]
    %v424 = vld [vmem:[#allocation8 + $0x200] sm:$0xff]
    %v425 = vld [vmem:[#allocation8 + $0x208] sm:$0xff]
    %v426 = vld [vmem:[#allocation8 + $0x210] sm:$0xff]
    %v427 = vld [vmem:[#allocation8 + $0x218] sm:$0xff]
    %v428 = vld [vmem:[#allocation8 + $0x220] sm:$0xff]
    %v429 = vld [vmem:[#allocation8 + $0x228] sm:$0xff]
    %v430 = vld [vmem:[#allocation8 + $0x230] sm:$0xff]
    %v431 = vld [vmem:[#allocation8 + $0x238] sm:$0xff]
    %v432 = vld [vmem:[#allocation8 + $0x240] sm:$0xff]
    %v433 = vld [vmem:[#allocation8 + $0x248] sm:$0xff]
    %v434 = vld [vmem:[#allocation8 + $0x250] sm:$0xff]
    %v435 = vld [vmem:[#allocation8 + $0x258] sm:$0xff]
    %v436 = vld [vmem:[#allocation8 + $0x260] sm:$0xff]
    %v437 = vld [vmem:[#allocation8 + $0x268] sm:$0xff]
    %v438 = vld [vmem:[#allocation8 + $0x270] sm:$0xff]
    %v439 = vld [vmem:[#allocation8 + $0x278] sm:$0xff]
    %v440 = vld [vmem:[#allocation8 + $0x280] sm:$0xff]
    %v441 = vld [vmem:[#allocation8 + $0x288] sm:$0xff]
    %v442 = vld [vmem:[#allocation8 + $0x290] sm:$0xff]
    %v443 = vld [vmem:[#allocation8 + $0x298] sm:$0xff]
    %v444 = vld [vmem:[#allocation8 + $0x2a0] sm:$0xff]
    %v445 = vld [vmem:[#allocation8 + $0x2a8] sm:$0xff]
    %v446 = vld [vmem:[#allocation8 + $0x2b0] sm:$0xff]
    %v447 = vld [vmem:[#allocation8 + $0x2b8] sm:$0xff]
    %v448 = vld [vmem:[#allocation8 + $0x2c0] sm:$0xff]
    %v449 = vld [vmem:[#allocation8 + $0x2c8] sm:$0xff]
    %v450 = vld [vmem:[#allocation8 + $0x2d0] sm:$0xff]
    %v451 = vld [vmem:[#allocation8 + $0x2d8] sm:$0xff]
    %v452 = vld [vmem:[#allocation8 + $0x2e0] sm:$0xff]
    %v453 = vld [vmem:[#allocation8 + $0x2e8] sm:$0xff]
    %v454 = vld [vmem:[#allocation8 + $0x2f0] sm:$0xff]
    %v455 = vld [vmem:[#allocation8 + $0x2f8] sm:$0xff]
    %v456 = vld [vmem:[#allocation8 + $0x300] sm:$0xff]
    %v457 = vld [vmem:[#allocation8 + $0x308] sm:$0xff]
    %v458 = vld [vmem:[#allocation8 + $0x310] sm:$0xff]
    %v459 = vld [vmem:[#allocation8 + $0x318] sm:$0xff]
    %v460 = vld [vmem:[#allocation8 + $0x320] sm:$0xff]
    %v461 = vld [vmem:[#allocation8 + $0x328] sm:$0xff]
    %v462 = vld [vmem:[#allocation8 + $0x330] sm:$0xff]
    %v463 = vld [vmem:[#allocation8 + $0x338] sm:$0xff]
    %v464 = vld [vmem:[#allocation8 + $0x340] sm:$0xff]
    %v465 = vld [vmem:[#allocation8 + $0x348] sm:$0xff]
    %v466 = vld [vmem:[#allocation8 + $0x350] sm:$0xff]
    %v467 = vld [vmem:[#allocation8 + $0x358] sm:$0xff]
    %v468 = vld [vmem:[#allocation8 + $0x360] sm:$0xff]
    %v469 = vld [vmem:[#allocation8 + $0x368] sm:$0xff]
    %v470 = vld [vmem:[#allocation8 + $0x370] sm:$0xff]
    %v471 = vld [vmem:[#allocation8 + $0x378] sm:$0xff]
    %v472 = vld [vmem:[#allocation8 + $0x380] sm:$0xff]
    %v473 = vld [vmem:[#allocation8 + $0x388] sm:$0xff]
    %v474 = vld [vmem:[#allocation8 + $0x390] sm:$0xff]
    %v475 = vld [vmem:[#allocation8 + $0x398] sm:$0xff]
    %v476 = vld [vmem:[#allocation8 + $0x3a0] sm:$0xff]
    %v477 = vld [vmem:[#allocation8 + $0x3a8] sm:$0xff]
    %v478 = vld [vmem:[#allocation8 + $0x3b0] sm:$0xff]
    %v479 = vld [vmem:[#allocation8 + $0x3b8] sm:$0xff]
    %v480 = vld [vmem:[#allocation8 + $0x3c0] sm:$0xff]
    %v481 = vld [vmem:[#allocation8 + $0x3c8] sm:$0xff]
    %v482 = vld [vmem:[#allocation8 + $0x3d0] sm:$0xff]
    %v483 = vld [vmem:[#allocation8 + $0x3d8] sm:$0xff]
    %v484 = vld [vmem:[#allocation8 + $0x3e0] sm:$0xff]
    %v485 = vld [vmem:[#allocation8 + $0x3e8] sm:$0xff]
    %v486 = vld [vmem:[#allocation8 + $0x3f0] sm:$0xff]
    %v487 = vld [vmem:[#allocation8 + $0x3f8] sm:$0xff]
    %v488 = vld [vmem:[#allocation8 + $0x400] sm:$0xff]
    %v489 = vld [vmem:[#allocation8 + $0x408] sm:$0xff]
    %v490 = vld [vmem:[#allocation8 + $0x410] sm:$0xff]
    %v491 = vld [vmem:[#allocation8 + $0x418] sm:$0xff]
    %v492 = vld [vmem:[#allocation8 + $0x420] sm:$0xff]
    %v493 = vld [vmem:[#allocation8 + $0x428] sm:$0xff]
    %v494 = vld [vmem:[#allocation8 + $0x430] sm:$0xff]
    %v495 = vld [vmem:[#allocation8 + $0x438] sm:$0xff]
    %v496 = vld [vmem:[#allocation8 + $0x440] sm:$0xff]
    %v497 = vld [vmem:[#allocation8 + $0x448] sm:$0xff]
    %v498 = vld [vmem:[#allocation8 + $0x450] sm:$0xff]
    %v499 = vld [vmem:[#allocation8 + $0x458] sm:$0xff]
    %v500 = vld [vmem:[#allocation8 + $0x460] sm:$0xff]
    %v501 = vld [vmem:[#allocation8 + $0x468] sm:$0xff]
    %v502 = vld [vmem:[#allocation8 + $0x470] sm:$0xff]
    %v503 = vld [vmem:[#allocation8 + $0x478] sm:$0xff]
    %v504 = vld [vmem:[#allocation8 + $0x480] sm:$0xff]
    %v505 = vld [vmem:[#allocation8 + $0x488] sm:$0xff]
    %v506 = vld [vmem:[#allocation8 + $0x490] sm:$0xff]
    %v507 = vld [vmem:[#allocation8 + $0x498] sm:$0xff]
    %v508 = vld [vmem:[#allocation8 + $0x4a0] sm:$0xff]
    %v509 = vld [vmem:[#allocation8 + $0x4a8] sm:$0xff]
    %v510 = vld [vmem:[#allocation8 + $0x4b0] sm:$0xff]
    %v511 = vld [vmem:[#allocation8 + $0x4b8] sm:$0xff]
    %v512 = vld [vmem:[#allocation8 + $0x4c0] sm:$0xff]
    %v513 = vld [vmem:[#allocation8 + $0x4c8] sm:$0xff]
    %v514 = vld [vmem:[#allocation8 + $0x4d0] sm:$0xff]
    %v515 = vld [vmem:[#allocation8 + $0x4d8] sm:$0xff]
    %v516 = vld [vmem:[#allocation8 + $0x4e0] sm:$0xff]
    %v517 = vld [vmem:[#allocation8 + $0x4e8] sm:$0xff]
    %v518 = vld [vmem:[#allocation8 + $0x4f0] sm:$0xff]
    %v519 = vld [vmem:[#allocation8 + $0x4f8] sm:$0xff]
    %v520 = vld [vmem:[#allocation8 + $0x500] sm:$0xff]
    %v521 = vld [vmem:[#allocation8 + $0x508] sm:$0xff]
    %v522 = vld [vmem:[#allocation8 + $0x510] sm:$0xff]
    %v523 = vld [vmem:[#allocation8 + $0x518] sm:$0xff]
    %v524 = vld [vmem:[#allocation8 + $0x520] sm:$0xff]
    %v525 = vld [vmem:[#allocation8 + $0x528] sm:$0xff]
    %v526 = vld [vmem:[#allocation8 + $0x530] sm:$0xff]
    %v527 = vld [vmem:[#allocation8 + $0x538] sm:$0xff]
    %v528 = vld [vmem:[#allocation8 + $0x540] sm:$0xff]
    %v529 = vld [vmem:[#allocation8 + $0x548] sm:$0xff]
    %v530 = vld [vmem:[#allocation8 + $0x550] sm:$0xff]
    %v531 = vld [vmem:[#allocation8 + $0x558] sm:$0xff]
    %v532 = vld [vmem:[#allocation8 + $0x560] sm:$0xff]
    %v533 = vld [vmem:[#allocation8 + $0x568] sm:$0xff]
    %v534 = vld [vmem:[#allocation8 + $0x570] sm:$0xff]
    %v535 = vld [vmem:[#allocation8 + $0x578] sm:$0xff]
    %v536 = vld [vmem:[#allocation8 + $0x580] sm:$0xff]
    %v537 = vld [vmem:[#allocation8 + $0x588] sm:$0xff]
    %v538 = vld [vmem:[#allocation8 + $0x590] sm:$0xff]
    %v539 = vld [vmem:[#allocation8 + $0x598] sm:$0xff]
    %v540 = vld [vmem:[#allocation8 + $0x5a0] sm:$0xff]
    %v541 = vld [vmem:[#allocation8 + $0x5a8] sm:$0xff]
    %v542 = vld [vmem:[#allocation8 + $0x5b0] sm:$0xff]
    %v543 = vld [vmem:[#allocation8 + $0x5b8] sm:$0xff]
    %v544 = vld [vmem:[#allocation8 + $0x5c0] sm:$0xff]
    %v545 = vld [vmem:[#allocation8 + $0x5c8] sm:$0xff]
    %v546 = vld [vmem:[#allocation8 + $0x5d0] sm:$0xff]
    %v547 = vld [vmem:[#allocation8 + $0x5d8] sm:$0xff]
    %v548 = vld [vmem:[#allocation8 + $0x5e0] sm:$0xff]
    %v549 = vld [vmem:[#allocation8 + $0x5e8] sm:$0xff]
    %v550 = vld [vmem:[#allocation8 + $0x5f0] sm:$0xff]
    %v551 = vld [vmem:[#allocation8 + $0x5f8] sm:$0xff]
    %v552 = vld [vmem:[#allocation8 + $0x600] sm:$0xff]
    %v553 = vld [vmem:[#allocation8 + $0x608] sm:$0xff]
    %v554 = vld [vmem:[#allocation8 + $0x610] sm:$0xff]
    %v555 = vld [vmem:[#allocation8 + $0x618] sm:$0xff]
    %v556 = vld [vmem:[#allocation8 + $0x620] sm:$0xff]
    %v557 = vld [vmem:[#allocation8 + $0x628] sm:$0xff]
    %v558 = vld [vmem:[#allocation8 + $0x630] sm:$0xff]
    %v559 = vld [vmem:[#allocation8 + $0x638] sm:$0xff]
    %v560 = vld [vmem:[#allocation8 + $0x640] sm:$0xff]
    %v561 = vld [vmem:[#allocation8 + $0x648] sm:$0xff]
    %v562 = vld [vmem:[#allocation8 + $0x650] sm:$0xff]
    %v563 = vld [vmem:[#allocation8 + $0x658] sm:$0xff]
    %v564 = vld [vmem:[#allocation8 + $0x660] sm:$0xff]
    %v565 = vld [vmem:[#allocation8 + $0x668] sm:$0xff]
    %v566 = vld [vmem:[#allocation8 + $0x670] sm:$0xff]
    %v567 = vld [vmem:[#allocation8 + $0x678] sm:$0xff]
    %v568 = vld [vmem:[#allocation8 + $0x680] sm:$0xff]
    %v569 = vld [vmem:[#allocation8 + $0x688] sm:$0xff]
    %v570 = vld [vmem:[#allocation8 + $0x690] sm:$0xff]
    %v571 = vld [vmem:[#allocation8 + $0x698] sm:$0xff]
    %v572 = vld [vmem:[#allocation8 + $0x6a0] sm:$0xff]
    %v573 = vld [vmem:[#allocation8 + $0x6a8] sm:$0xff]
    %v574 = vld [vmem:[#allocation8 + $0x6b0] sm:$0xff]
    %v575 = vld [vmem:[#allocation8 + $0x6b8] sm:$0xff]
    %v576 = vld [vmem:[#allocation8 + $0x6c0] sm:$0xff]
    %v577 = vld [vmem:[#allocation8 + $0x6c8] sm:$0xff]
    %v578 = vld [vmem:[#allocation8 + $0x6d0] sm:$0xff]
    %v579 = vld [vmem:[#allocation8 + $0x6d8] sm:$0xff]
    %v580 = vld [vmem:[#allocation8 + $0x6e0] sm:$0xff]
    %v581 = vld [vmem:[#allocation8 + $0x6e8] sm:$0xff]
    %v582 = vld [vmem:[#allocation8 + $0x6f0] sm:$0xff]
    %v583 = vld [vmem:[#allocation8 + $0x6f8] sm:$0xff]
    %v584 = vld [vmem:[#allocation8 + $0x700] sm:$0xff]
    %v585 = vld [vmem:[#allocation8 + $0x708] sm:$0xff]
    %v586 = vld [vmem:[#allocation8 + $0x710] sm:$0xff]
    %v587 = vld [vmem:[#allocation8 + $0x718] sm:$0xff]
    %v588 = vld [vmem:[#allocation8 + $0x720] sm:$0xff]
    %v589 = vld [vmem:[#allocation8 + $0x728] sm:$0xff]
    %v590 = vld [vmem:[#allocation8 + $0x730] sm:$0xff]
    %v591 = vld [vmem:[#allocation8 + $0x738] sm:$0xff]
    %v592 = vld [vmem:[#allocation8 + $0x740] sm:$0xff]
    %v593 = vld [vmem:[#allocation8 + $0x748] sm:$0xff]
    %v594 = vld [vmem:[#allocation8 + $0x750] sm:$0xff]
    %v595 = vld [vmem:[#allocation8 + $0x758] sm:$0xff]
    %v596 = vld [vmem:[#allocation8 + $0x760] sm:$0xff]
    %v597 = vld [vmem:[#allocation8 + $0x768] sm:$0xff]
    %v598 = vld [vmem:[#allocation8 + $0x770] sm:$0xff]
    %v599 = vld [vmem:[#allocation8 + $0x778] sm:$0xff]
    %v600 = vld [vmem:[#allocation8 + $0x780] sm:$0xff]
    %v601 = vld [vmem:[#allocation8 + $0x788] sm:$0xff]
    %v602 = vld [vmem:[#allocation8 + $0x790] sm:$0xff]
    %v603 = vld [vmem:[#allocation8 + $0x798] sm:$0xff]
    %v604 = vld [vmem:[#allocation8 + $0x7a0] sm:$0xff]
    %v605 = vld [vmem:[#allocation8 + $0x7a8] sm:$0xff]
    %v606 = vld [vmem:[#allocation8 + $0x7b0] sm:$0xff]
    %v607 = vld [vmem:[#allocation8 + $0x7b8] sm:$0xff]
    %v608 = vld [vmem:[#allocation8 + $0x7c0] sm:$0xff]
    %v609 = vld [vmem:[#allocation8 + $0x7c8] sm:$0xff]
    %v610 = vld [vmem:[#allocation8 + $0x7d0] sm:$0xff]
    %v611 = vld [vmem:[#allocation8 + $0x7d8] sm:$0xff]
    %v612 = vld [vmem:[#allocation8 + $0x7e0] sm:$0xff]
    %v613 = vld [vmem:[#allocation8 + $0x7e8] sm:$0xff]
    %v614 = vld [vmem:[#allocation8 + $0x7f0] sm:$0xff]
    %v615 = vld [vmem:[#allocation8 + $0x7f8] sm:$0xff]
    %v616 = vld [vmem:[#allocation8 + $0x800] sm:$0xff]
    %v617 = vld [vmem:[#allocation8 + $0x808] sm:$0xff]
    %v618 = vld [vmem:[#allocation8 + $0x810] sm:$0xff]
    %v619 = vld [vmem:[#allocation8 + $0x818] sm:$0xff]
    %v620 = vld [vmem:[#allocation8 + $0x820] sm:$0xff]
    %v621 = vld [vmem:[#allocation8 + $0x828] sm:$0xff]
    %v622 = vld [vmem:[#allocation8 + $0x830] sm:$0xff]
    %v623 = vld [vmem:[#allocation8 + $0x838] sm:$0xff]
    %v624 = vld [vmem:[#allocation8 + $0x840] sm:$0xff]
    %v625 = vld [vmem:[#allocation8 + $0x848] sm:$0xff]
    %v626 = vld [vmem:[#allocation8 + $0x850] sm:$0xff]
    %v627 = vld [vmem:[#allocation8 + $0x858] sm:$0xff]
    %v628 = vld [vmem:[#allocation8 + $0x860] sm:$0xff]
    %v629 = vld [vmem:[#allocation8 + $0x868] sm:$0xff]
    %v630 = vld [vmem:[#allocation8 + $0x870] sm:$0xff]
    %v631 = vld [vmem:[#allocation8 + $0x878] sm:$0xff]
    %v632 = vld [vmem:[#allocation8 + $0x880] sm:$0xff]
    %v633 = vld [vmem:[#allocation8 + $0x888] sm:$0xff]
    %v634 = vld [vmem:[#allocation8 + $0x890] sm:$0xff]
    %v635 = vld [vmem:[#allocation8 + $0x898] sm:$0xff]
    %v636 = vld [vmem:[#allocation8 + $0x8a0] sm:$0xff]
    %v637 = vld [vmem:[#allocation8 + $0x8a8] sm:$0xff]
    %v638 = vld [vmem:[#allocation8 + $0x8b0] sm:$0xff]
    %v639 = vld [vmem:[#allocation8 + $0x8b8] sm:$0xff]
    %v640 = vld [vmem:[#allocation8 + $0x8c0] sm:$0xff]
    %v641 = vld [vmem:[#allocation8 + $0x8c8] sm:$0xff]
    %v642 = vld [vmem:[#allocation8 + $0x8d0] sm:$0xff]
    %v643 = vld [vmem:[#allocation8 + $0x8d8] sm:$0xff]
    %v644 = vld [vmem:[#allocation8 + $0x8e0] sm:$0xff]
    %v645 = vld [vmem:[#allocation8 + $0x8e8] sm:$0xff]
    %v646 = vld [vmem:[#allocation8 + $0x8f0] sm:$0xff]
    %v647 = vld [vmem:[#allocation8 + $0x8f8] sm:$0xff]
    %v648 = vld [vmem:[#allocation8 + $0x900] sm:$0xff]
    %v649 = vld [vmem:[#allocation8 + $0x908] sm:$0xff]
    %v650 = vld [vmem:[#allocation8 + $0x910] sm:$0xff]
    %v651 = vld [vmem:[#allocation8 + $0x918] sm:$0xff]
    %v652 = vld [vmem:[#allocation8 + $0x920] sm:$0xff]
    %v653 = vld [vmem:[#allocation8 + $0x928] sm:$0xff]
    %v654 = vld [vmem:[#allocation8 + $0x930] sm:$0xff]
    %v655 = vld [vmem:[#allocation8 + $0x938] sm:$0xff]
    %v656 = vld [vmem:[#allocation8 + $0x940] sm:$0xff]
    %v657 = vld [vmem:[#allocation8 + $0x948] sm:$0xff]
    %v658 = vld [vmem:[#allocation8 + $0x950] sm:$0xff]
    %v659 = vld [vmem:[#allocation8 + $0x958] sm:$0xff]
    %v660 = vld [vmem:[#allocation8 + $0x960] sm:$0xff]
    %v661 = vld [vmem:[#allocation8 + $0x968] sm:$0xff]
    %v662 = vld [vmem:[#allocation8 + $0x970] sm:$0xff]
    %v663 = vld [vmem:[#allocation8 + $0x978] sm:$0xff]
    %v664 = vld [vmem:[#allocation8 + $0x980] sm:$0xff]
    %v665 = vld [vmem:[#allocation8 + $0x988] sm:$0xff]
    %v666 = vld [vmem:[#allocation8 + $0x990] sm:$0xff]
    %v667 = vld [vmem:[#allocation8 + $0x998] sm:$0xff]
    %v668 = vld [vmem:[#allocation8 + $0x9a0] sm:$0xff]
    %v669 = vld [vmem:[#allocation8 + $0x9a8] sm:$0xff]
    %v670 = vld [vmem:[#allocation8 + $0x9b0] sm:$0xff]
    %v671 = vld [vmem:[#allocation8 + $0x9b8] sm:$0xff]
    %v672 = vld [vmem:[#allocation8 + $0x9c0] sm:$0xff]
    %v673 = vld [vmem:[#allocation8 + $0x9c8] sm:$0xff]
    %v674 = vld [vmem:[#allocation8 + $0x9d0] sm:$0xff]
    %v675 = vld [vmem:[#allocation8 + $0x9d8] sm:$0xff]
    %v676 = vld [vmem:[#allocation8 + $0x9e0] sm:$0xff]
    %v677 = vld [vmem:[#allocation8 + $0x9e8] sm:$0xff]
    %v678 = vld [vmem:[#allocation8 + $0x9f0] sm:$0xff]
    %v679 = vld [vmem:[#allocation8 + $0x9f8] sm:$0xff]
    %v680 = vld [vmem:[#allocation8 + $0xa00] sm:$0xff]
    %v681 = vld [vmem:[#allocation8 + $0xa08] sm:$0xff]
    %v682 = vld [vmem:[#allocation8 + $0xa10] sm:$0xff]
    %v683 = vld [vmem:[#allocation8 + $0xa18] sm:$0xff]
    %v684 = vld [vmem:[#allocation8 + $0xa20] sm:$0xff]
    %v685 = vld [vmem:[#allocation8 + $0xa28] sm:$0xff]
    %v686 = vld [vmem:[#allocation8 + $0xa30] sm:$0xff]
    %v687 = vld [vmem:[#allocation8 + $0xa38] sm:$0xff]
    %v688 = vld [vmem:[#allocation8 + $0xa40] sm:$0xff]
    %v689 = vld [vmem:[#allocation8 + $0xa48] sm:$0xff]
    %v690 = vld [vmem:[#allocation8 + $0xa50] sm:$0xff]
    %v691 = vld [vmem:[#allocation8 + $0xa58] sm:$0xff]
    %v692 = vld [vmem:[#allocation8 + $0xa60] sm:$0xff]
    %v693 = vld [vmem:[#allocation8 + $0xa68] sm:$0xff]
    %v694 = vld [vmem:[#allocation8 + $0xa70] sm:$0xff]
    %v695 = vld [vmem:[#allocation8 + $0xa78] sm:$0xff]
    %v696 = vld [vmem:[#allocation8 + $0xa80] sm:$0xff]
    %v697 = vld [vmem:[#allocation8 + $0xa88] sm:$0xff]
    %v698 = vld [vmem:[#allocation8 + $0xa90] sm:$0xff]
    %v699 = vld [vmem:[#allocation8 + $0xa98] sm:$0xff]
    %v700 = vld [vmem:[#allocation8 + $0xaa0] sm:$0xff]
    %v701 = vld [vmem:[#allocation8 + $0xaa8] sm:$0xff]
    %v702 = vld [vmem:[#allocation8 + $0xab0] sm:$0xff]
    %v703 = vld [vmem:[#allocation8 + $0xab8] sm:$0xff]
    %v704 = vld [vmem:[#allocation8 + $0xac0] sm:$0xff]
    %v705 = vld [vmem:[#allocation8 + $0xac8] sm:$0xff]
    %v706 = vld [vmem:[#allocation8 + $0xad0] sm:$0xff]
    %v707 = vld [vmem:[#allocation8 + $0xad8] sm:$0xff]
    %v708 = vld [vmem:[#allocation8 + $0xae0] sm:$0xff]
    %v709 = vld [vmem:[#allocation8 + $0xae8] sm:$0xff]
    %v710 = vld [vmem:[#allocation8 + $0xaf0] sm:$0xff]
    %v711 = vld [vmem:[#allocation8 + $0xaf8] sm:$0xff]
    %v712 = vld [vmem:[#allocation8 + $0xb00] sm:$0xff]
    %v713 = vld [vmem:[#allocation8 + $0xb08] sm:$0xff]
    %v714 = vld [vmem:[#allocation8 + $0xb10] sm:$0xff]
    %v715 = vld [vmem:[#allocation8 + $0xb18] sm:$0xff]
    %v716 = vld [vmem:[#allocation8 + $0xb20] sm:$0xff]
    %v717 = vld [vmem:[#allocation8 + $0xb28] sm:$0xff]
    %v718 = vld [vmem:[#allocation8 + $0xb30] sm:$0xff]
    %v719 = vld [vmem:[#allocation8 + $0xb38] sm:$0xff]
    %v720 = vld [vmem:[#allocation8 + $0xb40] sm:$0xff]
    %v721 = vld [vmem:[#allocation8 + $0xb48] sm:$0xff]
    %v722 = vld [vmem:[#allocation8 + $0xb50] sm:$0xff]
    %v723 = vld [vmem:[#allocation8 + $0xb58] sm:$0xff]
    %v724 = vld [vmem:[#allocation8 + $0xb60] sm:$0xff]
    %v725 = vld [vmem:[#allocation8 + $0xb68] sm:$0xff]
    %v726 = vld [vmem:[#allocation8 + $0xb70] sm:$0xff]
    %v727 = vld [vmem:[#allocation8 + $0xb78] sm:$0xff]
    %v728 = vld [vmem:[#allocation8 + $0xb80] sm:$0xff]
    %v729 = vld [vmem:[#allocation8 + $0xb88] sm:$0xff]
    %v730 = vld [vmem:[#allocation8 + $0xb90] sm:$0xff]
    %v731 = vld [vmem:[#allocation8 + $0xb98] sm:$0xff]
    %v732 = vld [vmem:[#allocation8 + $0xba0] sm:$0xff]
    %v733 = vld [vmem:[#allocation8 + $0xba8] sm:$0xff]
    %v734 = vld [vmem:[#allocation8 + $0xbb0] sm:$0xff]
    %v735 = vld [vmem:[#allocation8 + $0xbb8] sm:$0xff]
    %v736 = vld [vmem:[#allocation8 + $0xbc0] sm:$0xff]
    %v737 = vld [vmem:[#allocation8 + $0xbc8] sm:$0xff]
    %v738 = vld [vmem:[#allocation8 + $0xbd0] sm:$0xff]
    %v739 = vld [vmem:[#allocation8 + $0xbd8] sm:$0xff]
    %v740 = vld [vmem:[#allocation8 + $0xbe0] sm:$0xff]
    %v741 = vld [vmem:[#allocation8 + $0xbe8] sm:$0xff]
    %v742 = vld [vmem:[#allocation8 + $0xbf0] sm:$0xff]
    %v743 = vld [vmem:[#allocation8 + $0xbf8] sm:$0xff]
    %v744 = vld [vmem:[#allocation10] sm:$0xff]
    %v746 = vlaneseq
    %v747 = vshrl.u32 %v746, 7
    %v748 = vsub.s32 0, %v747
    %v749 = vrot.slane %v744, %v748
    %v750 = vlaneseq
    %v751 = vshrl.u32 %v750, 7
    %v752 = vsub.s32 1, %v751
    %v753 = vrot.slane %v744, %v752
    %v754 = vlaneseq
    %v755 = vshrl.u32 %v754, 7
    %v756 = vsub.s32 2, %v755
    %v757 = vrot.slane %v744, %v756
    %v758 = vlaneseq
    %v759 = vshrl.u32 %v758, 7
    %v760 = vsub.s32 3, %v759
    %v761 = vrot.slane %v744, %v760
    %v762 = vlaneseq
    %v763 = vshrl.u32 %v762, 7
    %v764 = vsub.s32 4, %v763
    %v765 = vrot.slane %v744, %v764
    %v766 = vlaneseq
    %v767 = vshrl.u32 %v766, 7
    %v768 = vsub.s32 5, %v767
    %v769 = vrot.slane %v744, %v768
    %v770 = vlaneseq
    %v771 = vshrl.u32 %v770, 7
    %v772 = vsub.s32 6, %v771
    %v773 = vrot.slane %v744, %v772
    %v774 = vlaneseq
    %v775 = vshrl.u32 %v774, 7
    %v776 = vsub.s32 7, %v775
    %v777 = vrot.slane %v744, %v776
    %v1170 = vunpack.c.l.b16 %v360
    %v1171 = vunpack.c.h.b16 %v360
    %v1172 = vunpack.c.l.b16 %v361
    %v1173 = vunpack.c.h.b16 %v361
    %v1174 = vunpack.c.l.b16 %v362
    %v1175 = vunpack.c.h.b16 %v362
    %v1176 = vunpack.c.l.b16 %v363
    %v1177 = vunpack.c.h.b16 %v363
    %v1178 = vunpack.c.l.b16 %v364
    %v1179 = vunpack.c.h.b16 %v364
    %v1180 = vunpack.c.l.b16 %v365
    %v1181 = vunpack.c.h.b16 %v365
    %v1182 = vunpack.c.l.b16 %v366
    %v1183 = vunpack.c.h.b16 %v366
    %v1184 = vunpack.c.l.b16 %v367
    %v1185 = vunpack.c.h.b16 %v367
    %v1186 = vunpack.c.l.b16 %v368
    %v1187 = vunpack.c.h.b16 %v368
    %v1188 = vunpack.c.l.b16 %v369
    %v1189 = vunpack.c.h.b16 %v369
    %v1190 = vunpack.c.l.b16 %v370
    %v1191 = vunpack.c.h.b16 %v370
    %v1192 = vunpack.c.l.b16 %v371
    %v1193 = vunpack.c.h.b16 %v371
    %v1194 = vunpack.c.l.b16 %v372
    %v1195 = vunpack.c.h.b16 %v372
    %v1196 = vunpack.c.l.b16 %v373
    %v1197 = vunpack.c.h.b16 %v373
    %v1198 = vunpack.c.l.b16 %v374
    %v1199 = vunpack.c.h.b16 %v374
    %v1200 = vunpack.c.l.b16 %v375
    %v1201 = vunpack.c.h.b16 %v375
    %v1202 = vunpack.c.l.b16 %v376
    %v1203 = vunpack.c.h.b16 %v376
    %v1204 = vunpack.c.l.b16 %v377
    %v1205 = vunpack.c.h.b16 %v377
    %v1206 = vunpack.c.l.b16 %v378
    %v1207 = vunpack.c.h.b16 %v378
    %v1208 = vunpack.c.l.b16 %v379
    %v1209 = vunpack.c.h.b16 %v379
    %v1210 = vunpack.c.l.b16 %v380
    %v1211 = vunpack.c.h.b16 %v380
    %v1212 = vunpack.c.l.b16 %v381
    %v1213 = vunpack.c.h.b16 %v381
    %v1214 = vunpack.c.l.b16 %v382
    %v1215 = vunpack.c.h.b16 %v382
    %v1216 = vunpack.c.l.b16 %v383
    %v1217 = vunpack.c.h.b16 %v383
    %v1218 = vunpack.c.l.b16 %v384
    %v1219 = vunpack.c.h.b16 %v384
    %v1220 = vunpack.c.l.b16 %v385
    %v1221 = vunpack.c.h.b16 %v385
    %v1222 = vunpack.c.l.b16 %v386
    %v1223 = vunpack.c.h.b16 %v386
    %v1224 = vunpack.c.l.b16 %v387
    %v1225 = vunpack.c.h.b16 %v387
    %v1226 = vunpack.c.l.b16 %v388
    %v1227 = vunpack.c.h.b16 %v388
    %v1228 = vunpack.c.l.b16 %v389
    %v1229 = vunpack.c.h.b16 %v389
    %v1230 = vunpack.c.l.b16 %v390
    %v1231 = vunpack.c.h.b16 %v390
    %v1232 = vunpack.c.l.b16 %v391
    %v1233 = vunpack.c.h.b16 %v391
    %v1234 = vunpack.c.l.b16 %v392
    %v1235 = vunpack.c.h.b16 %v392
    %v1236 = vunpack.c.l.b16 %v393
    %v1237 = vunpack.c.h.b16 %v393
    %v1238 = vunpack.c.l.b16 %v394
    %v1239 = vunpack.c.h.b16 %v394
    %v1240 = vunpack.c.l.b16 %v395
    %v1241 = vunpack.c.h.b16 %v395
    %v1242 = vunpack.c.l.b16 %v396
    %v1243 = vunpack.c.h.b16 %v396
    %v1244 = vunpack.c.l.b16 %v397
    %v1245 = vunpack.c.h.b16 %v397
    %v1246 = vunpack.c.l.b16 %v398
    %v1247 = vunpack.c.h.b16 %v398
    %v1248 = vunpack.c.l.b16 %v399
    %v1249 = vunpack.c.h.b16 %v399
    %v1250 = vunpack.c.l.b16 %v400
    %v1251 = vunpack.c.h.b16 %v400
    %v1252 = vunpack.c.l.b16 %v401
    %v1253 = vunpack.c.h.b16 %v401
    %v1254 = vunpack.c.l.b16 %v402
    %v1255 = vunpack.c.h.b16 %v402
    %v1256 = vunpack.c.l.b16 %v403
    %v1257 = vunpack.c.h.b16 %v403
    %v1258 = vunpack.c.l.b16 %v404
    %v1259 = vunpack.c.h.b16 %v404
    %v1260 = vunpack.c.l.b16 %v405
    %v1261 = vunpack.c.h.b16 %v405
    %v1262 = vunpack.c.l.b16 %v406
    %v1263 = vunpack.c.h.b16 %v406
    %v1264 = vunpack.c.l.b16 %v407
    %v1265 = vunpack.c.h.b16 %v407
    %v1266 = vunpack.c.l.b16 %v408
    %v1267 = vunpack.c.h.b16 %v408
    %v1268 = vunpack.c.l.b16 %v409
    %v1269 = vunpack.c.h.b16 %v409
    %v1270 = vunpack.c.l.b16 %v410
    %v1271 = vunpack.c.h.b16 %v410
    %v1272 = vunpack.c.l.b16 %v411
    %v1273 = vunpack.c.h.b16 %v411
    %v1274 = vunpack.c.l.b16 %v412
    %v1275 = vunpack.c.h.b16 %v412
    %v1276 = vunpack.c.l.b16 %v413
    %v1277 = vunpack.c.h.b16 %v413
    %v1278 = vunpack.c.l.b16 %v414
    %v1279 = vunpack.c.h.b16 %v414
    %v1280 = vunpack.c.l.b16 %v415
    %v1281 = vunpack.c.h.b16 %v415
    %v1282 = vunpack.c.l.b16 %v416
    %v1283 = vunpack.c.h.b16 %v416
    %v1284 = vunpack.c.l.b16 %v417
    %v1285 = vunpack.c.h.b16 %v417
    %v1286 = vunpack.c.l.b16 %v418
    %v1287 = vunpack.c.h.b16 %v418
    %v1288 = vunpack.c.l.b16 %v419
    %v1289 = vunpack.c.h.b16 %v419
    %v1290 = vunpack.c.l.b16 %v420
    %v1291 = vunpack.c.h.b16 %v420
    %v1292 = vunpack.c.l.b16 %v421
    %v1293 = vunpack.c.h.b16 %v421
    %v1294 = vunpack.c.l.b16 %v422
    %v1295 = vunpack.c.h.b16 %v422
    %v1296 = vunpack.c.l.b16 %v423
    %v1297 = vunpack.c.h.b16 %v423
    %v1298 = vunpack.c.l.b16 %v424
    %v1299 = vunpack.c.h.b16 %v424
    %v1300 = vunpack.c.l.b16 %v425
    %v1301 = vunpack.c.h.b16 %v425
    %v1302 = vunpack.c.l.b16 %v426
    %v1303 = vunpack.c.h.b16 %v426
    %v1304 = vunpack.c.l.b16 %v427
    %v1305 = vunpack.c.h.b16 %v427
    %v1306 = vunpack.c.l.b16 %v428
    %v1307 = vunpack.c.h.b16 %v428
    %v1308 = vunpack.c.l.b16 %v429
    %v1309 = vunpack.c.h.b16 %v429
    %v1310 = vunpack.c.l.b16 %v430
    %v1311 = vunpack.c.h.b16 %v430
    %v1312 = vunpack.c.l.b16 %v431
    %v1313 = vunpack.c.h.b16 %v431
    %v1314 = vunpack.c.l.b16 %v432
    %v1315 = vunpack.c.h.b16 %v432
    %v1316 = vunpack.c.l.b16 %v433
    %v1317 = vunpack.c.h.b16 %v433
    %v1318 = vunpack.c.l.b16 %v434
    %v1319 = vunpack.c.h.b16 %v434
    %v1320 = vunpack.c.l.b16 %v435
    %v1321 = vunpack.c.h.b16 %v435
    %v1322 = vunpack.c.l.b16 %v436
    %v1323 = vunpack.c.h.b16 %v436
    %v1324 = vunpack.c.l.b16 %v437
    %v1325 = vunpack.c.h.b16 %v437
    %v1326 = vunpack.c.l.b16 %v438
    %v1327 = vunpack.c.h.b16 %v438
    %v1328 = vunpack.c.l.b16 %v439
    %v1329 = vunpack.c.h.b16 %v439
    %v1330 = vunpack.c.l.b16 %v440
    %v1331 = vunpack.c.h.b16 %v440
    %v1332 = vunpack.c.l.b16 %v441
    %v1333 = vunpack.c.h.b16 %v441
    %v1334 = vunpack.c.l.b16 %v442
    %v1335 = vunpack.c.h.b16 %v442
    %v1336 = vunpack.c.l.b16 %v443
    %v1337 = vunpack.c.h.b16 %v443
    %v1338 = vunpack.c.l.b16 %v444
    %v1339 = vunpack.c.h.b16 %v444
    %v1340 = vunpack.c.l.b16 %v445
    %v1341 = vunpack.c.h.b16 %v445
    %v1342 = vunpack.c.l.b16 %v446
    %v1343 = vunpack.c.h.b16 %v446
    %v1344 = vunpack.c.l.b16 %v447
    %v1345 = vunpack.c.h.b16 %v447
    %v1346 = vunpack.c.l.b16 %v448
    %v1347 = vunpack.c.h.b16 %v448
    %v1348 = vunpack.c.l.b16 %v449
    %v1349 = vunpack.c.h.b16 %v449
    %v1350 = vunpack.c.l.b16 %v450
    %v1351 = vunpack.c.h.b16 %v450
    %v1352 = vunpack.c.l.b16 %v451
    %v1353 = vunpack.c.h.b16 %v451
    %v1354 = vunpack.c.l.b16 %v452
    %v1355 = vunpack.c.h.b16 %v452
    %v1356 = vunpack.c.l.b16 %v453
    %v1357 = vunpack.c.h.b16 %v453
    %v1358 = vunpack.c.l.b16 %v454
    %v1359 = vunpack.c.h.b16 %v454
    %v1360 = vunpack.c.l.b16 %v455
    %v1361 = vunpack.c.h.b16 %v455
    %v1362 = vunpack.c.l.b16 %v456
    %v1363 = vunpack.c.h.b16 %v456
    %v1364 = vunpack.c.l.b16 %v457
    %v1365 = vunpack.c.h.b16 %v457
    %v1366 = vunpack.c.l.b16 %v458
    %v1367 = vunpack.c.h.b16 %v458
    %v1368 = vunpack.c.l.b16 %v459
    %v1369 = vunpack.c.h.b16 %v459
    %v1370 = vunpack.c.l.b16 %v460
    %v1371 = vunpack.c.h.b16 %v460
    %v1372 = vunpack.c.l.b16 %v461
    %v1373 = vunpack.c.h.b16 %v461
    %v1374 = vunpack.c.l.b16 %v462
    %v1375 = vunpack.c.h.b16 %v462
    %v1376 = vunpack.c.l.b16 %v463
    %v1377 = vunpack.c.h.b16 %v463
    %v1378 = vunpack.c.l.b16 %v464
    %v1379 = vunpack.c.h.b16 %v464
    %v1380 = vunpack.c.l.b16 %v465
    %v1381 = vunpack.c.h.b16 %v465
    %v1382 = vunpack.c.l.b16 %v466
    %v1383 = vunpack.c.h.b16 %v466
    %v1384 = vunpack.c.l.b16 %v467
    %v1385 = vunpack.c.h.b16 %v467
    %v1386 = vunpack.c.l.b16 %v468
    %v1387 = vunpack.c.h.b16 %v468
    %v1388 = vunpack.c.l.b16 %v469
    %v1389 = vunpack.c.h.b16 %v469
    %v1390 = vunpack.c.l.b16 %v470
    %v1391 = vunpack.c.h.b16 %v470
    %v1392 = vunpack.c.l.b16 %v471
    %v1393 = vunpack.c.h.b16 %v471
    %v1394 = vunpack.c.l.b16 %v472
    %v1395 = vunpack.c.h.b16 %v472
    %v1396 = vunpack.c.l.b16 %v473
    %v1397 = vunpack.c.h.b16 %v473
    %v1398 = vunpack.c.l.b16 %v474
    %v1399 = vunpack.c.h.b16 %v474
    %v1400 = vunpack.c.l.b16 %v475
    %v1401 = vunpack.c.h.b16 %v475
    %v1402 = vunpack.c.l.b16 %v476
    %v1403 = vunpack.c.h.b16 %v476
    %v1404 = vunpack.c.l.b16 %v477
    %v1405 = vunpack.c.h.b16 %v477
    %v1406 = vunpack.c.l.b16 %v478
    %v1407 = vunpack.c.h.b16 %v478
    %v1408 = vunpack.c.l.b16 %v479
    %v1409 = vunpack.c.h.b16 %v479
    %v1410 = vunpack.c.l.b16 %v480
    %v1411 = vunpack.c.h.b16 %v480
    %v1412 = vunpack.c.l.b16 %v481
    %v1413 = vunpack.c.h.b16 %v481
    %v1414 = vunpack.c.l.b16 %v482
    %v1415 = vunpack.c.h.b16 %v482
    %v1416 = vunpack.c.l.b16 %v483
    %v1417 = vunpack.c.h.b16 %v483
    %v1418 = vunpack.c.l.b16 %v484
    %v1419 = vunpack.c.h.b16 %v484
    %v1420 = vunpack.c.l.b16 %v485
    %v1421 = vunpack.c.h.b16 %v485
    %v1422 = vunpack.c.l.b16 %v486
    %v1423 = vunpack.c.h.b16 %v486
    %v1424 = vunpack.c.l.b16 %v487
    %v1425 = vunpack.c.h.b16 %v487
    %v1426 = vunpack.c.l.b16 %v488
    %v1427 = vunpack.c.h.b16 %v488
    %v1428 = vunpack.c.l.b16 %v489
    %v1429 = vunpack.c.h.b16 %v489
    %v1430 = vunpack.c.l.b16 %v490
    %v1431 = vunpack.c.h.b16 %v490
    %v1432 = vunpack.c.l.b16 %v491
    %v1433 = vunpack.c.h.b16 %v491
    %v1434 = vunpack.c.l.b16 %v492
    %v1435 = vunpack.c.h.b16 %v492
    %v1436 = vunpack.c.l.b16 %v493
    %v1437 = vunpack.c.h.b16 %v493
    %v1438 = vunpack.c.l.b16 %v494
    %v1439 = vunpack.c.h.b16 %v494
    %v1440 = vunpack.c.l.b16 %v495
    %v1441 = vunpack.c.h.b16 %v495
    %v1442 = vunpack.c.l.b16 %v496
    %v1443 = vunpack.c.h.b16 %v496
    %v1444 = vunpack.c.l.b16 %v497
    %v1445 = vunpack.c.h.b16 %v497
    %v1446 = vunpack.c.l.b16 %v498
    %v1447 = vunpack.c.h.b16 %v498
    %v1448 = vunpack.c.l.b16 %v499
    %v1449 = vunpack.c.h.b16 %v499
    %v1450 = vunpack.c.l.b16 %v500
    %v1451 = vunpack.c.h.b16 %v500
    %v1452 = vunpack.c.l.b16 %v501
    %v1453 = vunpack.c.h.b16 %v501
    %v1454 = vunpack.c.l.b16 %v502
    %v1455 = vunpack.c.h.b16 %v502
    %v1456 = vunpack.c.l.b16 %v503
    %v1457 = vunpack.c.h.b16 %v503
    %v1458 = vunpack.c.l.b16 %v504
    %v1459 = vunpack.c.h.b16 %v504
    %v1460 = vunpack.c.l.b16 %v505
    %v1461 = vunpack.c.h.b16 %v505
    %v1462 = vunpack.c.l.b16 %v506
    %v1463 = vunpack.c.h.b16 %v506
    %v1464 = vunpack.c.l.b16 %v507
    %v1465 = vunpack.c.h.b16 %v507
    %v1466 = vunpack.c.l.b16 %v508
    %v1467 = vunpack.c.h.b16 %v508
    %v1468 = vunpack.c.l.b16 %v509
    %v1469 = vunpack.c.h.b16 %v509
    %v1470 = vunpack.c.l.b16 %v510
    %v1471 = vunpack.c.h.b16 %v510
    %v1472 = vunpack.c.l.b16 %v511
    %v1473 = vunpack.c.h.b16 %v511
    %v1474 = vunpack.c.l.b16 %v512
    %v1475 = vunpack.c.h.b16 %v512
    %v1476 = vunpack.c.l.b16 %v513
    %v1477 = vunpack.c.h.b16 %v513
    %v1478 = vunpack.c.l.b16 %v514
    %v1479 = vunpack.c.h.b16 %v514
    %v1480 = vunpack.c.l.b16 %v515
    %v1481 = vunpack.c.h.b16 %v515
    %v1482 = vunpack.c.l.b16 %v516
    %v1483 = vunpack.c.h.b16 %v516
    %v1484 = vunpack.c.l.b16 %v517
    %v1485 = vunpack.c.h.b16 %v517
    %v1486 = vunpack.c.l.b16 %v518
    %v1487 = vunpack.c.h.b16 %v518
    %v1488 = vunpack.c.l.b16 %v519
    %v1489 = vunpack.c.h.b16 %v519
    %v1490 = vunpack.c.l.b16 %v520
    %v1491 = vunpack.c.h.b16 %v520
    %v1492 = vunpack.c.l.b16 %v521
    %v1493 = vunpack.c.h.b16 %v521
    %v1494 = vunpack.c.l.b16 %v522
    %v1495 = vunpack.c.h.b16 %v522
    %v1496 = vunpack.c.l.b16 %v523
    %v1497 = vunpack.c.h.b16 %v523
    %v1498 = vunpack.c.l.b16 %v524
    %v1499 = vunpack.c.h.b16 %v524
    %v1500 = vunpack.c.l.b16 %v525
    %v1501 = vunpack.c.h.b16 %v525
    %v1502 = vunpack.c.l.b16 %v526
    %v1503 = vunpack.c.h.b16 %v526
    %v1504 = vunpack.c.l.b16 %v527
    %v1505 = vunpack.c.h.b16 %v527
    %v1506 = vunpack.c.l.b16 %v528
    %v1507 = vunpack.c.h.b16 %v528
    %v1508 = vunpack.c.l.b16 %v529
    %v1509 = vunpack.c.h.b16 %v529
    %v1510 = vunpack.c.l.b16 %v530
    %v1511 = vunpack.c.h.b16 %v530
    %v1512 = vunpack.c.l.b16 %v531
    %v1513 = vunpack.c.h.b16 %v531
    %v1514 = vunpack.c.l.b16 %v532
    %v1515 = vunpack.c.h.b16 %v532
    %v1516 = vunpack.c.l.b16 %v533
    %v1517 = vunpack.c.h.b16 %v533
    %v1518 = vunpack.c.l.b16 %v534
    %v1519 = vunpack.c.h.b16 %v534
    %v1520 = vunpack.c.l.b16 %v535
    %v1521 = vunpack.c.h.b16 %v535
    %v1522 = vunpack.c.l.b16 %v536
    %v1523 = vunpack.c.h.b16 %v536
    %v1524 = vunpack.c.l.b16 %v537
    %v1525 = vunpack.c.h.b16 %v537
    %v1526 = vunpack.c.l.b16 %v538
    %v1527 = vunpack.c.h.b16 %v538
    %v1528 = vunpack.c.l.b16 %v539
    %v1529 = vunpack.c.h.b16 %v539
    %v1530 = vunpack.c.l.b16 %v540
    %v1531 = vunpack.c.h.b16 %v540
    %v1532 = vunpack.c.l.b16 %v541
    %v1533 = vunpack.c.h.b16 %v541
    %v1534 = vunpack.c.l.b16 %v542
    %v1535 = vunpack.c.h.b16 %v542
    %v1536 = vunpack.c.l.b16 %v543
    %v1537 = vunpack.c.h.b16 %v543
    %v1538 = vunpack.c.l.b16 %v544
    %v1539 = vunpack.c.h.b16 %v544
    %v1540 = vunpack.c.l.b16 %v545
    %v1541 = vunpack.c.h.b16 %v545
    %v1542 = vunpack.c.l.b16 %v546
    %v1543 = vunpack.c.h.b16 %v546
    %v1544 = vunpack.c.l.b16 %v547
    %v1545 = vunpack.c.h.b16 %v547
    %v1546 = vunpack.c.l.b16 %v548
    %v1547 = vunpack.c.h.b16 %v548
    %v1548 = vunpack.c.l.b16 %v549
    %v1549 = vunpack.c.h.b16 %v549
    %v1550 = vunpack.c.l.b16 %v550
    %v1551 = vunpack.c.h.b16 %v550
    %v1552 = vunpack.c.l.b16 %v551
    %v1553 = vunpack.c.h.b16 %v551
    %v1554 = vunpack.c.l.b16 %v552
    %v1555 = vunpack.c.h.b16 %v552
    %v1556 = vunpack.c.l.b16 %v553
    %v1557 = vunpack.c.h.b16 %v553
    %v1558 = vunpack.c.l.b16 %v554
    %v1559 = vunpack.c.h.b16 %v554
    %v1560 = vunpack.c.l.b16 %v555
    %v1561 = vunpack.c.h.b16 %v555
    %v1562 = vunpack.c.l.b16 %v556
    %v1563 = vunpack.c.h.b16 %v556
    %v1564 = vunpack.c.l.b16 %v557
    %v1565 = vunpack.c.h.b16 %v557
    %v1566 = vunpack.c.l.b16 %v558
    %v1567 = vunpack.c.h.b16 %v558
    %v1568 = vunpack.c.l.b16 %v559
    %v1569 = vunpack.c.h.b16 %v559
    %v1570 = vunpack.c.l.b16 %v560
    %v1571 = vunpack.c.h.b16 %v560
    %v1572 = vunpack.c.l.b16 %v561
    %v1573 = vunpack.c.h.b16 %v561
    %v1574 = vunpack.c.l.b16 %v562
    %v1575 = vunpack.c.h.b16 %v562
    %v1576 = vunpack.c.l.b16 %v563
    %v1577 = vunpack.c.h.b16 %v563
    %v1578 = vunpack.c.l.b16 %v564
    %v1579 = vunpack.c.h.b16 %v564
    %v1580 = vunpack.c.l.b16 %v565
    %v1581 = vunpack.c.h.b16 %v565
    %v1582 = vunpack.c.l.b16 %v566
    %v1583 = vunpack.c.h.b16 %v566
    %v1584 = vunpack.c.l.b16 %v567
    %v1585 = vunpack.c.h.b16 %v567
    %v1586 = vunpack.c.l.b16 %v568
    %v1587 = vunpack.c.h.b16 %v568
    %v1588 = vunpack.c.l.b16 %v569
    %v1589 = vunpack.c.h.b16 %v569
    %v1590 = vunpack.c.l.b16 %v570
    %v1591 = vunpack.c.h.b16 %v570
    %v1592 = vunpack.c.l.b16 %v571
    %v1593 = vunpack.c.h.b16 %v571
    %v1594 = vunpack.c.l.b16 %v572
    %v1595 = vunpack.c.h.b16 %v572
    %v1596 = vunpack.c.l.b16 %v573
    %v1597 = vunpack.c.h.b16 %v573
    %v1598 = vunpack.c.l.b16 %v574
    %v1599 = vunpack.c.h.b16 %v574
    %v1600 = vunpack.c.l.b16 %v575
    %v1601 = vunpack.c.h.b16 %v575
    %v1602 = vunpack.c.l.b16 %v576
    %v1603 = vunpack.c.h.b16 %v576
    %v1604 = vunpack.c.l.b16 %v577
    %v1605 = vunpack.c.h.b16 %v577
    %v1606 = vunpack.c.l.b16 %v578
    %v1607 = vunpack.c.h.b16 %v578
    %v1608 = vunpack.c.l.b16 %v579
    %v1609 = vunpack.c.h.b16 %v579
    %v1610 = vunpack.c.l.b16 %v580
    %v1611 = vunpack.c.h.b16 %v580
    %v1612 = vunpack.c.l.b16 %v581
    %v1613 = vunpack.c.h.b16 %v581
    %v1614 = vunpack.c.l.b16 %v582
    %v1615 = vunpack.c.h.b16 %v582
    %v1616 = vunpack.c.l.b16 %v583
    %v1617 = vunpack.c.h.b16 %v583
    %v1618 = vunpack.c.l.b16 %v584
    %v1619 = vunpack.c.h.b16 %v584
    %v1620 = vunpack.c.l.b16 %v585
    %v1621 = vunpack.c.h.b16 %v585
    %v1622 = vunpack.c.l.b16 %v586
    %v1623 = vunpack.c.h.b16 %v586
    %v1624 = vunpack.c.l.b16 %v587
    %v1625 = vunpack.c.h.b16 %v587
    %v1626 = vunpack.c.l.b16 %v588
    %v1627 = vunpack.c.h.b16 %v588
    %v1628 = vunpack.c.l.b16 %v589
    %v1629 = vunpack.c.h.b16 %v589
    %v1630 = vunpack.c.l.b16 %v590
    %v1631 = vunpack.c.h.b16 %v590
    %v1632 = vunpack.c.l.b16 %v591
    %v1633 = vunpack.c.h.b16 %v591
    %v1634 = vunpack.c.l.b16 %v592
    %v1635 = vunpack.c.h.b16 %v592
    %v1636 = vunpack.c.l.b16 %v593
    %v1637 = vunpack.c.h.b16 %v593
    %v1638 = vunpack.c.l.b16 %v594
    %v1639 = vunpack.c.h.b16 %v594
    %v1640 = vunpack.c.l.b16 %v595
    %v1641 = vunpack.c.h.b16 %v595
    %v1642 = vunpack.c.l.b16 %v596
    %v1643 = vunpack.c.h.b16 %v596
    %v1644 = vunpack.c.l.b16 %v597
    %v1645 = vunpack.c.h.b16 %v597
    %v1646 = vunpack.c.l.b16 %v598
    %v1647 = vunpack.c.h.b16 %v598
    %v1648 = vunpack.c.l.b16 %v599
    %v1649 = vunpack.c.h.b16 %v599
    %v1650 = vunpack.c.l.b16 %v600
    %v1651 = vunpack.c.h.b16 %v600
    %v1652 = vunpack.c.l.b16 %v601
    %v1653 = vunpack.c.h.b16 %v601
    %v1654 = vunpack.c.l.b16 %v602
    %v1655 = vunpack.c.h.b16 %v602
    %v1656 = vunpack.c.l.b16 %v603
    %v1657 = vunpack.c.h.b16 %v603
    %v1658 = vunpack.c.l.b16 %v604
    %v1659 = vunpack.c.h.b16 %v604
    %v1660 = vunpack.c.l.b16 %v605
    %v1661 = vunpack.c.h.b16 %v605
    %v1662 = vunpack.c.l.b16 %v606
    %v1663 = vunpack.c.h.b16 %v606
    %v1664 = vunpack.c.l.b16 %v607
    %v1665 = vunpack.c.h.b16 %v607
    %v1666 = vunpack.c.l.b16 %v608
    %v1667 = vunpack.c.h.b16 %v608
    %v1668 = vunpack.c.l.b16 %v609
    %v1669 = vunpack.c.h.b16 %v609
    %v1670 = vunpack.c.l.b16 %v610
    %v1671 = vunpack.c.h.b16 %v610
    %v1672 = vunpack.c.l.b16 %v611
    %v1673 = vunpack.c.h.b16 %v611
    %v1674 = vunpack.c.l.b16 %v612
    %v1675 = vunpack.c.h.b16 %v612
    %v1676 = vunpack.c.l.b16 %v613
    %v1677 = vunpack.c.h.b16 %v613
    %v1678 = vunpack.c.l.b16 %v614
    %v1679 = vunpack.c.h.b16 %v614
    %v1680 = vunpack.c.l.b16 %v615
    %v1681 = vunpack.c.h.b16 %v615
    %v1682 = vunpack.c.l.b16 %v616
    %v1683 = vunpack.c.h.b16 %v616
    %v1684 = vunpack.c.l.b16 %v617
    %v1685 = vunpack.c.h.b16 %v617
    %v1686 = vunpack.c.l.b16 %v618
    %v1687 = vunpack.c.h.b16 %v618
    %v1688 = vunpack.c.l.b16 %v619
    %v1689 = vunpack.c.h.b16 %v619
    %v1690 = vunpack.c.l.b16 %v620
    %v1691 = vunpack.c.h.b16 %v620
    %v1692 = vunpack.c.l.b16 %v621
    %v1693 = vunpack.c.h.b16 %v621
    %v1694 = vunpack.c.l.b16 %v622
    %v1695 = vunpack.c.h.b16 %v622
    %v1696 = vunpack.c.l.b16 %v623
    %v1697 = vunpack.c.h.b16 %v623
    %v1698 = vunpack.c.l.b16 %v624
    %v1699 = vunpack.c.h.b16 %v624
    %v1700 = vunpack.c.l.b16 %v625
    %v1701 = vunpack.c.h.b16 %v625
    %v1702 = vunpack.c.l.b16 %v626
    %v1703 = vunpack.c.h.b16 %v626
    %v1704 = vunpack.c.l.b16 %v627
    %v1705 = vunpack.c.h.b16 %v627
    %v1706 = vunpack.c.l.b16 %v628
    %v1707 = vunpack.c.h.b16 %v628
    %v1708 = vunpack.c.l.b16 %v629
    %v1709 = vunpack.c.h.b16 %v629
    %v1710 = vunpack.c.l.b16 %v630
    %v1711 = vunpack.c.h.b16 %v630
    %v1712 = vunpack.c.l.b16 %v631
    %v1713 = vunpack.c.h.b16 %v631
    %v1714 = vunpack.c.l.b16 %v632
    %v1715 = vunpack.c.h.b16 %v632
    %v1716 = vunpack.c.l.b16 %v633
    %v1717 = vunpack.c.h.b16 %v633
    %v1718 = vunpack.c.l.b16 %v634
    %v1719 = vunpack.c.h.b16 %v634
    %v1720 = vunpack.c.l.b16 %v635
    %v1721 = vunpack.c.h.b16 %v635
    %v1722 = vunpack.c.l.b16 %v636
    %v1723 = vunpack.c.h.b16 %v636
    %v1724 = vunpack.c.l.b16 %v637
    %v1725 = vunpack.c.h.b16 %v637
    %v1726 = vunpack.c.l.b16 %v638
    %v1727 = vunpack.c.h.b16 %v638
    %v1728 = vunpack.c.l.b16 %v639
    %v1729 = vunpack.c.h.b16 %v639
    %v1730 = vunpack.c.l.b16 %v640
    %v1731 = vunpack.c.h.b16 %v640
    %v1732 = vunpack.c.l.b16 %v641
    %v1733 = vunpack.c.h.b16 %v641
    %v1734 = vunpack.c.l.b16 %v642
    %v1735 = vunpack.c.h.b16 %v642
    %v1736 = vunpack.c.l.b16 %v643
    %v1737 = vunpack.c.h.b16 %v643
    %v1738 = vunpack.c.l.b16 %v644
    %v1739 = vunpack.c.h.b16 %v644
    %v1740 = vunpack.c.l.b16 %v645
    %v1741 = vunpack.c.h.b16 %v645
    %v1742 = vunpack.c.l.b16 %v646
    %v1743 = vunpack.c.h.b16 %v646
    %v1744 = vunpack.c.l.b16 %v647
    %v1745 = vunpack.c.h.b16 %v647
    %v1746 = vunpack.c.l.b16 %v648
    %v1747 = vunpack.c.h.b16 %v648
    %v1748 = vunpack.c.l.b16 %v649
    %v1749 = vunpack.c.h.b16 %v649
    %v1750 = vunpack.c.l.b16 %v650
    %v1751 = vunpack.c.h.b16 %v650
    %v1752 = vunpack.c.l.b16 %v651
    %v1753 = vunpack.c.h.b16 %v651
    %v1754 = vunpack.c.l.b16 %v652
    %v1755 = vunpack.c.h.b16 %v652
    %v1756 = vunpack.c.l.b16 %v653
    %v1757 = vunpack.c.h.b16 %v653
    %v1758 = vunpack.c.l.b16 %v654
    %v1759 = vunpack.c.h.b16 %v654
    %v1760 = vunpack.c.l.b16 %v655
    %v1761 = vunpack.c.h.b16 %v655
    %v1762 = vunpack.c.l.b16 %v656
    %v1763 = vunpack.c.h.b16 %v656
    %v1764 = vunpack.c.l.b16 %v657
    %v1765 = vunpack.c.h.b16 %v657
    %v1766 = vunpack.c.l.b16 %v658
    %v1767 = vunpack.c.h.b16 %v658
    %v1768 = vunpack.c.l.b16 %v659
    %v1769 = vunpack.c.h.b16 %v659
    %v1770 = vunpack.c.l.b16 %v660
    %v1771 = vunpack.c.h.b16 %v660
    %v1772 = vunpack.c.l.b16 %v661
    %v1773 = vunpack.c.h.b16 %v661
    %v1774 = vunpack.c.l.b16 %v662
    %v1775 = vunpack.c.h.b16 %v662
    %v1776 = vunpack.c.l.b16 %v663
    %v1777 = vunpack.c.h.b16 %v663
    %v1778 = vunpack.c.l.b16 %v664
    %v1779 = vunpack.c.h.b16 %v664
    %v1780 = vunpack.c.l.b16 %v665
    %v1781 = vunpack.c.h.b16 %v665
    %v1782 = vunpack.c.l.b16 %v666
    %v1783 = vunpack.c.h.b16 %v666
    %v1784 = vunpack.c.l.b16 %v667
    %v1785 = vunpack.c.h.b16 %v667
    %v1786 = vunpack.c.l.b16 %v668
    %v1787 = vunpack.c.h.b16 %v668
    %v1788 = vunpack.c.l.b16 %v669
    %v1789 = vunpack.c.h.b16 %v669
    %v1790 = vunpack.c.l.b16 %v670
    %v1791 = vunpack.c.h.b16 %v670
    %v1792 = vunpack.c.l.b16 %v671
    %v1793 = vunpack.c.h.b16 %v671
    %v1794 = vunpack.c.l.b16 %v672
    %v1795 = vunpack.c.h.b16 %v672
    %v1796 = vunpack.c.l.b16 %v673
    %v1797 = vunpack.c.h.b16 %v673
    %v1798 = vunpack.c.l.b16 %v674
    %v1799 = vunpack.c.h.b16 %v674
    %v1800 = vunpack.c.l.b16 %v675
    %v1801 = vunpack.c.h.b16 %v675
    %v1802 = vunpack.c.l.b16 %v676
    %v1803 = vunpack.c.h.b16 %v676
    %v1804 = vunpack.c.l.b16 %v677
    %v1805 = vunpack.c.h.b16 %v677
    %v1806 = vunpack.c.l.b16 %v678
    %v1807 = vunpack.c.h.b16 %v678
    %v1808 = vunpack.c.l.b16 %v679
    %v1809 = vunpack.c.h.b16 %v679
    %v1810 = vunpack.c.l.b16 %v680
    %v1811 = vunpack.c.h.b16 %v680
    %v1812 = vunpack.c.l.b16 %v681
    %v1813 = vunpack.c.h.b16 %v681
    %v1814 = vunpack.c.l.b16 %v682
    %v1815 = vunpack.c.h.b16 %v682
    %v1816 = vunpack.c.l.b16 %v683
    %v1817 = vunpack.c.h.b16 %v683
    %v1818 = vunpack.c.l.b16 %v684
    %v1819 = vunpack.c.h.b16 %v684
    %v1820 = vunpack.c.l.b16 %v685
    %v1821 = vunpack.c.h.b16 %v685
    %v1822 = vunpack.c.l.b16 %v686
    %v1823 = vunpack.c.h.b16 %v686
    %v1824 = vunpack.c.l.b16 %v687
    %v1825 = vunpack.c.h.b16 %v687
    %v1826 = vunpack.c.l.b16 %v688
    %v1827 = vunpack.c.h.b16 %v688
    %v1828 = vunpack.c.l.b16 %v689
    %v1829 = vunpack.c.h.b16 %v689
    %v1830 = vunpack.c.l.b16 %v690
    %v1831 = vunpack.c.h.b16 %v690
    %v1832 = vunpack.c.l.b16 %v691
    %v1833 = vunpack.c.h.b16 %v691
    %v1834 = vunpack.c.l.b16 %v692
    %v1835 = vunpack.c.h.b16 %v692
    %v1836 = vunpack.c.l.b16 %v693
    %v1837 = vunpack.c.h.b16 %v693
    %v1838 = vunpack.c.l.b16 %v694
    %v1839 = vunpack.c.h.b16 %v694
    %v1840 = vunpack.c.l.b16 %v695
    %v1841 = vunpack.c.h.b16 %v695
    %v1842 = vunpack.c.l.b16 %v696
    %v1843 = vunpack.c.h.b16 %v696
    %v1844 = vunpack.c.l.b16 %v697
    %v1845 = vunpack.c.h.b16 %v697
    %v1846 = vunpack.c.l.b16 %v698
    %v1847 = vunpack.c.h.b16 %v698
    %v1848 = vunpack.c.l.b16 %v699
    %v1849 = vunpack.c.h.b16 %v699
    %v1850 = vunpack.c.l.b16 %v700
    %v1851 = vunpack.c.h.b16 %v700
    %v1852 = vunpack.c.l.b16 %v701
    %v1853 = vunpack.c.h.b16 %v701
    %v1854 = vunpack.c.l.b16 %v702
    %v1855 = vunpack.c.h.b16 %v702
    %v1856 = vunpack.c.l.b16 %v703
    %v1857 = vunpack.c.h.b16 %v703
    %v1858 = vunpack.c.l.b16 %v704
    %v1859 = vunpack.c.h.b16 %v704
    %v1860 = vunpack.c.l.b16 %v705
    %v1861 = vunpack.c.h.b16 %v705
    %v1862 = vunpack.c.l.b16 %v706
    %v1863 = vunpack.c.h.b16 %v706
    %v1864 = vunpack.c.l.b16 %v707
    %v1865 = vunpack.c.h.b16 %v707
    %v1866 = vunpack.c.l.b16 %v708
    %v1867 = vunpack.c.h.b16 %v708
    %v1868 = vunpack.c.l.b16 %v709
    %v1869 = vunpack.c.h.b16 %v709
    %v1870 = vunpack.c.l.b16 %v710
    %v1871 = vunpack.c.h.b16 %v710
    %v1872 = vunpack.c.l.b16 %v711
    %v1873 = vunpack.c.h.b16 %v711
    %v1874 = vunpack.c.l.b16 %v712
    %v1875 = vunpack.c.h.b16 %v712
    %v1876 = vunpack.c.l.b16 %v713
    %v1877 = vunpack.c.h.b16 %v713
    %v1878 = vunpack.c.l.b16 %v714
    %v1879 = vunpack.c.h.b16 %v714
    %v1880 = vunpack.c.l.b16 %v715
    %v1881 = vunpack.c.h.b16 %v715
    %v1882 = vunpack.c.l.b16 %v716
    %v1883 = vunpack.c.h.b16 %v716
    %v1884 = vunpack.c.l.b16 %v717
    %v1885 = vunpack.c.h.b16 %v717
    %v1886 = vunpack.c.l.b16 %v718
    %v1887 = vunpack.c.h.b16 %v718
    %v1888 = vunpack.c.l.b16 %v719
    %v1889 = vunpack.c.h.b16 %v719
    %v1890 = vunpack.c.l.b16 %v720
    %v1891 = vunpack.c.h.b16 %v720
    %v1892 = vunpack.c.l.b16 %v721
    %v1893 = vunpack.c.h.b16 %v721
    %v1894 = vunpack.c.l.b16 %v722
    %v1895 = vunpack.c.h.b16 %v722
    %v1896 = vunpack.c.l.b16 %v723
    %v1897 = vunpack.c.h.b16 %v723
    %v1898 = vunpack.c.l.b16 %v724
    %v1899 = vunpack.c.h.b16 %v724
    %v1900 = vunpack.c.l.b16 %v725
    %v1901 = vunpack.c.h.b16 %v725
    %v1902 = vunpack.c.l.b16 %v726
    %v1903 = vunpack.c.h.b16 %v726
    %v1904 = vunpack.c.l.b16 %v727
    %v1905 = vunpack.c.h.b16 %v727
    %v1906 = vunpack.c.l.b16 %v728
    %v1907 = vunpack.c.h.b16 %v728
    %v1908 = vunpack.c.l.b16 %v729
    %v1909 = vunpack.c.h.b16 %v729
    %v1910 = vunpack.c.l.b16 %v730
    %v1911 = vunpack.c.h.b16 %v730
    %v1912 = vunpack.c.l.b16 %v731
    %v1913 = vunpack.c.h.b16 %v731
    %v1914 = vunpack.c.l.b16 %v732
    %v1915 = vunpack.c.h.b16 %v732
    %v1916 = vunpack.c.l.b16 %v733
    %v1917 = vunpack.c.h.b16 %v733
    %v1918 = vunpack.c.l.b16 %v734
    %v1919 = vunpack.c.h.b16 %v734
    %v1920 = vunpack.c.l.b16 %v735
    %v1921 = vunpack.c.h.b16 %v735
    %v1922 = vunpack.c.l.b16 %v736
    %v1923 = vunpack.c.h.b16 %v736
    %v1924 = vunpack.c.l.b16 %v737
    %v1925 = vunpack.c.h.b16 %v737
    %v1926 = vunpack.c.l.b16 %v738
    %v1927 = vunpack.c.h.b16 %v738
    %v1928 = vunpack.c.l.b16 %v739
    %v1929 = vunpack.c.h.b16 %v739
    %v1930 = vunpack.c.l.b16 %v740
    %v1931 = vunpack.c.h.b16 %v740
    %v1932 = vunpack.c.l.b16 %v741
    %v1933 = vunpack.c.h.b16 %v741
    %v1934 = vunpack.c.l.b16 %v742
    %v1935 = vunpack.c.h.b16 %v742
    %v1936 = vunpack.c.l.b16 %v743
    %v1937 = vunpack.c.h.b16 %v743
    %v1938 = vpack.c.b16 %v1178, %v1170
    %v1939 = vpack.c.b16 %v1179, %v1171
    %v1940 = vpack.c.b16 %v1180, %v1172
    %v1941 = vpack.c.b16 %v1181, %v1173
    %v1942 = vpack.c.b16 %v1182, %v1174
    %v1943 = vpack.c.b16 %v1183, %v1175
    %v1944 = vpack.c.b16 %v1184, %v1176
    %v1945 = vpack.c.b16 %v1185, %v1177
    %v1946 = vpack.c.b16 %v1194, %v1186
    %v1947 = vpack.c.b16 %v1195, %v1187
    %v1948 = vpack.c.b16 %v1196, %v1188
    %v1949 = vpack.c.b16 %v1197, %v1189
    %v1950 = vpack.c.b16 %v1198, %v1190
    %v1951 = vpack.c.b16 %v1199, %v1191
    %v1952 = vpack.c.b16 %v1200, %v1192
    %v1953 = vpack.c.b16 %v1201, %v1193
    %v1954 = vpack.c.b16 %v1210, %v1202
    %v1955 = vpack.c.b16 %v1211, %v1203
    %v1956 = vpack.c.b16 %v1212, %v1204
    %v1957 = vpack.c.b16 %v1213, %v1205
    %v1958 = vpack.c.b16 %v1214, %v1206
    %v1959 = vpack.c.b16 %v1215, %v1207
    %v1960 = vpack.c.b16 %v1216, %v1208
    %v1961 = vpack.c.b16 %v1217, %v1209
    %v1962 = vpack.c.b16 %v1226, %v1218
    %v1963 = vpack.c.b16 %v1227, %v1219
    %v1964 = vpack.c.b16 %v1228, %v1220
    %v1965 = vpack.c.b16 %v1229, %v1221
    %v1966 = vpack.c.b16 %v1230, %v1222
    %v1967 = vpack.c.b16 %v1231, %v1223
    %v1968 = vpack.c.b16 %v1232, %v1224
    %v1969 = vpack.c.b16 %v1233, %v1225
    %v1970 = vpack.c.b16 %v1242, %v1234
    %v1971 = vpack.c.b16 %v1243, %v1235
    %v1972 = vpack.c.b16 %v1244, %v1236
    %v1973 = vpack.c.b16 %v1245, %v1237
    %v1974 = vpack.c.b16 %v1246, %v1238
    %v1975 = vpack.c.b16 %v1247, %v1239
    %v1976 = vpack.c.b16 %v1248, %v1240
    %v1977 = vpack.c.b16 %v1249, %v1241
    %v1978 = vpack.c.b16 %v1258, %v1250
    %v1979 = vpack.c.b16 %v1259, %v1251
    %v1980 = vpack.c.b16 %v1260, %v1252
    %v1981 = vpack.c.b16 %v1261, %v1253
    %v1982 = vpack.c.b16 %v1262, %v1254
    %v1983 = vpack.c.b16 %v1263, %v1255
    %v1984 = vpack.c.b16 %v1264, %v1256
    %v1985 = vpack.c.b16 %v1265, %v1257
    %v1986 = vpack.c.b16 %v1274, %v1266
    %v1987 = vpack.c.b16 %v1275, %v1267
    %v1988 = vpack.c.b16 %v1276, %v1268
    %v1989 = vpack.c.b16 %v1277, %v1269
    %v1990 = vpack.c.b16 %v1278, %v1270
    %v1991 = vpack.c.b16 %v1279, %v1271
    %v1992 = vpack.c.b16 %v1280, %v1272
    %v1993 = vpack.c.b16 %v1281, %v1273
    %v1994 = vpack.c.b16 %v1290, %v1282
    %v1995 = vpack.c.b16 %v1291, %v1283
    %v1996 = vpack.c.b16 %v1292, %v1284
    %v1997 = vpack.c.b16 %v1293, %v1285
    %v1998 = vpack.c.b16 %v1294, %v1286
    %v1999 = vpack.c.b16 %v1295, %v1287
    %v2000 = vpack.c.b16 %v1296, %v1288
    %v2001 = vpack.c.b16 %v1297, %v1289
    %v2002 = vpack.c.b16 %v1306, %v1298
    %v2003 = vpack.c.b16 %v1307, %v1299
    %v2004 = vpack.c.b16 %v1308, %v1300
    %v2005 = vpack.c.b16 %v1309, %v1301
    %v2006 = vpack.c.b16 %v1310, %v1302
    %v2007 = vpack.c.b16 %v1311, %v1303
    %v2008 = vpack.c.b16 %v1312, %v1304
    %v2009 = vpack.c.b16 %v1313, %v1305
    %v2010 = vpack.c.b16 %v1322, %v1314
    %v2011 = vpack.c.b16 %v1323, %v1315
    %v2012 = vpack.c.b16 %v1324, %v1316
    %v2013 = vpack.c.b16 %v1325, %v1317
    %v2014 = vpack.c.b16 %v1326, %v1318
    %v2015 = vpack.c.b16 %v1327, %v1319
    %v2016 = vpack.c.b16 %v1328, %v1320
    %v2017 = vpack.c.b16 %v1329, %v1321
    %v2018 = vpack.c.b16 %v1338, %v1330
    %v2019 = vpack.c.b16 %v1339, %v1331
    %v2020 = vpack.c.b16 %v1340, %v1332
    %v2021 = vpack.c.b16 %v1341, %v1333
    %v2022 = vpack.c.b16 %v1342, %v1334
    %v2023 = vpack.c.b16 %v1343, %v1335
    %v2024 = vpack.c.b16 %v1344, %v1336
    %v2025 = vpack.c.b16 %v1345, %v1337
    %v2026 = vpack.c.b16 %v1354, %v1346
    %v2027 = vpack.c.b16 %v1355, %v1347
    %v2028 = vpack.c.b16 %v1356, %v1348
    %v2029 = vpack.c.b16 %v1357, %v1349
    %v2030 = vpack.c.b16 %v1358, %v1350
    %v2031 = vpack.c.b16 %v1359, %v1351
    %v2032 = vpack.c.b16 %v1360, %v1352
    %v2033 = vpack.c.b16 %v1361, %v1353
    %v2034 = vpack.c.b16 %v1370, %v1362
    %v2035 = vpack.c.b16 %v1371, %v1363
    %v2036 = vpack.c.b16 %v1372, %v1364
    %v2037 = vpack.c.b16 %v1373, %v1365
    %v2038 = vpack.c.b16 %v1374, %v1366
    %v2039 = vpack.c.b16 %v1375, %v1367
    %v2040 = vpack.c.b16 %v1376, %v1368
    %v2041 = vpack.c.b16 %v1377, %v1369
    %v2042 = vpack.c.b16 %v1386, %v1378
    %v2043 = vpack.c.b16 %v1387, %v1379
    %v2044 = vpack.c.b16 %v1388, %v1380
    %v2045 = vpack.c.b16 %v1389, %v1381
    %v2046 = vpack.c.b16 %v1390, %v1382
    %v2047 = vpack.c.b16 %v1391, %v1383
    %v2048 = vpack.c.b16 %v1392, %v1384
    %v2049 = vpack.c.b16 %v1393, %v1385
    %v2050 = vpack.c.b16 %v1402, %v1394
    %v2051 = vpack.c.b16 %v1403, %v1395
    %v2052 = vpack.c.b16 %v1404, %v1396
    %v2053 = vpack.c.b16 %v1405, %v1397
    %v2054 = vpack.c.b16 %v1406, %v1398
    %v2055 = vpack.c.b16 %v1407, %v1399
    %v2056 = vpack.c.b16 %v1408, %v1400
    %v2057 = vpack.c.b16 %v1409, %v1401
    %v2058 = vpack.c.b16 %v1418, %v1410
    %v2059 = vpack.c.b16 %v1419, %v1411
    %v2060 = vpack.c.b16 %v1420, %v1412
    %v2061 = vpack.c.b16 %v1421, %v1413
    %v2062 = vpack.c.b16 %v1422, %v1414
    %v2063 = vpack.c.b16 %v1423, %v1415
    %v2064 = vpack.c.b16 %v1424, %v1416
    %v2065 = vpack.c.b16 %v1425, %v1417
    %v2066 = vpack.c.b16 %v1434, %v1426
    %v2067 = vpack.c.b16 %v1435, %v1427
    %v2068 = vpack.c.b16 %v1436, %v1428
    %v2069 = vpack.c.b16 %v1437, %v1429
    %v2070 = vpack.c.b16 %v1438, %v1430
    %v2071 = vpack.c.b16 %v1439, %v1431
    %v2072 = vpack.c.b16 %v1440, %v1432
    %v2073 = vpack.c.b16 %v1441, %v1433
    %v2074 = vpack.c.b16 %v1450, %v1442
    %v2075 = vpack.c.b16 %v1451, %v1443
    %v2076 = vpack.c.b16 %v1452, %v1444
    %v2077 = vpack.c.b16 %v1453, %v1445
    %v2078 = vpack.c.b16 %v1454, %v1446
    %v2079 = vpack.c.b16 %v1455, %v1447
    %v2080 = vpack.c.b16 %v1456, %v1448
    %v2081 = vpack.c.b16 %v1457, %v1449
    %v2082 = vpack.c.b16 %v1466, %v1458
    %v2083 = vpack.c.b16 %v1467, %v1459
    %v2084 = vpack.c.b16 %v1468, %v1460
    %v2085 = vpack.c.b16 %v1469, %v1461
    %v2086 = vpack.c.b16 %v1470, %v1462
    %v2087 = vpack.c.b16 %v1471, %v1463
    %v2088 = vpack.c.b16 %v1472, %v1464
    %v2089 = vpack.c.b16 %v1473, %v1465
    %v2090 = vpack.c.b16 %v1482, %v1474
    %v2091 = vpack.c.b16 %v1483, %v1475
    %v2092 = vpack.c.b16 %v1484, %v1476
    %v2093 = vpack.c.b16 %v1485, %v1477
    %v2094 = vpack.c.b16 %v1486, %v1478
    %v2095 = vpack.c.b16 %v1487, %v1479
    %v2096 = vpack.c.b16 %v1488, %v1480
    %v2097 = vpack.c.b16 %v1489, %v1481
    %v2098 = vpack.c.b16 %v1498, %v1490
    %v2099 = vpack.c.b16 %v1499, %v1491
    %v2100 = vpack.c.b16 %v1500, %v1492
    %v2101 = vpack.c.b16 %v1501, %v1493
    %v2102 = vpack.c.b16 %v1502, %v1494
    %v2103 = vpack.c.b16 %v1503, %v1495
    %v2104 = vpack.c.b16 %v1504, %v1496
    %v2105 = vpack.c.b16 %v1505, %v1497
    %v2106 = vpack.c.b16 %v1514, %v1506
    %v2107 = vpack.c.b16 %v1515, %v1507
    %v2108 = vpack.c.b16 %v1516, %v1508
    %v2109 = vpack.c.b16 %v1517, %v1509
    %v2110 = vpack.c.b16 %v1518, %v1510
    %v2111 = vpack.c.b16 %v1519, %v1511
    %v2112 = vpack.c.b16 %v1520, %v1512
    %v2113 = vpack.c.b16 %v1521, %v1513
    %v2114 = vpack.c.b16 %v1530, %v1522
    %v2115 = vpack.c.b16 %v1531, %v1523
    %v2116 = vpack.c.b16 %v1532, %v1524
    %v2117 = vpack.c.b16 %v1533, %v1525
    %v2118 = vpack.c.b16 %v1534, %v1526
    %v2119 = vpack.c.b16 %v1535, %v1527
    %v2120 = vpack.c.b16 %v1536, %v1528
    %v2121 = vpack.c.b16 %v1537, %v1529
    %v2122 = vpack.c.b16 %v1546, %v1538
    %v2123 = vpack.c.b16 %v1547, %v1539
    %v2124 = vpack.c.b16 %v1548, %v1540
    %v2125 = vpack.c.b16 %v1549, %v1541
    %v2126 = vpack.c.b16 %v1550, %v1542
    %v2127 = vpack.c.b16 %v1551, %v1543
    %v2128 = vpack.c.b16 %v1552, %v1544
    %v2129 = vpack.c.b16 %v1553, %v1545
    %v2130 = vpack.c.b16 %v1562, %v1554
    %v2131 = vpack.c.b16 %v1563, %v1555
    %v2132 = vpack.c.b16 %v1564, %v1556
    %v2133 = vpack.c.b16 %v1565, %v1557
    %v2134 = vpack.c.b16 %v1566, %v1558
    %v2135 = vpack.c.b16 %v1567, %v1559
    %v2136 = vpack.c.b16 %v1568, %v1560
    %v2137 = vpack.c.b16 %v1569, %v1561
    %v2138 = vpack.c.b16 %v1578, %v1570
    %v2139 = vpack.c.b16 %v1579, %v1571
    %v2140 = vpack.c.b16 %v1580, %v1572
    %v2141 = vpack.c.b16 %v1581, %v1573
    %v2142 = vpack.c.b16 %v1582, %v1574
    %v2143 = vpack.c.b16 %v1583, %v1575
    %v2144 = vpack.c.b16 %v1584, %v1576
    %v2145 = vpack.c.b16 %v1585, %v1577
    %v2146 = vpack.c.b16 %v1594, %v1586
    %v2147 = vpack.c.b16 %v1595, %v1587
    %v2148 = vpack.c.b16 %v1596, %v1588
    %v2149 = vpack.c.b16 %v1597, %v1589
    %v2150 = vpack.c.b16 %v1598, %v1590
    %v2151 = vpack.c.b16 %v1599, %v1591
    %v2152 = vpack.c.b16 %v1600, %v1592
    %v2153 = vpack.c.b16 %v1601, %v1593
    %v2154 = vpack.c.b16 %v1610, %v1602
    %v2155 = vpack.c.b16 %v1611, %v1603
    %v2156 = vpack.c.b16 %v1612, %v1604
    %v2157 = vpack.c.b16 %v1613, %v1605
    %v2158 = vpack.c.b16 %v1614, %v1606
    %v2159 = vpack.c.b16 %v1615, %v1607
    %v2160 = vpack.c.b16 %v1616, %v1608
    %v2161 = vpack.c.b16 %v1617, %v1609
    %v2162 = vpack.c.b16 %v1626, %v1618
    %v2163 = vpack.c.b16 %v1627, %v1619
    %v2164 = vpack.c.b16 %v1628, %v1620
    %v2165 = vpack.c.b16 %v1629, %v1621
    %v2166 = vpack.c.b16 %v1630, %v1622
    %v2167 = vpack.c.b16 %v1631, %v1623
    %v2168 = vpack.c.b16 %v1632, %v1624
    %v2169 = vpack.c.b16 %v1633, %v1625
    %v2170 = vpack.c.b16 %v1642, %v1634
    %v2171 = vpack.c.b16 %v1643, %v1635
    %v2172 = vpack.c.b16 %v1644, %v1636
    %v2173 = vpack.c.b16 %v1645, %v1637
    %v2174 = vpack.c.b16 %v1646, %v1638
    %v2175 = vpack.c.b16 %v1647, %v1639
    %v2176 = vpack.c.b16 %v1648, %v1640
    %v2177 = vpack.c.b16 %v1649, %v1641
    %v2178 = vpack.c.b16 %v1658, %v1650
    %v2179 = vpack.c.b16 %v1659, %v1651
    %v2180 = vpack.c.b16 %v1660, %v1652
    %v2181 = vpack.c.b16 %v1661, %v1653
    %v2182 = vpack.c.b16 %v1662, %v1654
    %v2183 = vpack.c.b16 %v1663, %v1655
    %v2184 = vpack.c.b16 %v1664, %v1656
    %v2185 = vpack.c.b16 %v1665, %v1657
    %v2186 = vpack.c.b16 %v1674, %v1666
    %v2187 = vpack.c.b16 %v1675, %v1667
    %v2188 = vpack.c.b16 %v1676, %v1668
    %v2189 = vpack.c.b16 %v1677, %v1669
    %v2190 = vpack.c.b16 %v1678, %v1670
    %v2191 = vpack.c.b16 %v1679, %v1671
    %v2192 = vpack.c.b16 %v1680, %v1672
    %v2193 = vpack.c.b16 %v1681, %v1673
    %v2194 = vpack.c.b16 %v1690, %v1682
    %v2195 = vpack.c.b16 %v1691, %v1683
    %v2196 = vpack.c.b16 %v1692, %v1684
    %v2197 = vpack.c.b16 %v1693, %v1685
    %v2198 = vpack.c.b16 %v1694, %v1686
    %v2199 = vpack.c.b16 %v1695, %v1687
    %v2200 = vpack.c.b16 %v1696, %v1688
    %v2201 = vpack.c.b16 %v1697, %v1689
    %v2202 = vpack.c.b16 %v1706, %v1698
    %v2203 = vpack.c.b16 %v1707, %v1699
    %v2204 = vpack.c.b16 %v1708, %v1700
    %v2205 = vpack.c.b16 %v1709, %v1701
    %v2206 = vpack.c.b16 %v1710, %v1702
    %v2207 = vpack.c.b16 %v1711, %v1703
    %v2208 = vpack.c.b16 %v1712, %v1704
    %v2209 = vpack.c.b16 %v1713, %v1705
    %v2210 = vpack.c.b16 %v1722, %v1714
    %v2211 = vpack.c.b16 %v1723, %v1715
    %v2212 = vpack.c.b16 %v1724, %v1716
    %v2213 = vpack.c.b16 %v1725, %v1717
    %v2214 = vpack.c.b16 %v1726, %v1718
    %v2215 = vpack.c.b16 %v1727, %v1719
    %v2216 = vpack.c.b16 %v1728, %v1720
    %v2217 = vpack.c.b16 %v1729, %v1721
    %v2218 = vpack.c.b16 %v1738, %v1730
    %v2219 = vpack.c.b16 %v1739, %v1731
    %v2220 = vpack.c.b16 %v1740, %v1732
    %v2221 = vpack.c.b16 %v1741, %v1733
    %v2222 = vpack.c.b16 %v1742, %v1734
    %v2223 = vpack.c.b16 %v1743, %v1735
    %v2224 = vpack.c.b16 %v1744, %v1736
    %v2225 = vpack.c.b16 %v1745, %v1737
    %v2226 = vpack.c.b16 %v1754, %v1746
    %v2227 = vpack.c.b16 %v1755, %v1747
    %v2228 = vpack.c.b16 %v1756, %v1748
    %v2229 = vpack.c.b16 %v1757, %v1749
    %v2230 = vpack.c.b16 %v1758, %v1750
    %v2231 = vpack.c.b16 %v1759, %v1751
    %v2232 = vpack.c.b16 %v1760, %v1752
    %v2233 = vpack.c.b16 %v1761, %v1753
    %v2234 = vpack.c.b16 %v1770, %v1762
    %v2235 = vpack.c.b16 %v1771, %v1763
    %v2236 = vpack.c.b16 %v1772, %v1764
    %v2237 = vpack.c.b16 %v1773, %v1765
    %v2238 = vpack.c.b16 %v1774, %v1766
    %v2239 = vpack.c.b16 %v1775, %v1767
    %v2240 = vpack.c.b16 %v1776, %v1768
    %v2241 = vpack.c.b16 %v1777, %v1769
    %v2242 = vpack.c.b16 %v1786, %v1778
    %v2243 = vpack.c.b16 %v1787, %v1779
    %v2244 = vpack.c.b16 %v1788, %v1780
    %v2245 = vpack.c.b16 %v1789, %v1781
    %v2246 = vpack.c.b16 %v1790, %v1782
    %v2247 = vpack.c.b16 %v1791, %v1783
    %v2248 = vpack.c.b16 %v1792, %v1784
    %v2249 = vpack.c.b16 %v1793, %v1785
    %v2250 = vpack.c.b16 %v1802, %v1794
    %v2251 = vpack.c.b16 %v1803, %v1795
    %v2252 = vpack.c.b16 %v1804, %v1796
    %v2253 = vpack.c.b16 %v1805, %v1797
    %v2254 = vpack.c.b16 %v1806, %v1798
    %v2255 = vpack.c.b16 %v1807, %v1799
    %v2256 = vpack.c.b16 %v1808, %v1800
    %v2257 = vpack.c.b16 %v1809, %v1801
    %v2258 = vpack.c.b16 %v1818, %v1810
    %v2259 = vpack.c.b16 %v1819, %v1811
    %v2260 = vpack.c.b16 %v1820, %v1812
    %v2261 = vpack.c.b16 %v1821, %v1813
    %v2262 = vpack.c.b16 %v1822, %v1814
    %v2263 = vpack.c.b16 %v1823, %v1815
    %v2264 = vpack.c.b16 %v1824, %v1816
    %v2265 = vpack.c.b16 %v1825, %v1817
    %v2266 = vpack.c.b16 %v1834, %v1826
    %v2267 = vpack.c.b16 %v1835, %v1827
    %v2268 = vpack.c.b16 %v1836, %v1828
    %v2269 = vpack.c.b16 %v1837, %v1829
    %v2270 = vpack.c.b16 %v1838, %v1830
    %v2271 = vpack.c.b16 %v1839, %v1831
    %v2272 = vpack.c.b16 %v1840, %v1832
    %v2273 = vpack.c.b16 %v1841, %v1833
    %v2274 = vpack.c.b16 %v1850, %v1842
    %v2275 = vpack.c.b16 %v1851, %v1843
    %v2276 = vpack.c.b16 %v1852, %v1844
    %v2277 = vpack.c.b16 %v1853, %v1845
    %v2278 = vpack.c.b16 %v1854, %v1846
    %v2279 = vpack.c.b16 %v1855, %v1847
    %v2280 = vpack.c.b16 %v1856, %v1848
    %v2281 = vpack.c.b16 %v1857, %v1849
    %v2282 = vpack.c.b16 %v1866, %v1858
    %v2283 = vpack.c.b16 %v1867, %v1859
    %v2284 = vpack.c.b16 %v1868, %v1860
    %v2285 = vpack.c.b16 %v1869, %v1861
    %v2286 = vpack.c.b16 %v1870, %v1862
    %v2287 = vpack.c.b16 %v1871, %v1863
    %v2288 = vpack.c.b16 %v1872, %v1864
    %v2289 = vpack.c.b16 %v1873, %v1865
    %v2290 = vpack.c.b16 %v1882, %v1874
    %v2291 = vpack.c.b16 %v1883, %v1875
    %v2292 = vpack.c.b16 %v1884, %v1876
    %v2293 = vpack.c.b16 %v1885, %v1877
    %v2294 = vpack.c.b16 %v1886, %v1878
    %v2295 = vpack.c.b16 %v1887, %v1879
    %v2296 = vpack.c.b16 %v1888, %v1880
    %v2297 = vpack.c.b16 %v1889, %v1881
    %v2298 = vpack.c.b16 %v1898, %v1890
    %v2299 = vpack.c.b16 %v1899, %v1891
    %v2300 = vpack.c.b16 %v1900, %v1892
    %v2301 = vpack.c.b16 %v1901, %v1893
    %v2302 = vpack.c.b16 %v1902, %v1894
    %v2303 = vpack.c.b16 %v1903, %v1895
    %v2304 = vpack.c.b16 %v1904, %v1896
    %v2305 = vpack.c.b16 %v1905, %v1897
    %v2306 = vpack.c.b16 %v1914, %v1906
    %v2307 = vpack.c.b16 %v1915, %v1907
    %v2308 = vpack.c.b16 %v1916, %v1908
    %v2309 = vpack.c.b16 %v1917, %v1909
    %v2310 = vpack.c.b16 %v1918, %v1910
    %v2311 = vpack.c.b16 %v1919, %v1911
    %v2312 = vpack.c.b16 %v1920, %v1912
    %v2313 = vpack.c.b16 %v1921, %v1913
    %v2314 = vpack.c.b16 %v1930, %v1922
    %v2315 = vpack.c.b16 %v1931, %v1923
    %v2316 = vpack.c.b16 %v1932, %v1924
    %v2317 = vpack.c.b16 %v1933, %v1925
    %v2318 = vpack.c.b16 %v1934, %v1926
    %v2319 = vpack.c.b16 %v1935, %v1927
    %v2320 = vpack.c.b16 %v1936, %v1928
    %v2321 = vpack.c.b16 %v1937, %v1929
    %2706 = vmatprep.subr.bf16.mxu0 %v1939
    %2707 = vmatpush1.bf16.msra.mxu0 %v1938
    %2708 = vmatprep.subr.bf16.mxu0 %v1947
    %2709 = vmatpush1.bf16.msra.mxu0 %v1946
    %2710 = vmatprep.subr.bf16.mxu0 %v1955
    %2711 = vmatpush1.bf16.msra.mxu0 %v1954
    %2712 = vmatprep.subr.bf16.mxu0 %v1963
    %2713 = vmatpush1.bf16.msra.mxu0 %v1962
    %2714 = vmatprep.subr.bf16.mxu0 %v1971
    %2715 = vmatpush1.bf16.msra.mxu0 %v1970
    %2716 = vmatprep.subr.bf16.mxu0 %v1979
    %2717 = vmatpush1.bf16.msra.mxu0 %v1978
    %2718 = vmatprep.subr.bf16.mxu0 %v1987
    %2719 = vmatpush1.bf16.msra.mxu0 %v1986
    %2720 = vmatprep.subr.bf16.mxu0 %v1995
    %2721 = vmatpush1.bf16.msra.mxu0 %v1994
    %2722 = vmatprep.subr.bf16.mxu0 %v2003
    %2723 = vmatpush1.bf16.msra.mxu0 %v2002
    %2724 = vmatprep.subr.bf16.mxu0 %v2011
    %2725 = vmatpush1.bf16.msra.mxu0 %v2010
    %2726 = vmatprep.subr.bf16.mxu0 %v2019
    %2727 = vmatpush1.bf16.msra.mxu0 %v2018
    %2728 = vmatprep.subr.bf16.mxu0 %v2027
    %2729 = vmatpush1.bf16.msra.mxu0 %v2026
    %2730 = vmatprep.subr.bf16.mxu0 %v2035
    %2731 = vmatpush1.bf16.msra.mxu0 %v2034
    %2732 = vmatprep.subr.bf16.mxu0 %v2043
    %2733 = vmatpush1.bf16.msra.mxu0 %v2042
    %2734 = vmatprep.subr.bf16.mxu0 %v2051
    %2735 = vmatpush1.bf16.msra.mxu0 %v2050
    %2736 = vmatprep.subr.bf16.mxu0 %v2059
    %2737 = vmatpush1.bf16.msra.mxu0 %v2058
    %2738 = vmatprep.mubr.bf16.mxu0 %v355
    %2739 = vmatmul.mubr.bf16.gmra.mrb[0].mxu0 %v354
    %v2740 = vpop.f32.mrb[0].mxu0
    %v2741 = vadd.f32 %v749, %v2740
    %v2742 = vpop.f32.mrb[0].mxu0
    %v2743 = vadd.f32 %v753, %v2742
    %v2744 = vpop.f32.mrb[0].mxu0
    %v2745 = vpop.f32.mrb[0].mxu0
    %2746 = vdwg.mxu0
    %2747 = vmatprep.subr.bf16.mxu0 %v2067
    %2748 = vmatpush1.bf16.msra.mxu0 %v2066
    %2749 = vmatprep.subr.bf16.mxu0 %v2075
    %2750 = vmatpush1.bf16.msra.mxu0 %v2074
    %2751 = vmatprep.subr.bf16.mxu0 %v2083
    %2752 = vmatpush1.bf16.msra.mxu0 %v2082
    %2753 = vmatprep.subr.bf16.mxu0 %v2091
    %2754 = vmatpush1.bf16.msra.mxu0 %v2090
    %2755 = vmatprep.subr.bf16.mxu0 %v2099
    %2756 = vmatpush1.bf16.msra.mxu0 %v2098
    %2757 = vmatprep.subr.bf16.mxu0 %v2107
    %2758 = vmatpush1.bf16.msra.mxu0 %v2106
    %2759 = vmatprep.subr.bf16.mxu0 %v2115
    %2760 = vmatpush1.bf16.msra.mxu0 %v2114
    %2761 = vmatprep.subr.bf16.mxu0 %v2123
    %2762 = vmatpush1.bf16.msra.mxu0 %v2122
    %2763 = vmatprep.subr.bf16.mxu0 %v2131
    %2764 = vmatpush1.bf16.msra.mxu0 %v2130
    %2765 = vmatprep.subr.bf16.mxu0 %v2139
    %2766 = vmatpush1.bf16.msra.mxu0 %v2138
    %2767 = vmatprep.subr.bf16.mxu0 %v2147
    %2768 = vmatpush1.bf16.msra.mxu0 %v2146
    %2769 = vmatprep.subr.bf16.mxu0 %v2155
    %2770 = vmatpush1.bf16.msra.mxu0 %v2154
    %2771 = vmatprep.subr.bf16.mxu0 %v2163
    %2772 = vmatpush1.bf16.msra.mxu0 %v2162
    %2773 = vmatprep.subr.bf16.mxu0 %v2171
    %2774 = vmatpush1.bf16.msra.mxu0 %v2170
    %2775 = vmatprep.subr.bf16.mxu0 %v2179
    %2776 = vmatpush1.bf16.msra.mxu0 %v2178
    %2777 = vmatprep.subr.bf16.mxu0 %v2187
    %2778 = vmatpush1.bf16.msra.mxu0 %v2186
    %2779 = vmatprep.mubr.bf16.mxu0 %v357
    %2780 = vmatmul.mubr.bf16.gmra.mrb[0].mxu0 %v356
    %v2781 = vpop.f32.mrb[0].mxu0
    %v2782 = vadd.f32 %v2741, %v2781
    %v2783 = vpop.f32.mrb[0].mxu0
    %v2784 = vadd.f32 %v2743, %v2783
    %v2785 = vpop.f32.mrb[0].mxu0
    %v2786 = vpop.f32.mrb[0].mxu0
    %2787 = vdwg.mxu0
    %2788 = vmatprep.subr.bf16.mxu0 %v2195
    %2789 = vmatpush1.bf16.msra.mxu0 %v2194
    %2790 = vmatprep.subr.bf16.mxu0 %v2203
    %2791 = vmatpush1.bf16.msra.mxu0 %v2202
    %2792 = vmatprep.subr.bf16.mxu0 %v2211
    %2793 = vmatpush1.bf16.msra.mxu0 %v2210
    %2794 = vmatprep.subr.bf16.mxu0 %v2219
    %2795 = vmatpush1.bf16.msra.mxu0 %v2218
    %2796 = vmatprep.subr.bf16.mxu0 %v2227
    %2797 = vmatpush1.bf16.msra.mxu0 %v2226
    %2798 = vmatprep.subr.bf16.mxu0 %v2235
    %2799 = vmatpush1.bf16.msra.mxu0 %v2234
    %2800 = vmatprep.subr.bf16.mxu0 %v2243
    %2801 = vmatpush1.bf16.msra.mxu0 %v2242
    %2802 = vmatprep.subr.bf16.mxu0 %v2251
    %2803 = vmatpush1.bf16.msra.mxu0 %v2250
    %2804 = vmatprep.subr.bf16.mxu0 %v2259
    %2805 = vmatpush1.bf16.msra.mxu0 %v2258
    %2806 = vmatprep.subr.bf16.mxu0 %v2267
    %2807 = vmatpush1.bf16.msra.mxu0 %v2266
    %2808 = vmatprep.subr.bf16.mxu0 %v2275
    %2809 = vmatpush1.bf16.msra.mxu0 %v2274
    %2810 = vmatprep.subr.bf16.mxu0 %v2283
    %2811 = vmatpush1.bf16.msra.mxu0 %v2282
    %2812 = vmatprep.subr.bf16.mxu0 %v2291
    %2813 = vmatpush1.bf16.msra.mxu0 %v2290
    %2814 = vmatprep.subr.bf16.mxu0 %v2299
    %2815 = vmatpush1.bf16.msra.mxu0 %v2298
    %2816 = vmatprep.subr.bf16.mxu0 %v2307
    %2817 = vmatpush1.bf16.msra.mxu0 %v2306
    %2818 = vmatprep.subr.bf16.mxu0 %v2315
    %2819 = vmatpush1.bf16.msra.mxu0 %v2314
    %2820 = vmatprep.mubr.bf16.mxu0 %v359
    %2821 = vmatmul.mubr.bf16.gmra.mrb[0].mxu0 %v358
    %v2822 = vpop.f32.mrb[0].mxu0
    %v2823 = vadd.f32 %v2782, %v2822
    %v2824 = vpop.f32.mrb[0].mxu0
    %v2825 = vadd.f32 %v2784, %v2824
    %v2826 = vpop.f32.mrb[0].mxu0
    %v2827 = vpop.f32.mrb[0].mxu0
    %2828 = vdwg.mxu0
    %2829 = vmatprep.subr.bf16.mxu0 %v1941
    %2830 = vmatpush1.bf16.msra.mxu0 %v1940
    %2831 = vmatprep.subr.bf16.mxu0 %v1949
    %2832 = vmatpush1.bf16.msra.mxu0 %v1948
    %2833 = vmatprep.subr.bf16.mxu0 %v1957
    %2834 = vmatpush1.bf16.msra.mxu0 %v1956
    %2835 = vmatprep.subr.bf16.mxu0 %v1965
    %2836 = vmatpush1.bf16.msra.mxu0 %v1964
    %2837 = vmatprep.subr.bf16.mxu0 %v1973
    %2838 = vmatpush1.bf16.msra.mxu0 %v1972
    %2839 = vmatprep.subr.bf16.mxu0 %v1981
    %2840 = vmatpush1.bf16.msra.mxu0 %v1980
    %2841 = vmatprep.subr.bf16.mxu0 %v1989
    %2842 = vmatpush1.bf16.msra.mxu0 %v1988
    %2843 = vmatprep.subr.bf16.mxu0 %v1997
    %2844 = vmatpush1.bf16.msra.mxu0 %v1996
    %2845 = vmatprep.subr.bf16.mxu0 %v2005
    %2846 = vmatpush1.bf16.msra.mxu0 %v2004
    %2847 = vmatprep.subr.bf16.mxu0 %v2013
    %2848 = vmatpush1.bf16.msra.mxu0 %v2012
    %2849 = vmatprep.subr.bf16.mxu0 %v2021
    %2850 = vmatpush1.bf16.msra.mxu0 %v2020
    %2851 = vmatprep.subr.bf16.mxu0 %v2029
    %2852 = vmatpush1.bf16.msra.mxu0 %v2028
    %2853 = vmatprep.subr.bf16.mxu0 %v2037
    %2854 = vmatpush1.bf16.msra.mxu0 %v2036
    %2855 = vmatprep.subr.bf16.mxu0 %v2045
    %2856 = vmatpush1.bf16.msra.mxu0 %v2044
    %2857 = vmatprep.subr.bf16.mxu0 %v2053
    %2858 = vmatpush1.bf16.msra.mxu0 %v2052
    %2859 = vmatprep.subr.bf16.mxu0 %v2061
    %2860 = vmatpush1.bf16.msra.mxu0 %v2060
    %2861 = vmatprep.mubr.bf16.mxu0 %v355
    %2862 = vmatmul.mubr.bf16.gmra.mrb[0].mxu0 %v354
    %v2863 = vpop.f32.mrb[0].mxu0
    %v2864 = vadd.f32 %v757, %v2863
    %v2865 = vpop.f32.mrb[0].mxu0
    %v2866 = vadd.f32 %v761, %v2865
    %v2867 = vpop.f32.mrb[0].mxu0
    %v2868 = vpop.f32.mrb[0].mxu0
    %2869 = vdwg.mxu0
    %2870 = vmatprep.subr.bf16.mxu0 %v2069
    %2871 = vmatpush1.bf16.msra.mxu0 %v2068
    %2872 = vmatprep.subr.bf16.mxu0 %v2077
    %2873 = vmatpush1.bf16.msra.mxu0 %v2076
    %2874 = vmatprep.subr.bf16.mxu0 %v2085
    %2875 = vmatpush1.bf16.msra.mxu0 %v2084
    %2876 = vmatprep.subr.bf16.mxu0 %v2093
    %2877 = vmatpush1.bf16.msra.mxu0 %v2092
    %2878 = vmatprep.subr.bf16.mxu0 %v2101
    %2879 = vmatpush1.bf16.msra.mxu0 %v2100
    %2880 = vmatprep.subr.bf16.mxu0 %v2109
    %2881 = vmatpush1.bf16.msra.mxu0 %v2108
    %2882 = vmatprep.subr.bf16.mxu0 %v2117
    %2883 = vmatpush1.bf16.msra.mxu0 %v2116
    %2884 = vmatprep.subr.bf16.mxu0 %v2125
    %2885 = vmatpush1.bf16.msra.mxu0 %v2124
    %2886 = vmatprep.subr.bf16.mxu0 %v2133
    %2887 = vmatpush1.bf16.msra.mxu0 %v2132
    %2888 = vmatprep.subr.bf16.mxu0 %v2141
    %2889 = vmatpush1.bf16.msra.mxu0 %v2140
    %2890 = vmatprep.subr.bf16.mxu0 %v2149
    %2891 = vmatpush1.bf16.msra.mxu0 %v2148
    %2892 = vmatprep.subr.bf16.mxu0 %v2157
    %2893 = vmatpush1.bf16.msra.mxu0 %v2156
    %2894 = vmatprep.subr.bf16.mxu0 %v2165
    %2895 = vmatpush1.bf16.msra.mxu0 %v2164
    %2896 = vmatprep.subr.bf16.mxu0 %v2173
    %2897 = vmatpush1.bf16.msra.mxu0 %v2172
    %2898 = vmatprep.subr.bf16.mxu0 %v2181
    %2899 = vmatpush1.bf16.msra.mxu0 %v2180
    %2900 = vmatprep.subr.bf16.mxu0 %v2189
    %2901 = vmatpush1.bf16.msra.mxu0 %v2188
    %2902 = vmatprep.mubr.bf16.mxu0 %v357
    %2903 = vmatmul.mubr.bf16.gmra.mrb[0].mxu0 %v356
    %v2904 = vpop.f32.mrb[0].mxu0
    %v2905 = vadd.f32 %v2864, %v2904
    %v2906 = vpop.f32.mrb[0].mxu0
    %v2907 = vadd.f32 %v2866, %v2906
    %v2908 = vpop.f32.mrb[0].mxu0
    %v2909 = vpop.f32.mrb[0].mxu0
    %2910 = vdwg.mxu0
    %2911 = vmatprep.subr.bf16.mxu0 %v2197
    %2912 = vmatpush1.bf16.msra.mxu0 %v2196
    %2913 = vmatprep.subr.bf16.mxu0 %v2205
    %2914 = vmatpush1.bf16.msra.mxu0 %v2204
    %2915 = vmatprep.subr.bf16.mxu0 %v2213
    %2916 = vmatpush1.bf16.msra.mxu0 %v2212
    %2917 = vmatprep.subr.bf16.mxu0 %v2221
    %2918 = vmatpush1.bf16.msra.mxu0 %v2220
    %2919 = vmatprep.subr.bf16.mxu0 %v2229
    %2920 = vmatpush1.bf16.msra.mxu0 %v2228
    %2921 = vmatprep.subr.bf16.mxu0 %v2237
    %2922 = vmatpush1.bf16.msra.mxu0 %v2236
    %2923 = vmatprep.subr.bf16.mxu0 %v2245
    %2924 = vmatpush1.bf16.msra.mxu0 %v2244
    %2925 = vmatprep.subr.bf16.mxu0 %v2253
    %2926 = vmatpush1.bf16.msra.mxu0 %v2252
    %2927 = vmatprep.subr.bf16.mxu0 %v2261
    %2928 = vmatpush1.bf16.msra.mxu0 %v2260
    %2929 = vmatprep.subr.bf16.mxu0 %v2269
    %2930 = vmatpush1.bf16.msra.mxu0 %v2268
    %2931 = vmatprep.subr.bf16.mxu0 %v2277
    %2932 = vmatpush1.bf16.msra.mxu0 %v2276
    %2933 = vmatprep.subr.bf16.mxu0 %v2285
    %2934 = vmatpush1.bf16.msra.mxu0 %v2284
    %2935 = vmatprep.subr.bf16.mxu0 %v2293
    %2936 = vmatpush1.bf16.msra.mxu0 %v2292
    %2937 = vmatprep.subr.bf16.mxu0 %v2301
    %2938 = vmatpush1.bf16.msra.mxu0 %v2300
    %2939 = vmatprep.subr.bf16.mxu0 %v2309
    %2940 = vmatpush1.bf16.msra.mxu0 %v2308
    %2941 = vmatprep.subr.bf16.mxu0 %v2317
    %2942 = vmatpush1.bf16.msra.mxu0 %v2316
    %2943 = vmatprep.mubr.bf16.mxu0 %v359
    %2944 = vmatmul.mubr.bf16.gmra.mrb[0].mxu0 %v358
    %v2945 = vpop.f32.mrb[0].mxu0
    %v2946 = vadd.f32 %v2905, %v2945
    %v2947 = vpop.f32.mrb[0].mxu0
    %v2948 = vadd.f32 %v2907, %v2947
    %v2949 = vpop.f32.mrb[0].mxu0
    %v2950 = vpop.f32.mrb[0].mxu0
    %2951 = vdwg.mxu0
    %2952 = vmatprep.subr.bf16.mxu0 %v1943
    %2953 = vmatpush1.bf16.msra.mxu0 %v1942
    %2954 = vmatprep.subr.bf16.mxu0 %v1951
    %2955 = vmatpush1.bf16.msra.mxu0 %v1950
    %2956 = vmatprep.subr.bf16.mxu0 %v1959
    %2957 = vmatpush1.bf16.msra.mxu0 %v1958
    %2958 = vmatprep.subr.bf16.mxu0 %v1967
    %2959 = vmatpush1.bf16.msra.mxu0 %v1966
    %2960 = vmatprep.subr.bf16.mxu0 %v1975
    %2961 = vmatpush1.bf16.msra.mxu0 %v1974
    %2962 = vmatprep.subr.bf16.mxu0 %v1983
    %2963 = vmatpush1.bf16.msra.mxu0 %v1982
    %2964 = vmatprep.subr.bf16.mxu0 %v1991
    %2965 = vmatpush1.bf16.msra.mxu0 %v1990
    %2966 = vmatprep.subr.bf16.mxu0 %v1999
    %2967 = vmatpush1.bf16.msra.mxu0 %v1998
    %2968 = vmatprep.subr.bf16.mxu0 %v2007
    %2969 = vmatpush1.bf16.msra.mxu0 %v2006
    %2970 = vmatprep.subr.bf16.mxu0 %v2015
    %2971 = vmatpush1.bf16.msra.mxu0 %v2014
    %2972 = vmatprep.subr.bf16.mxu0 %v2023
    %2973 = vmatpush1.bf16.msra.mxu0 %v2022
    %2974 = vmatprep.subr.bf16.mxu0 %v2031
    %2975 = vmatpush1.bf16.msra.mxu0 %v2030
    %2976 = vmatprep.subr.bf16.mxu0 %v2039
    %2977 = vmatpush1.bf16.msra.mxu0 %v2038
    %2978 = vmatprep.subr.bf16.mxu0 %v2047
    %2979 = vmatpush1.bf16.msra.mxu0 %v2046
    %2980 = vmatprep.subr.bf16.mxu0 %v2055
    %2981 = vmatpush1.bf16.msra.mxu0 %v2054
    %2982 = vmatprep.subr.bf16.mxu0 %v2063
    %2983 = vmatpush1.bf16.msra.mxu0 %v2062
    %2984 = vmatprep.mubr.bf16.mxu0 %v355
    %2985 = vmatmul.mubr.bf16.gmra.mrb[0].mxu0 %v354
    %v2986 = vpop.f32.mrb[0].mxu0
    %v2987 = vadd.f32 %v765, %v2986
    %v2988 = vpop.f32.mrb[0].mxu0
    %v2989 = vadd.f32 %v769, %v2988
    %v2990 = vpop.f32.mrb[0].mxu0
    %v2991 = vpop.f32.mrb[0].mxu0
    %2992 = vdwg.mxu0
    %2993 = vmatprep.subr.bf16.mxu0 %v2071
    %2994 = vmatpush1.bf16.msra.mxu0 %v2070
    %2995 = vmatprep.subr.bf16.mxu0 %v2079
    %2996 = vmatpush1.bf16.msra.mxu0 %v2078
    %2997 = vmatprep.subr.bf16.mxu0 %v2087
    %2998 = vmatpush1.bf16.msra.mxu0 %v2086
    %2999 = vmatprep.subr.bf16.mxu0 %v2095
    %3000 = vmatpush1.bf16.msra.mxu0 %v2094
    %3001 = vmatprep.subr.bf16.mxu0 %v2103
    %3002 = vmatpush1.bf16.msra.mxu0 %v2102
    %3003 = vmatprep.subr.bf16.mxu0 %v2111
    %3004 = vmatpush1.bf16.msra.mxu0 %v2110
    %3005 = vmatprep.subr.bf16.mxu0 %v2119
    %3006 = vmatpush1.bf16.msra.mxu0 %v2118
    %3007 = vmatprep.subr.bf16.mxu0 %v2127
    %3008 = vmatpush1.bf16.msra.mxu0 %v2126
    %3009 = vmatprep.subr.bf16.mxu0 %v2135
    %3010 = vmatpush1.bf16.msra.mxu0 %v2134
    %3011 = vmatprep.subr.bf16.mxu0 %v2143
    %3012 = vmatpush1.bf16.msra.mxu0 %v2142
    %3013 = vmatprep.subr.bf16.mxu0 %v2151
    %3014 = vmatpush1.bf16.msra.mxu0 %v2150
    %3015 = vmatprep.subr.bf16.mxu0 %v2159
    %3016 = vmatpush1.bf16.msra.mxu0 %v2158
    %3017 = vmatprep.subr.bf16.mxu0 %v2167
    %3018 = vmatpush1.bf16.msra.mxu0 %v2166
    %3019 = vmatprep.subr.bf16.mxu0 %v2175
    %3020 = vmatpush1.bf16.msra.mxu0 %v2174
    %3021 = vmatprep.subr.bf16.mxu0 %v2183
    %3022 = vmatpush1.bf16.msra.mxu0 %v2182
    %3023 = vmatprep.subr.bf16.mxu0 %v2191
    %3024 = vmatpush1.bf16.msra.mxu0 %v2190
    %3025 = vmatprep.mubr.bf16.mxu0 %v357
    %3026 = vmatmul.mubr.bf16.gmra.mrb[0].mxu0 %v356
    %v3027 = vpop.f32.mrb[0].mxu0
    %v3028 = vadd.f32 %v2987, %v3027
    %v3029 = vpop.f32.mrb[0].mxu0
    %v3030 = vadd.f32 %v2989, %v3029
    %v3031 = vpop.f32.mrb[0].mxu0
    %v3032 = vpop.f32.mrb[0].mxu0
    %3033 = vdwg.mxu0
    %3034 = vmatprep.subr.bf16.mxu0 %v2199
    %3035 = vmatpush1.bf16.msra.mxu0 %v2198
    %3036 = vmatprep.subr.bf16.mxu0 %v2207
    %3037 = vmatpush1.bf16.msra.mxu0 %v2206
    %3038 = vmatprep.subr.bf16.mxu0 %v2215
    %3039 = vmatpush1.bf16.msra.mxu0 %v2214
    %3040 = vmatprep.subr.bf16.mxu0 %v2223
    %3041 = vmatpush1.bf16.msra.mxu0 %v2222
    %3042 = vmatprep.subr.bf16.mxu0 %v2231
    %3043 = vmatpush1.bf16.msra.mxu0 %v2230
    %3044 = vmatprep.subr.bf16.mxu0 %v2239
    %3045 = vmatpush1.bf16.msra.mxu0 %v2238
    %3046 = vmatprep.subr.bf16.mxu0 %v2247
    %3047 = vmatpush1.bf16.msra.mxu0 %v2246
    %3048 = vmatprep.subr.bf16.mxu0 %v2255
    %3049 = vmatpush1.bf16.msra.mxu0 %v2254
    %3050 = vmatprep.subr.bf16.mxu0 %v2263
    %3051 = vmatpush1.bf16.msra.mxu0 %v2262
    %3052 = vmatprep.subr.bf16.mxu0 %v2271
    %3053 = vmatpush1.bf16.msra.mxu0 %v2270
    %3054 = vmatprep.subr.bf16.mxu0 %v2279
    %3055 = vmatpush1.bf16.msra.mxu0 %v2278
    %3056 = vmatprep.subr.bf16.mxu0 %v2287
    %3057 = vmatpush1.bf16.msra.mxu0 %v2286
    %3058 = vmatprep.subr.bf16.mxu0 %v2295
    %3059 = vmatpush1.bf16.msra.mxu0 %v2294
    %3060 = vmatprep.subr.bf16.mxu0 %v2303
    %3061 = vmatpush1.bf16.msra.mxu0 %v2302
    %3062 = vmatprep.subr.bf16.mxu0 %v2311
    %3063 = vmatpush1.bf16.msra.mxu0 %v2310
    %3064 = vmatprep.subr.bf16.mxu0 %v2319
    %3065 = vmatpush1.bf16.msra.mxu0 %v2318
    %3066 = vmatprep.mubr.bf16.mxu0 %v359
    %3067 = vmatmul.mubr.bf16.gmra.mrb[0].mxu0 %v358
    %v3068 = vpop.f32.mrb[0].mxu0
    %v3069 = vadd.f32 %v3028, %v3068
    %v3070 = vpop.f32.mrb[0].mxu0
    %v3071 = vadd.f32 %v3030, %v3070
    %v3072 = vpop.f32.mrb[0].mxu0
    %v3073 = vpop.f32.mrb[0].mxu0
    %3074 = vdwg.mxu0
    %3075 = vmatprep.subr.bf16.mxu0 %v1945
    %3076 = vmatpush1.bf16.msra.mxu0 %v1944
    %3077 = vmatprep.subr.bf16.mxu0 %v1953
    %3078 = vmatpush1.bf16.msra.mxu0 %v1952
    %3079 = vmatprep.subr.bf16.mxu0 %v1961
    %3080 = vmatpush1.bf16.msra.mxu0 %v1960
    %3081 = vmatprep.subr.bf16.mxu0 %v1969
    %3082 = vmatpush1.bf16.msra.mxu0 %v1968
    %3083 = vmatprep.subr.bf16.mxu0 %v1977
    %3084 = vmatpush1.bf16.msra.mxu0 %v1976
    %3085 = vmatprep.subr.bf16.mxu0 %v1985
    %3086 = vmatpush1.bf16.msra.mxu0 %v1984
    %3087 = vmatprep.subr.bf16.mxu0 %v1993
    %3088 = vmatpush1.bf16.msra.mxu0 %v1992
    %3089 = vmatprep.subr.bf16.mxu0 %v2001
    %3090 = vmatpush1.bf16.msra.mxu0 %v2000
    %3091 = vmatprep.subr.bf16.mxu0 %v2009
    %3092 = vmatpush1.bf16.msra.mxu0 %v2008
    %3093 = vmatprep.subr.bf16.mxu0 %v2017
    %3094 = vmatpush1.bf16.msra.mxu0 %v2016
    %3095 = vmatprep.subr.bf16.mxu0 %v2025
    %3096 = vmatpush1.bf16.msra.mxu0 %v2024
    %3097 = vmatprep.subr.bf16.mxu0 %v2033
    %3098 = vmatpush1.bf16.msra.mxu0 %v2032
    %3099 = vmatprep.subr.bf16.mxu0 %v2041
    %3100 = vmatpush1.bf16.msra.mxu0 %v2040
    %3101 = vmatprep.subr.bf16.mxu0 %v2049
    %3102 = vmatpush1.bf16.msra.mxu0 %v2048
    %3103 = vmatprep.subr.bf16.mxu0 %v2057
    %3104 = vmatpush1.bf16.msra.mxu0 %v2056
    %3105 = vmatprep.subr.bf16.mxu0 %v2065
    %3106 = vmatpush1.bf16.msra.mxu0 %v2064
    %3107 = vmatprep.mubr.bf16.mxu0 %v355
    %3108 = vmatmul.mubr.bf16.gmra.mrb[0].mxu0 %v354
    %v3109 = vpop.f32.mrb[0].mxu0
    %v3110 = vadd.f32 %v773, %v3109
    %v3111 = vpop.f32.mrb[0].mxu0
    %v3112 = vadd.f32 %v777, %v3111
    %v3113 = vpop.f32.mrb[0].mxu0
    %v3114 = vpop.f32.mrb[0].mxu0
    %3115 = vdwg.mxu0
    %3116 = vmatprep.subr.bf16.mxu0 %v2073
    %3117 = vmatpush1.bf16.msra.mxu0 %v2072
    %3118 = vmatprep.subr.bf16.mxu0 %v2081
    %3119 = vmatpush1.bf16.msra.mxu0 %v2080
    %3120 = vmatprep.subr.bf16.mxu0 %v2089
    %3121 = vmatpush1.bf16.msra.mxu0 %v2088
    %3122 = vmatprep.subr.bf16.mxu0 %v2097
    %3123 = vmatpush1.bf16.msra.mxu0 %v2096
    %3124 = vmatprep.subr.bf16.mxu0 %v2105
    %3125 = vmatpush1.bf16.msra.mxu0 %v2104
    %3126 = vmatprep.subr.bf16.mxu0 %v2113
    %3127 = vmatpush1.bf16.msra.mxu0 %v2112
    %3128 = vmatprep.subr.bf16.mxu0 %v2121
    %3129 = vmatpush1.bf16.msra.mxu0 %v2120
    %3130 = vmatprep.subr.bf16.mxu0 %v2129
    %3131 = vmatpush1.bf16.msra.mxu0 %v2128
    %3132 = vmatprep.subr.bf16.mxu0 %v2137
    %3133 = vmatpush1.bf16.msra.mxu0 %v2136
    %3134 = vmatprep.subr.bf16.mxu0 %v2145
    %3135 = vmatpush1.bf16.msra.mxu0 %v2144
    %3136 = vmatprep.subr.bf16.mxu0 %v2153
    %3137 = vmatpush1.bf16.msra.mxu0 %v2152
    %3138 = vmatprep.subr.bf16.mxu0 %v2161
    %3139 = vmatpush1.bf16.msra.mxu0 %v2160
    %3140 = vmatprep.subr.bf16.mxu0 %v2169
    %3141 = vmatpush1.bf16.msra.mxu0 %v2168
    %3142 = vmatprep.subr.bf16.mxu0 %v2177
    %3143 = vmatpush1.bf16.msra.mxu0 %v2176
    %3144 = vmatprep.subr.bf16.mxu0 %v2185
    %3145 = vmatpush1.bf16.msra.mxu0 %v2184
    %3146 = vmatprep.subr.bf16.mxu0 %v2193
    %3147 = vmatpush1.bf16.msra.mxu0 %v2192
    %3148 = vmatprep.mubr.bf16.mxu0 %v357
    %3149 = vmatmul.mubr.bf16.gmra.mrb[0].mxu0 %v356
    %v3150 = vpop.f32.mrb[0].mxu0
    %v3151 = vadd.f32 %v3110, %v3150
    %v3152 = vpop.f32.mrb[0].mxu0
    %v3153 = vadd.f32 %v3112, %v3152
    %v3154 = vpop.f32.mrb[0].mxu0
    %v3155 = vpop.f32.mrb[0].mxu0
    %3156 = vdwg.mxu0
    %3157 = vmatprep.subr.bf16.mxu0 %v2201
    %3158 = vmatpush1.bf16.msra.mxu0 %v2200
    %3159 = vmatprep.subr.bf16.mxu0 %v2209
    %3160 = vmatpush1.bf16.msra.mxu0 %v2208
    %3161 = vmatprep.subr.bf16.mxu0 %v2217
    %3162 = vmatpush1.bf16.msra.mxu0 %v2216
    %3163 = vmatprep.subr.bf16.mxu0 %v2225
    %3164 = vmatpush1.bf16.msra.mxu0 %v2224
    %3165 = vmatprep.subr.bf16.mxu0 %v2233
    %3166 = vmatpush1.bf16.msra.mxu0 %v2232
    %3167 = vmatprep.subr.bf16.mxu0 %v2241
    %3168 = vmatpush1.bf16.msra.mxu0 %v2240
    %3169 = vmatprep.subr.bf16.mxu0 %v2249
    %3170 = vmatpush1.bf16.msra.mxu0 %v2248
    %3171 = vmatprep.subr.bf16.mxu0 %v2257
    %3172 = vmatpush1.bf16.msra.mxu0 %v2256
    %3173 = vmatprep.subr.bf16.mxu0 %v2265
    %3174 = vmatpush1.bf16.msra.mxu0 %v2264
    %3175 = vmatprep.subr.bf16.mxu0 %v2273
    %3176 = vmatpush1.bf16.msra.mxu0 %v2272
    %3177 = vmatprep.subr.bf16.mxu0 %v2281
    %3178 = vmatpush1.bf16.msra.mxu0 %v2280
    %3179 = vmatprep.subr.bf16.mxu0 %v2289
    %3180 = vmatpush1.bf16.msra.mxu0 %v2288
    %3181 = vmatprep.subr.bf16.mxu0 %v2297
    %3182 = vmatpush1.bf16.msra.mxu0 %v2296
    %3183 = vmatprep.subr.bf16.mxu0 %v2305
    %3184 = vmatpush1.bf16.msra.mxu0 %v2304
    %3185 = vmatprep.subr.bf16.mxu0 %v2313
    %3186 = vmatpush1.bf16.msra.mxu0 %v2312
    %3187 = vmatprep.subr.bf16.mxu0 %v2321
    %3188 = vmatpush1.bf16.msra.mxu0 %v2320
    %3189 = vmatprep.mubr.bf16.mxu0 %v359
    %3190 = vmatmul.mubr.bf16.gmra.mrb[0].mxu0 %v358
    %v3191 = vpop.f32.mrb[0].mxu0
    %v3192 = vadd.f32 %v3151, %v3191
    %v3193 = vpop.f32.mrb[0].mxu0
    %v3194 = vadd.f32 %v3153, %v3193
    %v3195 = vpop.f32.mrb[0].mxu0
    %v3196 = vpop.f32.mrb[0].mxu0
    %3197 = vdwg.mxu0
    %v3198 = vmax.f32 %v2823, 0.0
    %v3199 = vmax.f32 %v2825, 0.0
    %v3200 = vmax.f32 %v2946, 0.0
    %v3201 = vmax.f32 %v2948, 0.0
    %v3202 = vmax.f32 %v3069, 0.0
    %v3203 = vmax.f32 %v3071, 0.0
    %v3204 = vmax.f32 %v3192, 0.0
    %v3205 = vmax.f32 %v3194, 0.0
    %v3206 = vpack.c.bf16 %v3198, %v3198
    %v3207 = vpack.c.bf16 %v3199, %v3199
    %v3208 = vpack.c.bf16 %v3200, %v3200
    %v3209 = vpack.c.bf16 %v3201, %v3201
    %v3210 = vpack.c.bf16 %v3202, %v3202
    %v3211 = vpack.c.bf16 %v3203, %v3203
    %v3212 = vpack.c.bf16 %v3204, %v3204
    %v3213 = vpack.c.bf16 %v3205, %v3205
    %v3214 = vld [vmem:[#allocation11] sm:$0xf]
    %v3215 = vld [vmem:[#allocation11 + $0x4] sm:$0xf]
    %v3216 = vld [vmem:[#allocation11 + $0x8] sm:$0xf]
    %v3217 = vld [vmem:[#allocation11 + $0xc] sm:$0xf]
    %v3218 = vld [vmem:[#allocation11 + $0x10] sm:$0xf]
    %v3219 = vld [vmem:[#allocation11 + $0x14] sm:$0xf]
    %v3220 = vld [vmem:[#allocation11 + $0x18] sm:$0xf]
    %v3221 = vld [vmem:[#allocation11 + $0x1c] sm:$0xf]
    %v3222 = vld [vmem:[#allocation11 + $0x20] sm:$0xf]
    %v3223 = vld [vmem:[#allocation11 + $0x24] sm:$0xf]
    %v3224 = vld [vmem:[#allocation11 + $0x28] sm:$0xf]
    %v3225 = vld [vmem:[#allocation11 + $0x2c] sm:$0xf]
    %v3226 = vld [vmem:[#allocation11 + $0x30] sm:$0xf]
    %v3227 = vld [vmem:[#allocation11 + $0x34] sm:$0xf]
    %v3228 = vld [vmem:[#allocation11 + $0x38] sm:$0xf]
    %v3229 = vld [vmem:[#allocation11 + $0x3c] sm:$0xf]
    %v3230 = vld [vmem:[#allocation11 + $0x40] sm:$0xf]
    %v3231 = vld [vmem:[#allocation11 + $0x44] sm:$0xf]
    %v3232 = vld [vmem:[#allocation11 + $0x48] sm:$0xf]
    %v3233 = vld [vmem:[#allocation11 + $0x4c] sm:$0xf]
    %v3234 = vld [vmem:[#allocation11 + $0x50] sm:$0xf]
    %v3235 = vld [vmem:[#allocation11 + $0x54] sm:$0xf]
    %v3236 = vld [vmem:[#allocation11 + $0x58] sm:$0xf]
    %v3237 = vld [vmem:[#allocation11 + $0x5c] sm:$0xf]
    %v3238 = vld [vmem:[#allocation11 + $0x60] sm:$0xf]
    %v3239 = vld [vmem:[#allocation11 + $0x64] sm:$0xf]
    %v3240 = vld [vmem:[#allocation11 + $0x68] sm:$0xf]
    %v3241 = vld [vmem:[#allocation11 + $0x6c] sm:$0xf]
    %v3242 = vld [vmem:[#allocation11 + $0x70] sm:$0xf]
    %v3243 = vld [vmem:[#allocation11 + $0x74] sm:$0xf]
    %v3244 = vld [vmem:[#allocation11 + $0x78] sm:$0xf]
    %v3245 = vld [vmem:[#allocation11 + $0x7c] sm:$0xf]
    %v3246 = vld [vmem:[#allocation11 + $0x80] sm:$0xf]
    %v3247 = vld [vmem:[#allocation11 + $0x84] sm:$0xf]
    %v3248 = vld [vmem:[#allocation11 + $0x88] sm:$0xf]
    %v3249 = vld [vmem:[#allocation11 + $0x8c] sm:$0xf]
    %v3250 = vld [vmem:[#allocation11 + $0x90] sm:$0xf]
    %v3251 = vld [vmem:[#allocation11 + $0x94] sm:$0xf]
    %v3252 = vld [vmem:[#allocation11 + $0x98] sm:$0xf]
    %v3253 = vld [vmem:[#allocation11 + $0x9c] sm:$0xf]
    %v3254 = vld [vmem:[#allocation11 + $0xa0] sm:$0xf]
    %v3255 = vld [vmem:[#allocation11 + $0xa4] sm:$0xf]
    %v3256 = vld [vmem:[#allocation11 + $0xa8] sm:$0xf]
    %v3257 = vld [vmem:[#allocation11 + $0xac] sm:$0xf]
    %v3258 = vld [vmem:[#allocation11 + $0xb0] sm:$0xf]
    %v3259 = vld [vmem:[#allocation11 + $0xb4] sm:$0xf]
    %v3260 = vld [vmem:[#allocation11 + $0xb8] sm:$0xf]
    %v3261 = vld [vmem:[#allocation11 + $0xbc] sm:$0xf]
    %v3262 = vld [vmem:[#allocation11 + $0xc0] sm:$0xf]
    %v3263 = vld [vmem:[#allocation11 + $0xc4] sm:$0xf]
    %v3264 = vld [vmem:[#allocation11 + $0xc8] sm:$0xf]
    %v3265 = vld [vmem:[#allocation11 + $0xcc] sm:$0xf]
    %v3266 = vld [vmem:[#allocation11 + $0xd0] sm:$0xf]
    %v3267 = vld [vmem:[#allocation11 + $0xd4] sm:$0xf]
    %v3268 = vld [vmem:[#allocation11 + $0xd8] sm:$0xf]
    %v3269 = vld [vmem:[#allocation11 + $0xdc] sm:$0xf]
    %v3270 = vld [vmem:[#allocation11 + $0xe0] sm:$0xf]
    %v3271 = vld [vmem:[#allocation11 + $0xe4] sm:$0xf]
    %v3272 = vld [vmem:[#allocation11 + $0xe8] sm:$0xf]
    %v3273 = vld [vmem:[#allocation11 + $0xec] sm:$0xf]
    %v3274 = vld [vmem:[#allocation11 + $0xf0] sm:$0xf]
    %v3275 = vld [vmem:[#allocation11 + $0xf4] sm:$0xf]
    %v3276 = vld [vmem:[#allocation11 + $0xf8] sm:$0xf]
    %v3277 = vld [vmem:[#allocation11 + $0xfc] sm:$0xf]
    %v3278 = vld [vmem:[#allocation11 + $0x100] sm:$0xf]
    %v3279 = vld [vmem:[#allocation11 + $0x104] sm:$0xf]
    %v3280 = vld [vmem:[#allocation11 + $0x108] sm:$0xf]
    %v3281 = vld [vmem:[#allocation11 + $0x10c] sm:$0xf]
    %v3282 = vld [vmem:[#allocation11 + $0x110] sm:$0xf]
    %v3283 = vld [vmem:[#allocation11 + $0x114] sm:$0xf]
    %v3284 = vld [vmem:[#allocation11 + $0x118] sm:$0xf]
    %v3285 = vld [vmem:[#allocation11 + $0x11c] sm:$0xf]
    %v3286 = vld [vmem:[#allocation11 + $0x120] sm:$0xf]
    %v3287 = vld [vmem:[#allocation11 + $0x124] sm:$0xf]
    %v3288 = vld [vmem:[#allocation11 + $0x128] sm:$0xf]
    %v3289 = vld [vmem:[#allocation11 + $0x12c] sm:$0xf]
    %v3290 = vld [vmem:[#allocation11 + $0x130] sm:$0xf]
    %v3291 = vld [vmem:[#allocation11 + $0x134] sm:$0xf]
    %v3292 = vld [vmem:[#allocation11 + $0x138] sm:$0xf]
    %v3293 = vld [vmem:[#allocation11 + $0x13c] sm:$0xf]
    %v3294 = vld [vmem:[#allocation11 + $0x140] sm:$0xf]
    %v3295 = vld [vmem:[#allocation11 + $0x144] sm:$0xf]
    %v3296 = vld [vmem:[#allocation11 + $0x148] sm:$0xf]
    %v3297 = vld [vmem:[#allocation11 + $0x14c] sm:$0xf]
    %v3298 = vld [vmem:[#allocation11 + $0x150] sm:$0xf]
    %v3299 = vld [vmem:[#allocation11 + $0x154] sm:$0xf]
    %v3300 = vld [vmem:[#allocation11 + $0x158] sm:$0xf]
    %v3301 = vld [vmem:[#allocation11 + $0x15c] sm:$0xf]
    %v3302 = vld [vmem:[#allocation11 + $0x160] sm:$0xf]
    %v3303 = vld [vmem:[#allocation11 + $0x164] sm:$0xf]
    %v3304 = vld [vmem:[#allocation11 + $0x168] sm:$0xf]
    %v3305 = vld [vmem:[#allocation11 + $0x16c] sm:$0xf]
    %v3306 = vld [vmem:[#allocation11 + $0x170] sm:$0xf]
    %v3307 = vld [vmem:[#allocation11 + $0x174] sm:$0xf]
    %v3308 = vld [vmem:[#allocation11 + $0x178] sm:$0xf]
    %v3309 = vld [vmem:[#allocation11 + $0x17c] sm:$0xf]
    %v3310 = vld [vmem:[#allocation11 + $0x180] sm:$0xf]
    %v3311 = vld [vmem:[#allocation11 + $0x184] sm:$0xf]
    %v3312 = vld [vmem:[#allocation11 + $0x188] sm:$0xf]
    %v3313 = vld [vmem:[#allocation11 + $0x18c] sm:$0xf]
    %v3314 = vld [vmem:[#allocation11 + $0x190] sm:$0xf]
    %v3315 = vld [vmem:[#allocation11 + $0x194] sm:$0xf]
    %v3316 = vld [vmem:[#allocation11 + $0x198] sm:$0xf]
    %v3317 = vld [vmem:[#allocation11 + $0x19c] sm:$0xf]
    %v3318 = vld [vmem:[#allocation11 + $0x1a0] sm:$0xf]
    %v3319 = vld [vmem:[#allocation11 + $0x1a4] sm:$0xf]
    %v3320 = vld [vmem:[#allocation11 + $0x1a8] sm:$0xf]
    %v3321 = vld [vmem:[#allocation11 + $0x1ac] sm:$0xf]
    %v3322 = vld [vmem:[#allocation11 + $0x1b0] sm:$0xf]
    %v3323 = vld [vmem:[#allocation11 + $0x1b4] sm:$0xf]
    %v3324 = vld [vmem:[#allocation11 + $0x1b8] sm:$0xf]
    %v3325 = vld [vmem:[#allocation11 + $0x1bc] sm:$0xf]
    %v3326 = vld [vmem:[#allocation11 + $0x1c0] sm:$0xf]
    %v3327 = vld [vmem:[#allocation11 + $0x1c4] sm:$0xf]
    %v3328 = vld [vmem:[#allocation11 + $0x1c8] sm:$0xf]
    %v3329 = vld [vmem:[#allocation11 + $0x1cc] sm:$0xf]
    %v3330 = vld [vmem:[#allocation11 + $0x1d0] sm:$0xf]
    %v3331 = vld [vmem:[#allocation11 + $0x1d4] sm:$0xf]
    %v3332 = vld [vmem:[#allocation11 + $0x1d8] sm:$0xf]
    %v3333 = vld [vmem:[#allocation11 + $0x1dc] sm:$0xf]
    %v3334 = vld [vmem:[#allocation11 + $0x1e0] sm:$0xf]
    %v3335 = vld [vmem:[#allocation11 + $0x1e4] sm:$0xf]
    %v3336 = vld [vmem:[#allocation11 + $0x1e8] sm:$0xf]
    %v3337 = vld [vmem:[#allocation11 + $0x1ec] sm:$0xf]
    %v3338 = vld [vmem:[#allocation11 + $0x1f0] sm:$0xf]
    %v3339 = vld [vmem:[#allocation11 + $0x1f4] sm:$0xf]
    %v3340 = vld [vmem:[#allocation11 + $0x1f8] sm:$0xf]
    %v3341 = vld [vmem:[#allocation11 + $0x1fc] sm:$0xf]
    %v3342 = vld [vmem:[#allocation13] sm:$0x1]
    %v3344 = vlaneseq
    %v3345 = vshrl.u32 %v3344, 7
    %v3346 = vsub.s32 0, %v3345
    %v3347 = vrot.slane %v3342, %v3346
    %v3477 = vunpack.c.l.b16 %v3214
    %v3478 = vunpack.c.l.b16 %v3215
    %v3479 = vunpack.c.l.b16 %v3216
    %v3480 = vunpack.c.l.b16 %v3217
    %v3481 = vunpack.c.l.b16 %v3218
    %v3482 = vunpack.c.l.b16 %v3219
    %v3483 = vunpack.c.l.b16 %v3220
    %v3484 = vunpack.c.l.b16 %v3221
    %v3485 = vunpack.c.l.b16 %v3222
    %v3486 = vunpack.c.l.b16 %v3223
    %v3487 = vunpack.c.l.b16 %v3224
    %v3488 = vunpack.c.l.b16 %v3225
    %v3489 = vunpack.c.l.b16 %v3226
    %v3490 = vunpack.c.l.b16 %v3227
    %v3491 = vunpack.c.l.b16 %v3228
    %v3492 = vunpack.c.l.b16 %v3229
    %v3493 = vunpack.c.l.b16 %v3230
    %v3494 = vunpack.c.l.b16 %v3231
    %v3495 = vunpack.c.l.b16 %v3232
    %v3496 = vunpack.c.l.b16 %v3233
    %v3497 = vunpack.c.l.b16 %v3234
    %v3498 = vunpack.c.l.b16 %v3235
    %v3499 = vunpack.c.l.b16 %v3236
    %v3500 = vunpack.c.l.b16 %v3237
    %v3501 = vunpack.c.l.b16 %v3238
    %v3502 = vunpack.c.l.b16 %v3239
    %v3503 = vunpack.c.l.b16 %v3240
    %v3504 = vunpack.c.l.b16 %v3241
    %v3505 = vunpack.c.l.b16 %v3242
    %v3506 = vunpack.c.l.b16 %v3243
    %v3507 = vunpack.c.l.b16 %v3244
    %v3508 = vunpack.c.l.b16 %v3245
    %v3509 = vunpack.c.l.b16 %v3246
    %v3510 = vunpack.c.l.b16 %v3247
    %v3511 = vunpack.c.l.b16 %v3248
    %v3512 = vunpack.c.l.b16 %v3249
    %v3513 = vunpack.c.l.b16 %v3250
    %v3514 = vunpack.c.l.b16 %v3251
    %v3515 = vunpack.c.l.b16 %v3252
    %v3516 = vunpack.c.l.b16 %v3253
    %v3517 = vunpack.c.l.b16 %v3254
    %v3518 = vunpack.c.l.b16 %v3255
    %v3519 = vunpack.c.l.b16 %v3256
    %v3520 = vunpack.c.l.b16 %v3257
    %v3521 = vunpack.c.l.b16 %v3258
    %v3522 = vunpack.c.l.b16 %v3259
    %v3523 = vunpack.c.l.b16 %v3260
    %v3524 = vunpack.c.l.b16 %v3261
    %v3525 = vunpack.c.l.b16 %v3262
    %v3526 = vunpack.c.l.b16 %v3263
    %v3527 = vunpack.c.l.b16 %v3264
    %v3528 = vunpack.c.l.b16 %v3265
    %v3529 = vunpack.c.l.b16 %v3266
    %v3530 = vunpack.c.l.b16 %v3267
    %v3531 = vunpack.c.l.b16 %v3268
    %v3532 = vunpack.c.l.b16 %v3269
    %v3533 = vunpack.c.l.b16 %v3270
    %v3534 = vunpack.c.l.b16 %v3271
    %v3535 = vunpack.c.l.b16 %v3272
    %v3536 = vunpack.c.l.b16 %v3273
    %v3537 = vunpack.c.l.b16 %v3274
    %v3538 = vunpack.c.l.b16 %v3275
    %v3539 = vunpack.c.l.b16 %v3276
    %v3540 = vunpack.c.l.b16 %v3277
    %v3541 = vunpack.c.l.b16 %v3278
    %v3542 = vunpack.c.l.b16 %v3279
    %v3543 = vunpack.c.l.b16 %v3280
    %v3544 = vunpack.c.l.b16 %v3281
    %v3545 = vunpack.c.l.b16 %v3282
    %v3546 = vunpack.c.l.b16 %v3283
    %v3547 = vunpack.c.l.b16 %v3284
    %v3548 = vunpack.c.l.b16 %v3285
    %v3549 = vunpack.c.l.b16 %v3286
    %v3550 = vunpack.c.l.b16 %v3287
    %v3551 = vunpack.c.l.b16 %v3288
    %v3552 = vunpack.c.l.b16 %v3289
    %v3553 = vunpack.c.l.b16 %v3290
    %v3554 = vunpack.c.l.b16 %v3291
    %v3555 = vunpack.c.l.b16 %v3292
    %v3556 = vunpack.c.l.b16 %v3293
    %v3557 = vunpack.c.l.b16 %v3294
    %v3558 = vunpack.c.l.b16 %v3295
    %v3559 = vunpack.c.l.b16 %v3296
    %v3560 = vunpack.c.l.b16 %v3297
    %v3561 = vunpack.c.l.b16 %v3298
    %v3562 = vunpack.c.l.b16 %v3299
    %v3563 = vunpack.c.l.b16 %v3300
    %v3564 = vunpack.c.l.b16 %v3301
    %v3565 = vunpack.c.l.b16 %v3302
    %v3566 = vunpack.c.l.b16 %v3303
    %v3567 = vunpack.c.l.b16 %v3304
    %v3568 = vunpack.c.l.b16 %v3305
    %v3569 = vunpack.c.l.b16 %v3306
    %v3570 = vunpack.c.l.b16 %v3307
    %v3571 = vunpack.c.l.b16 %v3308
    %v3572 = vunpack.c.l.b16 %v3309
    %v3573 = vunpack.c.l.b16 %v3310
    %v3574 = vunpack.c.l.b16 %v3311
    %v3575 = vunpack.c.l.b16 %v3312
    %v3576 = vunpack.c.l.b16 %v3313
    %v3577 = vunpack.c.l.b16 %v3314
    %v3578 = vunpack.c.l.b16 %v3315
    %v3579 = vunpack.c.l.b16 %v3316
    %v3580 = vunpack.c.l.b16 %v3317
    %v3581 = vunpack.c.l.b16 %v3318
    %v3582 = vunpack.c.l.b16 %v3319
    %v3583 = vunpack.c.l.b16 %v3320
    %v3584 = vunpack.c.l.b16 %v3321
    %v3585 = vunpack.c.l.b16 %v3322
    %v3586 = vunpack.c.l.b16 %v3323
    %v3587 = vunpack.c.l.b16 %v3324
    %v3588 = vunpack.c.l.b16 %v3325
    %v3589 = vunpack.c.l.b16 %v3326
    %v3590 = vunpack.c.l.b16 %v3327
    %v3591 = vunpack.c.l.b16 %v3328
    %v3592 = vunpack.c.l.b16 %v3329
    %v3593 = vunpack.c.l.b16 %v3330
    %v3594 = vunpack.c.l.b16 %v3331
    %v3595 = vunpack.c.l.b16 %v3332
    %v3596 = vunpack.c.l.b16 %v3333
    %v3597 = vunpack.c.l.b16 %v3334
    %v3598 = vunpack.c.l.b16 %v3335
    %v3599 = vunpack.c.l.b16 %v3336
    %v3600 = vunpack.c.l.b16 %v3337
    %v3601 = vunpack.c.l.b16 %v3338
    %v3602 = vunpack.c.l.b16 %v3339
    %v3603 = vunpack.c.l.b16 %v3340
    %v3604 = vunpack.c.l.b16 %v3341
    %v3605 = vpack.c.b16 %v3478, %v3477
    %v3606 = vpack.c.b16 %v3480, %v3479
    %v3607 = vpack.c.b16 %v3482, %v3481
    %v3608 = vpack.c.b16 %v3484, %v3483
    %v3609 = vpack.c.b16 %v3486, %v3485
    %v3610 = vpack.c.b16 %v3488, %v3487
    %v3611 = vpack.c.b16 %v3490, %v3489
    %v3612 = vpack.c.b16 %v3492, %v3491
    %v3613 = vpack.c.b16 %v3494, %v3493
    %v3614 = vpack.c.b16 %v3496, %v3495
    %v3615 = vpack.c.b16 %v3498, %v3497
    %v3616 = vpack.c.b16 %v3500, %v3499
    %v3617 = vpack.c.b16 %v3502, %v3501
    %v3618 = vpack.c.b16 %v3504, %v3503
    %v3619 = vpack.c.b16 %v3506, %v3505
    %v3620 = vpack.c.b16 %v3508, %v3507
    %v3621 = vpack.c.b16 %v3510, %v3509
    %v3622 = vpack.c.b16 %v3512, %v3511
    %v3623 = vpack.c.b16 %v3514, %v3513
    %v3624 = vpack.c.b16 %v3516, %v3515
    %v3625 = vpack.c.b16 %v3518, %v3517
    %v3626 = vpack.c.b16 %v3520, %v3519
    %v3627 = vpack.c.b16 %v3522, %v3521
    %v3628 = vpack.c.b16 %v3524, %v3523
    %v3629 = vpack.c.b16 %v3526, %v3525
    %v3630 = vpack.c.b16 %v3528, %v3527
    %v3631 = vpack.c.b16 %v3530, %v3529
    %v3632 = vpack.c.b16 %v3532, %v3531
    %v3633 = vpack.c.b16 %v3534, %v3533
    %v3634 = vpack.c.b16 %v3536, %v3535
    %v3635 = vpack.c.b16 %v3538, %v3537
    %v3636 = vpack.c.b16 %v3540, %v3539
    %v3637 = vpack.c.b16 %v3542, %v3541
    %v3638 = vpack.c.b16 %v3544, %v3543
    %v3639 = vpack.c.b16 %v3546, %v3545
    %v3640 = vpack.c.b16 %v3548, %v3547
    %v3641 = vpack.c.b16 %v3550, %v3549
    %v3642 = vpack.c.b16 %v3552, %v3551
    %v3643 = vpack.c.b16 %v3554, %v3553
    %v3644 = vpack.c.b16 %v3556, %v3555
    %v3645 = vpack.c.b16 %v3558, %v3557
    %v3646 = vpack.c.b16 %v3560, %v3559
    %v3647 = vpack.c.b16 %v3562, %v3561
    %v3648 = vpack.c.b16 %v3564, %v3563
    %v3649 = vpack.c.b16 %v3566, %v3565
    %v3650 = vpack.c.b16 %v3568, %v3567
    %v3651 = vpack.c.b16 %v3570, %v3569
    %v3652 = vpack.c.b16 %v3572, %v3571
    %v3653 = vpack.c.b16 %v3574, %v3573
    %v3654 = vpack.c.b16 %v3576, %v3575
    %v3655 = vpack.c.b16 %v3578, %v3577
    %v3656 = vpack.c.b16 %v3580, %v3579
    %v3657 = vpack.c.b16 %v3582, %v3581
    %v3658 = vpack.c.b16 %v3584, %v3583
    %v3659 = vpack.c.b16 %v3586, %v3585
    %v3660 = vpack.c.b16 %v3588, %v3587
    %v3661 = vpack.c.b16 %v3590, %v3589
    %v3662 = vpack.c.b16 %v3592, %v3591
    %v3663 = vpack.c.b16 %v3594, %v3593
    %v3664 = vpack.c.b16 %v3596, %v3595
    %v3665 = vpack.c.b16 %v3598, %v3597
    %v3666 = vpack.c.b16 %v3600, %v3599
    %v3667 = vpack.c.b16 %v3602, %v3601
    %v3668 = vpack.c.b16 %v3604, %v3603
    %3733 = vmatprep.subr.bf16.mxu0 0
    %3734 = vmatpush1.bf16.msra.mxu0 %v3605
    %3735 = vmatprep.subr.bf16.mxu0 0
    %3736 = vmatpush1.bf16.msra.mxu0 %v3606
    %3737 = vmatprep.subr.bf16.mxu0 0
    %3738 = vmatpush1.bf16.msra.mxu0 %v3607
    %3739 = vmatprep.subr.bf16.mxu0 0
    %3740 = vmatpush1.bf16.msra.mxu0 %v3608
    %3741 = vmatprep.subr.bf16.mxu0 0
    %3742 = vmatpush1.bf16.msra.mxu0 %v3609
    %3743 = vmatprep.subr.bf16.mxu0 0
    %3744 = vmatpush1.bf16.msra.mxu0 %v3610
    %3745 = vmatprep.subr.bf16.mxu0 0
    %3746 = vmatpush1.bf16.msra.mxu0 %v3611
    %3747 = vmatprep.subr.bf16.mxu0 0
    %3748 = vmatpush1.bf16.msra.mxu0 %v3612
    %3749 = vmatprep.subr.bf16.mxu0 0
    %3750 = vmatpush1.bf16.msra.mxu0 %v3613
    %3751 = vmatprep.subr.bf16.mxu0 0
    %3752 = vmatpush1.bf16.msra.mxu0 %v3614
    %3753 = vmatprep.subr.bf16.mxu0 0
    %3754 = vmatpush1.bf16.msra.mxu0 %v3615
    %3755 = vmatprep.subr.bf16.mxu0 0
    %3756 = vmatpush1.bf16.msra.mxu0 %v3616
    %3757 = vmatprep.subr.bf16.mxu0 0
    %3758 = vmatpush1.bf16.msra.mxu0 %v3617
    %3759 = vmatprep.subr.bf16.mxu0 0
    %3760 = vmatpush1.bf16.msra.mxu0 %v3618
    %3761 = vmatprep.subr.bf16.mxu0 0
    %3762 = vmatpush1.bf16.msra.mxu0 %v3619
    %3763 = vmatprep.subr.bf16.mxu0 0
    %3764 = vmatpush1.bf16.msra.mxu0 %v3620
    %3765 = vmatprep.mubr.bf16.mxu0 %v3207
    %3766 = vmatmul.mubr.bf16.gmra.mrb[0].mxu0 %v3206
    %v3767 = vpop.f32.mrb[0].mxu0
    %v3768 = vadd.f32 %v3347, %v3767
    %v3769 = vpop.f32.mrb[0].mxu0
    %v3770 = vpop.f32.mrb[0].mxu0
    %v3771 = vpop.f32.mrb[0].mxu0
    %3772 = vdwg.mxu0
    %3773 = vmatprep.subr.bf16.mxu0 0
    %3774 = vmatpush1.bf16.msra.mxu0 %v3621
    %3775 = vmatprep.subr.bf16.mxu0 0
    %3776 = vmatpush1.bf16.msra.mxu0 %v3622
    %3777 = vmatprep.subr.bf16.mxu0 0
    %3778 = vmatpush1.bf16.msra.mxu0 %v3623
    %3779 = vmatprep.subr.bf16.mxu0 0
    %3780 = vmatpush1.bf16.msra.mxu0 %v3624
    %3781 = vmatprep.subr.bf16.mxu0 0
    %3782 = vmatpush1.bf16.msra.mxu0 %v3625
    %3783 = vmatprep.subr.bf16.mxu0 0
    %3784 = vmatpush1.bf16.msra.mxu0 %v3626
    %3785 = vmatprep.subr.bf16.mxu0 0
    %3786 = vmatpush1.bf16.msra.mxu0 %v3627
    %3787 = vmatprep.subr.bf16.mxu0 0
    %3788 = vmatpush1.bf16.msra.mxu0 %v3628
    %3789 = vmatprep.subr.bf16.mxu0 0
    %3790 = vmatpush1.bf16.msra.mxu0 %v3629
    %3791 = vmatprep.subr.bf16.mxu0 0
    %3792 = vmatpush1.bf16.msra.mxu0 %v3630
    %3793 = vmatprep.subr.bf16.mxu0 0
    %3794 = vmatpush1.bf16.msra.mxu0 %v3631
    %3795 = vmatprep.subr.bf16.mxu0 0
    %3796 = vmatpush1.bf16.msra.mxu0 %v3632
    %3797 = vmatprep.subr.bf16.mxu0 0
    %3798 = vmatpush1.bf16.msra.mxu0 %v3633
    %3799 = vmatprep.subr.bf16.mxu0 0
    %3800 = vmatpush1.bf16.msra.mxu0 %v3634
    %3801 = vmatprep.subr.bf16.mxu0 0
    %3802 = vmatpush1.bf16.msra.mxu0 %v3635
    %3803 = vmatprep.subr.bf16.mxu0 0
    %3804 = vmatpush1.bf16.msra.mxu0 %v3636
    %3805 = vmatprep.mubr.bf16.mxu0 %v3209
    %3806 = vmatmul.mubr.bf16.gmra.mrb[0].mxu0 %v3208
    %v3807 = vpop.f32.mrb[0].mxu0
    %v3808 = vadd.f32 %v3768, %v3807
    %v3809 = vpop.f32.mrb[0].mxu0
    %v3810 = vpop.f32.mrb[0].mxu0
    %v3811 = vpop.f32.mrb[0].mxu0
    %3812 = vdwg.mxu0
    %3813 = vmatprep.subr.bf16.mxu0 0
    %3814 = vmatpush1.bf16.msra.mxu0 %v3637
    %3815 = vmatprep.subr.bf16.mxu0 0
    %3816 = vmatpush1.bf16.msra.mxu0 %v3638
    %3817 = vmatprep.subr.bf16.mxu0 0
    %3818 = vmatpush1.bf16.msra.mxu0 %v3639
    %3819 = vmatprep.subr.bf16.mxu0 0
    %3820 = vmatpush1.bf16.msra.mxu0 %v3640
    %3821 = vmatprep.subr.bf16.mxu0 0
    %3822 = vmatpush1.bf16.msra.mxu0 %v3641
    %3823 = vmatprep.subr.bf16.mxu0 0
    %3824 = vmatpush1.bf16.msra.mxu0 %v3642
    %3825 = vmatprep.subr.bf16.mxu0 0
    %3826 = vmatpush1.bf16.msra.mxu0 %v3643
    %3827 = vmatprep.subr.bf16.mxu0 0
    %3828 = vmatpush1.bf16.msra.mxu0 %v3644
    %3829 = vmatprep.subr.bf16.mxu0 0
    %3830 = vmatpush1.bf16.msra.mxu0 %v3645
    %3831 = vmatprep.subr.bf16.mxu0 0
    %3832 = vmatpush1.bf16.msra.mxu0 %v3646
    %3833 = vmatprep.subr.bf16.mxu0 0
    %3834 = vmatpush1.bf16.msra.mxu0 %v3647
    %3835 = vmatprep.subr.bf16.mxu0 0
    %3836 = vmatpush1.bf16.msra.mxu0 %v3648
    %3837 = vmatprep.subr.bf16.mxu0 0
    %3838 = vmatpush1.bf16.msra.mxu0 %v3649
    %3839 = vmatprep.subr.bf16.mxu0 0
    %3840 = vmatpush1.bf16.msra.mxu0 %v3650
    %3841 = vmatprep.subr.bf16.mxu0 0
    %3842 = vmatpush1.bf16.msra.mxu0 %v3651
    %3843 = vmatprep.subr.bf16.mxu0 0
    %3844 = vmatpush1.bf16.msra.mxu0 %v3652
    %3845 = vmatprep.mubr.bf16.mxu0 %v3211
    %3846 = vmatmul.mubr.bf16.gmra.mrb[0].mxu0 %v3210
    %v3847 = vpop.f32.mrb[0].mxu0
    %v3848 = vadd.f32 %v3808, %v3847
    %v3849 = vpop.f32.mrb[0].mxu0
    %v3850 = vpop.f32.mrb[0].mxu0
    %v3851 = vpop.f32.mrb[0].mxu0
    %3852 = vdwg.mxu0
    %3853 = vmatprep.subr.bf16.mxu0 0
    %3854 = vmatpush1.bf16.msra.mxu0 %v3653
    %3855 = vmatprep.subr.bf16.mxu0 0
    %3856 = vmatpush1.bf16.msra.mxu0 %v3654
    %3857 = vmatprep.subr.bf16.mxu0 0
    %3858 = vmatpush1.bf16.msra.mxu0 %v3655
    %3859 = vmatprep.subr.bf16.mxu0 0
    %3860 = vmatpush1.bf16.msra.mxu0 %v3656
    %3861 = vmatprep.subr.bf16.mxu0 0
    %3862 = vmatpush1.bf16.msra.mxu0 %v3657
    %3863 = vmatprep.subr.bf16.mxu0 0
    %3864 = vmatpush1.bf16.msra.mxu0 %v3658
    %3865 = vmatprep.subr.bf16.mxu0 0
    %3866 = vmatpush1.bf16.msra.mxu0 %v3659
    %3867 = vmatprep.subr.bf16.mxu0 0
    %3868 = vmatpush1.bf16.msra.mxu0 %v3660
    %3869 = vmatprep.subr.bf16.mxu0 0
    %3870 = vmatpush1.bf16.msra.mxu0 %v3661
    %3871 = vmatprep.subr.bf16.mxu0 0
    %3872 = vmatpush1.bf16.msra.mxu0 %v3662
    %3873 = vmatprep.subr.bf16.mxu0 0
    %3874 = vmatpush1.bf16.msra.mxu0 %v3663
    %3875 = vmatprep.subr.bf16.mxu0 0
    %3876 = vmatpush1.bf16.msra.mxu0 %v3664
    %3877 = vmatprep.subr.bf16.mxu0 0
    %3878 = vmatpush1.bf16.msra.mxu0 %v3665
    %3879 = vmatprep.subr.bf16.mxu0 0
    %3880 = vmatpush1.bf16.msra.mxu0 %v3666
    %3881 = vmatprep.subr.bf16.mxu0 0
    %3882 = vmatpush1.bf16.msra.mxu0 %v3667
    %3883 = vmatprep.subr.bf16.mxu0 0
    %3884 = vmatpush1.bf16.msra.mxu0 %v3668
    %3885 = vmatprep.mubr.bf16.mxu0 %v3213
    %3886 = vmatmul.mubr.bf16.gmra.mrb[0].mxu0 %v3212
    %v3887 = vpop.f32.mrb[0].mxu0
    %v3888 = vadd.f32 %v3848, %v3887
    %v3889 = vpop.f32.mrb[0].mxu0
    %v3890 = vpop.f32.mrb[0].mxu0
    %v3891 = vpop.f32.mrb[0].mxu0
    %3892 = vdwg.mxu0
    %3893 = vst [vmem:[#allocation14] sm:$0xff] %v3888
    // Predicated region
    $region58: #{tpu_custom_call.1} parent=1 // pred_check
      _
    $region59: #{tpu_custom_call.1} parent=1 // pred_check_branch
      %3895 = sbr.rel (0) target = $region61
    $region60: #{tpu_custom_call.1} parent=1 // pred_region
      %s3897 = ssub.s32 128, 128
      %3898 = vsyncadd [#allocation4], %s3897
      %s3900 = sshll.u32 [#allocation14], 4
      %s3901 = int_to_ptr.vmem [resolvable:$true] %s3900
      %3903 = dma.vmem_to_hbm [thread:$0]  %s3901, 128, %s7, [#allocation4]
    $region61: #{tpu_custom_call.1} parent=1 // pred_fallthru
      _
    // Predicated region
    $region62: #{tpu_custom_call.1} parent=1 // pred_check
      _
    $region63: #{tpu_custom_call.1} parent=1 // pred_check_branch
      %3905 = sbr.rel (0) target = $region65
    $region64: #{tpu_custom_call.1} parent=1 // pred_region
      %3906 = dma.done [#allocation4], 128
    $region65: #{tpu_custom_call.1} parent=1 // pred_fallthru
      _
    %3907 = vsyncpa [#allocation3], 1
    %3908 = vsyncpa [#allocation6], 1
    %3909 = vsyncpa [#allocation9], 1
    %3910 = vsyncpa [#allocation12], 1
    %3911 = vsyncpa [#allocation4], 1

</llo_original>
